<compile_context>
chip_gen: v7x
topology: tpu7x:2x2x1
jax: 0.10.0
libtpu: 0.0.40
codegen_flags: <defaults>
</compile_context>

<pallas_src>
import functools
import math

import jax
import jax.numpy as jnp
from jax import lax
from jax.experimental import pallas as pl
from jax.experimental.pallas import tpu as pltpu

BF16 = jnp.bfloat16


# ----------------------------------------------------------------------------
# In-kernel helpers (traced inside the Pallas kernels)
# ----------------------------------------------------------------------------

def _layernorm(x2, g, b, eps=1e-5):
    """x2: (rows, D); g, b: (1, D). Biased variance, matches nn.LayerNorm."""
    mu = jnp.mean(x2, axis=-1, keepdims=True)
    xc = x2 - mu
    var = jnp.mean(xc * xc, axis=-1, keepdims=True)
    return xc * lax.rsqrt(var + eps) * g + b


def _ffn(x2, w1_t, b1, w2_t, b2, slope=0.01):
    """leaky_relu MLP on flattened rows. x2 f32; weights bf16; accumulate f32."""
    h = jnp.dot(x2.astype(BF16), w1_t, preferred_element_type=jnp.float32) + b1
    h = jnp.where(h >= 0, h, slope * h)
    return jnp.dot(h.astype(BF16), w2_t, preferred_element_type=jnp.float32) + b2


def _attention(q_in, k_in, v_in, bias, w_in_t, b_in, wo_t, bo, nhead, ctx_ref):
    """Multi-head attention on one batch block.

    q_in: (B, Lq, D) f32 (positional embedding already added)
    k_in: (B, Lk, D) f32; v_in: (B, Lk, D) f32
    bias: (B, 1, Lk) additive key-padding bias (0 / -1e30), or None.
    w_in_t: (D, 3D) bf16 fused QKV projection (1/sqrt(dh) folded into Q cols)
    b_in:   (1, 3D) f32; wo_t: (D, D) bf16; bo: (1, D) f32
    ctx_ref: (Lq, D) f32 VMEM scratch for per-head contexts (B block == 1).
    """
    B, Lq, D = q_in.shape
    Lk = k_in.shape[1]
    dh = D // nhead

    def proj(x, start, width):
        rows = x.shape[0] * x.shape[1]
        return (jnp.dot(x.reshape(rows, D).astype(BF16),
                        w_in_t[:, start:start + width],
                        preferred_element_type=jnp.float32)
                + b_in[:, start:start + width])

    # Fuse projections that share the same input (one full-depth MXU pass).
    if q_in is k_in:                       # self-attention: Q and K share input
        qk = proj(q_in, 0, 2 * D).reshape(B, Lq, 2 * D)
        q = qk[:, :, :D]
        k = qk[:, :, D:]
        v = proj(v_in, 2 * D, D).reshape(B, Lk, D)
    elif k_in is v_in:                     # cross-attention: K and V share input
        q = proj(q_in, 0, D).reshape(B, Lq, D)
        kv = proj(k_in, D, 2 * D).reshape(B, Lk, 2 * D)
        k = kv[:, :, :D]
        v = kv[:, :, D:]
    else:
        q = proj(q_in, 0, D).reshape(B, Lq, D)
        k = proj(k_in, D, D).reshape(B, Lk, D)
        v = proj(v_in, 2 * D, D).reshape(B, Lk, D)

    if bias is not None:
        bias = jnp.broadcast_to(bias, (B, Lq, Lk))     # broadcast once, not per head

    for h in range(nhead):                 # nhead is small & static
        qh = q[:, :, h * dh:(h + 1) * dh].astype(BF16)
        kh = k[:, :, h * dh:(h + 1) * dh].astype(BF16)
        vh = v[:, :, h * dh:(h + 1) * dh].astype(BF16)
        s = jnp.einsum('bqd,bkd->bqk', qh, kh,
                       preferred_element_type=jnp.float32)       # (B, Lq, Lk) f32
        if bias is not None:
            s = s + bias
        m = jnp.max(s, axis=-1, keepdims=True)
        p = jnp.exp(s - m)
        denom = jnp.sum(p, axis=-1, keepdims=True)
        p = p * pl.reciprocal(denom, approx=True)                # EUP slot
        ctx = jnp.einsum('bqk,bkd->bqd', p.astype(BF16), vh,
                         preferred_element_type=jnp.float32)     # (B, Lq, dh) f32
        # Park each head's context at its lane offset; no per-head W_out matmuls.
        ctx_ref[:, h * dh:(h + 1) * dh] = ctx.reshape(B * Lq, dh)

    # Single full-depth output projection.
    out = (jnp.dot(ctx_ref[...].astype(BF16), wo_t,
                   preferred_element_type=jnp.float32) + bo)
    return out.reshape(B, Lq, D)


# ----------------------------------------------------------------------------
# Fused stack kernels (grid = (batch, layer); activations live in out_ref)
# ----------------------------------------------------------------------------

def _encoder_stack_kernel(src_ref, pos_ref, bias_ref,
                          w_in_ref, b_in_ref, wo_ref, bo_ref,
                          ln1g_ref, ln1b_ref, w1_ref, b1_ref, w2_ref, b2_ref,
                          ln2g_ref, ln2b_ref,
                          out_ref, ctx_ref, *, nhead):
    l = pl.program_id(1)

    @pl.when(l == 0)
    def _():
        out_ref[...] = src_ref[...]

    x3 = out_ref[...]                    # (1, L, D) activations, resident in VMEM
    pos = pos_ref[...]
    bias = bias_ref[...]                 # (1, 1, L)
    B, L, D = x3.shape

    qk = x3 + pos                        # with_pos_embed folded in
    a = _attention(qk, qk, x3, bias,
                   w_in_ref[0], b_in_ref[0], wo_ref[0], bo_ref[0], nhead, ctx_ref)
    x = _layernorm((x3 + a).reshape(B * L, D), ln1g_ref[0], ln1b_ref[0])
    ff = _ffn(x, w1_ref[0], b1_ref[0], w2_ref[0], b2_ref[0])
    x = _layernorm(x + ff, ln2g_ref[0], ln2b_ref[0])

    out_ref[...] = x.reshape(B, L, D)


def _decoder_stack_kernel(qpos_ref, mem1_ref, mem2_ref, mem2p_ref, bias_ref,
                          saw_ref, sab_ref, sao_ref, saob_ref,
                          c1w_ref, c1b_ref, c1o_ref, c1ob_ref,
                          c2w_ref, c2b_ref, c2o_ref, c2ob_ref,
                          ln1g_ref, ln1b_ref, ln2g_ref, ln2b_ref,
                          ln3g_ref, ln3b_ref, ln4g_ref, ln4b_ref,
                          w1_ref, b1_ref, w2_ref, b2_ref,
                          fng_ref, fnb_ref,
                          out_ref, ctx_ref, *, nhead):
    l = pl.program_id(1)
    nl = pl.num_programs(1)

    @pl.when(l == 0)
    def _():
        out_ref[...] = jnp.zeros_like(out_ref)    # tgt = zeros_like(query_embed)

    tgt = out_ref[...]                   # (1, Q, D)
    qpos = qpos_ref[...]
    mem1 = mem1_ref[...]
    mem2 = mem2_ref[...]
    mem2p = mem2p_ref[...]               # mem2 + pos, hoisted host-side
    bias = bias_ref[...]                 # (1, 1, L)
    B, Q, D = tgt.shape

    # 1) self-attention (no masks); Q/K projections fused (same input)
    qk = tgt + qpos
    a = _attention(qk, qk, tgt, None,
                   saw_ref[0], sab_ref[0], sao_ref[0], saob_ref[0], nhead, ctx_ref)
    x = _layernorm((tgt + a).reshape(B * Q, D), ln1g_ref[0], ln1b_ref[0])
    x3 = x.reshape(B, Q, D)

    # 2) cross-attention over snippet memory; K/V projections fused (same input)
    a = _attention(x3 + qpos, mem1, mem1, bias,
                   c1w_ref[0], c1b_ref[0], c1o_ref[0], c1ob_ref[0], nhead, ctx_ref)
    x = _layernorm((x3 + a).reshape(B * Q, D), ln2g_ref[0], ln2b_ref[0])
    x3 = x.reshape(B, Q, D)

    # 3) cross-attention over video memory (keys carry pos embedding)
    a = _attention(x3 + qpos, mem2p, mem2, bias,
                   c2w_ref[0], c2b_ref[0], c2o_ref[0], c2ob_ref[0], nhead, ctx_ref)
    x = _layernorm((x3 + a).reshape(B * Q, D), ln3g_ref[0], ln3b_ref[0])

    # 4) feed-forward
    ff = _ffn(x, w1_ref[0], b1_ref[0], w2_ref[0], b2_ref[0])
    x = _layernorm(x + ff, ln4g_ref[0], ln4b_ref[0])

    out_ref[...] = x.reshape(B, Q, D)

    # Final decoder LayerNorm folded into the last grid step.
    @pl.when(l == nl - 1)
    def _():
        out_ref[...] = _layernorm(x, fng_ref[...], fnb_ref[...]).reshape(B, Q, D)


# ----------------------------------------------------------------------------
# BlockSpec helpers & pallas_call wrappers
# ----------------------------------------------------------------------------

def _batch_spec(arr):
    nd = arr.ndim
    return pl.BlockSpec((1,) + tuple(arr.shape[1:]),
                        lambda b, l, nd=nd: (b,) + (0,) * (nd - 1))


def _layer_spec(arr):
    nd = arr.ndim
    return pl.BlockSpec((1,) + tuple(arr.shape[1:]),
                        lambda b, l, nd=nd: (l,) + (0,) * (nd - 1))


def _const_spec(arr):
    nd = arr.ndim
    return pl.BlockSpec(tuple(arr.shape), lambda b, l, nd=nd: (0,) * nd)


def _blk_bytes(a, drop_leading=True):
    shape = a.shape[1:] if drop_leading else a.shape
    return math.prod(shape) * a.dtype.itemsize


def _vmem_limit(blocked_inputs, const_inputs, out_block_elems, scratch_elems):
    need = 2 * sum(_blk_bytes(a) for a in blocked_inputs)          # double-buffered
    need += 2 * sum(_blk_bytes(a, False) for a in const_inputs)
    need += 2 * out_block_elems * 4                                # resident output block
    need += scratch_elems * 4                                      # ctx scratch
    need = int(need * 1.5) + (8 << 20)       # headroom for in-kernel temporaries
    return min(max(need, 32 << 20), 64 << 20)


ENC_WEIGHT_ORDER = ('w_in_t', 'b_in', 'wo_t', 'bo',
                    'ln1_g', 'ln1_b', 'w1_t', 'b1', 'w2_t', 'b2',
                    'ln2_g', 'ln2_b')

DEC_WEIGHT_ORDER = ('sa_w_in_t', 'sa_b_in', 'sa_wo_t', 'sa_bo',
                    'c1_w_in_t', 'c1_b_in', 'c1_wo_t', 'c1_bo',
                    'c2_w_in_t', 'c2_b_in', 'c2_wo_t', 'c2_bo',
                    'ln1_g', 'ln1_b', 'ln2_g', 'ln2_b',
                    'ln3_g', 'ln3_b', 'ln4_g', 'ln4_b',
                    'w1_t', 'b1', 'w2_t', 'b2')


def encoder_stack_forward(src, pos, key_bias, p, nhead):
    B, L, D = src.shape
    nl = p['w_in_t'].shape[0]
    weights = [p[name] for name in ENC_WEIGHT_ORDER]
    in_specs = ([_batch_spec(src), _batch_spec(pos), _batch_spec(key_bias)]
                + [_layer_spec(w) for w in weights])
    vmem_limit = _vmem_limit([src, pos, key_bias] + weights, [], L * D, L * D)
    return pl.pallas_call(
        functools.partial(_encoder_stack_kernel, nhead=nhead),
        grid=(B, nl),
        in_specs=in_specs,
        out_specs=pl.BlockSpec((1, L, D), lambda b, l: (b, 0, 0)),
        out_shape=jax.ShapeDtypeStruct((B, L, D), jnp.float32),
        scratch_shapes=[pltpu.VMEM((L, D), jnp.float32)],
        compiler_params=pltpu.CompilerParams(
            dimension_semantics=("parallel", "arbitrary"),
            vmem_limit_bytes=vmem_limit),
    )(src, pos, key_bias, *weights)


def decoder_stack_forward(query_pos, mem1, mem2, mem2_plus_pos, key_bias, p,
                          final_g, final_b, nhead):
    B, Q, D = query_pos.shape
    nl = p['sa_w_in_t'].shape[0]
    weights = [p[name] for name in DEC_WEIGHT_ORDER]
    consts = (query_pos, mem1, mem2, mem2_plus_pos, key_bias)
    in_specs = ([_batch_spec(a) for a in consts]
                + [_layer_spec(w) for w in weights]
                + [_const_spec(final_g), _const_spec(final_b)])
    vmem_limit = _vmem_limit(list(consts) + weights, [final_g, final_b],
                             Q * D, Q * D)
    return pl.pallas_call(
        functools.partial(_decoder_stack_kernel, nhead=nhead),
        grid=(B, nl),
        in_specs=in_specs,
        out_specs=pl.BlockSpec((1, Q, D), lambda b, l: (b, 0, 0)),
        out_shape=jax.ShapeDtypeStruct((B, Q, D), jnp.float32),
        scratch_shapes=[pltpu.VMEM((Q, D), jnp.float32)],
        compiler_params=pltpu.CompilerParams(
            dimension_semantics=("parallel", "arbitrary"),
            vmem_limit_bytes=vmem_limit),
    )(*consts, *weights, final_g, final_b)


# ----------------------------------------------------------------------------
# Top-level forward (matches TransformerMultipleEncoder.forward semantics)
# ----------------------------------------------------------------------------

def transformer_multiple_encoder_forward(params, src, orig_src, src_mask,
                                         query_embed, pos_embed,
                                         nhead, snippet_window):
    bs, c, t = src.shape
    src_bld = jnp.transpose(src, (0, 2, 1))            # (bs, t, c)
    pos_bld = jnp.transpose(pos_embed, (0, 2, 1))      # (bs, t, c)
    query_bld = jnp.transpose(query_embed, (1, 0, 2))  # (bs, nq, c)

    key_bias = jnp.where(src_mask, -1e30, 0.0).astype(jnp.float32).reshape(bs, 1, t)

    # --- snippet encoder -----------------------------------------------------
    # TODO(synk): snippet_model is an external frozen module; identity stand-in,
    # reproducing the reshape plumbing of the t % snippet_window == 0 branch.
    assert t % snippet_window == 0
    w = snippet_window
    orig_tbc = jnp.transpose(orig_src, (2, 0, 1))      # (t, bs, c)
    mem_snip = orig_tbc.reshape(bs * (t // w), -1, w)  # snippet_encoder == identity
    mem_snip = mem_snip.reshape(bs, -1, t).reshape(t, bs, c)
    mem_snip_bld = jnp.transpose(mem_snip, (1, 0, 2))  # (bs, t, c)

    # --- video encoder (single fused pallas_call over all layers) ------------
    memory_video_bld = encoder_stack_forward(src_bld, pos_bld, key_bias,
                                             params['encoder'], nhead)

    # mem2 + pos is identical every decoder layer -> hoist host-side.
    mem2_plus_pos = memory_video_bld + pos_bld

    # --- decoder (single fused pallas_call over all layers + final norm) -----
    hs_bld = decoder_stack_forward(query_bld, mem_snip_bld, memory_video_bld,
                                   mem2_plus_pos, key_bias, params['decoder'],
                                   params['dec_norm_g'], params['dec_norm_b'],
                                   nhead)

    hs = hs_bld[None]                                          # (1, bs, nq, c)
    memory_video = jnp.transpose(memory_video_bld, (0, 2, 1))  # (bs, c, t)
    return hs, memory_video


# ----------------------------------------------------------------------------
# Deterministic parameter initialization (shapes per the PyTorch __init__)
# Matmul weights are stored bf16 (streamed per-layer); biases / LN params f32.
# ----------------------------------------------------------------------------

def _xavier(key, shape):
    fan_out, fan_in = shape
    limit = math.sqrt(6.0 / (fan_in + fan_out))
    return jax.random.uniform(key, shape, jnp.float32, -limit, limit)


def init_mha(key, d, nhead):
    k1, k2 = jax.random.split(key)
    scale = 1.0 / math.sqrt(d // nhead)
    w_in_t = _xavier(k1, (3 * d, d)).T                 # (d, 3d), x @ W layout
    w_in_t = w_in_t.at[:, :d].multiply(scale)          # fold 1/sqrt(dh) into Q proj
    b_in = jnp.zeros((1, 3 * d), jnp.float32)
    b_in = b_in.at[:, :d].multiply(scale)
    wo_t = _xavier(k2, (d, d)).T
    bo = jnp.zeros((1, d), jnp.float32)
    return w_in_t.astype(BF16), b_in, wo_t.astype(BF16), bo


def init_enc_layer(key, d, dff, nhead):
    k0, k1, k2 = jax.random.split(key, 3)
    w_in_t, b_in, wo_t, bo = init_mha(k0, d, nhead)
    return dict(
        w_in_t=w_in_t, b_in=b_in, wo_t=wo_t, bo=bo,
        ln1_g=jnp.ones((1, d), jnp.float32), ln1_b=jnp.zeros((1, d), jnp.float32),
        w1_t=_xavier(k1, (dff, d)).T.astype(BF16), b1=jnp.zeros((1, dff), jnp.float32),
        w2_t=_xavier(k2, (d, dff)).T.astype(BF16), b2=jnp.zeros((1, d), jnp.float32),
        ln2_g=jnp.ones((1, d), jnp.float32), ln2_b=jnp.zeros((1, d), jnp.float32),
    )


def init_dec_layer(key, d, dff, nhead):
    ks = jax.random.split(key, 5)
    sa = init_mha(ks[0], d, nhead)
    c1 = init_mha(ks[1], d, nhead)
    c2 = init_mha(ks[2], d, nhead)
    p = dict(
        sa_w_in_t=sa[0], sa_b_in=sa[1], sa_wo_t=sa[2], sa_bo=sa[3],
        c1_w_in_t=c1[0], c1_b_in=c1[1], c1_wo_t=c1[2], c1_bo=c1[3],
        c2_w_in_t=c2[0], c2_b_in=c2[1], c2_wo_t=c2[2], c2_bo=c2[3],
        w1_t=_xavier(ks[3], (dff, d)).T.astype(BF16), b1=jnp.zeros((1, dff), jnp.float32),
        w2_t=_xavier(ks[4], (d, dff)).T.astype(BF16), b2=jnp.zeros((1, d), jnp.float32),
    )
    for i in range(1, 5):
        p[f'ln{i}_g'] = jnp.ones((1, d), jnp.float32)
        p[f'ln{i}_b'] = jnp.zeros((1, d), jnp.float32)
    return p


def stack_layers(layer_dicts):
    return {k: jnp.stack([lp[k] for lp in layer_dicts], axis=0)
            for k in layer_dicts[0]}


# ----------------------------------------------------------------------------

if __name__ == "__main__":
    bs, d_model, t = 2, 32, 16
    nhead, dff = 4, 64
    num_encoder_layers, num_decoder_layers = 2, 2
    snippet_window = 8
    num_queries = 8

    key = jax.random.PRNGKey(0)
    keys = jax.random.split(key, 6)

    src = jax.random.normal(keys[0], (bs, d_model, t), jnp.float32)
    orig_src = jax.random.normal(keys[1], (bs, d_model, t), jnp.float32)
    pos_embed = jax.random.normal(keys[2], (bs, d_model, t), jnp.float32)
    query_embed = jax.random.normal(keys[3], (num_queries, bs, d_model), jnp.float32)
    src_mask = jnp.zeros((bs, t), bool).at[1, -2:].set(True)  # key padding mask

    enc_keys = jax.random.split(keys[4], num_encoder_layers)
    dec_keys = jax.random.split(keys[5], num_decoder_layers)
    params = dict(
        encoder=stack_layers([init_enc_layer(k, d_model, dff, nhead)
                              for k in enc_keys]),
        decoder=stack_layers([init_dec_layer(k, d_model, dff, nhead)
                              for k in dec_keys]),
        dec_norm_g=jnp.ones((1, d_model), jnp.float32),
        dec_norm_b=jnp.zeros((1, d_model), jnp.float32),
    )

    @jax.jit
    def fwd(params, src, orig_src, src_mask, query_embed, pos_embed):
        return transformer_multiple_encoder_forward(
            params, src, orig_src, src_mask, query_embed, pos_embed,
            nhead=nhead, snippet_window=snippet_window)

    hs, memory_video = fwd(params, src, orig_src, src_mask, query_embed, pos_embed)
    jax.block_until_ready((hs, memory_video))

    assert hs.shape == (1, bs, num_queries, d_model)
    assert memory_video.shape == (bs, d_model, t)
    assert bool(jnp.all(jnp.isfinite(hs))) and bool(jnp.all(jnp.isfinite(memory_video)))
    print("KERNEL_OK")
</pallas_src>

<mosaic_0001>
module attributes {stable_mosaic.version = 11 : i64} {
  func.func @_encoder_stack_kernel(%arg0: i32, %arg1: i32, %arg2: memref<1x16x32xf32, #tpu.memory_space<vmem>>, %arg3: memref<1x16x32xf32, #tpu.memory_space<vmem>>, %arg4: memref<1x1x16xf32, #tpu.memory_space<vmem>>, %arg5: memref<1x32x96xbf16, #tpu.memory_space<vmem>>, %arg6: memref<1x1x96xf32, #tpu.memory_space<vmem>>, %arg7: memref<1x32x32xbf16, #tpu.memory_space<vmem>>, %arg8: memref<1x1x32xf32, #tpu.memory_space<vmem>>, %arg9: memref<1x1x32xf32, #tpu.memory_space<vmem>>, %arg10: memref<1x1x32xf32, #tpu.memory_space<vmem>>, %arg11: memref<1x32x64xbf16, #tpu.memory_space<vmem>>, %arg12: memref<1x1x64xf32, #tpu.memory_space<vmem>>, %arg13: memref<1x64x32xbf16, #tpu.memory_space<vmem>>, %arg14: memref<1x1x32xf32, #tpu.memory_space<vmem>>, %arg15: memref<1x1x32xf32, #tpu.memory_space<vmem>>, %arg16: memref<1x1x32xf32, #tpu.memory_space<vmem>>, %arg17: memref<1x16x32xf32, #tpu.memory_space<vmem>>, %arg18: memref<16x32xf32, #tpu.memory_space<vmem>>) attributes {dimension_semantics = [#tpu.dimension_semantics<parallel>, #tpu.dimension_semantics<arbitrary>], iteration_bounds = array<i64: 2, 2>, scalar_prefetch = 0 : i64, scratch_operands = 1 : i64, tpu.core_type = #tpu.core_type<tc>, window_params = [{transform_indices = @transform_0, window_bounds = array<i64: 1, 16, 32>}, {transform_indices = @transform_1, window_bounds = array<i64: 1, 16, 32>}, {transform_indices = @transform_2, window_bounds = array<i64: 1, 1, 16>}, {transform_indices = @transform_3, window_bounds = array<i64: 1, 32, 96>}, {transform_indices = @transform_4, window_bounds = array<i64: 1, 1, 96>}, {transform_indices = @transform_5, window_bounds = array<i64: 1, 32, 32>}, {transform_indices = @transform_6, window_bounds = array<i64: 1, 1, 32>}, {transform_indices = @transform_7, window_bounds = array<i64: 1, 1, 32>}, {transform_indices = @transform_8, window_bounds = array<i64: 1, 1, 32>}, {transform_indices = @transform_9, window_bounds = array<i64: 1, 32, 64>}, {transform_indices = @transform_10, window_bounds = array<i64: 1, 1, 64>}, {transform_indices = @transform_11, window_bounds = array<i64: 1, 64, 32>}, {transform_indices = @transform_12, window_bounds = array<i64: 1, 1, 32>}, {transform_indices = @transform_13, window_bounds = array<i64: 1, 1, 32>}, {transform_indices = @transform_14, window_bounds = array<i64: 1, 1, 32>}, {transform_indices = @transform_15, window_bounds = array<i64: 1, 16, 32>}]} {
    %c0_i32 = arith.constant 0 : i32
    %0 = arith.cmpi eq, %arg1, %c0_i32 : i32
    %1 = arith.extui %0 : i1 to i32
    %c0_i32_0 = arith.constant 0 : i32
    %2 = arith.cmpi ne, %1, %c0_i32_0 : i32
    scf.if %2 {
      %c0_87 = arith.constant 0 : index
      %c0_88 = arith.constant 0 : index
      %c0_89 = arith.constant 0 : index
      %203 = vector.load %arg2[%c0_87, %c0_88, %c0_89] : memref<1x16x32xf32, #tpu.memory_space<vmem>>, vector<1x16x32xf32>
      %c0_90 = arith.constant 0 : index
      %c0_91 = arith.constant 0 : index
      %c0_92 = arith.constant 0 : index
      %204 = vector.load %arg17[%c0_90, %c0_91, %c0_92] : memref<1x16x32xf32, #tpu.memory_space<vmem>>, vector<1x16x32xf32>
      tpu.vector_store %arg17[%c0_90, %c0_91, %c0_92], %203 {strides = array<i32>} : memref<1x16x32xf32, #tpu.memory_space<vmem>>, vector<1x16x32xf32>,
    } else {
    }
    %c0 = arith.constant 0 : index
    %c0_1 = arith.constant 0 : index
    %c0_2 = arith.constant 0 : index
    %3 = vector.load %arg17[%c0, %c0_1, %c0_2] : memref<1x16x32xf32, #tpu.memory_space<vmem>>, vector<1x16x32xf32>
    %c0_3 = arith.constant 0 : index
    %c0_4 = arith.constant 0 : index
    %c0_5 = arith.constant 0 : index
    %4 = vector.load %arg3[%c0_3, %c0_4, %c0_5] : memref<1x16x32xf32, #tpu.memory_space<vmem>>, vector<1x16x32xf32>
    %c0_6 = arith.constant 0 : index
    %c0_7 = arith.constant 0 : index
    %c0_8 = arith.constant 0 : index
    %5 = vector.load %arg4[%c0_6, %c0_7, %c0_8] : memref<1x1x16xf32, #tpu.memory_space<vmem>>, vector<1x1x16xf32>
    %6 = arith.addf %3, %4 : vector<1x16x32xf32>
    %c0_9 = arith.constant 0 : index
    %c0_10 = arith.constant 0 : index
    %c0_11 = arith.constant 0 : index
    %7 = vector.load %arg5[%c0_9, %c0_10, %c0_11] : memref<1x32x96xbf16, #tpu.memory_space<vmem>>, vector<1x32x96xbf16>
    %8 = vector.shape_cast %7 : vector<1x32x96xbf16> to vector<32x96xbf16>
    %c0_12 = arith.constant 0 : index
    %c0_13 = arith.constant 0 : index
    %c0_14 = arith.constant 0 : index
    %9 = vector.load %arg6[%c0_12, %c0_13, %c0_14] : memref<1x1x96xf32, #tpu.memory_space<vmem>>, vector<1x1x96xf32>
    %10 = vector.shape_cast %9 : vector<1x1x96xf32> to vector<1x96xf32>
    %c0_15 = arith.constant 0 : index
    %c0_16 = arith.constant 0 : index
    %c0_17 = arith.constant 0 : index
    %11 = vector.load %arg7[%c0_15, %c0_16, %c0_17] : memref<1x32x32xbf16, #tpu.memory_space<vmem>>, vector<1x32x32xbf16>
    %12 = vector.shape_cast %11 : vector<1x32x32xbf16> to vector<32x32xbf16>
    %c0_18 = arith.constant 0 : index
    %c0_19 = arith.constant 0 : index
    %c0_20 = arith.constant 0 : index
    %13 = vector.load %arg8[%c0_18, %c0_19, %c0_20] : memref<1x1x32xf32, #tpu.memory_space<vmem>>, vector<1x1x32xf32>
    %14 = vector.shape_cast %13 : vector<1x1x32xf32> to vector<1x32xf32>
    %15 = vector.shape_cast %6 : vector<1x16x32xf32> to vector<16x32xf32>
    %16 = arith.truncf %15 : vector<16x32xf32> to vector<16x32xbf16>
    %17 = vector.extract_strided_slice %8 {offsets = [0, 0], sizes = [32, 64], strides = [1, 1]} : vector<32x96xbf16> to vector<32x64xbf16>
    %cst = arith.constant dense<0.000000e+00> : vector<16x64xf32>
    %18 = tpu.matmul %16, %17, %cst {dimension_numbers = #tpu.dot_dimension_numbers<[1], [0], [0], [1], [0, 0, 1, 1], [], []>} : vector<16x32xbf16>, vector<32x64xbf16>, vector<16x64xf32> -> vector<16x64xf32>
    %19 = vector.extract_strided_slice %10 {offsets = [0, 0], sizes = [1, 64], strides = [1, 1]} : vector<1x96xf32> to vector<1x64xf32>
    %20 = vector.broadcast %19 : vector<1x64xf32> to vector<16x64xf32>
    %21 = arith.addf %18, %20 : vector<16x64xf32>
    %22 = vector.shape_cast %21 : vector<16x64xf32> to vector<1x16x64xf32>
    %23 = vector.extract_strided_slice %22 {offsets = [0, 0, 0], sizes = [1, 16, 32], strides = [1, 1, 1]} : vector<1x16x64xf32> to vector<1x16x32xf32>
    %24 = vector.extract_strided_slice %22 {offsets = [0, 0, 32], sizes = [1, 16, 32], strides = [1, 1, 1]} : vector<1x16x64xf32> to vector<1x16x32xf32>
    %25 = vector.shape_cast %3 : vector<1x16x32xf32> to vector<16x32xf32>
    %26 = arith.truncf %25 : vector<16x32xf32> to vector<16x32xbf16>
    %27 = vector.extract_strided_slice %8 {offsets = [0, 64], sizes = [32, 32], strides = [1, 1]} : vector<32x96xbf16> to vector<32x32xbf16>
    %cst_21 = arith.constant dense<0.000000e+00> : vector<16x32xf32>
    %28 = tpu.matmul %26, %27, %cst_21 {dimension_numbers = #tpu.dot_dimension_numbers<[1], [0], [0], [1], [0, 0, 1, 1], [], []>} : vector<16x32xbf16>, vector<32x32xbf16>, vector<16x32xf32> -> vector<16x32xf32>
    %29 = vector.extract_strided_slice %10 {offsets = [0, 64], sizes = [1, 32], strides = [1, 1]} : vector<1x96xf32> to vector<1x32xf32>
    %30 = vector.broadcast %29 : vector<1x32xf32> to vector<16x32xf32>
    %31 = arith.addf %28, %30 : vector<16x32xf32>
    %32 = vector.shape_cast %31 : vector<16x32xf32> to vector<1x16x32xf32>
    %33 = vector.shape_cast %5 : vector<1x1x16xf32> to vector<1x1x16xf32>
    %34 = vector.broadcast %33 : vector<1x1x16xf32> to vector<1x16x16xf32>
    %35 = vector.extract_strided_slice %23 {offsets = [0, 0, 0], sizes = [1, 16, 8], strides = [1, 1, 1]} : vector<1x16x32xf32> to vector<1x16x8xf32>
    %36 = arith.truncf %35 : vector<1x16x8xf32> to vector<1x16x8xbf16>
    %37 = vector.extract_strided_slice %24 {offsets = [0, 0, 0], sizes = [1, 16, 8], strides = [1, 1, 1]} : vector<1x16x32xf32> to vector<1x16x8xf32>
    %38 = arith.truncf %37 : vector<1x16x8xf32> to vector<1x16x8xbf16>
    %39 = vector.extract_strided_slice %32 {offsets = [0, 0, 0], sizes = [1, 16, 8], strides = [1, 1, 1]} : vector<1x16x32xf32> to vector<1x16x8xf32>
    %40 = arith.truncf %39 : vector<1x16x8xf32> to vector<1x16x8xbf16>
    "tpu.trace_start"() <{level = 10 : i32, message = "bqd,bkd->bqk"}> : () -> ()
    %cst_22 = arith.constant dense<0.000000e+00> : vector<1x16x16xf32>
    %41 = tpu.matmul %36, %38, %cst_22 {dimension_numbers = #tpu.dot_dimension_numbers<[2], [2], [1], [1], [0, 0, 0, 1, 1, 1], [0], [0]>} : vector<1x16x8xbf16>, vector<1x16x8xbf16>, vector<1x16x16xf32> -> vector<1x16x16xf32>
    "tpu.trace_stop"() : () -> ()
    %42 = arith.addf %41, %34 : vector<1x16x16xf32>
    %cst_23 = arith.constant dense<0xFF800000> : vector<1x16xf32>
    %43 = vector.multi_reduction <maximumf>, %42, %cst_23 [2] : vector<1x16x16xf32> to vector<1x16xf32>
    %44 = vector.shape_cast %43 : vector<1x16xf32> to vector<1x16x1xf32>
    %45 = vector.broadcast %44 : vector<1x16x1xf32> to vector<1x16x16xf32>
    %46 = arith.subf %42, %45 : vector<1x16x16xf32>
    %47 = math.exp %46 : vector<1x16x16xf32>
    %cst_24 = arith.constant dense<0.000000e+00> : vector<1x16xf32>
    %48 = vector.multi_reduction <add>, %47, %cst_24 [2] : vector<1x16x16xf32> to vector<1x16xf32>
    %49 = vector.shape_cast %48 : vector<1x16xf32> to vector<1x16x1xf32>
    %50 = tpu.reciprocal %49 {approx = true} : vector<1x16x1xf32> -> vector<1x16x1xf32>
    %51 = vector.broadcast %50 : vector<1x16x1xf32> to vector<1x16x16xf32>
    %52 = arith.mulf %47, %51 : vector<1x16x16xf32>
    %53 = arith.truncf %52 : vector<1x16x16xf32> to vector<1x16x16xbf16>
    "tpu.trace_start"() <{level = 10 : i32, message = "bqk,bkd->bqd"}> : () -> ()
    %cst_25 = arith.constant dense<0.000000e+00> : vector<1x16x8xf32>
    %54 = tpu.matmul %53, %40, %cst_25 {dimension_numbers = #tpu.dot_dimension_numbers<[2], [1], [1], [2], [0, 0, 0, 1, 1, 2], [0], [0]>} : vector<1x16x16xbf16>, vector<1x16x8xbf16>, vector<1x16x8xf32> -> vector<1x16x8xf32>
    "tpu.trace_stop"() : () -> ()
    %55 = vector.shape_cast %54 : vector<1x16x8xf32> to vector<16x8xf32>
    %c0_26 = arith.constant 0 : index
    %c0_27 = arith.constant 0 : index
    %56 = vector.load %arg18[%c0_26, %c0_27] : memref<16x32xf32, #tpu.memory_space<vmem>>, vector<16x8xf32>
    tpu.vector_store %arg18[%c0_26, %c0_27], %55 {strides = array<i32>} : memref<16x32xf32, #tpu.memory_space<vmem>>, vector<16x8xf32>,
    %57 = vector.extract_strided_slice %23 {offsets = [0, 0, 8], sizes = [1, 16, 8], strides = [1, 1, 1]} : vector<1x16x32xf32> to vector<1x16x8xf32>
    %58 = arith.truncf %57 : vector<1x16x8xf32> to vector<1x16x8xbf16>
    %59 = vector.extract_strided_slice %24 {offsets = [0, 0, 8], sizes = [1, 16, 8], strides = [1, 1, 1]} : vector<1x16x32xf32> to vector<1x16x8xf32>
    %60 = arith.truncf %59 : vector<1x16x8xf32> to vector<1x16x8xbf16>
    %61 = vector.extract_strided_slice %32 {offsets = [0, 0, 8], sizes = [1, 16, 8], strides = [1, 1, 1]} : vector<1x16x32xf32> to vector<1x16x8xf32>
    %62 = arith.truncf %61 : vector<1x16x8xf32> to vector<1x16x8xbf16>
    "tpu.trace_start"() <{level = 10 : i32, message = "bqd,bkd->bqk"}> : () -> ()
    %cst_28 = arith.constant dense<0.000000e+00> : vector<1x16x16xf32>
    %63 = tpu.matmul %58, %60, %cst_28 {dimension_numbers = #tpu.dot_dimension_numbers<[2], [2], [1], [1], [0, 0, 0, 1, 1, 1], [0], [0]>} : vector<1x16x8xbf16>, vector<1x16x8xbf16>, vector<1x16x16xf32> -> vector<1x16x16xf32>
    "tpu.trace_stop"() : () -> ()
    %64 = arith.addf %63, %34 : vector<1x16x16xf32>
    %cst_29 = arith.constant dense<0xFF800000> : vector<1x16xf32>
    %65 = vector.multi_reduction <maximumf>, %64, %cst_29 [2] : vector<1x16x16xf32> to vector<1x16xf32>
    %66 = vector.shape_cast %65 : vector<1x16xf32> to vector<1x16x1xf32>
    %67 = vector.broadcast %66 : vector<1x16x1xf32> to vector<1x16x16xf32>
    %68 = arith.subf %64, %67 : vector<1x16x16xf32>
    %69 = math.exp %68 : vector<1x16x16xf32>
    %cst_30 = arith.constant dense<0.000000e+00> : vector<1x16xf32>
    %70 = vector.multi_reduction <add>, %69, %cst_30 [2] : vector<1x16x16xf32> to vector<1x16xf32>
    %71 = vector.shape_cast %70 : vector<1x16xf32> to vector<1x16x1xf32>
    %72 = tpu.reciprocal %71 {approx = true} : vector<1x16x1xf32> -> vector<1x16x1xf32>
    %73 = vector.broadcast %72 : vector<1x16x1xf32> to vector<1x16x16xf32>
    %74 = arith.mulf %69, %73 : vector<1x16x16xf32>
    %75 = arith.truncf %74 : vector<1x16x16xf32> to vector<1x16x16xbf16>
    "tpu.trace_start"() <{level = 10 : i32, message = "bqk,bkd->bqd"}> : () -> ()
    %cst_31 = arith.constant dense<0.000000e+00> : vector<1x16x8xf32>
    %76 = tpu.matmul %75, %62, %cst_31 {dimension_numbers = #tpu.dot_dimension_numbers<[2], [1], [1], [2], [0, 0, 0, 1, 1, 2], [0], [0]>} : vector<1x16x16xbf16>, vector<1x16x8xbf16>, vector<1x16x8xf32> -> vector<1x16x8xf32>
    "tpu.trace_stop"() : () -> ()
    %77 = vector.shape_cast %76 : vector<1x16x8xf32> to vector<16x8xf32>
    %c0_32 = arith.constant 0 : index
    %c8 = arith.constant 8 : index
    %78 = vector.load %arg18[%c0_32, %c8] : memref<16x32xf32, #tpu.memory_space<vmem>>, vector<16x8xf32>
    tpu.vector_store %arg18[%c0_32, %c8], %77 {strides = array<i32>} : memref<16x32xf32, #tpu.memory_space<vmem>>, vector<16x8xf32>,
    %79 = vector.extract_strided_slice %23 {offsets = [0, 0, 16], sizes = [1, 16, 8], strides = [1, 1, 1]} : vector<1x16x32xf32> to vector<1x16x8xf32>
    %80 = arith.truncf %79 : vector<1x16x8xf32> to vector<1x16x8xbf16>
    %81 = vector.extract_strided_slice %24 {offsets = [0, 0, 16], sizes = [1, 16, 8], strides = [1, 1, 1]} : vector<1x16x32xf32> to vector<1x16x8xf32>
    %82 = arith.truncf %81 : vector<1x16x8xf32> to vector<1x16x8xbf16>
    %83 = vector.extract_strided_slice %32 {offsets = [0, 0, 16], sizes = [1, 16, 8], strides = [1, 1, 1]} : vector<1x16x32xf32> to vector<1x16x8xf32>
    %84 = arith.truncf %83 : vector<1x16x8xf32> to vector<1x16x8xbf16>
    "tpu.trace_start"() <{level = 10 : i32, message = "bqd,bkd->bqk"}> : () -> ()
    %cst_33 = arith.constant dense<0.000000e+00> : vector<1x16x16xf32>
    %85 = tpu.matmul %80, %82, %cst_33 {dimension_numbers = #tpu.dot_dimension_numbers<[2], [2], [1], [1], [0, 0, 0, 1, 1, 1], [0], [0]>} : vector<1x16x8xbf16>, vector<1x16x8xbf16>, vector<1x16x16xf32> -> vector<1x16x16xf32>
    "tpu.trace_stop"() : () -> ()
    %86 = arith.addf %85, %34 : vector<1x16x16xf32>
    %cst_34 = arith.constant dense<0xFF800000> : vector<1x16xf32>
    %87 = vector.multi_reduction <maximumf>, %86, %cst_34 [2] : vector<1x16x16xf32> to vector<1x16xf32>
    %88 = vector.shape_cast %87 : vector<1x16xf32> to vector<1x16x1xf32>
    %89 = vector.broadcast %88 : vector<1x16x1xf32> to vector<1x16x16xf32>
    %90 = arith.subf %86, %89 : vector<1x16x16xf32>
    %91 = math.exp %90 : vector<1x16x16xf32>
    %cst_35 = arith.constant dense<0.000000e+00> : vector<1x16xf32>
    %92 = vector.multi_reduction <add>, %91, %cst_35 [2] : vector<1x16x16xf32> to vector<1x16xf32>
    %93 = vector.shape_cast %92 : vector<1x16xf32> to vector<1x16x1xf32>
    %94 = tpu.reciprocal %93 {approx = true} : vector<1x16x1xf32> -> vector<1x16x1xf32>
    %95 = vector.broadcast %94 : vector<1x16x1xf32> to vector<1x16x16xf32>
    %96 = arith.mulf %91, %95 : vector<1x16x16xf32>
    %97 = arith.truncf %96 : vector<1x16x16xf32> to vector<1x16x16xbf16>
    "tpu.trace_start"() <{level = 10 : i32, message = "bqk,bkd->bqd"}> : () -> ()
    %cst_36 = arith.constant dense<0.000000e+00> : vector<1x16x8xf32>
    %98 = tpu.matmul %97, %84, %cst_36 {dimension_numbers = #tpu.dot_dimension_numbers<[2], [1], [1], [2], [0, 0, 0, 1, 1, 2], [0], [0]>} : vector<1x16x16xbf16>, vector<1x16x8xbf16>, vector<1x16x8xf32> -> vector<1x16x8xf32>
    "tpu.trace_stop"() : () -> ()
    %99 = vector.shape_cast %98 : vector<1x16x8xf32> to vector<16x8xf32>
    %c0_37 = arith.constant 0 : index
    %c16 = arith.constant 16 : index
    %100 = vector.load %arg18[%c0_37, %c16] : memref<16x32xf32, #tpu.memory_space<vmem>>, vector<16x8xf32>
    tpu.vector_store %arg18[%c0_37, %c16], %99 {strides = array<i32>} : memref<16x32xf32, #tpu.memory_space<vmem>>, vector<16x8xf32>,
    %101 = vector.extract_strided_slice %23 {offsets = [0, 0, 24], sizes = [1, 16, 8], strides = [1, 1, 1]} : vector<1x16x32xf32> to vector<1x16x8xf32>
    %102 = arith.truncf %101 : vector<1x16x8xf32> to vector<1x16x8xbf16>
    %103 = vector.extract_strided_slice %24 {offsets = [0, 0, 24], sizes = [1, 16, 8], strides = [1, 1, 1]} : vector<1x16x32xf32> to vector<1x16x8xf32>
    %104 = arith.truncf %103 : vector<1x16x8xf32> to vector<1x16x8xbf16>
    %105 = vector.extract_strided_slice %32 {offsets = [0, 0, 24], sizes = [1, 16, 8], strides = [1, 1, 1]} : vector<1x16x32xf32> to vector<1x16x8xf32>
    %106 = arith.truncf %105 : vector<1x16x8xf32> to vector<1x16x8xbf16>
    "tpu.trace_start"() <{level = 10 : i32, message = "bqd,bkd->bqk"}> : () -> ()
    %cst_38 = arith.constant dense<0.000000e+00> : vector<1x16x16xf32>
    %107 = tpu.matmul %102, %104, %cst_38 {dimension_numbers = #tpu.dot_dimension_numbers<[2], [2], [1], [1], [0, 0, 0, 1, 1, 1], [0], [0]>} : vector<1x16x8xbf16>, vector<1x16x8xbf16>, vector<1x16x16xf32> -> vector<1x16x16xf32>
    "tpu.trace_stop"() : () -> ()
    %108 = arith.addf %107, %34 : vector<1x16x16xf32>
    %cst_39 = arith.constant dense<0xFF800000> : vector<1x16xf32>
    %109 = vector.multi_reduction <maximumf>, %108, %cst_39 [2] : vector<1x16x16xf32> to vector<1x16xf32>
    %110 = vector.shape_cast %109 : vector<1x16xf32> to vector<1x16x1xf32>
    %111 = vector.broadcast %110 : vector<1x16x1xf32> to vector<1x16x16xf32>
    %112 = arith.subf %108, %111 : vector<1x16x16xf32>
    %113 = math.exp %112 : vector<1x16x16xf32>
    %cst_40 = arith.constant dense<0.000000e+00> : vector<1x16xf32>
    %114 = vector.multi_reduction <add>, %113, %cst_40 [2] : vector<1x16x16xf32> to vector<1x16xf32>
    %115 = vector.shape_cast %114 : vector<1x16xf32> to vector<1x16x1xf32>
    %116 = tpu.reciprocal %115 {approx = true} : vector<1x16x1xf32> -> vector<1x16x1xf32>
    %117 = vector.broadcast %116 : vector<1x16x1xf32> to vector<1x16x16xf32>
    %118 = arith.mulf %113, %117 : vector<1x16x16xf32>
    %119 = arith.truncf %118 : vector<1x16x16xf32> to vector<1x16x16xbf16>
    "tpu.trace_start"() <{level = 10 : i32, message = "bqk,bkd->bqd"}> : () -> ()
    %cst_41 = arith.constant dense<0.000000e+00> : vector<1x16x8xf32>
    %120 = tpu.matmul %119, %106, %cst_41 {dimension_numbers = #tpu.dot_dimension_numbers<[2], [1], [1], [2], [0, 0, 0, 1, 1, 2], [0], [0]>} : vector<1x16x16xbf16>, vector<1x16x8xbf16>, vector<1x16x8xf32> -> vector<1x16x8xf32>
    "tpu.trace_stop"() : () -> ()
    %121 = vector.shape_cast %120 : vector<1x16x8xf32> to vector<16x8xf32>
    %c0_42 = arith.constant 0 : index
    %c24 = arith.constant 24 : index
    %122 = vector.load %arg18[%c0_42, %c24] : memref<16x32xf32, #tpu.memory_space<vmem>>, vector<16x8xf32>
    tpu.vector_store %arg18[%c0_42, %c24], %121 {strides = array<i32>} : memref<16x32xf32, #tpu.memory_space<vmem>>, vector<16x8xf32>,
    %c0_43 = arith.constant 0 : index
    %c0_44 = arith.constant 0 : index
    %123 = vector.load %arg18[%c0_43, %c0_44] : memref<16x32xf32, #tpu.memory_space<vmem>>, vector<16x32xf32>
    %124 = arith.truncf %123 : vector<16x32xf32> to vector<16x32xbf16>
    %cst_45 = arith.constant dense<0.000000e+00> : vector<16x32xf32>
    %125 = tpu.matmul %124, %12, %cst_45 {dimension_numbers = #tpu.dot_dimension_numbers<[1], [0], [0], [1], [0, 0, 1, 1], [], []>} : vector<16x32xbf16>, vector<32x32xbf16>, vector<16x32xf32> -> vector<16x32xf32>
    %126 = vector.broadcast %14 : vector<1x32xf32> to vector<16x32xf32>
    %127 = arith.addf %125, %126 : vector<16x32xf32>
    %128 = vector.shape_cast %127 : vector<16x32xf32> to vector<1x16x32xf32>
    %129 = arith.addf %3, %128 : vector<1x16x32xf32>
    %130 = vector.shape_cast %129 : vector<1x16x32xf32> to vector<16x32xf32>
    %c0_46 = arith.constant 0 : index
    %c0_47 = arith.constant 0 : index
    %c0_48 = arith.constant 0 : index
    %131 = vector.load %arg9[%c0_46, %c0_47, %c0_48] : memref<1x1x32xf32, #tpu.memory_space<vmem>>, vector<1x1x32xf32>
    %132 = vector.shape_cast %131 : vector<1x1x32xf32> to vector<1x32xf32>
    %c0_49 = arith.constant 0 : index
    %c0_50 = arith.constant 0 : index
    %c0_51 = arith.constant 0 : index
    %133 = vector.load %arg10[%c0_49, %c0_50, %c0_51] : memref<1x1x32xf32, #tpu.memory_space<vmem>>, vector<1x1x32xf32>
    %134 = vector.shape_cast %133 : vector<1x1x32xf32> to vector<1x32xf32>
    %cst_52 = arith.constant dense<0.000000e+00> : vector<16xf32>
    %135 = vector.multi_reduction <add>, %130, %cst_52 [1] : vector<16x32xf32> to vector<16xf32>
    %136 = vector.shape_cast %135 : vector<16xf32> to vector<16x1xf32>
    %cst_53 = arith.constant 3.200000e+01 : f32
    %137 = vector.broadcast %cst_53 : f32 to vector<16x1xf32>
    %138 = arith.divf %136, %137 : vector<16x1xf32>
    %139 = vector.broadcast %138 : vector<16x1xf32> to vector<16x32xf32>
    %140 = arith.subf %130, %139 : vector<16x32xf32>
    %141 = arith.mulf %140, %140 : vector<16x32xf32>
    %cst_54 = arith.constant dense<0.000000e+00> : vector<16xf32>
    %142 = vector.multi_reduction <add>, %141, %cst_54 [1] : vector<16x32xf32> to vector<16xf32>
    %143 = vector.shape_cast %142 : vector<16xf32> to vector<16x1xf32>
    %cst_55 = arith.constant 3.200000e+01 : f32
    %144 = vector.broadcast %cst_55 : f32 to vector<16x1xf32>
    %145 = arith.divf %143, %144 : vector<16x1xf32>
    %cst_56 = arith.constant 9.99999974E-6 : f32
    %146 = vector.broadcast %cst_56 : f32 to vector<16x1xf32>
    %147 = arith.addf %145, %146 : vector<16x1xf32>
    %148 = math.rsqrt %147 : vector<16x1xf32>
    %149 = vector.broadcast %148 : vector<16x1xf32> to vector<16x32xf32>
    %150 = arith.mulf %140, %149 : vector<16x32xf32>
    %151 = vector.broadcast %132 : vector<1x32xf32> to vector<16x32xf32>
    %152 = arith.mulf %150, %151 : vector<16x32xf32>
    %153 = vector.broadcast %134 : vector<1x32xf32> to vector<16x32xf32>
    %154 = arith.addf %152, %153 : vector<16x32xf32>
    %c0_57 = arith.constant 0 : index
    %c0_58 = arith.constant 0 : index
    %c0_59 = arith.constant 0 : index
    %155 = vector.load %arg11[%c0_57, %c0_58, %c0_59] : memref<1x32x64xbf16, #tpu.memory_space<vmem>>, vector<1x32x64xbf16>
    %156 = vector.shape_cast %155 : vector<1x32x64xbf16> to vector<32x64xbf16>
    %c0_60 = arith.constant 0 : index
    %c0_61 = arith.constant 0 : index
    %c0_62 = arith.constant 0 : index
    %157 = vector.load %arg12[%c0_60, %c0_61, %c0_62] : memref<1x1x64xf32, #tpu.memory_space<vmem>>, vector<1x1x64xf32>
    %158 = vector.shape_cast %157 : vector<1x1x64xf32> to vector<1x64xf32>
    %c0_63 = arith.constant 0 : index
    %c0_64 = arith.constant 0 : index
    %c0_65 = arith.constant 0 : index
    %159 = vector.load %arg13[%c0_63, %c0_64, %c0_65] : memref<1x64x32xbf16, #tpu.memory_space<vmem>>, vector<1x64x32xbf16>
    %160 = vector.shape_cast %159 : vector<1x64x32xbf16> to vector<64x32xbf16>
    %c0_66 = arith.constant 0 : index
    %c0_67 = arith.constant 0 : index
    %c0_68 = arith.constant 0 : index
    %161 = vector.load %arg14[%c0_66, %c0_67, %c0_68] : memref<1x1x32xf32, #tpu.memory_space<vmem>>, vector<1x1x32xf32>
    %162 = vector.shape_cast %161 : vector<1x1x32xf32> to vector<1x32xf32>
    %163 = arith.truncf %154 : vector<16x32xf32> to vector<16x32xbf16>
    %cst_69 = arith.constant dense<0.000000e+00> : vector<16x64xf32>
    %164 = tpu.matmul %163, %156, %cst_69 {dimension_numbers = #tpu.dot_dimension_numbers<[1], [0], [0], [1], [0, 0, 1, 1], [], []>} : vector<16x32xbf16>, vector<32x64xbf16>, vector<16x64xf32> -> vector<16x64xf32>
    %165 = vector.broadcast %158 : vector<1x64xf32> to vector<16x64xf32>
    %166 = arith.addf %164, %165 : vector<16x64xf32>
    %cst_70 = arith.constant 0.000000e+00 : f32
    %167 = vector.broadcast %cst_70 : f32 to vector<16x64xf32>
    %168 = arith.cmpf oge, %166, %167 : vector<16x64xf32>
    %cst_71 = arith.constant 0.00999999977 : f32
    %169 = vector.broadcast %cst_71 : f32 to vector<16x64xf32>
    %170 = arith.mulf %169, %166 : vector<16x64xf32>
    %171 = arith.select %168, %166, %170 : vector<16x64xi1>, vector<16x64xf32>
    %172 = arith.truncf %171 : vector<16x64xf32> to vector<16x64xbf16>
    %cst_72 = arith.constant dense<0.000000e+00> : vector<16x32xf32>
    %173 = tpu.matmul %172, %160, %cst_72 {dimension_numbers = #tpu.dot_dimension_numbers<[1], [0], [0], [1], [0, 0, 1, 1], [], []>} : vector<16x64xbf16>, vector<64x32xbf16>, vector<16x32xf32> -> vector<16x32xf32>
    %174 = vector.broadcast %162 : vector<1x32xf32> to vector<16x32xf32>
    %175 = arith.addf %173, %174 : vector<16x32xf32>
    %176 = arith.addf %154, %175 : vector<16x32xf32>
    %c0_73 = arith.constant 0 : index
    %c0_74 = arith.constant 0 : index
    %c0_75 = arith.constant 0 : index
    %177 = vector.load %arg15[%c0_73, %c0_74, %c0_75] : memref<1x1x32xf32, #tpu.memory_space<vmem>>, vector<1x1x32xf32>
    %178 = vector.shape_cast %177 : vector<1x1x32xf32> to vector<1x32xf32>
    %c0_76 = arith.constant 0 : index
    %c0_77 = arith.constant 0 : index
    %c0_78 = arith.constant 0 : index
    %179 = vector.load %arg16[%c0_76, %c0_77, %c0_78] : memref<1x1x32xf32, #tpu.memory_space<vmem>>, vector<1x1x32xf32>
    %180 = vector.shape_cast %179 : vector<1x1x32xf32> to vector<1x32xf32>
    %cst_79 = arith.constant dense<0.000000e+00> : vector<16xf32>
    %181 = vector.multi_reduction <add>, %176, %cst_79 [1] : vector<16x32xf32> to vector<16xf32>
    %182 = vector.shape_cast %181 : vector<16xf32> to vector<16x1xf32>
    %cst_80 = arith.constant 3.200000e+01 : f32
    %183 = vector.broadcast %cst_80 : f32 to vector<16x1xf32>
    %184 = arith.divf %182, %183 : vector<16x1xf32>
    %185 = vector.broadcast %184 : vector<16x1xf32> to vector<16x32xf32>
    %186 = arith.subf %176, %185 : vector<16x32xf32>
    %187 = arith.mulf %186, %186 : vector<16x32xf32>
    %cst_81 = arith.constant dense<0.000000e+00> : vector<16xf32>
    %188 = vector.multi_reduction <add>, %187, %cst_81 [1] : vector<16x32xf32> to vector<16xf32>
    %189 = vector.shape_cast %188 : vector<16xf32> to vector<16x1xf32>
    %cst_82 = arith.constant 3.200000e+01 : f32
    %190 = vector.broadcast %cst_82 : f32 to vector<16x1xf32>
    %191 = arith.divf %189, %190 : vector<16x1xf32>
    %cst_83 = arith.constant 9.99999974E-6 : f32
    %192 = vector.broadcast %cst_83 : f32 to vector<16x1xf32>
    %193 = arith.addf %191, %192 : vector<16x1xf32>
    %194 = math.rsqrt %193 : vector<16x1xf32>
    %195 = vector.broadcast %194 : vector<16x1xf32> to vector<16x32xf32>
    %196 = arith.mulf %186, %195 : vector<16x32xf32>
    %197 = vector.broadcast %178 : vector<1x32xf32> to vector<16x32xf32>
    %198 = arith.mulf %196, %197 : vector<16x32xf32>
    %199 = vector.broadcast %180 : vector<1x32xf32> to vector<16x32xf32>
    %200 = arith.addf %198, %199 : vector<16x32xf32>
    %201 = vector.shape_cast %200 : vector<16x32xf32> to vector<1x16x32xf32>
    %c0_84 = arith.constant 0 : index
    %c0_85 = arith.constant 0 : index
    %c0_86 = arith.constant 0 : index
    %202 = vector.load %arg17[%c0_84, %c0_85, %c0_86] : memref<1x16x32xf32, #tpu.memory_space<vmem>>, vector<1x16x32xf32>
    tpu.vector_store %arg17[%c0_84, %c0_85, %c0_86], %201 {strides = array<i32>} : memref<1x16x32xf32, #tpu.memory_space<vmem>>, vector<1x16x32xf32>,
    return
  }
  func.func @transform_0(%arg0: i32, %arg1: i32) -> (i32, i32, i32) {
    %c0_i32 = arith.constant 0 : i32
    %c0_i32_0 = arith.constant 0 : i32
    %c0_i32_1 = arith.constant 0 : i32
    return %arg0, %c0_i32, %c0_i32_0 : i32, i32, i32
  }
  func.func @transform_1(%arg0: i32, %arg1: i32) -> (i32, i32, i32) {
    %c0_i32 = arith.constant 0 : i32
    %c0_i32_0 = arith.constant 0 : i32
    %c0_i32_1 = arith.constant 0 : i32
    return %arg0, %c0_i32, %c0_i32_0 : i32, i32, i32
  }
  func.func @transform_2(%arg0: i32, %arg1: i32) -> (i32, i32, i32) {
    %c0_i32 = arith.constant 0 : i32
    %c0_i32_0 = arith.constant 0 : i32
    %c0_i32_1 = arith.constant 0 : i32
    return %arg0, %c0_i32, %c0_i32_0 : i32, i32, i32
  }
  func.func @transform_3(%arg0: i32, %arg1: i32) -> (i32, i32, i32) {
    %c0_i32 = arith.constant 0 : i32
    %c0_i32_0 = arith.constant 0 : i32
    %c0_i32_1 = arith.constant 0 : i32
    return %arg1, %c0_i32, %c0_i32_0 : i32, i32, i32
  }
  func.func @transform_4(%arg0: i32, %arg1: i32) -> (i32, i32, i32) {
    %c0_i32 = arith.constant 0 : i32
    %c0_i32_0 = arith.constant 0 : i32
    %c0_i32_1 = arith.constant 0 : i32
    return %arg1, %c0_i32, %c0_i32_0 : i32, i32, i32
  }
  func.func @transform_5(%arg0: i32, %arg1: i32) -> (i32, i32, i32) {
    %c0_i32 = arith.constant 0 : i32
    %c0_i32_0 = arith.constant 0 : i32
    %c0_i32_1 = arith.constant 0 : i32
    return %arg1, %c0_i32, %c0_i32_0 : i32, i32, i32
  }
  func.func @transform_6(%arg0: i32, %arg1: i32) -> (i32, i32, i32) {
    %c0_i32 = arith.constant 0 : i32
    %c0_i32_0 = arith.constant 0 : i32
    %c0_i32_1 = arith.constant 0 : i32
    return %arg1, %c0_i32, %c0_i32_0 : i32, i32, i32
  }
  func.func @transform_7(%arg0: i32, %arg1: i32) -> (i32, i32, i32) {
    %c0_i32 = arith.constant 0 : i32
    %c0_i32_0 = arith.constant 0 : i32
    %c0_i32_1 = arith.constant 0 : i32
    return %arg1, %c0_i32, %c0_i32_0 : i32, i32, i32
  }
  func.func @transform_8(%arg0: i32, %arg1: i32) -> (i32, i32, i32) {
    %c0_i32 = arith.constant 0 : i32
    %c0_i32_0 = arith.constant 0 : i32
    %c0_i32_1 = arith.constant 0 : i32
    return %arg1, %c0_i32, %c0_i32_0 : i32, i32, i32
  }
  func.func @transform_9(%arg0: i32, %arg1: i32) -> (i32, i32, i32) {
    %c0_i32 = arith.constant 0 : i32
    %c0_i32_0 = arith.constant 0 : i32
    %c0_i32_1 = arith.constant 0 : i32
    return %arg1, %c0_i32, %c0_i32_0 : i32, i32, i32
  }
  func.func @transform_10(%arg0: i32, %arg1: i32) -> (i32, i32, i32) {
    %c0_i32 = arith.constant 0 : i32
    %c0_i32_0 = arith.constant 0 : i32
    %c0_i32_1 = arith.constant 0 : i32
    return %arg1, %c0_i32, %c0_i32_0 : i32, i32, i32
  }
  func.func @transform_11(%arg0: i32, %arg1: i32) -> (i32, i32, i32) {
    %c0_i32 = arith.constant 0 : i32
    %c0_i32_0 = arith.constant 0 : i32
    %c0_i32_1 = arith.constant 0 : i32
    return %arg1, %c0_i32, %c0_i32_0 : i32, i32, i32
  }
  func.func @transform_12(%arg0: i32, %arg1: i32) -> (i32, i32, i32) {
    %c0_i32 = arith.constant 0 : i32
    %c0_i32_0 = arith.constant 0 : i32
    %c0_i32_1 = arith.constant 0 : i32
    return %arg1, %c0_i32, %c0_i32_0 : i32, i32, i32
  }
  func.func @transform_13(%arg0: i32, %arg1: i32) -> (i32, i32, i32) {
    %c0_i32 = arith.constant 0 : i32
    %c0_i32_0 = arith.constant 0 : i32
    %c0_i32_1 = arith.constant 0 : i32
    return %arg1, %c0_i32, %c0_i32_0 : i32, i32, i32
  }
  func.func @transform_14(%arg0: i32, %arg1: i32) -> (i32, i32, i32) {
    %c0_i32 = arith.constant 0 : i32
    %c0_i32_0 = arith.constant 0 : i32
    %c0_i32_1 = arith.constant 0 : i32
    return %arg1, %c0_i32, %c0_i32_0 : i32, i32, i32
  }
  func.func @transform_15(%arg0: i32, %arg1: i32) -> (i32, i32, i32) {
    %c0_i32 = arith.constant 0 : i32
    %c0_i32_0 = arith.constant 0 : i32
    %c0_i32_1 = arith.constant 0 : i32
    return %arg0, %c0_i32, %c0_i32_0 : i32, i32, i32
  }
}

module attributes {stable_mosaic.version = 11 : i64} {
  func.func @_decoder_stack_kernel(%arg0: i32, %arg1: i32, %arg2: memref<1x8x32xf32, #tpu.memory_space<vmem>>, %arg3: memref<1x16x32xf32, #tpu.memory_space<vmem>>, %arg4: memref<1x16x32xf32, #tpu.memory_space<vmem>>, %arg5: memref<1x16x32xf32, #tpu.memory_space<vmem>>, %arg6: memref<1x1x16xf32, #tpu.memory_space<vmem>>, %arg7: memref<1x32x96xbf16, #tpu.memory_space<vmem>>, %arg8: memref<1x1x96xf32, #tpu.memory_space<vmem>>, %arg9: memref<1x32x32xbf16, #tpu.memory_space<vmem>>, %arg10: memref<1x1x32xf32, #tpu.memory_space<vmem>>, %arg11: memref<1x32x96xbf16, #tpu.memory_space<vmem>>, %arg12: memref<1x1x96xf32, #tpu.memory_space<vmem>>, %arg13: memref<1x32x32xbf16, #tpu.memory_space<vmem>>, %arg14: memref<1x1x32xf32, #tpu.memory_space<vmem>>, %arg15: memref<1x32x96xbf16, #tpu.memory_space<vmem>>, %arg16: memref<1x1x96xf32, #tpu.memory_space<vmem>>, %arg17: memref<1x32x32xbf16, #tpu.memory_space<vmem>>, %arg18: memref<1x1x32xf32, #tpu.memory_space<vmem>>, %arg19: memref<1x1x32xf32, #tpu.memory_space<vmem>>, %arg20: memref<1x1x32xf32, #tpu.memory_space<vmem>>, %arg21: memref<1x1x32xf32, #tpu.memory_space<vmem>>, %arg22: memref<1x1x32xf32, #tpu.memory_space<vmem>>, %arg23: memref<1x1x32xf32, #tpu.memory_space<vmem>>, %arg24: memref<1x1x32xf32, #tpu.memory_space<vmem>>, %arg25: memref<1x1x32xf32, #tpu.memory_space<vmem>>, %arg26: memref<1x1x32xf32, #tpu.memory_space<vmem>>, %arg27: memref<1x32x64xbf16, #tpu.memory_space<vmem>>, %arg28: memref<1x1x64xf32, #tpu.memory_space<vmem>>, %arg29: memref<1x64x32xbf16, #tpu.memory_space<vmem>>, %arg30: memref<1x1x32xf32, #tpu.memory_space<vmem>>, %arg31: memref<1x32xf32, #tpu.memory_space<vmem>>, %arg32: memref<1x32xf32, #tpu.memory_space<vmem>>, %arg33: memref<1x8x32xf32, #tpu.memory_space<vmem>>, %arg34: memref<8x32xf32, #tpu.memory_space<vmem>>) attributes {dimension_semantics = [#tpu.dimension_semantics<parallel>, #tpu.dimension_semantics<arbitrary>], iteration_bounds = array<i64: 2, 2>, scalar_prefetch = 0 : i64, scratch_operands = 1 : i64, tpu.core_type = #tpu.core_type<tc>, window_params = [{transform_indices = @transform_0, window_bounds = array<i64: 1, 8, 32>}, {transform_indices = @transform_1, window_bounds = array<i64: 1, 16, 32>}, {transform_indices = @transform_2, window_bounds = array<i64: 1, 16, 32>}, {transform_indices = @transform_3, window_bounds = array<i64: 1, 16, 32>}, {transform_indices = @transform_4, window_bounds = array<i64: 1, 1, 16>}, {transform_indices = @transform_5, window_bounds = array<i64: 1, 32, 96>}, {transform_indices = @transform_6, window_bounds = array<i64: 1, 1, 96>}, {transform_indices = @transform_7, window_bounds = array<i64: 1, 32, 32>}, {transform_indices = @transform_8, window_bounds = array<i64: 1, 1, 32>}, {transform_indices = @transform_9, window_bounds = array<i64: 1, 32, 96>}, {transform_indices = @transform_10, window_bounds = array<i64: 1, 1, 96>}, {transform_indices = @transform_11, window_bounds = array<i64: 1, 32, 32>}, {transform_indices = @transform_12, window_bounds = array<i64: 1, 1, 32>}, {transform_indices = @transform_13, window_bounds = array<i64: 1, 32, 96>}, {transform_indices = @transform_14, window_bounds = array<i64: 1, 1, 96>}, {transform_indices = @transform_15, window_bounds = array<i64: 1, 32, 32>}, {transform_indices = @transform_16, window_bounds = array<i64: 1, 1, 32>}, {transform_indices = @transform_17, window_bounds = array<i64: 1, 1, 32>}, {transform_indices = @transform_18, window_bounds = array<i64: 1, 1, 32>}, {transform_indices = @transform_19, window_bounds = array<i64: 1, 1, 32>}, {transform_indices = @transform_20, window_bounds = array<i64: 1, 1, 32>}, {transform_indices = @transform_21, window_bounds = array<i64: 1, 1, 32>}, {transform_indices = @transform_22, window_bounds = array<i64: 1, 1, 32>}, {transform_indices = @transform_23, window_bounds = array<i64: 1, 1, 32>}, {transform_indices = @transform_24, window_bounds = array<i64: 1, 1, 32>}, {transform_indices = @transform_25, window_bounds = array<i64: 1, 32, 64>}, {transform_indices = @transform_26, window_bounds = array<i64: 1, 1, 64>}, {transform_indices = @transform_27, window_bounds = array<i64: 1, 64, 32>}, {transform_indices = @transform_28, window_bounds = array<i64: 1, 1, 32>}, {pipeline_mode = #tpu.pipeline_mode<synchronous>, transform_indices = @transform_29, window_bounds = array<i64: 1, 32>}, {pipeline_mode = #tpu.pipeline_mode<synchronous>, transform_indices = @transform_30, window_bounds = array<i64: 1, 32>}, {transform_indices = @transform_31, window_bounds = array<i64: 1, 8, 32>}]} {
    %c0_i32 = arith.constant 0 : i32
    %0 = arith.cmpi eq, %arg1, %c0_i32 : i32
    %1 = arith.extui %0 : i1 to i32
    %c0_i32_0 = arith.constant 0 : i32
    %2 = arith.cmpi ne, %1, %c0_i32_0 : i32
    scf.if %2 {
      %cst_202 = arith.constant 0.000000e+00 : f32
      %509 = vector.broadcast %cst_202 : f32 to vector<1x8x32xf32>
      %c0_203 = arith.constant 0 : index
      %c0_204 = arith.constant 0 : index
      %c0_205 = arith.constant 0 : index
      %510 = vector.load %arg33[%c0_203, %c0_204, %c0_205] : memref<1x8x32xf32, #tpu.memory_space<vmem>>, vector<1x8x32xf32>
      tpu.vector_store %arg33[%c0_203, %c0_204, %c0_205], %509 {strides = array<i32>} : memref<1x8x32xf32, #tpu.memory_space<vmem>>, vector<1x8x32xf32>,
    } else {
    }
    %c0 = arith.constant 0 : index
    %c0_1 = arith.constant 0 : index
    %c0_2 = arith.constant 0 : index
    %3 = vector.load %arg33[%c0, %c0_1, %c0_2] : memref<1x8x32xf32, #tpu.memory_space<vmem>>, vector<1x8x32xf32>
    %c0_3 = arith.constant 0 : index
    %c0_4 = arith.constant 0 : index
    %c0_5 = arith.constant 0 : index
    %4 = vector.load %arg2[%c0_3, %c0_4, %c0_5] : memref<1x8x32xf32, #tpu.memory_space<vmem>>, vector<1x8x32xf32>
    %c0_6 = arith.constant 0 : index
    %c0_7 = arith.constant 0 : index
    %c0_8 = arith.constant 0 : index
    %5 = vector.load %arg3[%c0_6, %c0_7, %c0_8] : memref<1x16x32xf32, #tpu.memory_space<vmem>>, vector<1x16x32xf32>
    %c0_9 = arith.constant 0 : index
    %c0_10 = arith.constant 0 : index
    %c0_11 = arith.constant 0 : index
    %6 = vector.load %arg4[%c0_9, %c0_10, %c0_11] : memref<1x16x32xf32, #tpu.memory_space<vmem>>, vector<1x16x32xf32>
    %c0_12 = arith.constant 0 : index
    %c0_13 = arith.constant 0 : index
    %c0_14 = arith.constant 0 : index
    %7 = vector.load %arg5[%c0_12, %c0_13, %c0_14] : memref<1x16x32xf32, #tpu.memory_space<vmem>>, vector<1x16x32xf32>
    %c0_15 = arith.constant 0 : index
    %c0_16 = arith.constant 0 : index
    %c0_17 = arith.constant 0 : index
    %8 = vector.load %arg6[%c0_15, %c0_16, %c0_17] : memref<1x1x16xf32, #tpu.memory_space<vmem>>, vector<1x1x16xf32>
    %9 = arith.addf %3, %4 : vector<1x8x32xf32>
    %c0_18 = arith.constant 0 : index
    %c0_19 = arith.constant 0 : index
    %c0_20 = arith.constant 0 : index
    %10 = vector.load %arg7[%c0_18, %c0_19, %c0_20] : memref<1x32x96xbf16, #tpu.memory_space<vmem>>, vector<1x32x96xbf16>
    %11 = vector.shape_cast %10 : vector<1x32x96xbf16> to vector<32x96xbf16>
    %c0_21 = arith.constant 0 : index
    %c0_22 = arith.constant 0 : index
    %c0_23 = arith.constant 0 : index
    %12 = vector.load %arg8[%c0_21, %c0_22, %c0_23] : memref<1x1x96xf32, #tpu.memory_space<vmem>>, vector<1x1x96xf32>
    %13 = vector.shape_cast %12 : vector<1x1x96xf32> to vector<1x96xf32>
    %c0_24 = arith.constant 0 : index
    %c0_25 = arith.constant 0 : index
    %c0_26 = arith.constant 0 : index
    %14 = vector.load %arg9[%c0_24, %c0_25, %c0_26] : memref<1x32x32xbf16, #tpu.memory_space<vmem>>, vector<1x32x32xbf16>
    %15 = vector.shape_cast %14 : vector<1x32x32xbf16> to vector<32x32xbf16>
    %c0_27 = arith.constant 0 : index
    %c0_28 = arith.constant 0 : index
    %c0_29 = arith.constant 0 : index
    %16 = vector.load %arg10[%c0_27, %c0_28, %c0_29] : memref<1x1x32xf32, #tpu.memory_space<vmem>>, vector<1x1x32xf32>
    %17 = vector.shape_cast %16 : vector<1x1x32xf32> to vector<1x32xf32>
    %18 = vector.shape_cast %9 : vector<1x8x32xf32> to vector<8x32xf32>
    %19 = arith.truncf %18 : vector<8x32xf32> to vector<8x32xbf16>
    %20 = vector.extract_strided_slice %11 {offsets = [0, 0], sizes = [32, 64], strides = [1, 1]} : vector<32x96xbf16> to vector<32x64xbf16>
    %cst = arith.constant dense<0.000000e+00> : vector<8x64xf32>
    %21 = tpu.matmul %19, %20, %cst {dimension_numbers = #tpu.dot_dimension_numbers<[1], [0], [0], [1], [0, 0, 1, 1], [], []>} : vector<8x32xbf16>, vector<32x64xbf16>, vector<8x64xf32> -> vector<8x64xf32>
    %22 = vector.extract_strided_slice %13 {offsets = [0, 0], sizes = [1, 64], strides = [1, 1]} : vector<1x96xf32> to vector<1x64xf32>
    %23 = vector.broadcast %22 : vector<1x64xf32> to vector<8x64xf32>
    %24 = arith.addf %21, %23 : vector<8x64xf32>
    %25 = vector.shape_cast %24 : vector<8x64xf32> to vector<1x8x64xf32>
    %26 = vector.extract_strided_slice %25 {offsets = [0, 0, 0], sizes = [1, 8, 32], strides = [1, 1, 1]} : vector<1x8x64xf32> to vector<1x8x32xf32>
    %27 = vector.extract_strided_slice %25 {offsets = [0, 0, 32], sizes = [1, 8, 32], strides = [1, 1, 1]} : vector<1x8x64xf32> to vector<1x8x32xf32>
    %28 = vector.shape_cast %3 : vector<1x8x32xf32> to vector<8x32xf32>
    %29 = arith.truncf %28 : vector<8x32xf32> to vector<8x32xbf16>
    %30 = vector.extract_strided_slice %11 {offsets = [0, 64], sizes = [32, 32], strides = [1, 1]} : vector<32x96xbf16> to vector<32x32xbf16>
    %cst_30 = arith.constant dense<0.000000e+00> : vector<8x32xf32>
    %31 = tpu.matmul %29, %30, %cst_30 {dimension_numbers = #tpu.dot_dimension_numbers<[1], [0], [0], [1], [0, 0, 1, 1], [], []>} : vector<8x32xbf16>, vector<32x32xbf16>, vector<8x32xf32> -> vector<8x32xf32>
    %32 = vector.extract_strided_slice %13 {offsets = [0, 64], sizes = [1, 32], strides = [1, 1]} : vector<1x96xf32> to vector<1x32xf32>
    %33 = vector.broadcast %32 : vector<1x32xf32> to vector<8x32xf32>
    %34 = arith.addf %31, %33 : vector<8x32xf32>
    %35 = vector.shape_cast %34 : vector<8x32xf32> to vector<1x8x32xf32>
    %36 = vector.extract_strided_slice %26 {offsets = [0, 0, 0], sizes = [1, 8, 8], strides = [1, 1, 1]} : vector<1x8x32xf32> to vector<1x8x8xf32>
    %37 = arith.truncf %36 : vector<1x8x8xf32> to vector<1x8x8xbf16>
    %38 = vector.extract_strided_slice %27 {offsets = [0, 0, 0], sizes = [1, 8, 8], strides = [1, 1, 1]} : vector<1x8x32xf32> to vector<1x8x8xf32>
    %39 = arith.truncf %38 : vector<1x8x8xf32> to vector<1x8x8xbf16>
    %40 = vector.extract_strided_slice %35 {offsets = [0, 0, 0], sizes = [1, 8, 8], strides = [1, 1, 1]} : vector<1x8x32xf32> to vector<1x8x8xf32>
    %41 = arith.truncf %40 : vector<1x8x8xf32> to vector<1x8x8xbf16>
    "tpu.trace_start"() <{level = 10 : i32, message = "bqd,bkd->bqk"}> : () -> ()
    %cst_31 = arith.constant dense<0.000000e+00> : vector<1x8x8xf32>
    %42 = tpu.matmul %37, %39, %cst_31 {dimension_numbers = #tpu.dot_dimension_numbers<[2], [2], [1], [1], [0, 0, 0, 1, 1, 1], [0], [0]>} : vector<1x8x8xbf16>, vector<1x8x8xbf16>, vector<1x8x8xf32> -> vector<1x8x8xf32>
    "tpu.trace_stop"() : () -> ()
    %cst_32 = arith.constant dense<0xFF800000> : vector<1x8xf32>
    %43 = vector.multi_reduction <maximumf>, %42, %cst_32 [2] : vector<1x8x8xf32> to vector<1x8xf32>
    %44 = vector.shape_cast %43 : vector<1x8xf32> to vector<1x8x1xf32>
    %45 = vector.broadcast %44 : vector<1x8x1xf32> to vector<1x8x8xf32>
    %46 = arith.subf %42, %45 : vector<1x8x8xf32>
    %47 = math.exp %46 : vector<1x8x8xf32>
    %cst_33 = arith.constant dense<0.000000e+00> : vector<1x8xf32>
    %48 = vector.multi_reduction <add>, %47, %cst_33 [2] : vector<1x8x8xf32> to vector<1x8xf32>
    %49 = vector.shape_cast %48 : vector<1x8xf32> to vector<1x8x1xf32>
    %50 = tpu.reciprocal %49 {approx = true} : vector<1x8x1xf32> -> vector<1x8x1xf32>
    %51 = vector.broadcast %50 : vector<1x8x1xf32> to vector<1x8x8xf32>
    %52 = arith.mulf %47, %51 : vector<1x8x8xf32>
    %53 = arith.truncf %52 : vector<1x8x8xf32> to vector<1x8x8xbf16>
    "tpu.trace_start"() <{level = 10 : i32, message = "bqk,bkd->bqd"}> : () -> ()
    %cst_34 = arith.constant dense<0.000000e+00> : vector<1x8x8xf32>
    %54 = tpu.matmul %53, %41, %cst_34 {dimension_numbers = #tpu.dot_dimension_numbers<[2], [1], [1], [2], [0, 0, 0, 1, 1, 2], [0], [0]>} : vector<1x8x8xbf16>, vector<1x8x8xbf16>, vector<1x8x8xf32> -> vector<1x8x8xf32>
    "tpu.trace_stop"() : () -> ()
    %55 = vector.shape_cast %54 : vector<1x8x8xf32> to vector<8x8xf32>
    %c0_35 = arith.constant 0 : index
    %c0_36 = arith.constant 0 : index
    %56 = vector.load %arg34[%c0_35, %c0_36] : memref<8x32xf32, #tpu.memory_space<vmem>>, vector<8x8xf32>
    tpu.vector_store %arg34[%c0_35, %c0_36], %55 {strides = array<i32>} : memref<8x32xf32, #tpu.memory_space<vmem>>, vector<8x8xf32>,
    %57 = vector.extract_strided_slice %26 {offsets = [0, 0, 8], sizes = [1, 8, 8], strides = [1, 1, 1]} : vector<1x8x32xf32> to vector<1x8x8xf32>
    %58 = arith.truncf %57 : vector<1x8x8xf32> to vector<1x8x8xbf16>
    %59 = vector.extract_strided_slice %27 {offsets = [0, 0, 8], sizes = [1, 8, 8], strides = [1, 1, 1]} : vector<1x8x32xf32> to vector<1x8x8xf32>
    %60 = arith.truncf %59 : vector<1x8x8xf32> to vector<1x8x8xbf16>
    %61 = vector.extract_strided_slice %35 {offsets = [0, 0, 8], sizes = [1, 8, 8], strides = [1, 1, 1]} : vector<1x8x32xf32> to vector<1x8x8xf32>
    %62 = arith.truncf %61 : vector<1x8x8xf32> to vector<1x8x8xbf16>
    "tpu.trace_start"() <{level = 10 : i32, message = "bqd,bkd->bqk"}> : () -> ()
    %cst_37 = arith.constant dense<0.000000e+00> : vector<1x8x8xf32>
    %63 = tpu.matmul %58, %60, %cst_37 {dimension_numbers = #tpu.dot_dimension_numbers<[2], [2], [1], [1], [0, 0, 0, 1, 1, 1], [0], [0]>} : vector<1x8x8xbf16>, vector<1x8x8xbf16>, vector<1x8x8xf32> -> vector<1x8x8xf32>
    "tpu.trace_stop"() : () -> ()
    %cst_38 = arith.constant dense<0xFF800000> : vector<1x8xf32>
    %64 = vector.multi_reduction <maximumf>, %63, %cst_38 [2] : vector<1x8x8xf32> to vector<1x8xf32>
    %65 = vector.shape_cast %64 : vector<1x8xf32> to vector<1x8x1xf32>
    %66 = vector.broadcast %65 : vector<1x8x1xf32> to vector<1x8x8xf32>
    %67 = arith.subf %63, %66 : vector<1x8x8xf32>
    %68 = math.exp %67 : vector<1x8x8xf32>
    %cst_39 = arith.constant dense<0.000000e+00> : vector<1x8xf32>
    %69 = vector.multi_reduction <add>, %68, %cst_39 [2] : vector<1x8x8xf32> to vector<1x8xf32>
    %70 = vector.shape_cast %69 : vector<1x8xf32> to vector<1x8x1xf32>
    %71 = tpu.reciprocal %70 {approx = true} : vector<1x8x1xf32> -> vector<1x8x1xf32>
    %72 = vector.broadcast %71 : vector<1x8x1xf32> to vector<1x8x8xf32>
    %73 = arith.mulf %68, %72 : vector<1x8x8xf32>
    %74 = arith.truncf %73 : vector<1x8x8xf32> to vector<1x8x8xbf16>
    "tpu.trace_start"() <{level = 10 : i32, message = "bqk,bkd->bqd"}> : () -> ()
    %cst_40 = arith.constant dense<0.000000e+00> : vector<1x8x8xf32>
    %75 = tpu.matmul %74, %62, %cst_40 {dimension_numbers = #tpu.dot_dimension_numbers<[2], [1], [1], [2], [0, 0, 0, 1, 1, 2], [0], [0]>} : vector<1x8x8xbf16>, vector<1x8x8xbf16>, vector<1x8x8xf32> -> vector<1x8x8xf32>
    "tpu.trace_stop"() : () -> ()
    %76 = vector.shape_cast %75 : vector<1x8x8xf32> to vector<8x8xf32>
    %c0_41 = arith.constant 0 : index
    %c8 = arith.constant 8 : index
    %77 = vector.load %arg34[%c0_41, %c8] : memref<8x32xf32, #tpu.memory_space<vmem>>, vector<8x8xf32>
    tpu.vector_store %arg34[%c0_41, %c8], %76 {strides = array<i32>} : memref<8x32xf32, #tpu.memory_space<vmem>>, vector<8x8xf32>,
    %78 = vector.extract_strided_slice %26 {offsets = [0, 0, 16], sizes = [1, 8, 8], strides = [1, 1, 1]} : vector<1x8x32xf32> to vector<1x8x8xf32>
    %79 = arith.truncf %78 : vector<1x8x8xf32> to vector<1x8x8xbf16>
    %80 = vector.extract_strided_slice %27 {offsets = [0, 0, 16], sizes = [1, 8, 8], strides = [1, 1, 1]} : vector<1x8x32xf32> to vector<1x8x8xf32>
    %81 = arith.truncf %80 : vector<1x8x8xf32> to vector<1x8x8xbf16>
    %82 = vector.extract_strided_slice %35 {offsets = [0, 0, 16], sizes = [1, 8, 8], strides = [1, 1, 1]} : vector<1x8x32xf32> to vector<1x8x8xf32>
    %83 = arith.truncf %82 : vector<1x8x8xf32> to vector<1x8x8xbf16>
    "tpu.trace_start"() <{level = 10 : i32, message = "bqd,bkd->bqk"}> : () -> ()
    %cst_42 = arith.constant dense<0.000000e+00> : vector<1x8x8xf32>
    %84 = tpu.matmul %79, %81, %cst_42 {dimension_numbers = #tpu.dot_dimension_numbers<[2], [2], [1], [1], [0, 0, 0, 1, 1, 1], [0], [0]>} : vector<1x8x8xbf16>, vector<1x8x8xbf16>, vector<1x8x8xf32> -> vector<1x8x8xf32>
    "tpu.trace_stop"() : () -> ()
    %cst_43 = arith.constant dense<0xFF800000> : vector<1x8xf32>
    %85 = vector.multi_reduction <maximumf>, %84, %cst_43 [2] : vector<1x8x8xf32> to vector<1x8xf32>
    %86 = vector.shape_cast %85 : vector<1x8xf32> to vector<1x8x1xf32>
    %87 = vector.broadcast %86 : vector<1x8x1xf32> to vector<1x8x8xf32>
    %88 = arith.subf %84, %87 : vector<1x8x8xf32>
    %89 = math.exp %88 : vector<1x8x8xf32>
    %cst_44 = arith.constant dense<0.000000e+00> : vector<1x8xf32>
    %90 = vector.multi_reduction <add>, %89, %cst_44 [2] : vector<1x8x8xf32> to vector<1x8xf32>
    %91 = vector.shape_cast %90 : vector<1x8xf32> to vector<1x8x1xf32>
    %92 = tpu.reciprocal %91 {approx = true} : vector<1x8x1xf32> -> vector<1x8x1xf32>
    %93 = vector.broadcast %92 : vector<1x8x1xf32> to vector<1x8x8xf32>
    %94 = arith.mulf %89, %93 : vector<1x8x8xf32>
    %95 = arith.truncf %94 : vector<1x8x8xf32> to vector<1x8x8xbf16>
    "tpu.trace_start"() <{level = 10 : i32, message = "bqk,bkd->bqd"}> : () -> ()
    %cst_45 = arith.constant dense<0.000000e+00> : vector<1x8x8xf32>
    %96 = tpu.matmul %95, %83, %cst_45 {dimension_numbers = #tpu.dot_dimension_numbers<[2], [1], [1], [2], [0, 0, 0, 1, 1, 2], [0], [0]>} : vector<1x8x8xbf16>, vector<1x8x8xbf16>, vector<1x8x8xf32> -> vector<1x8x8xf32>
    "tpu.trace_stop"() : () -> ()
    %97 = vector.shape_cast %96 : vector<1x8x8xf32> to vector<8x8xf32>
    %c0_46 = arith.constant 0 : index
    %c16 = arith.constant 16 : index
    %98 = vector.load %arg34[%c0_46, %c16] : memref<8x32xf32, #tpu.memory_space<vmem>>, vector<8x8xf32>
    tpu.vector_store %arg34[%c0_46, %c16], %97 {strides = array<i32>} : memref<8x32xf32, #tpu.memory_space<vmem>>, vector<8x8xf32>,
    %99 = vector.extract_strided_slice %26 {offsets = [0, 0, 24], sizes = [1, 8, 8], strides = [1, 1, 1]} : vector<1x8x32xf32> to vector<1x8x8xf32>
    %100 = arith.truncf %99 : vector<1x8x8xf32> to vector<1x8x8xbf16>
    %101 = vector.extract_strided_slice %27 {offsets = [0, 0, 24], sizes = [1, 8, 8], strides = [1, 1, 1]} : vector<1x8x32xf32> to vector<1x8x8xf32>
    %102 = arith.truncf %101 : vector<1x8x8xf32> to vector<1x8x8xbf16>
    %103 = vector.extract_strided_slice %35 {offsets = [0, 0, 24], sizes = [1, 8, 8], strides = [1, 1, 1]} : vector<1x8x32xf32> to vector<1x8x8xf32>
    %104 = arith.truncf %103 : vector<1x8x8xf32> to vector<1x8x8xbf16>
    "tpu.trace_start"() <{level = 10 : i32, message = "bqd,bkd->bqk"}> : () -> ()
    %cst_47 = arith.constant dense<0.000000e+00> : vector<1x8x8xf32>
    %105 = tpu.matmul %100, %102, %cst_47 {dimension_numbers = #tpu.dot_dimension_numbers<[2], [2], [1], [1], [0, 0, 0, 1, 1, 1], [0], [0]>} : vector<1x8x8xbf16>, vector<1x8x8xbf16>, vector<1x8x8xf32> -> vector<1x8x8xf32>
    "tpu.trace_stop"() : () -> ()
    %cst_48 = arith.constant dense<0xFF800000> : vector<1x8xf32>
    %106 = vector.multi_reduction <maximumf>, %105, %cst_48 [2] : vector<1x8x8xf32> to vector<1x8xf32>
    %107 = vector.shape_cast %106 : vector<1x8xf32> to vector<1x8x1xf32>
    %108 = vector.broadcast %107 : vector<1x8x1xf32> to vector<1x8x8xf32>
    %109 = arith.subf %105, %108 : vector<1x8x8xf32>
    %110 = math.exp %109 : vector<1x8x8xf32>
    %cst_49 = arith.constant dense<0.000000e+00> : vector<1x8xf32>
    %111 = vector.multi_reduction <add>, %110, %cst_49 [2] : vector<1x8x8xf32> to vector<1x8xf32>
    %112 = vector.shape_cast %111 : vector<1x8xf32> to vector<1x8x1xf32>
    %113 = tpu.reciprocal %112 {approx = true} : vector<1x8x1xf32> -> vector<1x8x1xf32>
    %114 = vector.broadcast %113 : vector<1x8x1xf32> to vector<1x8x8xf32>
    %115 = arith.mulf %110, %114 : vector<1x8x8xf32>
    %116 = arith.truncf %115 : vector<1x8x8xf32> to vector<1x8x8xbf16>
    "tpu.trace_start"() <{level = 10 : i32, message = "bqk,bkd->bqd"}> : () -> ()
    %cst_50 = arith.constant dense<0.000000e+00> : vector<1x8x8xf32>
    %117 = tpu.matmul %116, %104, %cst_50 {dimension_numbers = #tpu.dot_dimension_numbers<[2], [1], [1], [2], [0, 0, 0, 1, 1, 2], [0], [0]>} : vector<1x8x8xbf16>, vector<1x8x8xbf16>, vector<1x8x8xf32> -> vector<1x8x8xf32>
    "tpu.trace_stop"() : () -> ()
    %118 = vector.shape_cast %117 : vector<1x8x8xf32> to vector<8x8xf32>
    %c0_51 = arith.constant 0 : index
    %c24 = arith.constant 24 : index
    %119 = vector.load %arg34[%c0_51, %c24] : memref<8x32xf32, #tpu.memory_space<vmem>>, vector<8x8xf32>
    tpu.vector_store %arg34[%c0_51, %c24], %118 {strides = array<i32>} : memref<8x32xf32, #tpu.memory_space<vmem>>, vector<8x8xf32>,
    %c0_52 = arith.constant 0 : index
    %c0_53 = arith.constant 0 : index
    %120 = vector.load %arg34[%c0_52, %c0_53] : memref<8x32xf32, #tpu.memory_space<vmem>>, vector<8x32xf32>
    %121 = arith.truncf %120 : vector<8x32xf32> to vector<8x32xbf16>
    %cst_54 = arith.constant dense<0.000000e+00> : vector<8x32xf32>
    %122 = tpu.matmul %121, %15, %cst_54 {dimension_numbers = #tpu.dot_dimension_numbers<[1], [0], [0], [1], [0, 0, 1, 1], [], []>} : vector<8x32xbf16>, vector<32x32xbf16>, vector<8x32xf32> -> vector<8x32xf32>
    %123 = vector.broadcast %17 : vector<1x32xf32> to vector<8x32xf32>
    %124 = arith.addf %122, %123 : vector<8x32xf32>
    %125 = vector.shape_cast %124 : vector<8x32xf32> to vector<1x8x32xf32>
    %126 = arith.addf %3, %125 : vector<1x8x32xf32>
    %127 = vector.shape_cast %126 : vector<1x8x32xf32> to vector<8x32xf32>
    %c0_55 = arith.constant 0 : index
    %c0_56 = arith.constant 0 : index
    %c0_57 = arith.constant 0 : index
    %128 = vector.load %arg19[%c0_55, %c0_56, %c0_57] : memref<1x1x32xf32, #tpu.memory_space<vmem>>, vector<1x1x32xf32>
    %129 = vector.shape_cast %128 : vector<1x1x32xf32> to vector<1x32xf32>
    %c0_58 = arith.constant 0 : index
    %c0_59 = arith.constant 0 : index
    %c0_60 = arith.constant 0 : index
    %130 = vector.load %arg20[%c0_58, %c0_59, %c0_60] : memref<1x1x32xf32, #tpu.memory_space<vmem>>, vector<1x1x32xf32>
    %131 = vector.shape_cast %130 : vector<1x1x32xf32> to vector<1x32xf32>
    %cst_61 = arith.constant dense<0.000000e+00> : vector<8xf32>
    %132 = vector.multi_reduction <add>, %127, %cst_61 [1] : vector<8x32xf32> to vector<8xf32>
    %133 = vector.shape_cast %132 : vector<8xf32> to vector<8x1xf32>
    %cst_62 = arith.constant 3.200000e+01 : f32
    %134 = vector.broadcast %cst_62 : f32 to vector<8x1xf32>
    %135 = arith.divf %133, %134 : vector<8x1xf32>
    %136 = vector.broadcast %135 : vector<8x1xf32> to vector<8x32xf32>
    %137 = arith.subf %127, %136 : vector<8x32xf32>
    %138 = arith.mulf %137, %137 : vector<8x32xf32>
    %cst_63 = arith.constant dense<0.000000e+00> : vector<8xf32>
    %139 = vector.multi_reduction <add>, %138, %cst_63 [1] : vector<8x32xf32> to vector<8xf32>
    %140 = vector.shape_cast %139 : vector<8xf32> to vector<8x1xf32>
    %cst_64 = arith.constant 3.200000e+01 : f32
    %141 = vector.broadcast %cst_64 : f32 to vector<8x1xf32>
    %142 = arith.divf %140, %141 : vector<8x1xf32>
    %cst_65 = arith.constant 9.99999974E-6 : f32
    %143 = vector.broadcast %cst_65 : f32 to vector<8x1xf32>
    %144 = arith.addf %142, %143 : vector<8x1xf32>
    %145 = math.rsqrt %144 : vector<8x1xf32>
    %146 = vector.broadcast %145 : vector<8x1xf32> to vector<8x32xf32>
    %147 = arith.mulf %137, %146 : vector<8x32xf32>
    %148 = vector.broadcast %129 : vector<1x32xf32> to vector<8x32xf32>
    %149 = arith.mulf %147, %148 : vector<8x32xf32>
    %150 = vector.broadcast %131 : vector<1x32xf32> to vector<8x32xf32>
    %151 = arith.addf %149, %150 : vector<8x32xf32>
    %152 = vector.shape_cast %151 : vector<8x32xf32> to vector<1x8x32xf32>
    %153 = arith.addf %152, %4 : vector<1x8x32xf32>
    %c0_66 = arith.constant 0 : index
    %c0_67 = arith.constant 0 : index
    %c0_68 = arith.constant 0 : index
    %154 = vector.load %arg11[%c0_66, %c0_67, %c0_68] : memref<1x32x96xbf16, #tpu.memory_space<vmem>>, vector<1x32x96xbf16>
    %155 = vector.shape_cast %154 : vector<1x32x96xbf16> to vector<32x96xbf16>
    %c0_69 = arith.constant 0 : index
    %c0_70 = arith.constant 0 : index
    %c0_71 = arith.constant 0 : index
    %156 = vector.load %arg12[%c0_69, %c0_70, %c0_71] : memref<1x1x96xf32, #tpu.memory_space<vmem>>, vector<1x1x96xf32>
    %157 = vector.shape_cast %156 : vector<1x1x96xf32> to vector<1x96xf32>
    %c0_72 = arith.constant 0 : index
    %c0_73 = arith.constant 0 : index
    %c0_74 = arith.constant 0 : index
    %158 = vector.load %arg13[%c0_72, %c0_73, %c0_74] : memref<1x32x32xbf16, #tpu.memory_space<vmem>>, vector<1x32x32xbf16>
    %159 = vector.shape_cast %158 : vector<1x32x32xbf16> to vector<32x32xbf16>
    %c0_75 = arith.constant 0 : index
    %c0_76 = arith.constant 0 : index
    %c0_77 = arith.constant 0 : index
    %160 = vector.load %arg14[%c0_75, %c0_76, %c0_77] : memref<1x1x32xf32, #tpu.memory_space<vmem>>, vector<1x1x32xf32>
    %161 = vector.shape_cast %160 : vector<1x1x32xf32> to vector<1x32xf32>
    %162 = vector.shape_cast %153 : vector<1x8x32xf32> to vector<8x32xf32>
    %163 = arith.truncf %162 : vector<8x32xf32> to vector<8x32xbf16>
    %164 = vector.extract_strided_slice %155 {offsets = [0, 0], sizes = [32, 32], strides = [1, 1]} : vector<32x96xbf16> to vector<32x32xbf16>
    %cst_78 = arith.constant dense<0.000000e+00> : vector<8x32xf32>
    %165 = tpu.matmul %163, %164, %cst_78 {dimension_numbers = #tpu.dot_dimension_numbers<[1], [0], [0], [1], [0, 0, 1, 1], [], []>} : vector<8x32xbf16>, vector<32x32xbf16>, vector<8x32xf32> -> vector<8x32xf32>
    %166 = vector.extract_strided_slice %157 {offsets = [0, 0], sizes = [1, 32], strides = [1, 1]} : vector<1x96xf32> to vector<1x32xf32>
    %167 = vector.broadcast %166 : vector<1x32xf32> to vector<8x32xf32>
    %168 = arith.addf %165, %167 : vector<8x32xf32>
    %169 = vector.shape_cast %168 : vector<8x32xf32> to vector<1x8x32xf32>
    %170 = vector.shape_cast %5 : vector<1x16x32xf32> to vector<16x32xf32>
    %171 = arith.truncf %170 : vector<16x32xf32> to vector<16x32xbf16>
    %172 = vector.extract_strided_slice %155 {offsets = [0, 32], sizes = [32, 64], strides = [1, 1]} : vector<32x96xbf16> to vector<32x64xbf16>
    %cst_79 = arith.constant dense<0.000000e+00> : vector<16x64xf32>
    %173 = tpu.matmul %171, %172, %cst_79 {dimension_numbers = #tpu.dot_dimension_numbers<[1], [0], [0], [1], [0, 0, 1, 1], [], []>} : vector<16x32xbf16>, vector<32x64xbf16>, vector<16x64xf32> -> vector<16x64xf32>
    %174 = vector.extract_strided_slice %157 {offsets = [0, 32], sizes = [1, 64], strides = [1, 1]} : vector<1x96xf32> to vector<1x64xf32>
    %175 = vector.broadcast %174 : vector<1x64xf32> to vector<16x64xf32>
    %176 = arith.addf %173, %175 : vector<16x64xf32>
    %177 = vector.shape_cast %176 : vector<16x64xf32> to vector<1x16x64xf32>
    %178 = vector.extract_strided_slice %177 {offsets = [0, 0, 0], sizes = [1, 16, 32], strides = [1, 1, 1]} : vector<1x16x64xf32> to vector<1x16x32xf32>
    %179 = vector.extract_strided_slice %177 {offsets = [0, 0, 32], sizes = [1, 16, 32], strides = [1, 1, 1]} : vector<1x16x64xf32> to vector<1x16x32xf32>
    %180 = vector.shape_cast %8 : vector<1x1x16xf32> to vector<1x1x16xf32>
    %181 = vector.broadcast %180 : vector<1x1x16xf32> to vector<1x8x16xf32>
    %182 = vector.extract_strided_slice %169 {offsets = [0, 0, 0], sizes = [1, 8, 8], strides = [1, 1, 1]} : vector<1x8x32xf32> to vector<1x8x8xf32>
    %183 = arith.truncf %182 : vector<1x8x8xf32> to vector<1x8x8xbf16>
    %184 = vector.extract_strided_slice %178 {offsets = [0, 0, 0], sizes = [1, 16, 8], strides = [1, 1, 1]} : vector<1x16x32xf32> to vector<1x16x8xf32>
    %185 = arith.truncf %184 : vector<1x16x8xf32> to vector<1x16x8xbf16>
    %186 = vector.extract_strided_slice %179 {offsets = [0, 0, 0], sizes = [1, 16, 8], strides = [1, 1, 1]} : vector<1x16x32xf32> to vector<1x16x8xf32>
    %187 = arith.truncf %186 : vector<1x16x8xf32> to vector<1x16x8xbf16>
    "tpu.trace_start"() <{level = 10 : i32, message = "bqd,bkd->bqk"}> : () -> ()
    %cst_80 = arith.constant dense<0.000000e+00> : vector<1x8x16xf32>
    %188 = tpu.matmul %183, %185, %cst_80 {dimension_numbers = #tpu.dot_dimension_numbers<[2], [2], [1], [1], [0, 0, 0, 1, 1, 1], [0], [0]>} : vector<1x8x8xbf16>, vector<1x16x8xbf16>, vector<1x8x16xf32> -> vector<1x8x16xf32>
    "tpu.trace_stop"() : () -> ()
    %189 = arith.addf %188, %181 : vector<1x8x16xf32>
    %cst_81 = arith.constant dense<0xFF800000> : vector<1x8xf32>
    %190 = vector.multi_reduction <maximumf>, %189, %cst_81 [2] : vector<1x8x16xf32> to vector<1x8xf32>
    %191 = vector.shape_cast %190 : vector<1x8xf32> to vector<1x8x1xf32>
    %192 = vector.broadcast %191 : vector<1x8x1xf32> to vector<1x8x16xf32>
    %193 = arith.subf %189, %192 : vector<1x8x16xf32>
    %194 = math.exp %193 : vector<1x8x16xf32>
    %cst_82 = arith.constant dense<0.000000e+00> : vector<1x8xf32>
    %195 = vector.multi_reduction <add>, %194, %cst_82 [2] : vector<1x8x16xf32> to vector<1x8xf32>
    %196 = vector.shape_cast %195 : vector<1x8xf32> to vector<1x8x1xf32>
    %197 = tpu.reciprocal %196 {approx = true} : vector<1x8x1xf32> -> vector<1x8x1xf32>
    %198 = vector.broadcast %197 : vector<1x8x1xf32> to vector<1x8x16xf32>
    %199 = arith.mulf %194, %198 : vector<1x8x16xf32>
    %200 = arith.truncf %199 : vector<1x8x16xf32> to vector<1x8x16xbf16>
    "tpu.trace_start"() <{level = 10 : i32, message = "bqk,bkd->bqd"}> : () -> ()
    %cst_83 = arith.constant dense<0.000000e+00> : vector<1x8x8xf32>
    %201 = tpu.matmul %200, %187, %cst_83 {dimension_numbers = #tpu.dot_dimension_numbers<[2], [1], [1], [2], [0, 0, 0, 1, 1, 2], [0], [0]>} : vector<1x8x16xbf16>, vector<1x16x8xbf16>, vector<1x8x8xf32> -> vector<1x8x8xf32>
    "tpu.trace_stop"() : () -> ()
    %202 = vector.shape_cast %201 : vector<1x8x8xf32> to vector<8x8xf32>
    %c0_84 = arith.constant 0 : index
    %c0_85 = arith.constant 0 : index
    %203 = vector.load %arg34[%c0_84, %c0_85] : memref<8x32xf32, #tpu.memory_space<vmem>>, vector<8x8xf32>
    tpu.vector_store %arg34[%c0_84, %c0_85], %202 {strides = array<i32>} : memref<8x32xf32, #tpu.memory_space<vmem>>, vector<8x8xf32>,
    %204 = vector.extract_strided_slice %169 {offsets = [0, 0, 8], sizes = [1, 8, 8], strides = [1, 1, 1]} : vector<1x8x32xf32> to vector<1x8x8xf32>
    %205 = arith.truncf %204 : vector<1x8x8xf32> to vector<1x8x8xbf16>
    %206 = vector.extract_strided_slice %178 {offsets = [0, 0, 8], sizes = [1, 16, 8], strides = [1, 1, 1]} : vector<1x16x32xf32> to vector<1x16x8xf32>
    %207 = arith.truncf %206 : vector<1x16x8xf32> to vector<1x16x8xbf16>
    %208 = vector.extract_strided_slice %179 {offsets = [0, 0, 8], sizes = [1, 16, 8], strides = [1, 1, 1]} : vector<1x16x32xf32> to vector<1x16x8xf32>
    %209 = arith.truncf %208 : vector<1x16x8xf32> to vector<1x16x8xbf16>
    "tpu.trace_start"() <{level = 10 : i32, message = "bqd,bkd->bqk"}> : () -> ()
    %cst_86 = arith.constant dense<0.000000e+00> : vector<1x8x16xf32>
    %210 = tpu.matmul %205, %207, %cst_86 {dimension_numbers = #tpu.dot_dimension_numbers<[2], [2], [1], [1], [0, 0, 0, 1, 1, 1], [0], [0]>} : vector<1x8x8xbf16>, vector<1x16x8xbf16>, vector<1x8x16xf32> -> vector<1x8x16xf32>
    "tpu.trace_stop"() : () -> ()
    %211 = arith.addf %210, %181 : vector<1x8x16xf32>
    %cst_87 = arith.constant dense<0xFF800000> : vector<1x8xf32>
    %212 = vector.multi_reduction <maximumf>, %211, %cst_87 [2] : vector<1x8x16xf32> to vector<1x8xf32>
    %213 = vector.shape_cast %212 : vector<1x8xf32> to vector<1x8x1xf32>
    %214 = vector.broadcast %213 : vector<1x8x1xf32> to vector<1x8x16xf32>
    %215 = arith.subf %211, %214 : vector<1x8x16xf32>
    %216 = math.exp %215 : vector<1x8x16xf32>
    %cst_88 = arith.constant dense<0.000000e+00> : vector<1x8xf32>
    %217 = vector.multi_reduction <add>, %216, %cst_88 [2] : vector<1x8x16xf32> to vector<1x8xf32>
    %218 = vector.shape_cast %217 : vector<1x8xf32> to vector<1x8x1xf32>
    %219 = tpu.reciprocal %218 {approx = true} : vector<1x8x1xf32> -> vector<1x8x1xf32>
    %220 = vector.broadcast %219 : vector<1x8x1xf32> to vector<1x8x16xf32>
    %221 = arith.mulf %216, %220 : vector<1x8x16xf32>
    %222 = arith.truncf %221 : vector<1x8x16xf32> to vector<1x8x16xbf16>
    "tpu.trace_start"() <{level = 10 : i32, message = "bqk,bkd->bqd"}> : () -> ()
    %cst_89 = arith.constant dense<0.000000e+00> : vector<1x8x8xf32>
    %223 = tpu.matmul %222, %209, %cst_89 {dimension_numbers = #tpu.dot_dimension_numbers<[2], [1], [1], [2], [0, 0, 0, 1, 1, 2], [0], [0]>} : vector<1x8x16xbf16>, vector<1x16x8xbf16>, vector<1x8x8xf32> -> vector<1x8x8xf32>
    "tpu.trace_stop"() : () -> ()
    %224 = vector.shape_cast %223 : vector<1x8x8xf32> to vector<8x8xf32>
    %c0_90 = arith.constant 0 : index
    %c8_91 = arith.constant 8 : index
    %225 = vector.load %arg34[%c0_90, %c8_91] : memref<8x32xf32, #tpu.memory_space<vmem>>, vector<8x8xf32>
    tpu.vector_store %arg34[%c0_90, %c8_91], %224 {strides = array<i32>} : memref<8x32xf32, #tpu.memory_space<vmem>>, vector<8x8xf32>,
    %226 = vector.extract_strided_slice %169 {offsets = [0, 0, 16], sizes = [1, 8, 8], strides = [1, 1, 1]} : vector<1x8x32xf32> to vector<1x8x8xf32>
    %227 = arith.truncf %226 : vector<1x8x8xf32> to vector<1x8x8xbf16>
    %228 = vector.extract_strided_slice %178 {offsets = [0, 0, 16], sizes = [1, 16, 8], strides = [1, 1, 1]} : vector<1x16x32xf32> to vector<1x16x8xf32>
    %229 = arith.truncf %228 : vector<1x16x8xf32> to vector<1x16x8xbf16>
    %230 = vector.extract_strided_slice %179 {offsets = [0, 0, 16], sizes = [1, 16, 8], strides = [1, 1, 1]} : vector<1x16x32xf32> to vector<1x16x8xf32>
    %231 = arith.truncf %230 : vector<1x16x8xf32> to vector<1x16x8xbf16>
    "tpu.trace_start"() <{level = 10 : i32, message = "bqd,bkd->bqk"}> : () -> ()
    %cst_92 = arith.constant dense<0.000000e+00> : vector<1x8x16xf32>
    %232 = tpu.matmul %227, %229, %cst_92 {dimension_numbers = #tpu.dot_dimension_numbers<[2], [2], [1], [1], [0, 0, 0, 1, 1, 1], [0], [0]>} : vector<1x8x8xbf16>, vector<1x16x8xbf16>, vector<1x8x16xf32> -> vector<1x8x16xf32>
    "tpu.trace_stop"() : () -> ()
    %233 = arith.addf %232, %181 : vector<1x8x16xf32>
    %cst_93 = arith.constant dense<0xFF800000> : vector<1x8xf32>
    %234 = vector.multi_reduction <maximumf>, %233, %cst_93 [2] : vector<1x8x16xf32> to vector<1x8xf32>
    %235 = vector.shape_cast %234 : vector<1x8xf32> to vector<1x8x1xf32>
    %236 = vector.broadcast %235 : vector<1x8x1xf32> to vector<1x8x16xf32>
    %237 = arith.subf %233, %236 : vector<1x8x16xf32>
    %238 = math.exp %237 : vector<1x8x16xf32>
    %cst_94 = arith.constant dense<0.000000e+00> : vector<1x8xf32>
    %239 = vector.multi_reduction <add>, %238, %cst_94 [2] : vector<1x8x16xf32> to vector<1x8xf32>
    %240 = vector.shape_cast %239 : vector<1x8xf32> to vector<1x8x1xf32>
    %241 = tpu.reciprocal %240 {approx = true} : vector<1x8x1xf32> -> vector<1x8x1xf32>
    %242 = vector.broadcast %241 : vector<1x8x1xf32> to vector<1x8x16xf32>
    %243 = arith.mulf %238, %242 : vector<1x8x16xf32>
    %244 = arith.truncf %243 : vector<1x8x16xf32> to vector<1x8x16xbf16>
    "tpu.trace_start"() <{level = 10 : i32, message = "bqk,bkd->bqd"}> : () -> ()
    %cst_95 = arith.constant dense<0.000000e+00> : vector<1x8x8xf32>
    %245 = tpu.matmul %244, %231, %cst_95 {dimension_numbers = #tpu.dot_dimension_numbers<[2], [1], [1], [2], [0, 0, 0, 1, 1, 2], [0], [0]>} : vector<1x8x16xbf16>, vector<1x16x8xbf16>, vector<1x8x8xf32> -> vector<1x8x8xf32>
    "tpu.trace_stop"() : () -> ()
    %246 = vector.shape_cast %245 : vector<1x8x8xf32> to vector<8x8xf32>
    %c0_96 = arith.constant 0 : index
    %c16_97 = arith.constant 16 : index
    %247 = vector.load %arg34[%c0_96, %c16_97] : memref<8x32xf32, #tpu.memory_space<vmem>>, vector<8x8xf32>
    tpu.vector_store %arg34[%c0_96, %c16_97], %246 {strides = array<i32>} : memref<8x32xf32, #tpu.memory_space<vmem>>, vector<8x8xf32>,
    %248 = vector.extract_strided_slice %169 {offsets = [0, 0, 24], sizes = [1, 8, 8], strides = [1, 1, 1]} : vector<1x8x32xf32> to vector<1x8x8xf32>
    %249 = arith.truncf %248 : vector<1x8x8xf32> to vector<1x8x8xbf16>
    %250 = vector.extract_strided_slice %178 {offsets = [0, 0, 24], sizes = [1, 16, 8], strides = [1, 1, 1]} : vector<1x16x32xf32> to vector<1x16x8xf32>
    %251 = arith.truncf %250 : vector<1x16x8xf32> to vector<1x16x8xbf16>
    %252 = vector.extract_strided_slice %179 {offsets = [0, 0, 24], sizes = [1, 16, 8], strides = [1, 1, 1]} : vector<1x16x32xf32> to vector<1x16x8xf32>
    %253 = arith.truncf %252 : vector<1x16x8xf32> to vector<1x16x8xbf16>
    "tpu.trace_start"() <{level = 10 : i32, message = "bqd,bkd->bqk"}> : () -> ()
    %cst_98 = arith.constant dense<0.000000e+00> : vector<1x8x16xf32>
    %254 = tpu.matmul %249, %251, %cst_98 {dimension_numbers = #tpu.dot_dimension_numbers<[2], [2], [1], [1], [0, 0, 0, 1, 1, 1], [0], [0]>} : vector<1x8x8xbf16>, vector<1x16x8xbf16>, vector<1x8x16xf32> -> vector<1x8x16xf32>
    "tpu.trace_stop"() : () -> ()
    %255 = arith.addf %254, %181 : vector<1x8x16xf32>
    %cst_99 = arith.constant dense<0xFF800000> : vector<1x8xf32>
    %256 = vector.multi_reduction <maximumf>, %255, %cst_99 [2] : vector<1x8x16xf32> to vector<1x8xf32>
    %257 = vector.shape_cast %256 : vector<1x8xf32> to vector<1x8x1xf32>
    %258 = vector.broadcast %257 : vector<1x8x1xf32> to vector<1x8x16xf32>
    %259 = arith.subf %255, %258 : vector<1x8x16xf32>
    %260 = math.exp %259 : vector<1x8x16xf32>
    %cst_100 = arith.constant dense<0.000000e+00> : vector<1x8xf32>
    %261 = vector.multi_reduction <add>, %260, %cst_100 [2] : vector<1x8x16xf32> to vector<1x8xf32>
    %262 = vector.shape_cast %261 : vector<1x8xf32> to vector<1x8x1xf32>
    %263 = tpu.reciprocal %262 {approx = true} : vector<1x8x1xf32> -> vector<1x8x1xf32>
    %264 = vector.broadcast %263 : vector<1x8x1xf32> to vector<1x8x16xf32>
    %265 = arith.mulf %260, %264 : vector<1x8x16xf32>
    %266 = arith.truncf %265 : vector<1x8x16xf32> to vector<1x8x16xbf16>
    "tpu.trace_start"() <{level = 10 : i32, message = "bqk,bkd->bqd"}> : () -> ()
    %cst_101 = arith.constant dense<0.000000e+00> : vector<1x8x8xf32>
    %267 = tpu.matmul %266, %253, %cst_101 {dimension_numbers = #tpu.dot_dimension_numbers<[2], [1], [1], [2], [0, 0, 0, 1, 1, 2], [0], [0]>} : vector<1x8x16xbf16>, vector<1x16x8xbf16>, vector<1x8x8xf32> -> vector<1x8x8xf32>
    "tpu.trace_stop"() : () -> ()
    %268 = vector.shape_cast %267 : vector<1x8x8xf32> to vector<8x8xf32>
    %c0_102 = arith.constant 0 : index
    %c24_103 = arith.constant 24 : index
    %269 = vector.load %arg34[%c0_102, %c24_103] : memref<8x32xf32, #tpu.memory_space<vmem>>, vector<8x8xf32>
    tpu.vector_store %arg34[%c0_102, %c24_103], %268 {strides = array<i32>} : memref<8x32xf32, #tpu.memory_space<vmem>>, vector<8x8xf32>,
    %c0_104 = arith.constant 0 : index
    %c0_105 = arith.constant 0 : index
    %270 = vector.load %arg34[%c0_104, %c0_105] : memref<8x32xf32, #tpu.memory_space<vmem>>, vector<8x32xf32>
    %271 = arith.truncf %270 : vector<8x32xf32> to vector<8x32xbf16>
    %cst_106 = arith.constant dense<0.000000e+00> : vector<8x32xf32>
    %272 = tpu.matmul %271, %159, %cst_106 {dimension_numbers = #tpu.dot_dimension_numbers<[1], [0], [0], [1], [0, 0, 1, 1], [], []>} : vector<8x32xbf16>, vector<32x32xbf16>, vector<8x32xf32> -> vector<8x32xf32>
    %273 = vector.broadcast %161 : vector<1x32xf32> to vector<8x32xf32>
    %274 = arith.addf %272, %273 : vector<8x32xf32>
    %275 = vector.shape_cast %274 : vector<8x32xf32> to vector<1x8x32xf32>
    %276 = arith.addf %152, %275 : vector<1x8x32xf32>
    %277 = vector.shape_cast %276 : vector<1x8x32xf32> to vector<8x32xf32>
    %c0_107 = arith.constant 0 : index
    %c0_108 = arith.constant 0 : index
    %c0_109 = arith.constant 0 : index
    %278 = vector.load %arg21[%c0_107, %c0_108, %c0_109] : memref<1x1x32xf32, #tpu.memory_space<vmem>>, vector<1x1x32xf32>
    %279 = vector.shape_cast %278 : vector<1x1x32xf32> to vector<1x32xf32>
    %c0_110 = arith.constant 0 : index
    %c0_111 = arith.constant 0 : index
    %c0_112 = arith.constant 0 : index
    %280 = vector.load %arg22[%c0_110, %c0_111, %c0_112] : memref<1x1x32xf32, #tpu.memory_space<vmem>>, vector<1x1x32xf32>
    %281 = vector.shape_cast %280 : vector<1x1x32xf32> to vector<1x32xf32>
    %cst_113 = arith.constant dense<0.000000e+00> : vector<8xf32>
    %282 = vector.multi_reduction <add>, %277, %cst_113 [1] : vector<8x32xf32> to vector<8xf32>
    %283 = vector.shape_cast %282 : vector<8xf32> to vector<8x1xf32>
    %cst_114 = arith.constant 3.200000e+01 : f32
    %284 = vector.broadcast %cst_114 : f32 to vector<8x1xf32>
    %285 = arith.divf %283, %284 : vector<8x1xf32>
    %286 = vector.broadcast %285 : vector<8x1xf32> to vector<8x32xf32>
    %287 = arith.subf %277, %286 : vector<8x32xf32>
    %288 = arith.mulf %287, %287 : vector<8x32xf32>
    %cst_115 = arith.constant dense<0.000000e+00> : vector<8xf32>
    %289 = vector.multi_reduction <add>, %288, %cst_115 [1] : vector<8x32xf32> to vector<8xf32>
    %290 = vector.shape_cast %289 : vector<8xf32> to vector<8x1xf32>
    %cst_116 = arith.constant 3.200000e+01 : f32
    %291 = vector.broadcast %cst_116 : f32 to vector<8x1xf32>
    %292 = arith.divf %290, %291 : vector<8x1xf32>
    %cst_117 = arith.constant 9.99999974E-6 : f32
    %293 = vector.broadcast %cst_117 : f32 to vector<8x1xf32>
    %294 = arith.addf %292, %293 : vector<8x1xf32>
    %295 = math.rsqrt %294 : vector<8x1xf32>
    %296 = vector.broadcast %295 : vector<8x1xf32> to vector<8x32xf32>
    %297 = arith.mulf %287, %296 : vector<8x32xf32>
    %298 = vector.broadcast %279 : vector<1x32xf32> to vector<8x32xf32>
    %299 = arith.mulf %297, %298 : vector<8x32xf32>
    %300 = vector.broadcast %281 : vector<1x32xf32> to vector<8x32xf32>
    %301 = arith.addf %299, %300 : vector<8x32xf32>
    %302 = vector.shape_cast %301 : vector<8x32xf32> to vector<1x8x32xf32>
    %303 = arith.addf %302, %4 : vector<1x8x32xf32>
    %c0_118 = arith.constant 0 : index
    %c0_119 = arith.constant 0 : index
    %c0_120 = arith.constant 0 : index
    %304 = vector.load %arg15[%c0_118, %c0_119, %c0_120] : memref<1x32x96xbf16, #tpu.memory_space<vmem>>, vector<1x32x96xbf16>
    %305 = vector.shape_cast %304 : vector<1x32x96xbf16> to vector<32x96xbf16>
    %c0_121 = arith.constant 0 : index
    %c0_122 = arith.constant 0 : index
    %c0_123 = arith.constant 0 : index
    %306 = vector.load %arg16[%c0_121, %c0_122, %c0_123] : memref<1x1x96xf32, #tpu.memory_space<vmem>>, vector<1x1x96xf32>
    %307 = vector.shape_cast %306 : vector<1x1x96xf32> to vector<1x96xf32>
    %c0_124 = arith.constant 0 : index
    %c0_125 = arith.constant 0 : index
    %c0_126 = arith.constant 0 : index
    %308 = vector.load %arg17[%c0_124, %c0_125, %c0_126] : memref<1x32x32xbf16, #tpu.memory_space<vmem>>, vector<1x32x32xbf16>
    %309 = vector.shape_cast %308 : vector<1x32x32xbf16> to vector<32x32xbf16>
    %c0_127 = arith.constant 0 : index
    %c0_128 = arith.constant 0 : index
    %c0_129 = arith.constant 0 : index
    %310 = vector.load %arg18[%c0_127, %c0_128, %c0_129] : memref<1x1x32xf32, #tpu.memory_space<vmem>>, vector<1x1x32xf32>
    %311 = vector.shape_cast %310 : vector<1x1x32xf32> to vector<1x32xf32>
    %312 = vector.shape_cast %303 : vector<1x8x32xf32> to vector<8x32xf32>
    %313 = arith.truncf %312 : vector<8x32xf32> to vector<8x32xbf16>
    %314 = vector.extract_strided_slice %305 {offsets = [0, 0], sizes = [32, 32], strides = [1, 1]} : vector<32x96xbf16> to vector<32x32xbf16>
    %cst_130 = arith.constant dense<0.000000e+00> : vector<8x32xf32>
    %315 = tpu.matmul %313, %314, %cst_130 {dimension_numbers = #tpu.dot_dimension_numbers<[1], [0], [0], [1], [0, 0, 1, 1], [], []>} : vector<8x32xbf16>, vector<32x32xbf16>, vector<8x32xf32> -> vector<8x32xf32>
    %316 = vector.extract_strided_slice %307 {offsets = [0, 0], sizes = [1, 32], strides = [1, 1]} : vector<1x96xf32> to vector<1x32xf32>
    %317 = vector.broadcast %316 : vector<1x32xf32> to vector<8x32xf32>
    %318 = arith.addf %315, %317 : vector<8x32xf32>
    %319 = vector.shape_cast %318 : vector<8x32xf32> to vector<1x8x32xf32>
    %320 = vector.shape_cast %7 : vector<1x16x32xf32> to vector<16x32xf32>
    %321 = arith.truncf %320 : vector<16x32xf32> to vector<16x32xbf16>
    %322 = vector.extract_strided_slice %305 {offsets = [0, 32], sizes = [32, 32], strides = [1, 1]} : vector<32x96xbf16> to vector<32x32xbf16>
    %cst_131 = arith.constant dense<0.000000e+00> : vector<16x32xf32>
    %323 = tpu.matmul %321, %322, %cst_131 {dimension_numbers = #tpu.dot_dimension_numbers<[1], [0], [0], [1], [0, 0, 1, 1], [], []>} : vector<16x32xbf16>, vector<32x32xbf16>, vector<16x32xf32> -> vector<16x32xf32>
    %324 = vector.extract_strided_slice %307 {offsets = [0, 32], sizes = [1, 32], strides = [1, 1]} : vector<1x96xf32> to vector<1x32xf32>
    %325 = vector.broadcast %324 : vector<1x32xf32> to vector<16x32xf32>
    %326 = arith.addf %323, %325 : vector<16x32xf32>
    %327 = vector.shape_cast %326 : vector<16x32xf32> to vector<1x16x32xf32>
    %328 = vector.shape_cast %6 : vector<1x16x32xf32> to vector<16x32xf32>
    %329 = arith.truncf %328 : vector<16x32xf32> to vector<16x32xbf16>
    %330 = vector.extract_strided_slice %305 {offsets = [0, 64], sizes = [32, 32], strides = [1, 1]} : vector<32x96xbf16> to vector<32x32xbf16>
    %cst_132 = arith.constant dense<0.000000e+00> : vector<16x32xf32>
    %331 = tpu.matmul %329, %330, %cst_132 {dimension_numbers = #tpu.dot_dimension_numbers<[1], [0], [0], [1], [0, 0, 1, 1], [], []>} : vector<16x32xbf16>, vector<32x32xbf16>, vector<16x32xf32> -> vector<16x32xf32>
    %332 = vector.extract_strided_slice %307 {offsets = [0, 64], sizes = [1, 32], strides = [1, 1]} : vector<1x96xf32> to vector<1x32xf32>
    %333 = vector.broadcast %332 : vector<1x32xf32> to vector<16x32xf32>
    %334 = arith.addf %331, %333 : vector<16x32xf32>
    %335 = vector.shape_cast %334 : vector<16x32xf32> to vector<1x16x32xf32>
    %336 = vector.shape_cast %8 : vector<1x1x16xf32> to vector<1x1x16xf32>
    %337 = vector.broadcast %336 : vector<1x1x16xf32> to vector<1x8x16xf32>
    %338 = vector.extract_strided_slice %319 {offsets = [0, 0, 0], sizes = [1, 8, 8], strides = [1, 1, 1]} : vector<1x8x32xf32> to vector<1x8x8xf32>
    %339 = arith.truncf %338 : vector<1x8x8xf32> to vector<1x8x8xbf16>
    %340 = vector.extract_strided_slice %327 {offsets = [0, 0, 0], sizes = [1, 16, 8], strides = [1, 1, 1]} : vector<1x16x32xf32> to vector<1x16x8xf32>
    %341 = arith.truncf %340 : vector<1x16x8xf32> to vector<1x16x8xbf16>
    %342 = vector.extract_strided_slice %335 {offsets = [0, 0, 0], sizes = [1, 16, 8], strides = [1, 1, 1]} : vector<1x16x32xf32> to vector<1x16x8xf32>
    %343 = arith.truncf %342 : vector<1x16x8xf32> to vector<1x16x8xbf16>
    "tpu.trace_start"() <{level = 10 : i32, message = "bqd,bkd->bqk"}> : () -> ()
    %cst_133 = arith.constant dense<0.000000e+00> : vector<1x8x16xf32>
    %344 = tpu.matmul %339, %341, %cst_133 {dimension_numbers = #tpu.dot_dimension_numbers<[2], [2], [1], [1], [0, 0, 0, 1, 1, 1], [0], [0]>} : vector<1x8x8xbf16>, vector<1x16x8xbf16>, vector<1x8x16xf32> -> vector<1x8x16xf32>
    "tpu.trace_stop"() : () -> ()
    %345 = arith.addf %344, %337 : vector<1x8x16xf32>
    %cst_134 = arith.constant dense<0xFF800000> : vector<1x8xf32>
    %346 = vector.multi_reduction <maximumf>, %345, %cst_134 [2] : vector<1x8x16xf32> to vector<1x8xf32>
    %347 = vector.shape_cast %346 : vector<1x8xf32> to vector<1x8x1xf32>
    %348 = vector.broadcast %347 : vector<1x8x1xf32> to vector<1x8x16xf32>
    %349 = arith.subf %345, %348 : vector<1x8x16xf32>
    %350 = math.exp %349 : vector<1x8x16xf32>
    %cst_135 = arith.constant dense<0.000000e+00> : vector<1x8xf32>
    %351 = vector.multi_reduction <add>, %350, %cst_135 [2] : vector<1x8x16xf32> to vector<1x8xf32>
    %352 = vector.shape_cast %351 : vector<1x8xf32> to vector<1x8x1xf32>
    %353 = tpu.reciprocal %352 {approx = true} : vector<1x8x1xf32> -> vector<1x8x1xf32>
    %354 = vector.broadcast %353 : vector<1x8x1xf32> to vector<1x8x16xf32>
    %355 = arith.mulf %350, %354 : vector<1x8x16xf32>
    %356 = arith.truncf %355 : vector<1x8x16xf32> to vector<1x8x16xbf16>
    "tpu.trace_start"() <{level = 10 : i32, message = "bqk,bkd->bqd"}> : () -> ()
    %cst_136 = arith.constant dense<0.000000e+00> : vector<1x8x8xf32>
    %357 = tpu.matmul %356, %343, %cst_136 {dimension_numbers = #tpu.dot_dimension_numbers<[2], [1], [1], [2], [0, 0, 0, 1, 1, 2], [0], [0]>} : vector<1x8x16xbf16>, vector<1x16x8xbf16>, vector<1x8x8xf32> -> vector<1x8x8xf32>
    "tpu.trace_stop"() : () -> ()
    %358 = vector.shape_cast %357 : vector<1x8x8xf32> to vector<8x8xf32>
    %c0_137 = arith.constant 0 : index
    %c0_138 = arith.constant 0 : index
    %359 = vector.load %arg34[%c0_137, %c0_138] : memref<8x32xf32, #tpu.memory_space<vmem>>, vector<8x8xf32>
    tpu.vector_store %arg34[%c0_137, %c0_138], %358 {strides = array<i32>} : memref<8x32xf32, #tpu.memory_space<vmem>>, vector<8x8xf32>,
    %360 = vector.extract_strided_slice %319 {offsets = [0, 0, 8], sizes = [1, 8, 8], strides = [1, 1, 1]} : vector<1x8x32xf32> to vector<1x8x8xf32>
    %361 = arith.truncf %360 : vector<1x8x8xf32> to vector<1x8x8xbf16>
    %362 = vector.extract_strided_slice %327 {offsets = [0, 0, 8], sizes = [1, 16, 8], strides = [1, 1, 1]} : vector<1x16x32xf32> to vector<1x16x8xf32>
    %363 = arith.truncf %362 : vector<1x16x8xf32> to vector<1x16x8xbf16>
    %364 = vector.extract_strided_slice %335 {offsets = [0, 0, 8], sizes = [1, 16, 8], strides = [1, 1, 1]} : vector<1x16x32xf32> to vector<1x16x8xf32>
    %365 = arith.truncf %364 : vector<1x16x8xf32> to vector<1x16x8xbf16>
    "tpu.trace_start"() <{level = 10 : i32, message = "bqd,bkd->bqk"}> : () -> ()
    %cst_139 = arith.constant dense<0.000000e+00> : vector<1x8x16xf32>
    %366 = tpu.matmul %361, %363, %cst_139 {dimension_numbers = #tpu.dot_dimension_numbers<[2], [2], [1], [1], [0, 0, 0, 1, 1, 1], [0], [0]>} : vector<1x8x8xbf16>, vector<1x16x8xbf16>, vector<1x8x16xf32> -> vector<1x8x16xf32>
    "tpu.trace_stop"() : () -> ()
    %367 = arith.addf %366, %337 : vector<1x8x16xf32>
    %cst_140 = arith.constant dense<0xFF800000> : vector<1x8xf32>
    %368 = vector.multi_reduction <maximumf>, %367, %cst_140 [2] : vector<1x8x16xf32> to vector<1x8xf32>
    %369 = vector.shape_cast %368 : vector<1x8xf32> to vector<1x8x1xf32>
    %370 = vector.broadcast %369 : vector<1x8x1xf32> to vector<1x8x16xf32>
    %371 = arith.subf %367, %370 : vector<1x8x16xf32>
    %372 = math.exp %371 : vector<1x8x16xf32>
    %cst_141 = arith.constant dense<0.000000e+00> : vector<1x8xf32>
    %373 = vector.multi_reduction <add>, %372, %cst_141 [2] : vector<1x8x16xf32> to vector<1x8xf32>
    %374 = vector.shape_cast %373 : vector<1x8xf32> to vector<1x8x1xf32>
    %375 = tpu.reciprocal %374 {approx = true} : vector<1x8x1xf32> -> vector<1x8x1xf32>
    %376 = vector.broadcast %375 : vector<1x8x1xf32> to vector<1x8x16xf32>
    %377 = arith.mulf %372, %376 : vector<1x8x16xf32>
    %378 = arith.truncf %377 : vector<1x8x16xf32> to vector<1x8x16xbf16>
    "tpu.trace_start"() <{level = 10 : i32, message = "bqk,bkd->bqd"}> : () -> ()
    %cst_142 = arith.constant dense<0.000000e+00> : vector<1x8x8xf32>
    %379 = tpu.matmul %378, %365, %cst_142 {dimension_numbers = #tpu.dot_dimension_numbers<[2], [1], [1], [2], [0, 0, 0, 1, 1, 2], [0], [0]>} : vector<1x8x16xbf16>, vector<1x16x8xbf16>, vector<1x8x8xf32> -> vector<1x8x8xf32>
    "tpu.trace_stop"() : () -> ()
    %380 = vector.shape_cast %379 : vector<1x8x8xf32> to vector<8x8xf32>
    %c0_143 = arith.constant 0 : index
    %c8_144 = arith.constant 8 : index
    %381 = vector.load %arg34[%c0_143, %c8_144] : memref<8x32xf32, #tpu.memory_space<vmem>>, vector<8x8xf32>
    tpu.vector_store %arg34[%c0_143, %c8_144], %380 {strides = array<i32>} : memref<8x32xf32, #tpu.memory_space<vmem>>, vector<8x8xf32>,
    %382 = vector.extract_strided_slice %319 {offsets = [0, 0, 16], sizes = [1, 8, 8], strides = [1, 1, 1]} : vector<1x8x32xf32> to vector<1x8x8xf32>
    %383 = arith.truncf %382 : vector<1x8x8xf32> to vector<1x8x8xbf16>
    %384 = vector.extract_strided_slice %327 {offsets = [0, 0, 16], sizes = [1, 16, 8], strides = [1, 1, 1]} : vector<1x16x32xf32> to vector<1x16x8xf32>
    %385 = arith.truncf %384 : vector<1x16x8xf32> to vector<1x16x8xbf16>
    %386 = vector.extract_strided_slice %335 {offsets = [0, 0, 16], sizes = [1, 16, 8], strides = [1, 1, 1]} : vector<1x16x32xf32> to vector<1x16x8xf32>
    %387 = arith.truncf %386 : vector<1x16x8xf32> to vector<1x16x8xbf16>
    "tpu.trace_start"() <{level = 10 : i32, message = "bqd,bkd->bqk"}> : () -> ()
    %cst_145 = arith.constant dense<0.000000e+00> : vector<1x8x16xf32>
    %388 = tpu.matmul %383, %385, %cst_145 {dimension_numbers = #tpu.dot_dimension_numbers<[2], [2], [1], [1], [0, 0, 0, 1, 1, 1], [0], [0]>} : vector<1x8x8xbf16>, vector<1x16x8xbf16>, vector<1x8x16xf32> -> vector<1x8x16xf32>
    "tpu.trace_stop"() : () -> ()
    %389 = arith.addf %388, %337 : vector<1x8x16xf32>
    %cst_146 = arith.constant dense<0xFF800000> : vector<1x8xf32>
    %390 = vector.multi_reduction <maximumf>, %389, %cst_146 [2] : vector<1x8x16xf32> to vector<1x8xf32>
    %391 = vector.shape_cast %390 : vector<1x8xf32> to vector<1x8x1xf32>
    %392 = vector.broadcast %391 : vector<1x8x1xf32> to vector<1x8x16xf32>
    %393 = arith.subf %389, %392 : vector<1x8x16xf32>
    %394 = math.exp %393 : vector<1x8x16xf32>
    %cst_147 = arith.constant dense<0.000000e+00> : vector<1x8xf32>
    %395 = vector.multi_reduction <add>, %394, %cst_147 [2] : vector<1x8x16xf32> to vector<1x8xf32>
    %396 = vector.shape_cast %395 : vector<1x8xf32> to vector<1x8x1xf32>
    %397 = tpu.reciprocal %396 {approx = true} : vector<1x8x1xf32> -> vector<1x8x1xf32>
    %398 = vector.broadcast %397 : vector<1x8x1xf32> to vector<1x8x16xf32>
    %399 = arith.mulf %394, %398 : vector<1x8x16xf32>
    %400 = arith.truncf %399 : vector<1x8x16xf32> to vector<1x8x16xbf16>
    "tpu.trace_start"() <{level = 10 : i32, message = "bqk,bkd->bqd"}> : () -> ()
    %cst_148 = arith.constant dense<0.000000e+00> : vector<1x8x8xf32>
    %401 = tpu.matmul %400, %387, %cst_148 {dimension_numbers = #tpu.dot_dimension_numbers<[2], [1], [1], [2], [0, 0, 0, 1, 1, 2], [0], [0]>} : vector<1x8x16xbf16>, vector<1x16x8xbf16>, vector<1x8x8xf32> -> vector<1x8x8xf32>
    "tpu.trace_stop"() : () -> ()
    %402 = vector.shape_cast %401 : vector<1x8x8xf32> to vector<8x8xf32>
    %c0_149 = arith.constant 0 : index
    %c16_150 = arith.constant 16 : index
    %403 = vector.load %arg34[%c0_149, %c16_150] : memref<8x32xf32, #tpu.memory_space<vmem>>, vector<8x8xf32>
    tpu.vector_store %arg34[%c0_149, %c16_150], %402 {strides = array<i32>} : memref<8x32xf32, #tpu.memory_space<vmem>>, vector<8x8xf32>,
    %404 = vector.extract_strided_slice %319 {offsets = [0, 0, 24], sizes = [1, 8, 8], strides = [1, 1, 1]} : vector<1x8x32xf32> to vector<1x8x8xf32>
    %405 = arith.truncf %404 : vector<1x8x8xf32> to vector<1x8x8xbf16>
    %406 = vector.extract_strided_slice %327 {offsets = [0, 0, 24], sizes = [1, 16, 8], strides = [1, 1, 1]} : vector<1x16x32xf32> to vector<1x16x8xf32>
    %407 = arith.truncf %406 : vector<1x16x8xf32> to vector<1x16x8xbf16>
    %408 = vector.extract_strided_slice %335 {offsets = [0, 0, 24], sizes = [1, 16, 8], strides = [1, 1, 1]} : vector<1x16x32xf32> to vector<1x16x8xf32>
    %409 = arith.truncf %408 : vector<1x16x8xf32> to vector<1x16x8xbf16>
    "tpu.trace_start"() <{level = 10 : i32, message = "bqd,bkd->bqk"}> : () -> ()
    %cst_151 = arith.constant dense<0.000000e+00> : vector<1x8x16xf32>
    %410 = tpu.matmul %405, %407, %cst_151 {dimension_numbers = #tpu.dot_dimension_numbers<[2], [2], [1], [1], [0, 0, 0, 1, 1, 1], [0], [0]>} : vector<1x8x8xbf16>, vector<1x16x8xbf16>, vector<1x8x16xf32> -> vector<1x8x16xf32>
    "tpu.trace_stop"() : () -> ()
    %411 = arith.addf %410, %337 : vector<1x8x16xf32>
    %cst_152 = arith.constant dense<0xFF800000> : vector<1x8xf32>
    %412 = vector.multi_reduction <maximumf>, %411, %cst_152 [2] : vector<1x8x16xf32> to vector<1x8xf32>
    %413 = vector.shape_cast %412 : vector<1x8xf32> to vector<1x8x1xf32>
    %414 = vector.broadcast %413 : vector<1x8x1xf32> to vector<1x8x16xf32>
    %415 = arith.subf %411, %414 : vector<1x8x16xf32>
    %416 = math.exp %415 : vector<1x8x16xf32>
    %cst_153 = arith.constant dense<0.000000e+00> : vector<1x8xf32>
    %417 = vector.multi_reduction <add>, %416, %cst_153 [2] : vector<1x8x16xf32> to vector<1x8xf32>
    %418 = vector.shape_cast %417 : vector<1x8xf32> to vector<1x8x1xf32>
    %419 = tpu.reciprocal %418 {approx = true} : vector<1x8x1xf32> -> vector<1x8x1xf32>
    %420 = vector.broadcast %419 : vector<1x8x1xf32> to vector<1x8x16xf32>
    %421 = arith.mulf %416, %420 : vector<1x8x16xf32>
    %422 = arith.truncf %421 : vector<1x8x16xf32> to vector<1x8x16xbf16>
    "tpu.trace_start"() <{level = 10 : i32, message = "bqk,bkd->bqd"}> : () -> ()
    %cst_154 = arith.constant dense<0.000000e+00> : vector<1x8x8xf32>
    %423 = tpu.matmul %422, %409, %cst_154 {dimension_numbers = #tpu.dot_dimension_numbers<[2], [1], [1], [2], [0, 0, 0, 1, 1, 2], [0], [0]>} : vector<1x8x16xbf16>, vector<1x16x8xbf16>, vector<1x8x8xf32> -> vector<1x8x8xf32>
    "tpu.trace_stop"() : () -> ()
    %424 = vector.shape_cast %423 : vector<1x8x8xf32> to vector<8x8xf32>
    %c0_155 = arith.constant 0 : index
    %c24_156 = arith.constant 24 : index
    %425 = vector.load %arg34[%c0_155, %c24_156] : memref<8x32xf32, #tpu.memory_space<vmem>>, vector<8x8xf32>
    tpu.vector_store %arg34[%c0_155, %c24_156], %424 {strides = array<i32>} : memref<8x32xf32, #tpu.memory_space<vmem>>, vector<8x8xf32>,
    %c0_157 = arith.constant 0 : index
    %c0_158 = arith.constant 0 : index
    %426 = vector.load %arg34[%c0_157, %c0_158] : memref<8x32xf32, #tpu.memory_space<vmem>>, vector<8x32xf32>
    %427 = arith.truncf %426 : vector<8x32xf32> to vector<8x32xbf16>
    %cst_159 = arith.constant dense<0.000000e+00> : vector<8x32xf32>
    %428 = tpu.matmul %427, %309, %cst_159 {dimension_numbers = #tpu.dot_dimension_numbers<[1], [0], [0], [1], [0, 0, 1, 1], [], []>} : vector<8x32xbf16>, vector<32x32xbf16>, vector<8x32xf32> -> vector<8x32xf32>
    %429 = vector.broadcast %311 : vector<1x32xf32> to vector<8x32xf32>
    %430 = arith.addf %428, %429 : vector<8x32xf32>
    %431 = vector.shape_cast %430 : vector<8x32xf32> to vector<1x8x32xf32>
    %432 = arith.addf %302, %431 : vector<1x8x32xf32>
    %433 = vector.shape_cast %432 : vector<1x8x32xf32> to vector<8x32xf32>
    %c0_160 = arith.constant 0 : index
    %c0_161 = arith.constant 0 : index
    %c0_162 = arith.constant 0 : index
    %434 = vector.load %arg23[%c0_160, %c0_161, %c0_162] : memref<1x1x32xf32, #tpu.memory_space<vmem>>, vector<1x1x32xf32>
    %435 = vector.shape_cast %434 : vector<1x1x32xf32> to vector<1x32xf32>
    %c0_163 = arith.constant 0 : index
    %c0_164 = arith.constant 0 : index
    %c0_165 = arith.constant 0 : index
    %436 = vector.load %arg24[%c0_163, %c0_164, %c0_165] : memref<1x1x32xf32, #tpu.memory_space<vmem>>, vector<1x1x32xf32>
    %437 = vector.shape_cast %436 : vector<1x1x32xf32> to vector<1x32xf32>
    %cst_166 = arith.constant dense<0.000000e+00> : vector<8xf32>
    %438 = vector.multi_reduction <add>, %433, %cst_166 [1] : vector<8x32xf32> to vector<8xf32>
    %439 = vector.shape_cast %438 : vector<8xf32> to vector<8x1xf32>
    %cst_167 = arith.constant 3.200000e+01 : f32
    %440 = vector.broadcast %cst_167 : f32 to vector<8x1xf32>
    %441 = arith.divf %439, %440 : vector<8x1xf32>
    %442 = vector.broadcast %441 : vector<8x1xf32> to vector<8x32xf32>
    %443 = arith.subf %433, %442 : vector<8x32xf32>
    %444 = arith.mulf %443, %443 : vector<8x32xf32>
    %cst_168 = arith.constant dense<0.000000e+00> : vector<8xf32>
    %445 = vector.multi_reduction <add>, %444, %cst_168 [1] : vector<8x32xf32> to vector<8xf32>
    %446 = vector.shape_cast %445 : vector<8xf32> to vector<8x1xf32>
    %cst_169 = arith.constant 3.200000e+01 : f32
    %447 = vector.broadcast %cst_169 : f32 to vector<8x1xf32>
    %448 = arith.divf %446, %447 : vector<8x1xf32>
    %cst_170 = arith.constant 9.99999974E-6 : f32
    %449 = vector.broadcast %cst_170 : f32 to vector<8x1xf32>
    %450 = arith.addf %448, %449 : vector<8x1xf32>
    %451 = math.rsqrt %450 : vector<8x1xf32>
    %452 = vector.broadcast %451 : vector<8x1xf32> to vector<8x32xf32>
    %453 = arith.mulf %443, %452 : vector<8x32xf32>
    %454 = vector.broadcast %435 : vector<1x32xf32> to vector<8x32xf32>
    %455 = arith.mulf %453, %454 : vector<8x32xf32>
    %456 = vector.broadcast %437 : vector<1x32xf32> to vector<8x32xf32>
    %457 = arith.addf %455, %456 : vector<8x32xf32>
    %c0_171 = arith.constant 0 : index
    %c0_172 = arith.constant 0 : index
    %c0_173 = arith.constant 0 : index
    %458 = vector.load %arg27[%c0_171, %c0_172, %c0_173] : memref<1x32x64xbf16, #tpu.memory_space<vmem>>, vector<1x32x64xbf16>
    %459 = vector.shape_cast %458 : vector<1x32x64xbf16> to vector<32x64xbf16>
    %c0_174 = arith.constant 0 : index
    %c0_175 = arith.constant 0 : index
    %c0_176 = arith.constant 0 : index
    %460 = vector.load %arg28[%c0_174, %c0_175, %c0_176] : memref<1x1x64xf32, #tpu.memory_space<vmem>>, vector<1x1x64xf32>
    %461 = vector.shape_cast %460 : vector<1x1x64xf32> to vector<1x64xf32>
    %c0_177 = arith.constant 0 : index
    %c0_178 = arith.constant 0 : index
    %c0_179 = arith.constant 0 : index
    %462 = vector.load %arg29[%c0_177, %c0_178, %c0_179] : memref<1x64x32xbf16, #tpu.memory_space<vmem>>, vector<1x64x32xbf16>
    %463 = vector.shape_cast %462 : vector<1x64x32xbf16> to vector<64x32xbf16>
    %c0_180 = arith.constant 0 : index
    %c0_181 = arith.constant 0 : index
    %c0_182 = arith.constant 0 : index
    %464 = vector.load %arg30[%c0_180, %c0_181, %c0_182] : memref<1x1x32xf32, #tpu.memory_space<vmem>>, vector<1x1x32xf32>
    %465 = vector.shape_cast %464 : vector<1x1x32xf32> to vector<1x32xf32>
    %466 = arith.truncf %457 : vector<8x32xf32> to vector<8x32xbf16>
    %cst_183 = arith.constant dense<0.000000e+00> : vector<8x64xf32>
    %467 = tpu.matmul %466, %459, %cst_183 {dimension_numbers = #tpu.dot_dimension_numbers<[1], [0], [0], [1], [0, 0, 1, 1], [], []>} : vector<8x32xbf16>, vector<32x64xbf16>, vector<8x64xf32> -> vector<8x64xf32>
    %468 = vector.broadcast %461 : vector<1x64xf32> to vector<8x64xf32>
    %469 = arith.addf %467, %468 : vector<8x64xf32>
    %cst_184 = arith.constant 0.000000e+00 : f32
    %470 = vector.broadcast %cst_184 : f32 to vector<8x64xf32>
    %471 = arith.cmpf oge, %469, %470 : vector<8x64xf32>
    %cst_185 = arith.constant 0.00999999977 : f32
    %472 = vector.broadcast %cst_185 : f32 to vector<8x64xf32>
    %473 = arith.mulf %472, %469 : vector<8x64xf32>
    %474 = arith.select %471, %469, %473 : vector<8x64xi1>, vector<8x64xf32>
    %475 = arith.truncf %474 : vector<8x64xf32> to vector<8x64xbf16>
    %cst_186 = arith.constant dense<0.000000e+00> : vector<8x32xf32>
    %476 = tpu.matmul %475, %463, %cst_186 {dimension_numbers = #tpu.dot_dimension_numbers<[1], [0], [0], [1], [0, 0, 1, 1], [], []>} : vector<8x64xbf16>, vector<64x32xbf16>, vector<8x32xf32> -> vector<8x32xf32>
    %477 = vector.broadcast %465 : vector<1x32xf32> to vector<8x32xf32>
    %478 = arith.addf %476, %477 : vector<8x32xf32>
    %479 = arith.addf %457, %478 : vector<8x32xf32>
    %c0_187 = arith.constant 0 : index
    %c0_188 = arith.constant 0 : index
    %c0_189 = arith.constant 0 : index
    %480 = vector.load %arg25[%c0_187, %c0_188, %c0_189] : memref<1x1x32xf32, #tpu.memory_space<vmem>>, vector<1x1x32xf32>
    %481 = vector.shape_cast %480 : vector<1x1x32xf32> to vector<1x32xf32>
    %c0_190 = arith.constant 0 : index
    %c0_191 = arith.constant 0 : index
    %c0_192 = arith.constant 0 : index
    %482 = vector.load %arg26[%c0_190, %c0_191, %c0_192] : memref<1x1x32xf32, #tpu.memory_space<vmem>>, vector<1x1x32xf32>
    %483 = vector.shape_cast %482 : vector<1x1x32xf32> to vector<1x32xf32>
    %cst_193 = arith.constant dense<0.000000e+00> : vector<8xf32>
    %484 = vector.multi_reduction <add>, %479, %cst_193 [1] : vector<8x32xf32> to vector<8xf32>
    %485 = vector.shape_cast %484 : vector<8xf32> to vector<8x1xf32>
    %cst_194 = arith.constant 3.200000e+01 : f32
    %486 = vector.broadcast %cst_194 : f32 to vector<8x1xf32>
    %487 = arith.divf %485, %486 : vector<8x1xf32>
    %488 = vector.broadcast %487 : vector<8x1xf32> to vector<8x32xf32>
    %489 = arith.subf %479, %488 : vector<8x32xf32>
    %490 = arith.mulf %489, %489 : vector<8x32xf32>
    %cst_195 = arith.constant dense<0.000000e+00> : vector<8xf32>
    %491 = vector.multi_reduction <add>, %490, %cst_195 [1] : vector<8x32xf32> to vector<8xf32>
    %492 = vector.shape_cast %491 : vector<8xf32> to vector<8x1xf32>
    %cst_196 = arith.constant 3.200000e+01 : f32
    %493 = vector.broadcast %cst_196 : f32 to vector<8x1xf32>
    %494 = arith.divf %492, %493 : vector<8x1xf32>
    %cst_197 = arith.constant 9.99999974E-6 : f32
    %495 = vector.broadcast %cst_197 : f32 to vector<8x1xf32>
    %496 = arith.addf %494, %495 : vector<8x1xf32>
    %497 = math.rsqrt %496 : vector<8x1xf32>
    %498 = vector.broadcast %497 : vector<8x1xf32> to vector<8x32xf32>
    %499 = arith.mulf %489, %498 : vector<8x32xf32>
    %500 = vector.broadcast %481 : vector<1x32xf32> to vector<8x32xf32>
    %501 = arith.mulf %499, %500 : vector<8x32xf32>
    %502 = vector.broadcast %483 : vector<1x32xf32> to vector<8x32xf32>
    %503 = arith.addf %501, %502 : vector<8x32xf32>
    %504 = vector.shape_cast %503 : vector<8x32xf32> to vector<1x8x32xf32>
    %c0_198 = arith.constant 0 : index
    %c0_199 = arith.constant 0 : index
    %c0_200 = arith.constant 0 : index
    %505 = vector.load %arg33[%c0_198, %c0_199, %c0_200] : memref<1x8x32xf32, #tpu.memory_space<vmem>>, vector<1x8x32xf32>
    tpu.vector_store %arg33[%c0_198, %c0_199, %c0_200], %504 {strides = array<i32>} : memref<1x8x32xf32, #tpu.memory_space<vmem>>, vector<1x8x32xf32>,
    %c1_i32 = arith.constant 1 : i32
    %506 = arith.cmpi eq, %arg1, %c1_i32 : i32
    %507 = arith.extui %506 : i1 to i32
    %c0_i32_201 = arith.constant 0 : i32
    %508 = arith.cmpi ne, %507, %c0_i32_201 : i32
    scf.if %508 {
      %c0_202 = arith.constant 0 : index
      %c0_203 = arith.constant 0 : index
      %509 = vector.load %arg31[%c0_202, %c0_203] : memref<1x32xf32, #tpu.memory_space<vmem>>, vector<1x32xf32>
      %c0_204 = arith.constant 0 : index
      %c0_205 = arith.constant 0 : index
      %510 = vector.load %arg32[%c0_204, %c0_205] : memref<1x32xf32, #tpu.memory_space<vmem>>, vector<1x32xf32>
      %cst_206 = arith.constant dense<0.000000e+00> : vector<8xf32>
      %511 = vector.multi_reduction <add>, %503, %cst_206 [1] : vector<8x32xf32> to vector<8xf32>
      %512 = vector.shape_cast %511 : vector<8xf32> to vector<8x1xf32>
      %cst_207 = arith.constant 3.200000e+01 : f32
      %513 = vector.broadcast %cst_207 : f32 to vector<8x1xf32>
      %514 = arith.divf %512, %513 : vector<8x1xf32>
      %515 = vector.broadcast %514 : vector<8x1xf32> to vector<8x32xf32>
      %516 = arith.subf %503, %515 : vector<8x32xf32>
      %517 = arith.mulf %516, %516 : vector<8x32xf32>
      %cst_208 = arith.constant dense<0.000000e+00> : vector<8xf32>
      %518 = vector.multi_reduction <add>, %517, %cst_208 [1] : vector<8x32xf32> to vector<8xf32>
      %519 = vector.shape_cast %518 : vector<8xf32> to vector<8x1xf32>
      %cst_209 = arith.constant 3.200000e+01 : f32
      %520 = vector.broadcast %cst_209 : f32 to vector<8x1xf32>
      %521 = arith.divf %519, %520 : vector<8x1xf32>
      %cst_210 = arith.constant 9.99999974E-6 : f32
      %522 = vector.broadcast %cst_210 : f32 to vector<8x1xf32>
      %523 = arith.addf %521, %522 : vector<8x1xf32>
      %524 = math.rsqrt %523 : vector<8x1xf32>
      %525 = vector.broadcast %524 : vector<8x1xf32> to vector<8x32xf32>
      %526 = arith.mulf %516, %525 : vector<8x32xf32>
      %527 = vector.broadcast %509 : vector<1x32xf32> to vector<8x32xf32>
      %528 = arith.mulf %526, %527 : vector<8x32xf32>
      %529 = vector.broadcast %510 : vector<1x32xf32> to vector<8x32xf32>
      %530 = arith.addf %528, %529 : vector<8x32xf32>
      %531 = vector.shape_cast %530 : vector<8x32xf32> to vector<1x8x32xf32>
      %c0_211 = arith.constant 0 : index
      %c0_212 = arith.constant 0 : index
      %c0_213 = arith.constant 0 : index
      %532 = vector.load %arg33[%c0_211, %c0_212, %c0_213] : memref<1x8x32xf32, #tpu.memory_space<vmem>>, vector<1x8x32xf32>
      tpu.vector_store %arg33[%c0_211, %c0_212, %c0_213], %531 {strides = array<i32>} : memref<1x8x32xf32, #tpu.memory_space<vmem>>, vector<1x8x32xf32>,
    } else {
    }
    return
  }
  func.func @transform_0(%arg0: i32, %arg1: i32) -> (i32, i32, i32) {
    %c0_i32 = arith.constant 0 : i32
    %c0_i32_0 = arith.constant 0 : i32
    %c0_i32_1 = arith.constant 0 : i32
    return %arg0, %c0_i32, %c0_i32_0 : i32, i32, i32
  }
  func.func @transform_1(%arg0: i32, %arg1: i32) -> (i32, i32, i32) {
    %c0_i32 = arith.constant 0 : i32
    %c0_i32_0 = arith.constant 0 : i32
    %c0_i32_1 = arith.constant 0 : i32
    return %arg0, %c0_i32, %c0_i32_0 : i32, i32, i32
  }
  func.func @transform_2(%arg0: i32, %arg1: i32) -> (i32, i32, i32) {
    %c0_i32 = arith.constant 0 : i32
    %c0_i32_0 = arith.constant 0 : i32
    %c0_i32_1 = arith.constant 0 : i32
    return %arg0, %c0_i32, %c0_i32_0 : i32, i32, i32
  }
  func.func @transform_3(%arg0: i32, %arg1: i32) -> (i32, i32, i32) {
    %c0_i32 = arith.constant 0 : i32
    %c0_i32_0 = arith.constant 0 : i32
    %c0_i32_1 = arith.constant 0 : i32
    return %arg0, %c0_i32, %c0_i32_0 : i32, i32, i32
  }
  func.func @transform_4(%arg0: i32, %arg1: i32) -> (i32, i32, i32) {
    %c0_i32 = arith.constant 0 : i32
    %c0_i32_0 = arith.constant 0 : i32
    %c0_i32_1 = arith.constant 0 : i32
    return %arg0, %c0_i32, %c0_i32_0 : i32, i32, i32
  }
  func.func @transform_5(%arg0: i32, %arg1: i32) -> (i32, i32, i32) {
    %c0_i32 = arith.constant 0 : i32
    %c0_i32_0 = arith.constant 0 : i32
    %c0_i32_1 = arith.constant 0 : i32
    return %arg1, %c0_i32, %c0_i32_0 : i32, i32, i32
  }
  func.func @transform_6(%arg0: i32, %arg1: i32) -> (i32, i32, i32) {
    %c0_i32 = arith.constant 0 : i32
    %c0_i32_0 = arith.constant 0 : i32
    %c0_i32_1 = arith.constant 0 : i32
    return %arg1, %c0_i32, %c0_i32_0 : i32, i32, i32
  }
  func.func @transform_7(%arg0: i32, %arg1: i32) -> (i32, i32, i32) {
    %c0_i32 = arith.constant 0 : i32
    %c0_i32_0 = arith.constant 0 : i32
    %c0_i32_1 = arith.constant 0 : i32
    return %arg1, %c0_i32, %c0_i32_0 : i32, i32, i32
  }
  func.func @transform_8(%arg0: i32, %arg1: i32) -> (i32, i32, i32) {
    %c0_i32 = arith.constant 0 : i32
    %c0_i32_0 = arith.constant 0 : i32
    %c0_i32_1 = arith.constant 0 : i32
    return %arg1, %c0_i32, %c0_i32_0 : i32, i32, i32
  }
  func.func @transform_9(%arg0: i32, %arg1: i32) -> (i32, i32, i32) {
    %c0_i32 = arith.constant 0 : i32
    %c0_i32_0 = arith.constant 0 : i32
    %c0_i32_1 = arith.constant 0 : i32
    return %arg1, %c0_i32, %c0_i32_0 : i32, i32, i32
  }
  func.func @transform_10(%arg0: i32, %arg1: i32) -> (i32, i32, i32) {
    %c0_i32 = arith.constant 0 : i32
    %c0_i32_0 = arith.constant 0 : i32
    %c0_i32_1 = arith.constant 0 : i32
    return %arg1, %c0_i32, %c0_i32_0 : i32, i32, i32
  }
  func.func @transform_11(%arg0: i32, %arg1: i32) -> (i32, i32, i32) {
    %c0_i32 = arith.constant 0 : i32
    %c0_i32_0 = arith.constant 0 : i32
    %c0_i32_1 = arith.constant 0 : i32
    return %arg1, %c0_i32, %c0_i32_0 : i32, i32, i32
  }
  func.func @transform_12(%arg0: i32, %arg1: i32) -> (i32, i32, i32) {
    %c0_i32 = arith.constant 0 : i32
    %c0_i32_0 = arith.constant 0 : i32
    %c0_i32_1 = arith.constant 0 : i32
    return %arg1, %c0_i32, %c0_i32_0 : i32, i32, i32
  }
  func.func @transform_13(%arg0: i32, %arg1: i32) -> (i32, i32, i32) {
    %c0_i32 = arith.constant 0 : i32
    %c0_i32_0 = arith.constant 0 : i32
    %c0_i32_1 = arith.constant 0 : i32
    return %arg1, %c0_i32, %c0_i32_0 : i32, i32, i32
  }
  func.func @transform_14(%arg0: i32, %arg1: i32) -> (i32, i32, i32) {
    %c0_i32 = arith.constant 0 : i32
    %c0_i32_0 = arith.constant 0 : i32
    %c0_i32_1 = arith.constant 0 : i32
    return %arg1, %c0_i32, %c0_i32_0 : i32, i32, i32
  }
  func.func @transform_15(%arg0: i32, %arg1: i32) -> (i32, i32, i32) {
    %c0_i32 = arith.constant 0 : i32
    %c0_i32_0 = arith.constant 0 : i32
    %c0_i32_1 = arith.constant 0 : i32
    return %arg1, %c0_i32, %c0_i32_0 : i32, i32, i32
  }
  func.func @transform_16(%arg0: i32, %arg1: i32) -> (i32, i32, i32) {
    %c0_i32 = arith.constant 0 : i32
    %c0_i32_0 = arith.constant 0 : i32
    %c0_i32_1 = arith.constant 0 : i32
    return %arg1, %c0_i32, %c0_i32_0 : i32, i32, i32
  }
  func.func @transform_17(%arg0: i32, %arg1: i32) -> (i32, i32, i32) {
    %c0_i32 = arith.constant 0 : i32
    %c0_i32_0 = arith.constant 0 : i32
    %c0_i32_1 = arith.constant 0 : i32
    return %arg1, %c0_i32, %c0_i32_0 : i32, i32, i32
  }
  func.func @transform_18(%arg0: i32, %arg1: i32) -> (i32, i32, i32) {
    %c0_i32 = arith.constant 0 : i32
    %c0_i32_0 = arith.constant 0 : i32
    %c0_i32_1 = arith.constant 0 : i32
    return %arg1, %c0_i32, %c0_i32_0 : i32, i32, i32
  }
  func.func @transform_19(%arg0: i32, %arg1: i32) -> (i32, i32, i32) {
    %c0_i32 = arith.constant 0 : i32
    %c0_i32_0 = arith.constant 0 : i32
    %c0_i32_1 = arith.constant 0 : i32
    return %arg1, %c0_i32, %c0_i32_0 : i32, i32, i32
  }
  func.func @transform_20(%arg0: i32, %arg1: i32) -> (i32, i32, i32) {
    %c0_i32 = arith.constant 0 : i32
    %c0_i32_0 = arith.constant 0 : i32
    %c0_i32_1 = arith.constant 0 : i32
    return %arg1, %c0_i32, %c0_i32_0 : i32, i32, i32
  }
  func.func @transform_21(%arg0: i32, %arg1: i32) -> (i32, i32, i32) {
    %c0_i32 = arith.constant 0 : i32
    %c0_i32_0 = arith.constant 0 : i32
    %c0_i32_1 = arith.constant 0 : i32
    return %arg1, %c0_i32, %c0_i32_0 : i32, i32, i32
  }
  func.func @transform_22(%arg0: i32, %arg1: i32) -> (i32, i32, i32) {
    %c0_i32 = arith.constant 0 : i32
    %c0_i32_0 = arith.constant 0 : i32
    %c0_i32_1 = arith.constant 0 : i32
    return %arg1, %c0_i32, %c0_i32_0 : i32, i32, i32
  }
  func.func @transform_23(%arg0: i32, %arg1: i32) -> (i32, i32, i32) {
    %c0_i32 = arith.constant 0 : i32
    %c0_i32_0 = arith.constant 0 : i32
    %c0_i32_1 = arith.constant 0 : i32
    return %arg1, %c0_i32, %c0_i32_0 : i32, i32, i32
  }
  func.func @transform_24(%arg0: i32, %arg1: i32) -> (i32, i32, i32) {
    %c0_i32 = arith.constant 0 : i32
    %c0_i32_0 = arith.constant 0 : i32
    %c0_i32_1 = arith.constant 0 : i32
    return %arg1, %c0_i32, %c0_i32_0 : i32, i32, i32
  }
  func.func @transform_25(%arg0: i32, %arg1: i32) -> (i32, i32, i32) {
    %c0_i32 = arith.constant 0 : i32
    %c0_i32_0 = arith.constant 0 : i32
    %c0_i32_1 = arith.constant 0 : i32
    return %arg1, %c0_i32, %c0_i32_0 : i32, i32, i32
  }
  func.func @transform_26(%arg0: i32, %arg1: i32) -> (i32, i32, i32) {
    %c0_i32 = arith.constant 0 : i32
    %c0_i32_0 = arith.constant 0 : i32
    %c0_i32_1 = arith.constant 0 : i32
    return %arg1, %c0_i32, %c0_i32_0 : i32, i32, i32
  }
  func.func @transform_27(%arg0: i32, %arg1: i32) -> (i32, i32, i32) {
    %c0_i32 = arith.constant 0 : i32
    %c0_i32_0 = arith.constant 0 : i32
    %c0_i32_1 = arith.constant 0 : i32
    return %arg1, %c0_i32, %c0_i32_0 : i32, i32, i32
  }
  func.func @transform_28(%arg0: i32, %arg1: i32) -> (i32, i32, i32) {
    %c0_i32 = arith.constant 0 : i32
    %c0_i32_0 = arith.constant 0 : i32
    %c0_i32_1 = arith.constant 0 : i32
    return %arg1, %c0_i32, %c0_i32_0 : i32, i32, i32
  }
  func.func @transform_29(%arg0: i32, %arg1: i32) -> (i32, i32) {
    %c0_i32 = arith.constant 0 : i32
    %c0_i32_0 = arith.constant 0 : i32
    %c0_i32_1 = arith.constant 0 : i32
    return %c0_i32, %c0_i32_0 : i32, i32
  }
  func.func @transform_30(%arg0: i32, %arg1: i32) -> (i32, i32) {
    %c0_i32 = arith.constant 0 : i32
    %c0_i32_0 = arith.constant 0 : i32
    %c0_i32_1 = arith.constant 0 : i32
    return %c0_i32, %c0_i32_0 : i32, i32
  }
  func.func @transform_31(%arg0: i32, %arg1: i32) -> (i32, i32, i32) {
    %c0_i32 = arith.constant 0 : i32
    %c0_i32_0 = arith.constant 0 : i32
    %c0_i32_1 = arith.constant 0 : i32
    return %arg0, %c0_i32, %c0_i32_0 : i32, i32, i32
  }
}

</mosaic_0001>

<llo_original>
// kernel: fwd.2
$region0: #{fwd.2}
  #allocation0 [shape = 'u32[]', space=smem, size = 0x4, offset = 0x4, fixed_abs, tag = 'smem constant byte address 0x4 - core index']
  #allocation1 [shape = 'u32[144,128]{1,0:T(1,128)}', space=vmem, size = 0x12000, scoped, tag = 'internal scratch']
  #allocation2 [shape = 'f32[16,32]{1,0:T(8,128)}', space=vmem, size = 0x2000, scoped, tag = 'scratch operand']
  %s0 = inlined_call_operand.vmem [shape: f32[2,16,32], index: 0, kind: input, shape index: {}]
  %s1 = inlined_call_operand.vmem [shape: f32[2,16,32], index: 1, kind: input, shape index: {}]
  %s2 = inlined_call_operand.vmem [shape: f32[2,1,16], index: 2, kind: input, shape index: {}]
  %s3 = inlined_call_operand.vmem [shape: bf16[2,32,96], index: 3, kind: input, shape index: {}]
  %s4 = inlined_call_operand.vmem [shape: f32[2,1,96], index: 4, kind: input, shape index: {}]
  %s5 = inlined_call_operand.vmem [shape: bf16[2,32,32], index: 5, kind: input, shape index: {}]
  %s6 = inlined_call_operand.vmem [shape: f32[2,1,32], index: 6, kind: input, shape index: {}]
  %s7 = inlined_call_operand.vmem [shape: f32[2,1,32], index: 7, kind: input, shape index: {}]
  %s8 = inlined_call_operand.vmem [shape: f32[2,1,32], index: 8, kind: input, shape index: {}]
  %s9 = inlined_call_operand.vmem [shape: bf16[2,32,64], index: 9, kind: input, shape index: {}]
  %s10 = inlined_call_operand.vmem [shape: f32[2,1,64], index: 10, kind: input, shape index: {}]
  %s11 = inlined_call_operand.vmem [shape: bf16[2,64,32], index: 11, kind: input, shape index: {}]
  %s12 = inlined_call_operand.vmem [shape: f32[2,1,32], index: 12, kind: input, shape index: {}]
  %s13 = inlined_call_operand.vmem [shape: f32[2,1,32], index: 13, kind: input, shape index: {}]
  %s14 = inlined_call_operand.vmem [shape: f32[2,1,32], index: 14, kind: input, shape index: {}]
  %s15 = inlined_call_operand.vmem [shape: f32[2,16,32], index: 15, kind: output, shape index: {}]
  %s16 = sld [smem:[#allocation0]]
  $region97: #{fwd.2} parent=0
    _
  %s18 = ssub.s32 1, %s16
  %s19 = scalar_select 0, %s18, %s16
  loop: start=0, step=1, limit=6
  $region2: #{fwd.2} parent=0 // loop_pre_header
    _
  $region3: #{fwd.2} parent=0 // loop_header
    %s21 = sphi 0, %s25
    %p22 = scmp.ge.s32.totalorder %s21, 6
    %s28 = sphi 0, %s40
    %s29 = sphi 0, %s36
    %s30 = sphi 0, %s28
    %s31 = sphi 0, %s29
    %s32 = sphi 0, %s30
    %s33 = sphi 0, %s31
    %s43 = sphi 0, %s45
    %s46 = sphi 0, %s43
    %s47 = sphi 0, %s46
    %s63 = sphi 0, %s47
    %s69 = sphi 0, %s71
    %s72 = sphi 0, %s69
    %s73 = sphi 0, %s72
    %s89 = sphi 0, %s73
    %s95 = sphi 0, %s97
    %s98 = sphi 0, %s95
    %s99 = sphi 0, %s98
    %s115 = sphi 0, %s99
    %s121 = sphi 0, %s123
    %s124 = sphi 0, %s121
    %s125 = sphi 0, %s124
    %s141 = sphi 0, %s125
    %s147 = sphi 0, %s149
    %s150 = sphi 0, %s147
    %s151 = sphi 0, %s150
    %s167 = sphi 0, %s151
    %s173 = sphi 0, %s175
    %s176 = sphi 0, %s173
    %s177 = sphi 0, %s176
    %s193 = sphi 0, %s177
    %s199 = sphi 0, %s201
    %s202 = sphi 0, %s199
    %s203 = sphi 0, %s202
    %s219 = sphi 0, %s203
    %s225 = sphi 0, %s227
    %s228 = sphi 0, %s225
    %s229 = sphi 0, %s228
    %s245 = sphi 0, %s229
    %s251 = sphi 0, %s253
    %s254 = sphi 0, %s251
    %s255 = sphi 0, %s254
    %s271 = sphi 0, %s255
    %s277 = sphi 0, %s279
    %s280 = sphi 0, %s277
    %s281 = sphi 0, %s280
    %s297 = sphi 0, %s281
    %s303 = sphi 0, %s305
    %s306 = sphi 0, %s303
    %s307 = sphi 0, %s306
    %s323 = sphi 0, %s307
    %s329 = sphi 0, %s331
    %s332 = sphi 0, %s329
    %s333 = sphi 0, %s332
    %s349 = sphi 0, %s333
    %s355 = sphi 0, %s357
    %s358 = sphi 0, %s355
    %s359 = sphi 0, %s358
    %s375 = sphi 0, %s359
    %s381 = sphi 0, %s383
    %s384 = sphi 0, %s381
    %s385 = sphi 0, %s384
    %s401 = sphi 0, %s385
    %s407 = sphi 0, %s409
    %s410 = sphi 0, %s407
    %s411 = sphi 0, %s410
    %s427 = sphi 0, %s411
    %s433 = sphi 0, %s435
    %s436 = sphi 0, %s433
    %s437 = sphi 0, %s436
    %s453 = sphi 0, %s437
  $region4: #{fwd.2} parent=0 // loop_header_branch
    %24 = sbr.rel (%p22) target = $region8
  $region5: #{fwd.2} parent=0 // loop_body
    %s26 = ssub.s32 %s21, 1
    %s27 = ssub.s32 %s21, 2
    %s34 = sadd.s32 1, %s29
    %p35 = scmp.ge.s32.totalorder %s34, 2
    %s36 = scalar_select %p35, 0, %s34
    %s37 = sadd.s32 1, %s28
    %s38 = scalar_select %p35, %s37, %s28
    %p39 = scmp.ge.s32.totalorder %s38, 2
    %s40 = scalar_select %p39, 0, %s38
    %s41 = ssub.s32 %s28, %s40
    %p42 = scmp.eq.s32.totalorder %s41, 0
    %s44 = sadd.s32 %s43, 1
    %s45 = scalar_select %p42, %s43, %s44
    %p48 = pneg %p42
    %p49 = scmp.eq.s32.totalorder %s21, 3
    %p50 = por %p48, %p49
    %p51 = scmp.ne.s32.totalorder %s43, %s46
    %p52 = scmp.eq.s32.totalorder %s21, 0
    %p53 = por %p51, %p52
    %p54 = scmp.ne.s32.totalorder %s43, %s46
    %p55 = scmp.eq.s32.totalorder %s26, 3
    %p56 = por %p54, %p55
    %p57 = scmp.ne.s32.totalorder %s46, %s47
    %p58 = scmp.eq.s32.totalorder %s26, 0
    %p59 = por %p57, %p58
    %p60 = scmp.ne.s32.totalorder %s46, %s47
    %p61 = scmp.eq.s32.totalorder %s27, 3
    %p62 = por %p60, %p61
    %p64 = scmp.ne.s32.totalorder %s47, %s63
    %p65 = scmp.eq.s32.totalorder %s27, 0
    %p66 = por %p64, %p65
    %s67 = ssub.s32 %s28, %s40
    %p68 = scmp.eq.s32.totalorder %s67, 0
    %s70 = sadd.s32 %s69, 1
    %s71 = scalar_select %p68, %s69, %s70
    %p74 = pneg %p68
    %p75 = scmp.eq.s32.totalorder %s21, 3
    %p76 = por %p74, %p75
    %p77 = scmp.ne.s32.totalorder %s69, %s72
    %p78 = scmp.eq.s32.totalorder %s21, 0
    %p79 = por %p77, %p78
    %p80 = scmp.ne.s32.totalorder %s69, %s72
    %p81 = scmp.eq.s32.totalorder %s26, 3
    %p82 = por %p80, %p81
    %p83 = scmp.ne.s32.totalorder %s72, %s73
    %p84 = scmp.eq.s32.totalorder %s26, 0
    %p85 = por %p83, %p84
    %p86 = scmp.ne.s32.totalorder %s72, %s73
    %p87 = scmp.eq.s32.totalorder %s27, 3
    %p88 = por %p86, %p87
    %p90 = scmp.ne.s32.totalorder %s73, %s89
    %p91 = scmp.eq.s32.totalorder %s27, 0
    %p92 = por %p90, %p91
    %s93 = ssub.s32 %s28, %s40
    %p94 = scmp.eq.s32.totalorder %s93, 0
    %s96 = sadd.s32 %s95, 1
    %s97 = scalar_select %p94, %s95, %s96
    %p100 = pneg %p94
    %p101 = scmp.eq.s32.totalorder %s21, 3
    %p102 = por %p100, %p101
    %p103 = scmp.ne.s32.totalorder %s95, %s98
    %p104 = scmp.eq.s32.totalorder %s21, 0
    %p105 = por %p103, %p104
    %p106 = scmp.ne.s32.totalorder %s95, %s98
    %p107 = scmp.eq.s32.totalorder %s26, 3
    %p108 = por %p106, %p107
    %p109 = scmp.ne.s32.totalorder %s98, %s99
    %p110 = scmp.eq.s32.totalorder %s26, 0
    %p111 = por %p109, %p110
    %p112 = scmp.ne.s32.totalorder %s98, %s99
    %p113 = scmp.eq.s32.totalorder %s27, 3
    %p114 = por %p112, %p113
    %p116 = scmp.ne.s32.totalorder %s99, %s115
    %p117 = scmp.eq.s32.totalorder %s27, 0
    %p118 = por %p116, %p117
    %s119 = ssub.s32 %s29, %s36
    %p120 = scmp.eq.s32.totalorder %s119, 0
    %s122 = sadd.s32 %s121, 1
    %s123 = scalar_select %p120, %s121, %s122
    %p126 = pneg %p120
    %p127 = scmp.eq.s32.totalorder %s21, 3
    %p128 = por %p126, %p127
    %p129 = scmp.ne.s32.totalorder %s121, %s124
    %p130 = scmp.eq.s32.totalorder %s21, 0
    %p131 = por %p129, %p130
    %p132 = scmp.ne.s32.totalorder %s121, %s124
    %p133 = scmp.eq.s32.totalorder %s26, 3
    %p134 = por %p132, %p133
    %p135 = scmp.ne.s32.totalorder %s124, %s125
    %p136 = scmp.eq.s32.totalorder %s26, 0
    %p137 = por %p135, %p136
    %p138 = scmp.ne.s32.totalorder %s124, %s125
    %p139 = scmp.eq.s32.totalorder %s27, 3
    %p140 = por %p138, %p139
    %p142 = scmp.ne.s32.totalorder %s125, %s141
    %p143 = scmp.eq.s32.totalorder %s27, 0
    %p144 = por %p142, %p143
    %s145 = ssub.s32 %s29, %s36
    %p146 = scmp.eq.s32.totalorder %s145, 0
    %s148 = sadd.s32 %s147, 1
    %s149 = scalar_select %p146, %s147, %s148
    %p152 = pneg %p146
    %p153 = scmp.eq.s32.totalorder %s21, 3
    %p154 = por %p152, %p153
    %p155 = scmp.ne.s32.totalorder %s147, %s150
    %p156 = scmp.eq.s32.totalorder %s21, 0
    %p157 = por %p155, %p156
    %p158 = scmp.ne.s32.totalorder %s147, %s150
    %p159 = scmp.eq.s32.totalorder %s26, 3
    %p160 = por %p158, %p159
    %p161 = scmp.ne.s32.totalorder %s150, %s151
    %p162 = scmp.eq.s32.totalorder %s26, 0
    %p163 = por %p161, %p162
    %p164 = scmp.ne.s32.totalorder %s150, %s151
    %p165 = scmp.eq.s32.totalorder %s27, 3
    %p166 = por %p164, %p165
    %p168 = scmp.ne.s32.totalorder %s151, %s167
    %p169 = scmp.eq.s32.totalorder %s27, 0
    %p170 = por %p168, %p169
    %s171 = ssub.s32 %s29, %s36
    %p172 = scmp.eq.s32.totalorder %s171, 0
    %s174 = sadd.s32 %s173, 1
    %s175 = scalar_select %p172, %s173, %s174
    %p178 = pneg %p172
    %p179 = scmp.eq.s32.totalorder %s21, 3
    %p180 = por %p178, %p179
    %p181 = scmp.ne.s32.totalorder %s173, %s176
    %p182 = scmp.eq.s32.totalorder %s21, 0
    %p183 = por %p181, %p182
    %p184 = scmp.ne.s32.totalorder %s173, %s176
    %p185 = scmp.eq.s32.totalorder %s26, 3
    %p186 = por %p184, %p185
    %p187 = scmp.ne.s32.totalorder %s176, %s177
    %p188 = scmp.eq.s32.totalorder %s26, 0
    %p189 = por %p187, %p188
    %p190 = scmp.ne.s32.totalorder %s176, %s177
    %p191 = scmp.eq.s32.totalorder %s27, 3
    %p192 = por %p190, %p191
    %p194 = scmp.ne.s32.totalorder %s177, %s193
    %p195 = scmp.eq.s32.totalorder %s27, 0
    %p196 = por %p194, %p195
    %s197 = ssub.s32 %s29, %s36
    %p198 = scmp.eq.s32.totalorder %s197, 0
    %s200 = sadd.s32 %s199, 1
    %s201 = scalar_select %p198, %s199, %s200
    %p204 = pneg %p198
    %p205 = scmp.eq.s32.totalorder %s21, 3
    %p206 = por %p204, %p205
    %p207 = scmp.ne.s32.totalorder %s199, %s202
    %p208 = scmp.eq.s32.totalorder %s21, 0
    %p209 = por %p207, %p208
    %p210 = scmp.ne.s32.totalorder %s199, %s202
    %p211 = scmp.eq.s32.totalorder %s26, 3
    %p212 = por %p210, %p211
    %p213 = scmp.ne.s32.totalorder %s202, %s203
    %p214 = scmp.eq.s32.totalorder %s26, 0
    %p215 = por %p213, %p214
    %p216 = scmp.ne.s32.totalorder %s202, %s203
    %p217 = scmp.eq.s32.totalorder %s27, 3
    %p218 = por %p216, %p217
    %p220 = scmp.ne.s32.totalorder %s203, %s219
    %p221 = scmp.eq.s32.totalorder %s27, 0
    %p222 = por %p220, %p221
    %s223 = ssub.s32 %s29, %s36
    %p224 = scmp.eq.s32.totalorder %s223, 0
    %s226 = sadd.s32 %s225, 1
    %s227 = scalar_select %p224, %s225, %s226
    %p230 = pneg %p224
    %p231 = scmp.eq.s32.totalorder %s21, 3
    %p232 = por %p230, %p231
    %p233 = scmp.ne.s32.totalorder %s225, %s228
    %p234 = scmp.eq.s32.totalorder %s21, 0
    %p235 = por %p233, %p234
    %p236 = scmp.ne.s32.totalorder %s225, %s228
    %p237 = scmp.eq.s32.totalorder %s26, 3
    %p238 = por %p236, %p237
    %p239 = scmp.ne.s32.totalorder %s228, %s229
    %p240 = scmp.eq.s32.totalorder %s26, 0
    %p241 = por %p239, %p240
    %p242 = scmp.ne.s32.totalorder %s228, %s229
    %p243 = scmp.eq.s32.totalorder %s27, 3
    %p244 = por %p242, %p243
    %p246 = scmp.ne.s32.totalorder %s229, %s245
    %p247 = scmp.eq.s32.totalorder %s27, 0
    %p248 = por %p246, %p247
    %s249 = ssub.s32 %s29, %s36
    %p250 = scmp.eq.s32.totalorder %s249, 0
    %s252 = sadd.s32 %s251, 1
    %s253 = scalar_select %p250, %s251, %s252
    %p256 = pneg %p250
    %p257 = scmp.eq.s32.totalorder %s21, 3
    %p258 = por %p256, %p257
    %p259 = scmp.ne.s32.totalorder %s251, %s254
    %p260 = scmp.eq.s32.totalorder %s21, 0
    %p261 = por %p259, %p260
    %p262 = scmp.ne.s32.totalorder %s251, %s254
    %p263 = scmp.eq.s32.totalorder %s26, 3
    %p264 = por %p262, %p263
    %p265 = scmp.ne.s32.totalorder %s254, %s255
    %p266 = scmp.eq.s32.totalorder %s26, 0
    %p267 = por %p265, %p266
    %p268 = scmp.ne.s32.totalorder %s254, %s255
    %p269 = scmp.eq.s32.totalorder %s27, 3
    %p270 = por %p268, %p269
    %p272 = scmp.ne.s32.totalorder %s255, %s271
    %p273 = scmp.eq.s32.totalorder %s27, 0
    %p274 = por %p272, %p273
    %s275 = ssub.s32 %s29, %s36
    %p276 = scmp.eq.s32.totalorder %s275, 0
    %s278 = sadd.s32 %s277, 1
    %s279 = scalar_select %p276, %s277, %s278
    %p282 = pneg %p276
    %p283 = scmp.eq.s32.totalorder %s21, 3
    %p284 = por %p282, %p283
    %p285 = scmp.ne.s32.totalorder %s277, %s280
    %p286 = scmp.eq.s32.totalorder %s21, 0
    %p287 = por %p285, %p286
    %p288 = scmp.ne.s32.totalorder %s277, %s280
    %p289 = scmp.eq.s32.totalorder %s26, 3
    %p290 = por %p288, %p289
    %p291 = scmp.ne.s32.totalorder %s280, %s281
    %p292 = scmp.eq.s32.totalorder %s26, 0
    %p293 = por %p291, %p292
    %p294 = scmp.ne.s32.totalorder %s280, %s281
    %p295 = scmp.eq.s32.totalorder %s27, 3
    %p296 = por %p294, %p295
    %p298 = scmp.ne.s32.totalorder %s281, %s297
    %p299 = scmp.eq.s32.totalorder %s27, 0
    %p300 = por %p298, %p299
    %s301 = ssub.s32 %s29, %s36
    %p302 = scmp.eq.s32.totalorder %s301, 0
    %s304 = sadd.s32 %s303, 1
    %s305 = scalar_select %p302, %s303, %s304
    %p308 = pneg %p302
    %p309 = scmp.eq.s32.totalorder %s21, 3
    %p310 = por %p308, %p309
    %p311 = scmp.ne.s32.totalorder %s303, %s306
    %p312 = scmp.eq.s32.totalorder %s21, 0
    %p313 = por %p311, %p312
    %p314 = scmp.ne.s32.totalorder %s303, %s306
    %p315 = scmp.eq.s32.totalorder %s26, 3
    %p316 = por %p314, %p315
    %p317 = scmp.ne.s32.totalorder %s306, %s307
    %p318 = scmp.eq.s32.totalorder %s26, 0
    %p319 = por %p317, %p318
    %p320 = scmp.ne.s32.totalorder %s306, %s307
    %p321 = scmp.eq.s32.totalorder %s27, 3
    %p322 = por %p320, %p321
    %p324 = scmp.ne.s32.totalorder %s307, %s323
    %p325 = scmp.eq.s32.totalorder %s27, 0
    %p326 = por %p324, %p325
    %s327 = ssub.s32 %s29, %s36
    %p328 = scmp.eq.s32.totalorder %s327, 0
    %s330 = sadd.s32 %s329, 1
    %s331 = scalar_select %p328, %s329, %s330
    %p334 = pneg %p328
    %p335 = scmp.eq.s32.totalorder %s21, 3
    %p336 = por %p334, %p335
    %p337 = scmp.ne.s32.totalorder %s329, %s332
    %p338 = scmp.eq.s32.totalorder %s21, 0
    %p339 = por %p337, %p338
    %p340 = scmp.ne.s32.totalorder %s329, %s332
    %p341 = scmp.eq.s32.totalorder %s26, 3
    %p342 = por %p340, %p341
    %p343 = scmp.ne.s32.totalorder %s332, %s333
    %p344 = scmp.eq.s32.totalorder %s26, 0
    %p345 = por %p343, %p344
    %p346 = scmp.ne.s32.totalorder %s332, %s333
    %p347 = scmp.eq.s32.totalorder %s27, 3
    %p348 = por %p346, %p347
    %p350 = scmp.ne.s32.totalorder %s333, %s349
    %p351 = scmp.eq.s32.totalorder %s27, 0
    %p352 = por %p350, %p351
    %s353 = ssub.s32 %s29, %s36
    %p354 = scmp.eq.s32.totalorder %s353, 0
    %s356 = sadd.s32 %s355, 1
    %s357 = scalar_select %p354, %s355, %s356
    %p360 = pneg %p354
    %p361 = scmp.eq.s32.totalorder %s21, 3
    %p362 = por %p360, %p361
    %p363 = scmp.ne.s32.totalorder %s355, %s358
    %p364 = scmp.eq.s32.totalorder %s21, 0
    %p365 = por %p363, %p364
    %p366 = scmp.ne.s32.totalorder %s355, %s358
    %p367 = scmp.eq.s32.totalorder %s26, 3
    %p368 = por %p366, %p367
    %p369 = scmp.ne.s32.totalorder %s358, %s359
    %p370 = scmp.eq.s32.totalorder %s26, 0
    %p371 = por %p369, %p370
    %p372 = scmp.ne.s32.totalorder %s358, %s359
    %p373 = scmp.eq.s32.totalorder %s27, 3
    %p374 = por %p372, %p373
    %p376 = scmp.ne.s32.totalorder %s359, %s375
    %p377 = scmp.eq.s32.totalorder %s27, 0
    %p378 = por %p376, %p377
    %s379 = ssub.s32 %s29, %s36
    %p380 = scmp.eq.s32.totalorder %s379, 0
    %s382 = sadd.s32 %s381, 1
    %s383 = scalar_select %p380, %s381, %s382
    %p386 = pneg %p380
    %p387 = scmp.eq.s32.totalorder %s21, 3
    %p388 = por %p386, %p387
    %p389 = scmp.ne.s32.totalorder %s381, %s384
    %p390 = scmp.eq.s32.totalorder %s21, 0
    %p391 = por %p389, %p390
    %p392 = scmp.ne.s32.totalorder %s381, %s384
    %p393 = scmp.eq.s32.totalorder %s26, 3
    %p394 = por %p392, %p393
    %p395 = scmp.ne.s32.totalorder %s384, %s385
    %p396 = scmp.eq.s32.totalorder %s26, 0
    %p397 = por %p395, %p396
    %p398 = scmp.ne.s32.totalorder %s384, %s385
    %p399 = scmp.eq.s32.totalorder %s27, 3
    %p400 = por %p398, %p399
    %p402 = scmp.ne.s32.totalorder %s385, %s401
    %p403 = scmp.eq.s32.totalorder %s27, 0
    %p404 = por %p402, %p403
    %s405 = ssub.s32 %s29, %s36
    %p406 = scmp.eq.s32.totalorder %s405, 0
    %s408 = sadd.s32 %s407, 1
    %s409 = scalar_select %p406, %s407, %s408
    %p412 = pneg %p406
    %p413 = scmp.eq.s32.totalorder %s21, 3
    %p414 = por %p412, %p413
    %p415 = scmp.ne.s32.totalorder %s407, %s410
    %p416 = scmp.eq.s32.totalorder %s21, 0
    %p417 = por %p415, %p416
    %p418 = scmp.ne.s32.totalorder %s407, %s410
    %p419 = scmp.eq.s32.totalorder %s26, 3
    %p420 = por %p418, %p419
    %p421 = scmp.ne.s32.totalorder %s410, %s411
    %p422 = scmp.eq.s32.totalorder %s26, 0
    %p423 = por %p421, %p422
    %p424 = scmp.ne.s32.totalorder %s410, %s411
    %p425 = scmp.eq.s32.totalorder %s27, 3
    %p426 = por %p424, %p425
    %p428 = scmp.ne.s32.totalorder %s411, %s427
    %p429 = scmp.eq.s32.totalorder %s27, 0
    %p430 = por %p428, %p429
    %s431 = ssub.s32 %s28, %s40
    %p432 = scmp.eq.s32.totalorder %s431, 0
    %s434 = sadd.s32 %s433, 1
    %s435 = scalar_select %p432, %s433, %s434
    %p438 = pneg %p432
    %p439 = scmp.eq.s32.totalorder %s21, 3
    %p440 = por %p438, %p439
    %p441 = scmp.ne.s32.totalorder %s433, %s436
    %p442 = scmp.eq.s32.totalorder %s21, 0
    %p443 = por %p441, %p442
    %p444 = scmp.ne.s32.totalorder %s433, %s436
    %p445 = scmp.eq.s32.totalorder %s26, 3
    %p446 = por %p444, %p445
    %p447 = scmp.ne.s32.totalorder %s436, %s437
    %p448 = scmp.eq.s32.totalorder %s26, 0
    %p449 = por %p447, %p448
    %p450 = scmp.ne.s32.totalorder %s436, %s437
    %p451 = scmp.eq.s32.totalorder %s27, 3
    %p452 = por %p450, %p451
    %p454 = scmp.ne.s32.totalorder %s437, %s453
    %p455 = scmp.eq.s32.totalorder %s27, 0
    %p456 = por %p454, %p455
    %p457 = scmp.le.s32.totalorder 1, %s21
    %p458 = scmp.lt.s32.totalorder %s21, 5
    %p459 = pnand %p457, %p458
    %p460 = pneg %p459
    // Predicated region
    $region9: #{fwd.2} parent=5 // pred_check
      _
    $region10: #{fwd.2} parent=5 // pred_check_branch
      %462 = sbr.rel (%p459) target = $region12
    $region11: #{fwd.2} parent=5 // pred_region
      %s463 = ssub.s32 %s21, 1
    $region12: #{fwd.2} parent=5 // pred_fallthru
      _
    %p464 = scmp.lt.s32.totalorder %s21, 4
    // Predicated region
    $region13: #{fwd.2} parent=5 // pred_check
      %p465 = pneg %p464
    $region14: #{fwd.2} parent=5 // pred_check_branch
      %467 = sbr.rel (%p465) target = $region16
    $region15: #{fwd.2} parent=5 // pred_region
      // Predicated region
      $region17: #{fwd.2} parent=15 // pred_check
        %p468 = pneg %p53
      $region18: #{fwd.2} parent=15 // pred_check_branch
        %470 = sbr.rel (%p468) target = $region20
      $region19: #{fwd.2} parent=15 // pred_region
        %p471 = scmp.lt.s32.totalorder %s28, 1
        %s472 = scalar_select %p471, %s28, 1
        %s473 = smul.addr %s472, 2
        %s474 = smul.addr %s473, 8
        %s475 = scalar_lea.vmem %s0, %s474
      $region20: #{fwd.2} parent=15 // pred_fallthru
        _
      // Predicated region
      $region21: #{fwd.2} parent=15 // pred_check
        %p476 = pneg %p79
      $region22: #{fwd.2} parent=15 // pred_check_branch
        %478 = sbr.rel (%p476) target = $region24
      $region23: #{fwd.2} parent=15 // pred_region
        %p479 = scmp.lt.s32.totalorder %s28, 1
        %s480 = scalar_select %p479, %s28, 1
        %s481 = smul.addr %s480, 2
        %s482 = smul.addr %s481, 8
        %s483 = scalar_lea.vmem %s1, %s482
      $region24: #{fwd.2} parent=15 // pred_fallthru
        _
      // Predicated region
      $region25: #{fwd.2} parent=15 // pred_check
        %p484 = pneg %p105
      $region26: #{fwd.2} parent=15 // pred_check_branch
        %486 = sbr.rel (%p484) target = $region28
      $region27: #{fwd.2} parent=15 // pred_region
        %p487 = scmp.lt.s32.totalorder %s28, 1
        %s488 = scalar_select %p487, %s28, 1
        %s489 = scalar_lea.vmem %s2, %s488
      $region28: #{fwd.2} parent=15 // pred_fallthru
        _
      // Predicated region
      $region29: #{fwd.2} parent=15 // pred_check
        %p490 = pneg %p131
      $region30: #{fwd.2} parent=15 // pred_check_branch
        %492 = sbr.rel (%p490) target = $region32
      $region31: #{fwd.2} parent=15 // pred_region
        %p493 = scmp.lt.s32.totalorder %s29, 1
        %s494 = scalar_select %p493, %s29, 1
        %s495 = smul.addr %s494, 4
        %s496 = smul.addr %s495, 4
        %s497 = scalar_lea.vmem %s3, %s496
      $region32: #{fwd.2} parent=15 // pred_fallthru
        _
      // Predicated region
      $region33: #{fwd.2} parent=15 // pred_check
        %p498 = pneg %p157
      $region34: #{fwd.2} parent=15 // pred_check_branch
        %500 = sbr.rel (%p498) target = $region36
      $region35: #{fwd.2} parent=15 // pred_region
        %p501 = scmp.lt.s32.totalorder %s29, 1
        %s502 = scalar_select %p501, %s29, 1
        %s503 = scalar_lea.vmem %s4, %s502
      $region36: #{fwd.2} parent=15 // pred_fallthru
        _
      // Predicated region
      $region37: #{fwd.2} parent=15 // pred_check
        %p504 = pneg %p183
      $region38: #{fwd.2} parent=15 // pred_check_branch
        %506 = sbr.rel (%p504) target = $region40
      $region39: #{fwd.2} parent=15 // pred_region
        %p507 = scmp.lt.s32.totalorder %s29, 1
        %s508 = scalar_select %p507, %s29, 1
        %s509 = smul.addr %s508, 4
        %s510 = smul.addr %s509, 4
        %s511 = scalar_lea.vmem %s5, %s510
      $region40: #{fwd.2} parent=15 // pred_fallthru
        _
      // Predicated region
      $region41: #{fwd.2} parent=15 // pred_check
        %p512 = pneg %p209
      $region42: #{fwd.2} parent=15 // pred_check_branch
        %514 = sbr.rel (%p512) target = $region44
      $region43: #{fwd.2} parent=15 // pred_region
        %p515 = scmp.lt.s32.totalorder %s29, 1
        %s516 = scalar_select %p515, %s29, 1
        %s517 = scalar_lea.vmem %s6, %s516
      $region44: #{fwd.2} parent=15 // pred_fallthru
        _
      // Predicated region
      $region45: #{fwd.2} parent=15 // pred_check
        %p518 = pneg %p235
      $region46: #{fwd.2} parent=15 // pred_check_branch
        %520 = sbr.rel (%p518) target = $region48
      $region47: #{fwd.2} parent=15 // pred_region
        %p521 = scmp.lt.s32.totalorder %s29, 1
        %s522 = scalar_select %p521, %s29, 1
        %s523 = scalar_lea.vmem %s7, %s522
      $region48: #{fwd.2} parent=15 // pred_fallthru
        _
      // Predicated region
      $region49: #{fwd.2} parent=15 // pred_check
        %p524 = pneg %p261
      $region50: #{fwd.2} parent=15 // pred_check_branch
        %526 = sbr.rel (%p524) target = $region52
      $region51: #{fwd.2} parent=15 // pred_region
        %p527 = scmp.lt.s32.totalorder %s29, 1
        %s528 = scalar_select %p527, %s29, 1
        %s529 = scalar_lea.vmem %s8, %s528
      $region52: #{fwd.2} parent=15 // pred_fallthru
        _
      // Predicated region
      $region53: #{fwd.2} parent=15 // pred_check
        %p530 = pneg %p287
      $region54: #{fwd.2} parent=15 // pred_check_branch
        %532 = sbr.rel (%p530) target = $region56
      $region55: #{fwd.2} parent=15 // pred_region
        %p533 = scmp.lt.s32.totalorder %s29, 1
        %s534 = scalar_select %p533, %s29, 1
        %s535 = smul.addr %s534, 4
        %s536 = smul.addr %s535, 4
        %s537 = scalar_lea.vmem %s9, %s536
      $region56: #{fwd.2} parent=15 // pred_fallthru
        _
      // Predicated region
      $region57: #{fwd.2} parent=15 // pred_check
        %p538 = pneg %p313
      $region58: #{fwd.2} parent=15 // pred_check_branch
        %540 = sbr.rel (%p538) target = $region60
      $region59: #{fwd.2} parent=15 // pred_region
        %p541 = scmp.lt.s32.totalorder %s29, 1
        %s542 = scalar_select %p541, %s29, 1
        %s543 = scalar_lea.vmem %s10, %s542
      $region60: #{fwd.2} parent=15 // pred_fallthru
        _
      // Predicated region
      $region61: #{fwd.2} parent=15 // pred_check
        %p544 = pneg %p339
      $region62: #{fwd.2} parent=15 // pred_check_branch
        %546 = sbr.rel (%p544) target = $region64
      $region63: #{fwd.2} parent=15 // pred_region
        %p547 = scmp.lt.s32.totalorder %s29, 1
        %s548 = scalar_select %p547, %s29, 1
        %s549 = smul.addr %s548, 8
        %s550 = smul.addr %s549, 4
        %s551 = scalar_lea.vmem %s11, %s550
      $region64: #{fwd.2} parent=15 // pred_fallthru
        _
      // Predicated region
      $region65: #{fwd.2} parent=15 // pred_check
        %p552 = pneg %p365
      $region66: #{fwd.2} parent=15 // pred_check_branch
        %554 = sbr.rel (%p552) target = $region68
      $region67: #{fwd.2} parent=15 // pred_region
        %p555 = scmp.lt.s32.totalorder %s29, 1
        %s556 = scalar_select %p555, %s29, 1
        %s557 = scalar_lea.vmem %s12, %s556
      $region68: #{fwd.2} parent=15 // pred_fallthru
        _
      // Predicated region
      $region69: #{fwd.2} parent=15 // pred_check
        %p558 = pneg %p391
      $region70: #{fwd.2} parent=15 // pred_check_branch
        %560 = sbr.rel (%p558) target = $region72
      $region71: #{fwd.2} parent=15 // pred_region
        %p561 = scmp.lt.s32.totalorder %s29, 1
        %s562 = scalar_select %p561, %s29, 1
        %s563 = scalar_lea.vmem %s13, %s562
      $region72: #{fwd.2} parent=15 // pred_fallthru
        _
      // Predicated region
      $region73: #{fwd.2} parent=15 // pred_check
        %p564 = pneg %p417
      $region74: #{fwd.2} parent=15 // pred_check_branch
        %566 = sbr.rel (%p564) target = $region76
      $region75: #{fwd.2} parent=15 // pred_region
        %p567 = scmp.lt.s32.totalorder %s29, 1
        %s568 = scalar_select %p567, %s29, 1
        %s569 = scalar_lea.vmem %s14, %s568
      $region76: #{fwd.2} parent=15 // pred_fallthru
        _
    $region16: #{fwd.2} parent=5 // pred_fallthru
      _
    %p570 = scmp.le.s32.totalorder 1, %s21
    %p571 = scmp.lt.s32.totalorder %s21, 5
    %p572 = pnand %p570, %p571
    %p573 = pneg %p572
    // Predicated region
    $region77: #{fwd.2} parent=5 // pred_check
      _
    $region78: #{fwd.2} parent=5 // pred_check_branch
      %575 = sbr.rel (%p572) target = $region80
    $region79: #{fwd.2} parent=5 // pred_region
      %s576 = ssub.s32 %s21, 1
      %p577 = scmp.lt.s32.totalorder %s30, 1
      %s578 = scalar_select %p577, %s30, 1
      %s579 = smul.addr %s578, 2
      %s580 = smul.addr %s579, 8
      %s581 = scalar_lea.vmem %s0, %s580
      %p582 = pneg %p59
      %p583 = pneg %p56
      %p584 = scmp.lt.s32.totalorder %s30, 1
      %s585 = scalar_select %p584, %s30, 1
      %s586 = smul.addr %s585, 2
      %s587 = smul.addr %s586, 8
      %s588 = scalar_lea.vmem %s1, %s587
      %p589 = pneg %p85
      %p590 = pneg %p82
      %p591 = scmp.lt.s32.totalorder %s30, 1
      %s592 = scalar_select %p591, %s30, 1
      %s593 = scalar_lea.vmem %s2, %s592
      %p594 = pneg %p111
      %p595 = pneg %p108
      %p596 = scmp.lt.s32.totalorder %s31, 1
      %s597 = scalar_select %p596, %s31, 1
      %s598 = smul.addr %s597, 4
      %s599 = smul.addr %s598, 4
      %s600 = scalar_lea.vmem %s3, %s599
      %p601 = pneg %p137
      %p602 = pneg %p134
      %p603 = scmp.lt.s32.totalorder %s31, 1
      %s604 = scalar_select %p603, %s31, 1
      %s605 = scalar_lea.vmem %s4, %s604
      %p606 = pneg %p163
      %p607 = pneg %p160
      %p608 = scmp.lt.s32.totalorder %s31, 1
      %s609 = scalar_select %p608, %s31, 1
      %s610 = smul.addr %s609, 4
      %s611 = smul.addr %s610, 4
      %s612 = scalar_lea.vmem %s5, %s611
      %p613 = pneg %p189
      %p614 = pneg %p186
      %p615 = scmp.lt.s32.totalorder %s31, 1
      %s616 = scalar_select %p615, %s31, 1
      %s617 = scalar_lea.vmem %s6, %s616
      %p618 = pneg %p215
      %p619 = pneg %p212
      %p620 = scmp.lt.s32.totalorder %s31, 1
      %s621 = scalar_select %p620, %s31, 1
      %s622 = scalar_lea.vmem %s7, %s621
      %p623 = pneg %p241
      %p624 = pneg %p238
      %p625 = scmp.lt.s32.totalorder %s31, 1
      %s626 = scalar_select %p625, %s31, 1
      %s627 = scalar_lea.vmem %s8, %s626
      %p628 = pneg %p267
      %p629 = pneg %p264
      %p630 = scmp.lt.s32.totalorder %s31, 1
      %s631 = scalar_select %p630, %s31, 1
      %s632 = smul.addr %s631, 4
      %s633 = smul.addr %s632, 4
      %s634 = scalar_lea.vmem %s9, %s633
      %p635 = pneg %p293
      %p636 = pneg %p290
      %p637 = scmp.lt.s32.totalorder %s31, 1
      %s638 = scalar_select %p637, %s31, 1
      %s639 = scalar_lea.vmem %s10, %s638
      %p640 = pneg %p319
      %p641 = pneg %p316
      %p642 = scmp.lt.s32.totalorder %s31, 1
      %s643 = scalar_select %p642, %s31, 1
      %s644 = smul.addr %s643, 8
      %s645 = smul.addr %s644, 4
      %s646 = scalar_lea.vmem %s11, %s645
      %p647 = pneg %p345
      %p648 = pneg %p342
      %p649 = scmp.lt.s32.totalorder %s31, 1
      %s650 = scalar_select %p649, %s31, 1
      %s651 = scalar_lea.vmem %s12, %s650
      %p652 = pneg %p371
      %p653 = pneg %p368
      %p654 = scmp.lt.s32.totalorder %s31, 1
      %s655 = scalar_select %p654, %s31, 1
      %s656 = scalar_lea.vmem %s13, %s655
      %p657 = pneg %p397
      %p658 = pneg %p394
      %p659 = scmp.lt.s32.totalorder %s31, 1
      %s660 = scalar_select %p659, %s31, 1
      %s661 = scalar_lea.vmem %s14, %s660
      %p662 = pneg %p423
      %p663 = pneg %p420
      %p664 = pneg %p449
      %p665 = pneg %p446
      %p666 = scmp.lt.s32.totalorder %s30, 1
      %s667 = scalar_select %p666, %s30, 1
      %s668 = smul.addr %s667, 2
      %s669 = smul.addr %s668, 8
      %s670 = scalar_lea.vmem %s15, %s669
      %p671 = scmp.lt.s32.totalorder %s30, 1
      %s672 = scalar_select %p671, %s30, 1
      %s673 = smul.addr %s672, 2
      %s674 = smul.addr %s673, 8
      %s675 = scalar_lea.vmem %s0, %s674
      %p676 = scmp.lt.s32.totalorder %s30, 1
      %s677 = scalar_select %p676, %s30, 1
      %s678 = smul.addr %s677, 2
      %s679 = smul.addr %s678, 8
      %s680 = scalar_lea.vmem %s1, %s679
      %p681 = scmp.lt.s32.totalorder %s30, 1
      %s682 = scalar_select %p681, %s30, 1
      %s683 = scalar_lea.vmem %s2, %s682
      %p684 = scmp.lt.s32.totalorder %s31, 1
      %s685 = scalar_select %p684, %s31, 1
      %s686 = smul.addr %s685, 4
      %s687 = smul.addr %s686, 4
      %s688 = scalar_lea.vmem %s3, %s687
      %p689 = scmp.lt.s32.totalorder %s31, 1
      %s690 = scalar_select %p689, %s31, 1
      %s691 = scalar_lea.vmem %s4, %s690
      %p692 = scmp.lt.s32.totalorder %s31, 1
      %s693 = scalar_select %p692, %s31, 1
      %s694 = smul.addr %s693, 4
      %s695 = smul.addr %s694, 4
      %s696 = scalar_lea.vmem %s5, %s695
      %p697 = scmp.lt.s32.totalorder %s31, 1
      %s698 = scalar_select %p697, %s31, 1
      %s699 = scalar_lea.vmem %s6, %s698
      %p700 = scmp.lt.s32.totalorder %s31, 1
      %s701 = scalar_select %p700, %s31, 1
      %s702 = scalar_lea.vmem %s7, %s701
      %p703 = scmp.lt.s32.totalorder %s31, 1
      %s704 = scalar_select %p703, %s31, 1
      %s705 = scalar_lea.vmem %s8, %s704
      %p706 = scmp.lt.s32.totalorder %s31, 1
      %s707 = scalar_select %p706, %s31, 1
      %s708 = smul.addr %s707, 4
      %s709 = smul.addr %s708, 4
      %s710 = scalar_lea.vmem %s9, %s709
      %p711 = scmp.lt.s32.totalorder %s31, 1
      %s712 = scalar_select %p711, %s31, 1
      %s713 = scalar_lea.vmem %s10, %s712
      %p714 = scmp.lt.s32.totalorder %s31, 1
      %s715 = scalar_select %p714, %s31, 1
      %s716 = smul.addr %s715, 8
      %s717 = smul.addr %s716, 4
      %s718 = scalar_lea.vmem %s11, %s717
      %p719 = scmp.lt.s32.totalorder %s31, 1
      %s720 = scalar_select %p719, %s31, 1
      %s721 = scalar_lea.vmem %s12, %s720
      %p722 = scmp.lt.s32.totalorder %s31, 1
      %s723 = scalar_select %p722, %s31, 1
      %s724 = scalar_lea.vmem %s13, %s723
      %p725 = scmp.lt.s32.totalorder %s31, 1
      %s726 = scalar_select %p725, %s31, 1
      %s727 = scalar_lea.vmem %s14, %s726
      %p728 = scmp.lt.s32.totalorder %s30, 1
      %s729 = scalar_select %p728, %s30, 1
      %s730 = smul.addr %s729, 2
      %s731 = smul.addr %s730, 8
      %s732 = scalar_lea.vmem %s15, %s731
      %p734 = scmp.eq.s32.totalorder %s31, 0
      // Predicated region
      $region81: #{fwd.2} parent=79 // pred_check
        %p735 = pneg %p734
      $region82: #{fwd.2} parent=79 // pred_check_branch
        %737 = sbr.rel (%p735) target = $region84
      $region83: #{fwd.2} parent=79 // pred_region
        %v738 = vld [vmem:[%s675] sm:$0xff]
        %v739 = vld [vmem:[%s675 + $0x8] sm:$0xff]
        %vm740 = vcmask 261120
        %741 = vst.msk [vmem:[%s732] sm:$0xff] %vm740, %v738
        %742 = vst.msk [vmem:[%s732 + $0x8] sm:$0xff] %vm740, %v739
      $region84: #{fwd.2} parent=79 // pred_fallthru
        _
      %v743 = vld [vmem:[%s732] sm:$0xff]
      %v744 = vld [vmem:[%s732 + $0x8] sm:$0xff]
      %v745 = vld [vmem:[%s680] sm:$0xff]
      %v746 = vld [vmem:[%s680 + $0x8] sm:$0xff]
      %v747 = vld [vmem:[%s683] sm:$0x1]
      %v748 = vadd.f32 %v743, %v745
      %v749 = vadd.f32 %v744, %v746
      %v750 = vld [vmem:[%s688] sm:$0xf]
      %v751 = vld [vmem:[%s688 + $0x4] sm:$0xf]
      %v752 = vld [vmem:[%s688 + $0x8] sm:$0xf]
      %v753 = vld [vmem:[%s688 + $0xc] sm:$0xf]
      %v754 = vld [vmem:[%s691] sm:$0x1]
      %v755 = vld [vmem:[%s696] sm:$0xf]
      %v756 = vld [vmem:[%s696 + $0x4] sm:$0xf]
      %v757 = vld [vmem:[%s696 + $0x8] sm:$0xf]
      %v758 = vld [vmem:[%s696 + $0xc] sm:$0xf]
      %v759 = vld [vmem:[%s699] sm:$0x1]
      %v760 = vpack.c.bf16 %v749, %v748
      %v762 = vlaneseq
      %v763 = vshrl.u32 %v762, 7
      %v764 = vsub.s32 0, %v763
      %v765 = vrot.slane %v754, %v764
      %v771 = vunpack.c.l.b16 %v750
      %v772 = vunpack.c.l.b16 %v751
      %v773 = vunpack.c.l.b16 %v752
      %v774 = vunpack.c.l.b16 %v753
      %v775 = vpack.c.b16 %v772, %v771
      %v776 = vpack.c.b16 %v774, %v773
      %vm779 = vcmask 261120
      %v781 = vsel %vm779, %v760, 0
      %783 = vmatprep.subr.bf16.mxu0 0
      %784 = vmatpush1.bf16.msra.mxu0 %v775
      %785 = vmatprep.subr.bf16.mxu0 0
      %786 = vmatpush1.bf16.msra.mxu0 %v776
      %787 = vmatprep.subr.bf16.mxu0 0
      %788 = vmatpush1.bf16.msra.mxu0 0
      %789 = vmatprep.subr.bf16.mxu0 0
      %790 = vmatpush1.bf16.msra.mxu0 0
      %791 = vmatprep.subr.bf16.mxu0 0
      %792 = vmatpush1.bf16.msra.mxu0 0
      %793 = vmatprep.subr.bf16.mxu0 0
      %794 = vmatpush1.bf16.msra.mxu0 0
      %795 = vmatprep.subr.bf16.mxu0 0
      %796 = vmatpush1.bf16.msra.mxu0 0
      %797 = vmatprep.subr.bf16.mxu0 0
      %798 = vmatpush1.bf16.msra.mxu0 0
      %799 = vmatprep.subr.bf16.mxu0 0
      %800 = vmatpush1.bf16.msra.mxu0 0
      %801 = vmatprep.subr.bf16.mxu0 0
      %802 = vmatpush1.bf16.msra.mxu0 0
      %803 = vmatprep.subr.bf16.mxu0 0
      %804 = vmatpush1.bf16.msra.mxu0 0
      %805 = vmatprep.subr.bf16.mxu0 0
      %806 = vmatpush1.bf16.msra.mxu0 0
      %807 = vmatprep.subr.bf16.mxu0 0
      %808 = vmatpush1.bf16.msra.mxu0 0
      %809 = vmatprep.subr.bf16.mxu0 0
      %810 = vmatpush1.bf16.msra.mxu0 0
      %811 = vmatprep.subr.bf16.mxu0 0
      %812 = vmatpush1.bf16.msra.mxu0 0
      %813 = vmatprep.subr.bf16.mxu0 0
      %814 = vmatpush1.bf16.msra.mxu0 0
      %815 = vmatprep.mubr.bf16.mxu0 0
      %816 = vmatmul.mubr.bf16.gmra.mrb[0].mxu0 %v781
      %v817 = vpop.f32.mrb[0].mxu0
      %v818 = vadd.f32 %v765, %v817
      %v819 = vpop.f32.mrb[0].mxu0
      %v820 = vpop.f32.mrb[0].mxu0
      %v821 = vadd.f32 %v765, %v820
      %v822 = vpop.f32.mrb[0].mxu0
      %823 = vdwg.mxu0
      %v824 = vpack.c.bf16 %v744, %v743
      %825 = vrot.lane.b32.xlu0 %v775, 64
      %v826 = vpop.permute.xlu0 %825
      %827 = vrot.lane.b32.xlu0 %v776, 64
      %v828 = vpop.permute.xlu0 %827
      %831 = vrot.lane.b32.xlu0 %v765, 64
      %v832 = vpop.permute.xlu0 %831
      %v835 = vsel %vm779, %v824, 0
      %837 = vmatprep.subr.bf16.mxu0 0
      %838 = vmatpush1.bf16.msra.mxu0 %v826
      %839 = vmatprep.subr.bf16.mxu0 0
      %840 = vmatpush1.bf16.msra.mxu0 %v828
      %841 = vmatprep.subr.bf16.mxu0 0
      %842 = vmatpush1.bf16.msra.mxu0 0
      %843 = vmatprep.subr.bf16.mxu0 0
      %844 = vmatpush1.bf16.msra.mxu0 0
      %845 = vmatprep.subr.bf16.mxu0 0
      %846 = vmatpush1.bf16.msra.mxu0 0
      %847 = vmatprep.subr.bf16.mxu0 0
      %848 = vmatpush1.bf16.msra.mxu0 0
      %849 = vmatprep.subr.bf16.mxu0 0
      %850 = vmatpush1.bf16.msra.mxu0 0
      %851 = vmatprep.subr.bf16.mxu0 0
      %852 = vmatpush1.bf16.msra.mxu0 0
      %853 = vmatprep.subr.bf16.mxu0 0
      %854 = vmatpush1.bf16.msra.mxu0 0
      %855 = vmatprep.subr.bf16.mxu0 0
      %856 = vmatpush1.bf16.msra.mxu0 0
      %857 = vmatprep.subr.bf16.mxu0 0
      %858 = vmatpush1.bf16.msra.mxu0 0
      %859 = vmatprep.subr.bf16.mxu0 0
      %860 = vmatpush1.bf16.msra.mxu0 0
      %861 = vmatprep.subr.bf16.mxu0 0
      %862 = vmatpush1.bf16.msra.mxu0 0
      %863 = vmatprep.subr.bf16.mxu0 0
      %864 = vmatpush1.bf16.msra.mxu0 0
      %865 = vmatprep.subr.bf16.mxu0 0
      %866 = vmatpush1.bf16.msra.mxu0 0
      %867 = vmatprep.subr.bf16.mxu0 0
      %868 = vmatpush1.bf16.msra.mxu0 0
      %869 = vmatprep.mubr.bf16.mxu0 0
      %870 = vmatmul.mubr.bf16.gmra.mrb[0].mxu0 %v835
      %v871 = vpop.f32.mrb[0].mxu0
      %v872 = vadd.f32 %v832, %v871
      %v873 = vpop.f32.mrb[0].mxu0
      %v874 = vpop.f32.mrb[0].mxu0
      %v875 = vadd.f32 %v832, %v874
      %v876 = vpop.f32.mrb[0].mxu0
      %877 = vdwg.mxu0
      %v879 = vlaneseq
      %v880 = vshrl.u32 %v879, 7
      %v881 = vsub.s32 0, %v880
      %v882 = vrot.slane %v747, %v881
      %v884 = vpack.c.bf16 %v821, %v818
      %v885 = vpack.c.bf16 %v875, %v872
      %887 = vrot.lane.b32.xlu0 %v884, 96
      %v888 = vpop.permute.xlu0 %887
      %vm889 = vcmask 64512
      %v891 = vsel %vm889, %v884, 0
      %v894 = vsel %vm889, %v888, 0
      %896 = vmatprep.subr.bf16.mxu0 0
      %897 = vmatpush1.bf16.xpose.msra.mxu0 %v894
      %898 = vmatprep.subr.bf16.mxu0 0
      %899 = vmatpush1.bf16.xpose.msra.mxu0 0
      %900 = vmatprep.subr.bf16.mxu0 0
      %901 = vmatpush1.bf16.xpose.msra.mxu0 0
      %902 = vmatprep.subr.bf16.mxu0 0
      %903 = vmatpush1.bf16.xpose.msra.mxu0 0
      %904 = vmatprep.subr.bf16.mxu0 0
      %905 = vmatpush1.bf16.xpose.msra.mxu0 0
      %906 = vmatprep.subr.bf16.mxu0 0
      %907 = vmatpush1.bf16.xpose.msra.mxu0 0
      %908 = vmatprep.subr.bf16.mxu0 0
      %909 = vmatpush1.bf16.xpose.msra.mxu0 0
      %910 = vmatprep.subr.bf16.mxu0 0
      %911 = vmatpush1.bf16.xpose.msra.mxu0 0
      %912 = vmatprep.subr.bf16.mxu0 0
      %913 = vmatpush1.bf16.xpose.msra.mxu0 0
      %914 = vmatprep.subr.bf16.mxu0 0
      %915 = vmatpush1.bf16.xpose.msra.mxu0 0
      %916 = vmatprep.subr.bf16.mxu0 0
      %917 = vmatpush1.bf16.xpose.msra.mxu0 0
      %918 = vmatprep.subr.bf16.mxu0 0
      %919 = vmatpush1.bf16.xpose.msra.mxu0 0
      %920 = vmatprep.subr.bf16.mxu0 0
      %921 = vmatpush1.bf16.xpose.msra.mxu0 0
      %922 = vmatprep.subr.bf16.mxu0 0
      %923 = vmatpush1.bf16.xpose.msra.mxu0 0
      %924 = vmatprep.subr.bf16.mxu0 0
      %925 = vmatpush1.bf16.xpose.msra.mxu0 0
      %926 = vmatprep.subr.bf16.mxu0 0
      %927 = vmatpush1.bf16.xpose.msra.mxu0 0
      %928 = vmatprep.mubr.bf16.mxu0 0
      %929 = vmatmul.mubr.bf16.gmra.mrb[0].mxu0 %v891
      %v930 = vpop.f32.mrb[0].mxu0
      %v931 = vadd.f32 %v882, %v930
      %v932 = vpop.f32.mrb[0].mxu0
      %v933 = vpop.f32.mrb[0].mxu0
      %v934 = vadd.f32 %v882, %v933
      %v935 = vpop.f32.mrb[0].mxu0
      %936 = vdwg.mxu0
      %vm937 = vcmask 130048
      %v938 = vsel %vm937, %v931, -inf
      %939 = vmax.xlane.f32.xlu0 %v938
      %v940 = vpop.xlane.xlu0 %939
      %v941 = vsel %vm937, %v934, -inf
      %942 = vmax.xlane.f32.xlu0 %v941
      %v943 = vpop.xlane.xlu0 %942
      %v944 = vsub.f32 %v931, %v940
      %v945 = vsub.f32 %v934, %v943
      %v946 = vmul.f32 %v944, 1.442695
      %v947 = vpow.pop %v946
      %v948 = vmul.f32 %v945, 1.442695
      %v949 = vpow.pop %v948
      %v950 = vsel %vm937, %v947, 0.0
      %951 = vadd.xlane.f32.xlu0 %v950
      %v952 = vpop.xlane.xlu0 %951
      %v953 = vsel %vm937, %v949, 0.0
      %954 = vadd.xlane.f32.xlu0 %v953
      %v955 = vpop.xlane.xlu0 %954
      %v956 = vrcp.pop %v952
      %v957 = vrcp.pop %v955
      %v958 = vmul.f32 %v947, %v956
      %v959 = vmul.f32 %v949, %v957
      %v960 = vpack.c.bf16 %v959, %v958
      %v962 = vsel %vm937, %v960, 0
      %964 = vmatprep.subr.bf16.mxu0 0
      %965 = vmatpush1.bf16.msra.mxu0 %v885
      %966 = vmatprep.subr.bf16.mxu0 0
      %967 = vmatpush1.bf16.msra.mxu0 0
      %968 = vmatprep.subr.bf16.mxu0 0
      %969 = vmatpush1.bf16.msra.mxu0 0
      %970 = vmatprep.subr.bf16.mxu0 0
      %971 = vmatpush1.bf16.msra.mxu0 0
      %972 = vmatprep.subr.bf16.mxu0 0
      %973 = vmatpush1.bf16.msra.mxu0 0
      %974 = vmatprep.subr.bf16.mxu0 0
      %975 = vmatpush1.bf16.msra.mxu0 0
      %976 = vmatprep.subr.bf16.mxu0 0
      %977 = vmatpush1.bf16.msra.mxu0 0
      %978 = vmatprep.subr.bf16.mxu0 0
      %979 = vmatpush1.bf16.msra.mxu0 0
      %980 = vmatprep.subr.bf16.mxu0 0
      %981 = vmatpush1.bf16.msra.mxu0 0
      %982 = vmatprep.subr.bf16.mxu0 0
      %983 = vmatpush1.bf16.msra.mxu0 0
      %984 = vmatprep.subr.bf16.mxu0 0
      %985 = vmatpush1.bf16.msra.mxu0 0
      %986 = vmatprep.subr.bf16.mxu0 0
      %987 = vmatpush1.bf16.msra.mxu0 0
      %988 = vmatprep.subr.bf16.mxu0 0
      %989 = vmatpush1.bf16.msra.mxu0 0
      %990 = vmatprep.subr.bf16.mxu0 0
      %991 = vmatpush1.bf16.msra.mxu0 0
      %992 = vmatprep.subr.bf16.mxu0 0
      %993 = vmatpush1.bf16.msra.mxu0 0
      %994 = vmatprep.subr.bf16.mxu0 0
      %995 = vmatpush1.bf16.msra.mxu0 0
      %996 = vmatprep.mubr.bf16.mxu0 0
      %997 = vmatmul.mubr.bf16.gmra.mrb[0].mxu0 %v962
      %v998 = vpop.f32.mrb[0].mxu0
      %v999 = vadd.f32 0.0, %v998
      %v1000 = vpop.f32.mrb[0].mxu0
      %v1001 = vpop.f32.mrb[0].mxu0
      %v1002 = vadd.f32 0.0, %v1001
      %v1003 = vpop.f32.mrb[0].mxu0
      %1004 = vdwg.mxu0
      %1005 = vst.msk [vmem:[#allocation2] sm:$0xff] %vm889, %v999
      %1006 = vst.msk [vmem:[#allocation2 + $0x8] sm:$0xff] %vm889, %v1002
      %1007 = vrot.lane.b32.xlu0 %v884, 120
      %v1008 = vpop.permute.xlu0 %1007
      %1009 = vrot.lane.b32.xlu0 %v884, 88
      %v1010 = vpop.permute.xlu0 %1009
      %v1012 = vsel %vm889, %v1008, 0
      %v1015 = vsel %vm889, %v1010, 0
      %1017 = vmatprep.subr.bf16.mxu0 0
      %1018 = vmatpush1.bf16.xpose.msra.mxu0 %v1015
      %1019 = vmatprep.subr.bf16.mxu0 0
      %1020 = vmatpush1.bf16.xpose.msra.mxu0 0
      %1021 = vmatprep.subr.bf16.mxu0 0
      %1022 = vmatpush1.bf16.xpose.msra.mxu0 0
      %1023 = vmatprep.subr.bf16.mxu0 0
      %1024 = vmatpush1.bf16.xpose.msra.mxu0 0
      %1025 = vmatprep.subr.bf16.mxu0 0
      %1026 = vmatpush1.bf16.xpose.msra.mxu0 0
      %1027 = vmatprep.subr.bf16.mxu0 0
      %1028 = vmatpush1.bf16.xpose.msra.mxu0 0
      %1029 = vmatprep.subr.bf16.mxu0 0
      %1030 = vmatpush1.bf16.xpose.msra.mxu0 0
      %1031 = vmatprep.subr.bf16.mxu0 0
      %1032 = vmatpush1.bf16.xpose.msra.mxu0 0
      %1033 = vmatprep.subr.bf16.mxu0 0
      %1034 = vmatpush1.bf16.xpose.msra.mxu0 0
      %1035 = vmatprep.subr.bf16.mxu0 0
      %1036 = vmatpush1.bf16.xpose.msra.mxu0 0
      %1037 = vmatprep.subr.bf16.mxu0 0
      %1038 = vmatpush1.bf16.xpose.msra.mxu0 0
      %1039 = vmatprep.subr.bf16.mxu0 0
      %1040 = vmatpush1.bf16.xpose.msra.mxu0 0
      %1041 = vmatprep.subr.bf16.mxu0 0
      %1042 = vmatpush1.bf16.xpose.msra.mxu0 0
      %1043 = vmatprep.subr.bf16.mxu0 0
      %1044 = vmatpush1.bf16.xpose.msra.mxu0 0
      %1045 = vmatprep.subr.bf16.mxu0 0
      %1046 = vmatpush1.bf16.xpose.msra.mxu0 0
      %1047 = vmatprep.subr.bf16.mxu0 0
      %1048 = vmatpush1.bf16.xpose.msra.mxu0 0
      %1049 = vmatprep.mubr.bf16.mxu0 0
      %1050 = vmatmul.mubr.bf16.gmra.mrb[0].mxu0 %v1012
      %v1051 = vpop.f32.mrb[0].mxu0
      %v1052 = vadd.f32 %v882, %v1051
      %v1053 = vpop.f32.mrb[0].mxu0
      %v1054 = vpop.f32.mrb[0].mxu0
      %v1055 = vadd.f32 %v882, %v1054
      %v1056 = vpop.f32.mrb[0].mxu0
      %1057 = vdwg.mxu0
      %v1058 = vsel %vm937, %v1052, -inf
      %1059 = vmax.xlane.f32.xlu0 %v1058
      %v1060 = vpop.xlane.xlu0 %1059
      %v1061 = vsel %vm937, %v1055, -inf
      %1062 = vmax.xlane.f32.xlu0 %v1061
      %v1063 = vpop.xlane.xlu0 %1062
      %v1064 = vsub.f32 %v1052, %v1060
      %v1065 = vsub.f32 %v1055, %v1063
      %v1066 = vmul.f32 %v1064, 1.442695
      %v1067 = vpow.pop %v1066
      %v1068 = vmul.f32 %v1065, 1.442695
      %v1069 = vpow.pop %v1068
      %v1070 = vsel %vm937, %v1067, 0.0
      %1071 = vadd.xlane.f32.xlu0 %v1070
      %v1072 = vpop.xlane.xlu0 %1071
      %v1073 = vsel %vm937, %v1069, 0.0
      %1074 = vadd.xlane.f32.xlu0 %v1073
      %v1075 = vpop.xlane.xlu0 %1074
      %v1076 = vrcp.pop %v1072
      %v1077 = vrcp.pop %v1075
      %v1078 = vmul.f32 %v1067, %v1076
      %v1079 = vmul.f32 %v1069, %v1077
      %v1080 = vpack.c.bf16 %v1079, %v1078
      %1082 = vrot.lane.b32.xlu0 %v885, 120
      %v1083 = vpop.permute.xlu0 %1082
      %v1086 = vsel %vm937, %v1080, 0
      %1088 = vmatprep.subr.bf16.mxu0 0
      %1089 = vmatpush1.bf16.msra.mxu0 %v1083
      %1090 = vmatprep.subr.bf16.mxu0 0
      %1091 = vmatpush1.bf16.msra.mxu0 0
      %1092 = vmatprep.subr.bf16.mxu0 0
      %1093 = vmatpush1.bf16.msra.mxu0 0
      %1094 = vmatprep.subr.bf16.mxu0 0
      %1095 = vmatpush1.bf16.msra.mxu0 0
      %1096 = vmatprep.subr.bf16.mxu0 0
      %1097 = vmatpush1.bf16.msra.mxu0 0
      %1098 = vmatprep.subr.bf16.mxu0 0
      %1099 = vmatpush1.bf16.msra.mxu0 0
      %1100 = vmatprep.subr.bf16.mxu0 0
      %1101 = vmatpush1.bf16.msra.mxu0 0
      %1102 = vmatprep.subr.bf16.mxu0 0
      %1103 = vmatpush1.bf16.msra.mxu0 0
      %1104 = vmatprep.subr.bf16.mxu0 0
      %1105 = vmatpush1.bf16.msra.mxu0 0
      %1106 = vmatprep.subr.bf16.mxu0 0
      %1107 = vmatpush1.bf16.msra.mxu0 0
      %1108 = vmatprep.subr.bf16.mxu0 0
      %1109 = vmatpush1.bf16.msra.mxu0 0
      %1110 = vmatprep.subr.bf16.mxu0 0
      %1111 = vmatpush1.bf16.msra.mxu0 0
      %1112 = vmatprep.subr.bf16.mxu0 0
      %1113 = vmatpush1.bf16.msra.mxu0 0
      %1114 = vmatprep.subr.bf16.mxu0 0
      %1115 = vmatpush1.bf16.msra.mxu0 0
      %1116 = vmatprep.subr.bf16.mxu0 0
      %1117 = vmatpush1.bf16.msra.mxu0 0
      %1118 = vmatprep.subr.bf16.mxu0 0
      %1119 = vmatpush1.bf16.msra.mxu0 0
      %1120 = vmatprep.mubr.bf16.mxu0 0
      %1121 = vmatmul.mubr.bf16.gmra.mrb[0].mxu0 %v1086
      %v1122 = vpop.f32.mrb[0].mxu0
      %v1123 = vadd.f32 0.0, %v1122
      %v1124 = vpop.f32.mrb[0].mxu0
      %v1125 = vpop.f32.mrb[0].mxu0
      %v1126 = vadd.f32 0.0, %v1125
      %v1127 = vpop.f32.mrb[0].mxu0
      %1128 = vdwg.mxu0
      %1131 = vrot.lane.b32.xlu0 %v1123, 8
      %v1132 = vpop.permute.xlu0 %1131
      %1133 = vrot.lane.b32.xlu0 %v1126, 8
      %v1134 = vpop.permute.xlu0 %1133
      %vm1137 = vcmask 130112
      %1138 = vst.msk [vmem:[#allocation2] sm:$0xff] %vm1137, %v1132
      %1139 = vst.msk [vmem:[#allocation2 + $0x8] sm:$0xff] %vm1137, %v1134
      %1140 = vrot.lane.b32.xlu0 %v884, 112
      %v1141 = vpop.permute.xlu0 %1140
      %1142 = vrot.lane.b32.xlu0 %v884, 80
      %v1143 = vpop.permute.xlu0 %1142
      %v1145 = vsel %vm889, %v1141, 0
      %v1148 = vsel %vm889, %v1143, 0
      %1150 = vmatprep.subr.bf16.mxu0 0
      %1151 = vmatpush1.bf16.xpose.msra.mxu0 %v1148
      %1152 = vmatprep.subr.bf16.mxu0 0
      %1153 = vmatpush1.bf16.xpose.msra.mxu0 0
      %1154 = vmatprep.subr.bf16.mxu0 0
      %1155 = vmatpush1.bf16.xpose.msra.mxu0 0
      %1156 = vmatprep.subr.bf16.mxu0 0
      %1157 = vmatpush1.bf16.xpose.msra.mxu0 0
      %1158 = vmatprep.subr.bf16.mxu0 0
      %1159 = vmatpush1.bf16.xpose.msra.mxu0 0
      %1160 = vmatprep.subr.bf16.mxu0 0
      %1161 = vmatpush1.bf16.xpose.msra.mxu0 0
      %1162 = vmatprep.subr.bf16.mxu0 0
      %1163 = vmatpush1.bf16.xpose.msra.mxu0 0
      %1164 = vmatprep.subr.bf16.mxu0 0
      %1165 = vmatpush1.bf16.xpose.msra.mxu0 0
      %1166 = vmatprep.subr.bf16.mxu0 0
      %1167 = vmatpush1.bf16.xpose.msra.mxu0 0
      %1168 = vmatprep.subr.bf16.mxu0 0
      %1169 = vmatpush1.bf16.xpose.msra.mxu0 0
      %1170 = vmatprep.subr.bf16.mxu0 0
      %1171 = vmatpush1.bf16.xpose.msra.mxu0 0
      %1172 = vmatprep.subr.bf16.mxu0 0
      %1173 = vmatpush1.bf16.xpose.msra.mxu0 0
      %1174 = vmatprep.subr.bf16.mxu0 0
      %1175 = vmatpush1.bf16.xpose.msra.mxu0 0
      %1176 = vmatprep.subr.bf16.mxu0 0
      %1177 = vmatpush1.bf16.xpose.msra.mxu0 0
      %1178 = vmatprep.subr.bf16.mxu0 0
      %1179 = vmatpush1.bf16.xpose.msra.mxu0 0
      %1180 = vmatprep.subr.bf16.mxu0 0
      %1181 = vmatpush1.bf16.xpose.msra.mxu0 0
      %1182 = vmatprep.mubr.bf16.mxu0 0
      %1183 = vmatmul.mubr.bf16.gmra.mrb[0].mxu0 %v1145
      %v1184 = vpop.f32.mrb[0].mxu0
      %v1185 = vadd.f32 %v882, %v1184
      %v1186 = vpop.f32.mrb[0].mxu0
      %v1187 = vpop.f32.mrb[0].mxu0
      %v1188 = vadd.f32 %v882, %v1187
      %v1189 = vpop.f32.mrb[0].mxu0
      %1190 = vdwg.mxu0
      %v1191 = vsel %vm937, %v1185, -inf
      %1192 = vmax.xlane.f32.xlu0 %v1191
      %v1193 = vpop.xlane.xlu0 %1192
      %v1194 = vsel %vm937, %v1188, -inf
      %1195 = vmax.xlane.f32.xlu0 %v1194
      %v1196 = vpop.xlane.xlu0 %1195
      %v1197 = vsub.f32 %v1185, %v1193
      %v1198 = vsub.f32 %v1188, %v1196
      %v1199 = vmul.f32 %v1197, 1.442695
      %v1200 = vpow.pop %v1199
      %v1201 = vmul.f32 %v1198, 1.442695
      %v1202 = vpow.pop %v1201
      %v1203 = vsel %vm937, %v1200, 0.0
      %1204 = vadd.xlane.f32.xlu0 %v1203
      %v1205 = vpop.xlane.xlu0 %1204
      %v1206 = vsel %vm937, %v1202, 0.0
      %1207 = vadd.xlane.f32.xlu0 %v1206
      %v1208 = vpop.xlane.xlu0 %1207
      %v1209 = vrcp.pop %v1205
      %v1210 = vrcp.pop %v1208
      %v1211 = vmul.f32 %v1200, %v1209
      %v1212 = vmul.f32 %v1202, %v1210
      %v1213 = vpack.c.bf16 %v1212, %v1211
      %1214 = vrot.lane.b32.xlu0 %v885, 112
      %v1215 = vpop.permute.xlu0 %1214
      %v1218 = vsel %vm937, %v1213, 0
      %1220 = vmatprep.subr.bf16.mxu0 0
      %1221 = vmatpush1.bf16.msra.mxu0 %v1215
      %1222 = vmatprep.subr.bf16.mxu0 0
      %1223 = vmatpush1.bf16.msra.mxu0 0
      %1224 = vmatprep.subr.bf16.mxu0 0
      %1225 = vmatpush1.bf16.msra.mxu0 0
      %1226 = vmatprep.subr.bf16.mxu0 0
      %1227 = vmatpush1.bf16.msra.mxu0 0
      %1228 = vmatprep.subr.bf16.mxu0 0
      %1229 = vmatpush1.bf16.msra.mxu0 0
      %1230 = vmatprep.subr.bf16.mxu0 0
      %1231 = vmatpush1.bf16.msra.mxu0 0
      %1232 = vmatprep.subr.bf16.mxu0 0
      %1233 = vmatpush1.bf16.msra.mxu0 0
      %1234 = vmatprep.subr.bf16.mxu0 0
      %1235 = vmatpush1.bf16.msra.mxu0 0
      %1236 = vmatprep.subr.bf16.mxu0 0
      %1237 = vmatpush1.bf16.msra.mxu0 0
      %1238 = vmatprep.subr.bf16.mxu0 0
      %1239 = vmatpush1.bf16.msra.mxu0 0
      %1240 = vmatprep.subr.bf16.mxu0 0
      %1241 = vmatpush1.bf16.msra.mxu0 0
      %1242 = vmatprep.subr.bf16.mxu0 0
      %1243 = vmatpush1.bf16.msra.mxu0 0
      %1244 = vmatprep.subr.bf16.mxu0 0
      %1245 = vmatpush1.bf16.msra.mxu0 0
      %1246 = vmatprep.subr.bf16.mxu0 0
      %1247 = vmatpush1.bf16.msra.mxu0 0
      %1248 = vmatprep.subr.bf16.mxu0 0
      %1249 = vmatpush1.bf16.msra.mxu0 0
      %1250 = vmatprep.subr.bf16.mxu0 0
      %1251 = vmatpush1.bf16.msra.mxu0 0
      %1252 = vmatprep.mubr.bf16.mxu0 0
      %1253 = vmatmul.mubr.bf16.gmra.mrb[0].mxu0 %v1218
      %v1254 = vpop.f32.mrb[0].mxu0
      %v1255 = vadd.f32 0.0, %v1254
      %v1256 = vpop.f32.mrb[0].mxu0
      %v1257 = vpop.f32.mrb[0].mxu0
      %v1258 = vadd.f32 0.0, %v1257
      %v1259 = vpop.f32.mrb[0].mxu0
      %1260 = vdwg.mxu0
      %1263 = vrot.lane.b32.xlu0 %v1255, 16
      %v1264 = vpop.permute.xlu0 %1263
      %1265 = vrot.lane.b32.xlu0 %v1258, 16
      %v1266 = vpop.permute.xlu0 %1265
      %vm1269 = vcmask 195712
      %1270 = vst.msk [vmem:[#allocation2] sm:$0xff] %vm1269, %v1264
      %1271 = vst.msk [vmem:[#allocation2 + $0x8] sm:$0xff] %vm1269, %v1266
      %1272 = vrot.lane.b32.xlu0 %v884, 104
      %v1273 = vpop.permute.xlu0 %1272
      %1274 = vrot.lane.b32.xlu0 %v884, 72
      %v1275 = vpop.permute.xlu0 %1274
      %v1277 = vsel %vm889, %v1273, 0
      %v1280 = vsel %vm889, %v1275, 0
      %1282 = vmatprep.subr.bf16.mxu0 0
      %1283 = vmatpush1.bf16.xpose.msra.mxu0 %v1280
      %1284 = vmatprep.subr.bf16.mxu0 0
      %1285 = vmatpush1.bf16.xpose.msra.mxu0 0
      %1286 = vmatprep.subr.bf16.mxu0 0
      %1287 = vmatpush1.bf16.xpose.msra.mxu0 0
      %1288 = vmatprep.subr.bf16.mxu0 0
      %1289 = vmatpush1.bf16.xpose.msra.mxu0 0
      %1290 = vmatprep.subr.bf16.mxu0 0
      %1291 = vmatpush1.bf16.xpose.msra.mxu0 0
      %1292 = vmatprep.subr.bf16.mxu0 0
      %1293 = vmatpush1.bf16.xpose.msra.mxu0 0
      %1294 = vmatprep.subr.bf16.mxu0 0
      %1295 = vmatpush1.bf16.xpose.msra.mxu0 0
      %1296 = vmatprep.subr.bf16.mxu0 0
      %1297 = vmatpush1.bf16.xpose.msra.mxu0 0
      %1298 = vmatprep.subr.bf16.mxu0 0
      %1299 = vmatpush1.bf16.xpose.msra.mxu0 0
      %1300 = vmatprep.subr.bf16.mxu0 0
      %1301 = vmatpush1.bf16.xpose.msra.mxu0 0
      %1302 = vmatprep.subr.bf16.mxu0 0
      %1303 = vmatpush1.bf16.xpose.msra.mxu0 0
      %1304 = vmatprep.subr.bf16.mxu0 0
      %1305 = vmatpush1.bf16.xpose.msra.mxu0 0
      %1306 = vmatprep.subr.bf16.mxu0 0
      %1307 = vmatpush1.bf16.xpose.msra.mxu0 0
      %1308 = vmatprep.subr.bf16.mxu0 0
      %1309 = vmatpush1.bf16.xpose.msra.mxu0 0
      %1310 = vmatprep.subr.bf16.mxu0 0
      %1311 = vmatpush1.bf16.xpose.msra.mxu0 0
      %1312 = vmatprep.subr.bf16.mxu0 0
      %1313 = vmatpush1.bf16.xpose.msra.mxu0 0
      %1314 = vmatprep.mubr.bf16.mxu0 0
      %1315 = vmatmul.mubr.bf16.gmra.mrb[0].mxu0 %v1277
      %v1316 = vpop.f32.mrb[0].mxu0
      %v1317 = vadd.f32 %v882, %v1316
      %v1318 = vpop.f32.mrb[0].mxu0
      %v1319 = vpop.f32.mrb[0].mxu0
      %v1320 = vadd.f32 %v882, %v1319
      %v1321 = vpop.f32.mrb[0].mxu0
      %1322 = vdwg.mxu0
      %v1323 = vsel %vm937, %v1317, -inf
      %1324 = vmax.xlane.f32.xlu0 %v1323
      %v1325 = vpop.xlane.xlu0 %1324
      %v1326 = vsel %vm937, %v1320, -inf
      %1327 = vmax.xlane.f32.xlu0 %v1326
      %v1328 = vpop.xlane.xlu0 %1327
      %v1329 = vsub.f32 %v1317, %v1325
      %v1330 = vsub.f32 %v1320, %v1328
      %v1331 = vmul.f32 %v1329, 1.442695
      %v1332 = vpow.pop %v1331
      %v1333 = vmul.f32 %v1330, 1.442695
      %v1334 = vpow.pop %v1333
      %v1335 = vsel %vm937, %v1332, 0.0
      %1336 = vadd.xlane.f32.xlu0 %v1335
      %v1337 = vpop.xlane.xlu0 %1336
      %v1338 = vsel %vm937, %v1334, 0.0
      %1339 = vadd.xlane.f32.xlu0 %v1338
      %v1340 = vpop.xlane.xlu0 %1339
      %v1341 = vrcp.pop %v1337
      %v1342 = vrcp.pop %v1340
      %v1343 = vmul.f32 %v1332, %v1341
      %v1344 = vmul.f32 %v1334, %v1342
      %v1345 = vpack.c.bf16 %v1344, %v1343
      %1346 = vrot.lane.b32.xlu0 %v885, 104
      %v1347 = vpop.permute.xlu0 %1346
      %v1350 = vsel %vm937, %v1345, 0
      %1352 = vmatprep.subr.bf16.mxu0 0
      %1353 = vmatpush1.bf16.msra.mxu0 %v1347
      %1354 = vmatprep.subr.bf16.mxu0 0
      %1355 = vmatpush1.bf16.msra.mxu0 0
      %1356 = vmatprep.subr.bf16.mxu0 0
      %1357 = vmatpush1.bf16.msra.mxu0 0
      %1358 = vmatprep.subr.bf16.mxu0 0
      %1359 = vmatpush1.bf16.msra.mxu0 0
      %1360 = vmatprep.subr.bf16.mxu0 0
      %1361 = vmatpush1.bf16.msra.mxu0 0
      %1362 = vmatprep.subr.bf16.mxu0 0
      %1363 = vmatpush1.bf16.msra.mxu0 0
      %1364 = vmatprep.subr.bf16.mxu0 0
      %1365 = vmatpush1.bf16.msra.mxu0 0
      %1366 = vmatprep.subr.bf16.mxu0 0
      %1367 = vmatpush1.bf16.msra.mxu0 0
      %1368 = vmatprep.subr.bf16.mxu0 0
      %1369 = vmatpush1.bf16.msra.mxu0 0
      %1370 = vmatprep.subr.bf16.mxu0 0
      %1371 = vmatpush1.bf16.msra.mxu0 0
      %1372 = vmatprep.subr.bf16.mxu0 0
      %1373 = vmatpush1.bf16.msra.mxu0 0
      %1374 = vmatprep.subr.bf16.mxu0 0
      %1375 = vmatpush1.bf16.msra.mxu0 0
      %1376 = vmatprep.subr.bf16.mxu0 0
      %1377 = vmatpush1.bf16.msra.mxu0 0
      %1378 = vmatprep.subr.bf16.mxu0 0
      %1379 = vmatpush1.bf16.msra.mxu0 0
      %1380 = vmatprep.subr.bf16.mxu0 0
      %1381 = vmatpush1.bf16.msra.mxu0 0
      %1382 = vmatprep.subr.bf16.mxu0 0
      %1383 = vmatpush1.bf16.msra.mxu0 0
      %1384 = vmatprep.mubr.bf16.mxu0 0
      %1385 = vmatmul.mubr.bf16.gmra.mrb[0].mxu0 %v1350
      %v1386 = vpop.f32.mrb[0].mxu0
      %v1387 = vadd.f32 0.0, %v1386
      %v1388 = vpop.f32.mrb[0].mxu0
      %v1389 = vpop.f32.mrb[0].mxu0
      %v1390 = vadd.f32 0.0, %v1389
      %v1391 = vpop.f32.mrb[0].mxu0
      %1392 = vdwg.mxu0
      %1395 = vrot.lane.b32.xlu0 %v1387, 24
      %v1396 = vpop.permute.xlu0 %1395
      %1397 = vrot.lane.b32.xlu0 %v1390, 24
      %v1398 = vpop.permute.xlu0 %1397
      %vm1401 = vcmask 261312
      %1402 = vst.msk [vmem:[#allocation2] sm:$0xff] %vm1401, %v1396
      %1403 = vst.msk [vmem:[#allocation2 + $0x8] sm:$0xff] %vm1401, %v1398
      %v1404 = vld [vmem:[#allocation2] sm:$0xff]
      %v1405 = vld [vmem:[#allocation2 + $0x8] sm:$0xff]
      %v1406 = vpack.c.bf16 %v1405, %v1404
      %v1408 = vlaneseq
      %v1409 = vshrl.u32 %v1408, 7
      %v1410 = vsub.s32 0, %v1409
      %v1411 = vrot.slane %v759, %v1410
      %v1417 = vunpack.c.l.b16 %v755
      %v1418 = vunpack.c.l.b16 %v756
      %v1419 = vunpack.c.l.b16 %v757
      %v1420 = vunpack.c.l.b16 %v758
      %v1421 = vpack.c.b16 %v1418, %v1417
      %v1422 = vpack.c.b16 %v1420, %v1419
      %v1426 = vsel %vm779, %v1406, 0
      %1428 = vmatprep.subr.bf16.mxu0 0
      %1429 = vmatpush1.bf16.msra.mxu0 %v1421
      %1430 = vmatprep.subr.bf16.mxu0 0
      %1431 = vmatpush1.bf16.msra.mxu0 %v1422
      %1432 = vmatprep.subr.bf16.mxu0 0
      %1433 = vmatpush1.bf16.msra.mxu0 0
      %1434 = vmatprep.subr.bf16.mxu0 0
      %1435 = vmatpush1.bf16.msra.mxu0 0
      %1436 = vmatprep.subr.bf16.mxu0 0
      %1437 = vmatpush1.bf16.msra.mxu0 0
      %1438 = vmatprep.subr.bf16.mxu0 0
      %1439 = vmatpush1.bf16.msra.mxu0 0
      %1440 = vmatprep.subr.bf16.mxu0 0
      %1441 = vmatpush1.bf16.msra.mxu0 0
      %1442 = vmatprep.subr.bf16.mxu0 0
      %1443 = vmatpush1.bf16.msra.mxu0 0
      %1444 = vmatprep.subr.bf16.mxu0 0
      %1445 = vmatpush1.bf16.msra.mxu0 0
      %1446 = vmatprep.subr.bf16.mxu0 0
      %1447 = vmatpush1.bf16.msra.mxu0 0
      %1448 = vmatprep.subr.bf16.mxu0 0
      %1449 = vmatpush1.bf16.msra.mxu0 0
      %1450 = vmatprep.subr.bf16.mxu0 0
      %1451 = vmatpush1.bf16.msra.mxu0 0
      %1452 = vmatprep.subr.bf16.mxu0 0
      %1453 = vmatpush1.bf16.msra.mxu0 0
      %1454 = vmatprep.subr.bf16.mxu0 0
      %1455 = vmatpush1.bf16.msra.mxu0 0
      %1456 = vmatprep.subr.bf16.mxu0 0
      %1457 = vmatpush1.bf16.msra.mxu0 0
      %1458 = vmatprep.subr.bf16.mxu0 0
      %1459 = vmatpush1.bf16.msra.mxu0 0
      %1460 = vmatprep.mubr.bf16.mxu0 0
      %1461 = vmatmul.mubr.bf16.gmra.mrb[0].mxu0 %v1426
      %v1462 = vpop.f32.mrb[0].mxu0
      %v1463 = vadd.f32 %v1411, %v1462
      %v1464 = vpop.f32.mrb[0].mxu0
      %v1465 = vpop.f32.mrb[0].mxu0
      %v1466 = vadd.f32 %v1411, %v1465
      %v1467 = vpop.f32.mrb[0].mxu0
      %1468 = vdwg.mxu0
      %v1469 = vadd.f32 %v743, %v1463
      %v1470 = vadd.f32 %v744, %v1466
      %v1471 = vld [vmem:[%s702] sm:$0x1]
      %v1472 = vld [vmem:[%s705] sm:$0x1]
      %v1473 = vsel %vm779, %v1469, 0.0
      %1474 = vadd.xlane.f32.xlu0 %v1473
      %v1475 = vpop.xlane.xlu0 %1474
      %v1476 = vsel %vm779, %v1470, 0.0
      %1477 = vadd.xlane.f32.xlu0 %v1476
      %v1478 = vpop.xlane.xlu0 %1477
      %v1479 = vrcp.pop 32.0
      %v1480 = vmul.f32 %v1475, %v1479
      %v1481 = vmul.f32 %v1478, %v1479
      %v1482 = vsub.f32 %v1469, %v1480
      %v1483 = vsub.f32 %v1470, %v1481
      %v1484 = vmul.f32 %v1482, %v1482
      %v1485 = vmul.f32 %v1483, %v1483
      %v1486 = vsel %vm779, %v1484, 0.0
      %1487 = vadd.xlane.f32.xlu0 %v1486
      %v1488 = vpop.xlane.xlu0 %1487
      %v1489 = vsel %vm779, %v1485, 0.0
      %1490 = vadd.xlane.f32.xlu0 %v1489
      %v1491 = vpop.xlane.xlu0 %1490
      %v1492 = vmul.f32 %v1488, %v1479
      %v1493 = vmul.f32 %v1491, %v1479
      %v1494 = vadd.f32 %v1492, 1e-05
      %v1495 = vadd.f32 %v1493, 1e-05
      %v1496 = vrsqrt.pop %v1494
      %v1497 = vrsqrt.pop %v1495
      %v1498 = vmul.f32 %v1482, %v1496
      %v1499 = vmul.f32 %v1483, %v1497
      %v1501 = vlaneseq
      %v1502 = vshrl.u32 %v1501, 7
      %v1503 = vsub.s32 0, %v1502
      %v1504 = vrot.slane %v1471, %v1503
      %v1506 = vmul.f32 %v1498, %v1504
      %v1507 = vmul.f32 %v1499, %v1504
      %v1509 = vlaneseq
      %v1510 = vshrl.u32 %v1509, 7
      %v1511 = vsub.s32 0, %v1510
      %v1512 = vrot.slane %v1472, %v1511
      %v1514 = vadd.f32 %v1506, %v1512
      %v1515 = vadd.f32 %v1507, %v1512
      %v1516 = vld [vmem:[%s710] sm:$0xf]
      %v1517 = vld [vmem:[%s710 + $0x4] sm:$0xf]
      %v1518 = vld [vmem:[%s710 + $0x8] sm:$0xf]
      %v1519 = vld [vmem:[%s710 + $0xc] sm:$0xf]
      %v1520 = vld [vmem:[%s713] sm:$0x1]
      %v1521 = vld [vmem:[%s718] sm:$0xf]
      %v1522 = vld [vmem:[%s718 + $0x4] sm:$0xf]
      %v1523 = vld [vmem:[%s718 + $0x8] sm:$0xf]
      %v1524 = vld [vmem:[%s718 + $0xc] sm:$0xf]
      %v1525 = vld [vmem:[%s718 + $0x10] sm:$0xf]
      %v1526 = vld [vmem:[%s718 + $0x14] sm:$0xf]
      %v1527 = vld [vmem:[%s718 + $0x18] sm:$0xf]
      %v1528 = vld [vmem:[%s718 + $0x1c] sm:$0xf]
      %v1529 = vld [vmem:[%s721] sm:$0x1]
      %v1530 = vpack.c.bf16 %v1515, %v1514
      %v1532 = vlaneseq
      %v1533 = vshrl.u32 %v1532, 7
      %v1534 = vsub.s32 0, %v1533
      %v1535 = vrot.slane %v1520, %v1534
      %v1541 = vunpack.c.l.b16 %v1516
      %v1542 = vunpack.c.l.b16 %v1517
      %v1543 = vunpack.c.l.b16 %v1518
      %v1544 = vunpack.c.l.b16 %v1519
      %v1545 = vpack.c.b16 %v1542, %v1541
      %v1546 = vpack.c.b16 %v1544, %v1543
      %v1550 = vsel %vm779, %v1530, 0
      %1552 = vmatprep.subr.bf16.mxu0 0
      %1553 = vmatpush1.bf16.msra.mxu0 %v1545
      %1554 = vmatprep.subr.bf16.mxu0 0
      %1555 = vmatpush1.bf16.msra.mxu0 %v1546
      %1556 = vmatprep.subr.bf16.mxu0 0
      %1557 = vmatpush1.bf16.msra.mxu0 0
      %1558 = vmatprep.subr.bf16.mxu0 0
      %1559 = vmatpush1.bf16.msra.mxu0 0
      %1560 = vmatprep.subr.bf16.mxu0 0
      %1561 = vmatpush1.bf16.msra.mxu0 0
      %1562 = vmatprep.subr.bf16.mxu0 0
      %1563 = vmatpush1.bf16.msra.mxu0 0
      %1564 = vmatprep.subr.bf16.mxu0 0
      %1565 = vmatpush1.bf16.msra.mxu0 0
      %1566 = vmatprep.subr.bf16.mxu0 0
      %1567 = vmatpush1.bf16.msra.mxu0 0
      %1568 = vmatprep.subr.bf16.mxu0 0
      %1569 = vmatpush1.bf16.msra.mxu0 0
      %1570 = vmatprep.subr.bf16.mxu0 0
      %1571 = vmatpush1.bf16.msra.mxu0 0
      %1572 = vmatprep.subr.bf16.mxu0 0
      %1573 = vmatpush1.bf16.msra.mxu0 0
      %1574 = vmatprep.subr.bf16.mxu0 0
      %1575 = vmatpush1.bf16.msra.mxu0 0
      %1576 = vmatprep.subr.bf16.mxu0 0
      %1577 = vmatpush1.bf16.msra.mxu0 0
      %1578 = vmatprep.subr.bf16.mxu0 0
      %1579 = vmatpush1.bf16.msra.mxu0 0
      %1580 = vmatprep.subr.bf16.mxu0 0
      %1581 = vmatpush1.bf16.msra.mxu0 0
      %1582 = vmatprep.subr.bf16.mxu0 0
      %1583 = vmatpush1.bf16.msra.mxu0 0
      %1584 = vmatprep.mubr.bf16.mxu0 0
      %1585 = vmatmul.mubr.bf16.gmra.mrb[0].mxu0 %v1550
      %v1586 = vpop.f32.mrb[0].mxu0
      %v1587 = vadd.f32 %v1535, %v1586
      %v1588 = vpop.f32.mrb[0].mxu0
      %v1589 = vpop.f32.mrb[0].mxu0
      %v1590 = vadd.f32 %v1535, %v1589
      %v1591 = vpop.f32.mrb[0].mxu0
      %1592 = vdwg.mxu0
      %vm1593 = vcmp.ge.f32.partialorder %v1587, 0.0
      %vm1594 = vcmp.ge.f32.partialorder %v1590, 0.0
      %v1595 = vmul.f32 %v1587, 0.01
      %v1596 = vmul.f32 %v1590, 0.01
      %v1597 = vsel %vm1593, %v1587, %v1595
      %v1598 = vsel %vm1594, %v1590, %v1596
      %v1599 = vpack.c.bf16 %v1598, %v1597
      %v1601 = vlaneseq
      %v1602 = vshrl.u32 %v1601, 7
      %v1603 = vsub.s32 0, %v1602
      %v1604 = vrot.slane %v1529, %v1603
      %v1614 = vunpack.c.l.b16 %v1521
      %v1615 = vunpack.c.l.b16 %v1522
      %v1616 = vunpack.c.l.b16 %v1523
      %v1617 = vunpack.c.l.b16 %v1524
      %v1618 = vunpack.c.l.b16 %v1525
      %v1619 = vunpack.c.l.b16 %v1526
      %v1620 = vunpack.c.l.b16 %v1527
      %v1621 = vunpack.c.l.b16 %v1528
      %v1622 = vpack.c.b16 %v1615, %v1614
      %v1623 = vpack.c.b16 %v1617, %v1616
      %v1624 = vpack.c.b16 %v1619, %v1618
      %v1625 = vpack.c.b16 %v1621, %v1620
      %vm1630 = vcmask 523264
      %v1632 = vsel %vm1630, %v1599, 0
      %1634 = vmatprep.subr.bf16.mxu0 0
      %1635 = vmatpush1.bf16.msra.mxu0 %v1622
      %1636 = vmatprep.subr.bf16.mxu0 0
      %1637 = vmatpush1.bf16.msra.mxu0 %v1623
      %1638 = vmatprep.subr.bf16.mxu0 0
      %1639 = vmatpush1.bf16.msra.mxu0 %v1624
      %1640 = vmatprep.subr.bf16.mxu0 0
      %1641 = vmatpush1.bf16.msra.mxu0 %v1625
      %1642 = vmatprep.subr.bf16.mxu0 0
      %1643 = vmatpush1.bf16.msra.mxu0 0
      %1644 = vmatprep.subr.bf16.mxu0 0
      %1645 = vmatpush1.bf16.msra.mxu0 0
      %1646 = vmatprep.subr.bf16.mxu0 0
      %1647 = vmatpush1.bf16.msra.mxu0 0
      %1648 = vmatprep.subr.bf16.mxu0 0
      %1649 = vmatpush1.bf16.msra.mxu0 0
      %1650 = vmatprep.subr.bf16.mxu0 0
      %1651 = vmatpush1.bf16.msra.mxu0 0
      %1652 = vmatprep.subr.bf16.mxu0 0
      %1653 = vmatpush1.bf16.msra.mxu0 0
      %1654 = vmatprep.subr.bf16.mxu0 0
      %1655 = vmatpush1.bf16.msra.mxu0 0
      %1656 = vmatprep.subr.bf16.mxu0 0
      %1657 = vmatpush1.bf16.msra.mxu0 0
      %1658 = vmatprep.subr.bf16.mxu0 0
      %1659 = vmatpush1.bf16.msra.mxu0 0
      %1660 = vmatprep.subr.bf16.mxu0 0
      %1661 = vmatpush1.bf16.msra.mxu0 0
      %1662 = vmatprep.subr.bf16.mxu0 0
      %1663 = vmatpush1.bf16.msra.mxu0 0
      %1664 = vmatprep.subr.bf16.mxu0 0
      %1665 = vmatpush1.bf16.msra.mxu0 0
      %1666 = vmatprep.mubr.bf16.mxu0 0
      %1667 = vmatmul.mubr.bf16.gmra.mrb[0].mxu0 %v1632
      %v1668 = vpop.f32.mrb[0].mxu0
      %v1669 = vadd.f32 %v1604, %v1668
      %v1670 = vpop.f32.mrb[0].mxu0
      %v1671 = vpop.f32.mrb[0].mxu0
      %v1672 = vadd.f32 %v1604, %v1671
      %v1673 = vpop.f32.mrb[0].mxu0
      %1674 = vdwg.mxu0
      %v1675 = vadd.f32 %v1514, %v1669
      %v1676 = vadd.f32 %v1515, %v1672
      %v1677 = vld [vmem:[%s724] sm:$0x1]
      %v1678 = vld [vmem:[%s727] sm:$0x1]
      %v1679 = vsel %vm779, %v1675, 0.0
      %1680 = vadd.xlane.f32.xlu0 %v1679
      %v1681 = vpop.xlane.xlu0 %1680
      %v1682 = vsel %vm779, %v1676, 0.0
      %1683 = vadd.xlane.f32.xlu0 %v1682
      %v1684 = vpop.xlane.xlu0 %1683
      %v1685 = vmul.f32 %v1681, %v1479
      %v1686 = vmul.f32 %v1684, %v1479
      %v1687 = vsub.f32 %v1675, %v1685
      %v1688 = vsub.f32 %v1676, %v1686
      %v1689 = vmul.f32 %v1687, %v1687
      %v1690 = vmul.f32 %v1688, %v1688
      %v1691 = vsel %vm779, %v1689, 0.0
      %1692 = vadd.xlane.f32.xlu0 %v1691
      %v1693 = vpop.xlane.xlu0 %1692
      %v1694 = vsel %vm779, %v1690, 0.0
      %1695 = vadd.xlane.f32.xlu0 %v1694
      %v1696 = vpop.xlane.xlu0 %1695
      %v1697 = vmul.f32 %v1693, %v1479
      %v1698 = vmul.f32 %v1696, %v1479
      %v1699 = vadd.f32 %v1697, 1e-05
      %v1700 = vadd.f32 %v1698, 1e-05
      %v1701 = vrsqrt.pop %v1699
      %v1702 = vrsqrt.pop %v1700
      %v1703 = vmul.f32 %v1687, %v1701
      %v1704 = vmul.f32 %v1688, %v1702
      %v1706 = vlaneseq
      %v1707 = vshrl.u32 %v1706, 7
      %v1708 = vsub.s32 0, %v1707
      %v1709 = vrot.slane %v1677, %v1708
      %v1711 = vmul.f32 %v1703, %v1709
      %v1712 = vmul.f32 %v1704, %v1709
      %v1714 = vlaneseq
      %v1715 = vshrl.u32 %v1714, 7
      %v1716 = vsub.s32 0, %v1715
      %v1717 = vrot.slane %v1678, %v1716
      %v1719 = vadd.f32 %v1711, %v1717
      %v1720 = vadd.f32 %v1712, %v1717
      %1721 = vst.msk [vmem:[%s732] sm:$0xff] %vm779, %v1719
      %1722 = vst.msk [vmem:[%s732 + $0x8] sm:$0xff] %vm779, %v1720
      %p1723 = scmp.lt.s32.totalorder %s30, 1
      %s1724 = scalar_select %p1723, %s30, 1
      %s1725 = smul.addr %s1724, 2
      %s1726 = smul.addr %s1725, 8
      %s1727 = scalar_lea.vmem %s15, %s1726
      // Predicated region
      $region85: #{fwd.2} parent=79 // pred_check
        %p1728 = pneg %p446
      $region86: #{fwd.2} parent=79 // pred_check_branch
        %1730 = sbr.rel (%p1728) target = $region88
      $region87: #{fwd.2} parent=79 // pred_region
        _
      $region88: #{fwd.2} parent=79 // pred_fallthru
        _
    $region80: #{fwd.2} parent=5 // pred_fallthru
      _
    %p1731 = scmp.le.s32.totalorder 2, %s21
    // Predicated region
    $region89: #{fwd.2} parent=5 // pred_check
      %p1732 = pneg %p1731
    $region90: #{fwd.2} parent=5 // pred_check_branch
      %1734 = sbr.rel (%p1732) target = $region92
    $region91: #{fwd.2} parent=5 // pred_region
      %s1735 = ssub.s32 %s21, 2
      // Predicated region
      $region93: #{fwd.2} parent=91 // pred_check
        %p1736 = pneg %p452
      $region94: #{fwd.2} parent=91 // pred_check_branch
        %1738 = sbr.rel (%p1736) target = $region96
      $region95: #{fwd.2} parent=91 // pred_region
        %p1739 = scmp.lt.s32.totalorder %s32, 1
        %s1740 = scalar_select %p1739, %s32, 1
        %s1741 = smul.addr %s1740, 2
        %s1742 = smul.addr %s1741, 8
        %s1743 = scalar_lea.vmem %s15, %s1742
      $region96: #{fwd.2} parent=91 // pred_fallthru
        _
    $region92: #{fwd.2} parent=5 // pred_fallthru
      _
  $region6: #{fwd.2} parent=0 // loop_footer
    %s25 = sadd.s32 1, %s21
  $region7: #{fwd.2} parent=0 // loop_footer_branch
    %20 = sbr.rel target = $region3
  $region8: #{fwd.2} parent=0 // loop_exit
    _

// kernel: fwd.3
$region0: #{fwd.3}
  #allocation0 [shape = 'u32[]', space=smem, size = 0x4, offset = 0x4, fixed_abs, tag = 'smem constant byte address 0x4 - core index']
  #allocation1 [shape = 'u32[144,128]{1,0:T(1,128)}', space=vmem, size = 0x12000, scoped, tag = 'internal scratch']
  #allocation2 [shape = 'f32[8,32]{1,0:T(8,128)}', space=vmem, size = 0x1000, scoped, tag = 'scratch operand']
  %s0 = inlined_call_operand.smem [shape: u32[32], index: -1, kind: input, shape index: {}]
  %s1 = sld [smem:[%s0]]
  %s2 = scalar_lea.smem %s0, 1
  %s3 = sld [smem:[%s2]]
  %s4 = scalar_lea.smem %s0, 2
  %s5 = sld [smem:[%s4]]
  %s6 = scalar_lea.smem %s0, 3
  %s7 = sld [smem:[%s6]]
  %s8 = scalar_lea.smem %s0, 4
  %s9 = sld [smem:[%s8]]
  %s10 = scalar_lea.smem %s0, 5
  %s11 = sld [smem:[%s10]]
  %s12 = scalar_lea.smem %s0, 6
  %s13 = sld [smem:[%s12]]
  %s14 = scalar_lea.smem %s0, 7
  %s15 = sld [smem:[%s14]]
  %s16 = scalar_lea.smem %s0, 8
  %s17 = sld [smem:[%s16]]
  %s18 = scalar_lea.smem %s0, 9
  %s19 = sld [smem:[%s18]]
  %s20 = scalar_lea.smem %s0, 10
  %s21 = sld [smem:[%s20]]
  %s22 = scalar_lea.smem %s0, 11
  %s23 = sld [smem:[%s22]]
  %s24 = scalar_lea.smem %s0, 12
  %s25 = sld [smem:[%s24]]
  %s26 = scalar_lea.smem %s0, 13
  %s27 = sld [smem:[%s26]]
  %s28 = scalar_lea.smem %s0, 14
  %s29 = sld [smem:[%s28]]
  %s30 = scalar_lea.smem %s0, 15
  %s31 = sld [smem:[%s30]]
  %s32 = scalar_lea.smem %s0, 16
  %s33 = sld [smem:[%s32]]
  %s34 = scalar_lea.smem %s0, 17
  %s35 = sld [smem:[%s34]]
  %s36 = scalar_lea.smem %s0, 18
  %s37 = sld [smem:[%s36]]
  %s38 = scalar_lea.smem %s0, 19
  %s39 = sld [smem:[%s38]]
  %s40 = scalar_lea.smem %s0, 20
  %s41 = sld [smem:[%s40]]
  %s42 = scalar_lea.smem %s0, 21
  %s43 = sld [smem:[%s42]]
  %s44 = scalar_lea.smem %s0, 22
  %s45 = sld [smem:[%s44]]
  %s46 = scalar_lea.smem %s0, 23
  %s47 = sld [smem:[%s46]]
  %s48 = scalar_lea.smem %s0, 24
  %s49 = sld [smem:[%s48]]
  %s50 = scalar_lea.smem %s0, 25
  %s51 = sld [smem:[%s50]]
  %s52 = scalar_lea.smem %s0, 26
  %s53 = sld [smem:[%s52]]
  %s54 = scalar_lea.smem %s0, 27
  %s55 = sld [smem:[%s54]]
  %s56 = scalar_lea.smem %s0, 28
  %s57 = sld [smem:[%s56]]
  %s58 = scalar_lea.smem %s0, 29
  %s59 = sld [smem:[%s58]]
  %s60 = scalar_lea.smem %s0, 30
  %s61 = sld [smem:[%s60]]
  %s62 = scalar_lea.smem %s0, 31
  %s63 = sld [smem:[%s62]]
  %s64 = sld [smem:[#allocation0]]
  $region169: #{fwd.3} parent=0
    _
  %s66 = ssub.s32 1, %s64
  %s67 = scalar_select 0, %s66, %s64
  $region1: #{fwd.3} parent=0
    #allocation3 [shape = 'u8[512]{0}', space=vmem, size = 0x400, scoped, tag = 'input window, operand 30, single buffered']
    #allocation4 [shape = 's32[2]{0}', space=sflag, size = 0x8, scoped, tag = 'scoped memory for fwd.3']
    #allocation5 [shape = 's32[2]{0}', space=sflag, size = 0x8, scoped, tag = 'scoped memory for fwd.3']
    #allocation6 [shape = 'u8[8192]{0}', space=vmem, size = 0x2000, scoped, tag = 'output window, operand 0']
    %68 = vsyncpa [#allocation4], 0
    %69 = vsyncpa [#allocation5], 0
    %s70 = scalar_lea.sflag [#allocation5], 1
    %71 = vsyncpa %s70, 0
    loop: start=0, step=1, limit=6
    $region2: #{fwd.3} parent=1 // loop_pre_header
      _
    $region3: #{fwd.3} parent=1 // loop_header
      %s73 = sphi 0, %s77
      %p74 = scmp.ge.s32.totalorder %s73, 6
      %s80 = sphi 0, %s92
      %s81 = sphi 0, %s88
      %s82 = sphi 0, %s80
      %s83 = sphi 0, %s81
      %s84 = sphi 0, %s82
      %s85 = sphi 0, %s83
      %s95 = sphi 0, %s97
      %s98 = sphi 0, %s95
      %s99 = sphi 0, %s98
      %s115 = sphi 0, %s99
      %s121 = sphi 0, %s123
      %s124 = sphi 0, %s121
      %s125 = sphi 0, %s124
      %s141 = sphi 0, %s125
      %s147 = sphi 0, %s149
      %s150 = sphi 0, %s147
      %s151 = sphi 0, %s150
      %s167 = sphi 0, %s151
      %s173 = sphi 0, %s175
      %s176 = sphi 0, %s173
      %s177 = sphi 0, %s176
      %s193 = sphi 0, %s177
      %s199 = sphi 0, %s201
      %s202 = sphi 0, %s199
      %s203 = sphi 0, %s202
      %s219 = sphi 0, %s203
      %s225 = sphi 0, %s227
      %s228 = sphi 0, %s225
      %s229 = sphi 0, %s228
      %s245 = sphi 0, %s229
      %s251 = sphi 0, %s253
      %s254 = sphi 0, %s251
      %s255 = sphi 0, %s254
      %s271 = sphi 0, %s255
      %s277 = sphi 0, %s279
      %s280 = sphi 0, %s277
      %s281 = sphi 0, %s280
      %s297 = sphi 0, %s281
      %s303 = sphi 0, %s305
      %s306 = sphi 0, %s303
      %s307 = sphi 0, %s306
      %s323 = sphi 0, %s307
      %s329 = sphi 0, %s331
      %s332 = sphi 0, %s329
      %s333 = sphi 0, %s332
      %s349 = sphi 0, %s333
      %s355 = sphi 0, %s357
      %s358 = sphi 0, %s355
      %s359 = sphi 0, %s358
      %s375 = sphi 0, %s359
      %s381 = sphi 0, %s383
      %s384 = sphi 0, %s381
      %s385 = sphi 0, %s384
      %s401 = sphi 0, %s385
      %s407 = sphi 0, %s409
      %s410 = sphi 0, %s407
      %s411 = sphi 0, %s410
      %s427 = sphi 0, %s411
      %s433 = sphi 0, %s435
      %s436 = sphi 0, %s433
      %s437 = sphi 0, %s436
      %s453 = sphi 0, %s437
      %s459 = sphi 0, %s461
      %s462 = sphi 0, %s459
      %s463 = sphi 0, %s462
      %s479 = sphi 0, %s463
      %s485 = sphi 0, %s487
      %s488 = sphi 0, %s485
      %s489 = sphi 0, %s488
      %s505 = sphi 0, %s489
      %s511 = sphi 0, %s513
      %s514 = sphi 0, %s511
      %s515 = sphi 0, %s514
      %s531 = sphi 0, %s515
      %s537 = sphi 0, %s539
      %s540 = sphi 0, %s537
      %s541 = sphi 0, %s540
      %s557 = sphi 0, %s541
      %s563 = sphi 0, %s565
      %s566 = sphi 0, %s563
      %s567 = sphi 0, %s566
      %s583 = sphi 0, %s567
      %s589 = sphi 0, %s591
      %s592 = sphi 0, %s589
      %s593 = sphi 0, %s592
      %s609 = sphi 0, %s593
      %s615 = sphi 0, %s617
      %s618 = sphi 0, %s615
      %s619 = sphi 0, %s618
      %s635 = sphi 0, %s619
      %s641 = sphi 0, %s643
      %s644 = sphi 0, %s641
      %s645 = sphi 0, %s644
      %s661 = sphi 0, %s645
      %s667 = sphi 0, %s669
      %s670 = sphi 0, %s667
      %s671 = sphi 0, %s670
      %s687 = sphi 0, %s671
      %s693 = sphi 0, %s695
      %s696 = sphi 0, %s693
      %s697 = sphi 0, %s696
      %s713 = sphi 0, %s697
      %s719 = sphi 0, %s721
      %s722 = sphi 0, %s719
      %s723 = sphi 0, %s722
      %s739 = sphi 0, %s723
      %s745 = sphi 0, %s747
      %s748 = sphi 0, %s745
      %s749 = sphi 0, %s748
      %s765 = sphi 0, %s749
      %s771 = sphi 0, %s773
      %s774 = sphi 0, %s771
      %s775 = sphi 0, %s774
      %s791 = sphi 0, %s775
      %s797 = sphi 0, %s799
      %s800 = sphi 0, %s797
      %s801 = sphi 0, %s800
      %s817 = sphi 0, %s801
      %s823 = sphi 0, %s825
      %s826 = sphi 0, %s823
      %s827 = sphi 0, %s826
      %s843 = sphi 0, %s827
      %s847 = sphi 0, %s847
      %s849 = sphi 0, %s847
      %s850 = sphi 0, %s849
      %s864 = sphi 0, %s850
      %s868 = sphi 0, %s868
      %s870 = sphi 0, %s868
      %s871 = sphi 0, %s870
      %s885 = sphi 0, %s871
      %s891 = sphi 0, %s893
      %s894 = sphi 0, %s891
      %s895 = sphi 0, %s894
      %s911 = sphi 0, %s895
    $region4: #{fwd.3} parent=1 // loop_header_branch
      %76 = sbr.rel (%p74) target = $region8
    $region5: #{fwd.3} parent=1 // loop_body
      %s78 = ssub.s32 %s73, 1
      %s79 = ssub.s32 %s73, 2
      %s86 = sadd.s32 1, %s81
      %p87 = scmp.ge.s32.totalorder %s86, 2
      %s88 = scalar_select %p87, 0, %s86
      %s89 = sadd.s32 1, %s80
      %s90 = scalar_select %p87, %s89, %s80
      %p91 = scmp.ge.s32.totalorder %s90, 2
      %s92 = scalar_select %p91, 0, %s90
      %s93 = ssub.s32 %s80, %s92
      %p94 = scmp.eq.s32.totalorder %s93, 0
      %s96 = sadd.s32 %s95, 1
      %s97 = scalar_select %p94, %s95, %s96
      %p100 = pneg %p94
      %p101 = scmp.eq.s32.totalorder %s73, 3
      %p102 = por %p100, %p101
      %p103 = scmp.ne.s32.totalorder %s95, %s98
      %p104 = scmp.eq.s32.totalorder %s73, 0
      %p105 = por %p103, %p104
      %p106 = scmp.ne.s32.totalorder %s95, %s98
      %p107 = scmp.eq.s32.totalorder %s78, 3
      %p108 = por %p106, %p107
      %p109 = scmp.ne.s32.totalorder %s98, %s99
      %p110 = scmp.eq.s32.totalorder %s78, 0
      %p111 = por %p109, %p110
      %p112 = scmp.ne.s32.totalorder %s98, %s99
      %p113 = scmp.eq.s32.totalorder %s79, 3
      %p114 = por %p112, %p113
      %p116 = scmp.ne.s32.totalorder %s99, %s115
      %p117 = scmp.eq.s32.totalorder %s79, 0
      %p118 = por %p116, %p117
      %s119 = ssub.s32 %s80, %s92
      %p120 = scmp.eq.s32.totalorder %s119, 0
      %s122 = sadd.s32 %s121, 1
      %s123 = scalar_select %p120, %s121, %s122
      %p126 = pneg %p120
      %p127 = scmp.eq.s32.totalorder %s73, 3
      %p128 = por %p126, %p127
      %p129 = scmp.ne.s32.totalorder %s121, %s124
      %p130 = scmp.eq.s32.totalorder %s73, 0
      %p131 = por %p129, %p130
      %p132 = scmp.ne.s32.totalorder %s121, %s124
      %p133 = scmp.eq.s32.totalorder %s78, 3
      %p134 = por %p132, %p133
      %p135 = scmp.ne.s32.totalorder %s124, %s125
      %p136 = scmp.eq.s32.totalorder %s78, 0
      %p137 = por %p135, %p136
      %p138 = scmp.ne.s32.totalorder %s124, %s125
      %p139 = scmp.eq.s32.totalorder %s79, 3
      %p140 = por %p138, %p139
      %p142 = scmp.ne.s32.totalorder %s125, %s141
      %p143 = scmp.eq.s32.totalorder %s79, 0
      %p144 = por %p142, %p143
      %s145 = ssub.s32 %s80, %s92
      %p146 = scmp.eq.s32.totalorder %s145, 0
      %s148 = sadd.s32 %s147, 1
      %s149 = scalar_select %p146, %s147, %s148
      %p152 = pneg %p146
      %p153 = scmp.eq.s32.totalorder %s73, 3
      %p154 = por %p152, %p153
      %p155 = scmp.ne.s32.totalorder %s147, %s150
      %p156 = scmp.eq.s32.totalorder %s73, 0
      %p157 = por %p155, %p156
      %p158 = scmp.ne.s32.totalorder %s147, %s150
      %p159 = scmp.eq.s32.totalorder %s78, 3
      %p160 = por %p158, %p159
      %p161 = scmp.ne.s32.totalorder %s150, %s151
      %p162 = scmp.eq.s32.totalorder %s78, 0
      %p163 = por %p161, %p162
      %p164 = scmp.ne.s32.totalorder %s150, %s151
      %p165 = scmp.eq.s32.totalorder %s79, 3
      %p166 = por %p164, %p165
      %p168 = scmp.ne.s32.totalorder %s151, %s167
      %p169 = scmp.eq.s32.totalorder %s79, 0
      %p170 = por %p168, %p169
      %s171 = ssub.s32 %s80, %s92
      %p172 = scmp.eq.s32.totalorder %s171, 0
      %s174 = sadd.s32 %s173, 1
      %s175 = scalar_select %p172, %s173, %s174
      %p178 = pneg %p172
      %p179 = scmp.eq.s32.totalorder %s73, 3
      %p180 = por %p178, %p179
      %p181 = scmp.ne.s32.totalorder %s173, %s176
      %p182 = scmp.eq.s32.totalorder %s73, 0
      %p183 = por %p181, %p182
      %p184 = scmp.ne.s32.totalorder %s173, %s176
      %p185 = scmp.eq.s32.totalorder %s78, 3
      %p186 = por %p184, %p185
      %p187 = scmp.ne.s32.totalorder %s176, %s177
      %p188 = scmp.eq.s32.totalorder %s78, 0
      %p189 = por %p187, %p188
      %p190 = scmp.ne.s32.totalorder %s176, %s177
      %p191 = scmp.eq.s32.totalorder %s79, 3
      %p192 = por %p190, %p191
      %p194 = scmp.ne.s32.totalorder %s177, %s193
      %p195 = scmp.eq.s32.totalorder %s79, 0
      %p196 = por %p194, %p195
      %s197 = ssub.s32 %s80, %s92
      %p198 = scmp.eq.s32.totalorder %s197, 0
      %s200 = sadd.s32 %s199, 1
      %s201 = scalar_select %p198, %s199, %s200
      %p204 = pneg %p198
      %p205 = scmp.eq.s32.totalorder %s73, 3
      %p206 = por %p204, %p205
      %p207 = scmp.ne.s32.totalorder %s199, %s202
      %p208 = scmp.eq.s32.totalorder %s73, 0
      %p209 = por %p207, %p208
      %p210 = scmp.ne.s32.totalorder %s199, %s202
      %p211 = scmp.eq.s32.totalorder %s78, 3
      %p212 = por %p210, %p211
      %p213 = scmp.ne.s32.totalorder %s202, %s203
      %p214 = scmp.eq.s32.totalorder %s78, 0
      %p215 = por %p213, %p214
      %p216 = scmp.ne.s32.totalorder %s202, %s203
      %p217 = scmp.eq.s32.totalorder %s79, 3
      %p218 = por %p216, %p217
      %p220 = scmp.ne.s32.totalorder %s203, %s219
      %p221 = scmp.eq.s32.totalorder %s79, 0
      %p222 = por %p220, %p221
      %s223 = ssub.s32 %s81, %s88
      %p224 = scmp.eq.s32.totalorder %s223, 0
      %s226 = sadd.s32 %s225, 1
      %s227 = scalar_select %p224, %s225, %s226
      %p230 = pneg %p224
      %p231 = scmp.eq.s32.totalorder %s73, 3
      %p232 = por %p230, %p231
      %p233 = scmp.ne.s32.totalorder %s225, %s228
      %p234 = scmp.eq.s32.totalorder %s73, 0
      %p235 = por %p233, %p234
      %p236 = scmp.ne.s32.totalorder %s225, %s228
      %p237 = scmp.eq.s32.totalorder %s78, 3
      %p238 = por %p236, %p237
      %p239 = scmp.ne.s32.totalorder %s228, %s229
      %p240 = scmp.eq.s32.totalorder %s78, 0
      %p241 = por %p239, %p240
      %p242 = scmp.ne.s32.totalorder %s228, %s229
      %p243 = scmp.eq.s32.totalorder %s79, 3
      %p244 = por %p242, %p243
      %p246 = scmp.ne.s32.totalorder %s229, %s245
      %p247 = scmp.eq.s32.totalorder %s79, 0
      %p248 = por %p246, %p247
      %s249 = ssub.s32 %s81, %s88
      %p250 = scmp.eq.s32.totalorder %s249, 0
      %s252 = sadd.s32 %s251, 1
      %s253 = scalar_select %p250, %s251, %s252
      %p256 = pneg %p250
      %p257 = scmp.eq.s32.totalorder %s73, 3
      %p258 = por %p256, %p257
      %p259 = scmp.ne.s32.totalorder %s251, %s254
      %p260 = scmp.eq.s32.totalorder %s73, 0
      %p261 = por %p259, %p260
      %p262 = scmp.ne.s32.totalorder %s251, %s254
      %p263 = scmp.eq.s32.totalorder %s78, 3
      %p264 = por %p262, %p263
      %p265 = scmp.ne.s32.totalorder %s254, %s255
      %p266 = scmp.eq.s32.totalorder %s78, 0
      %p267 = por %p265, %p266
      %p268 = scmp.ne.s32.totalorder %s254, %s255
      %p269 = scmp.eq.s32.totalorder %s79, 3
      %p270 = por %p268, %p269
      %p272 = scmp.ne.s32.totalorder %s255, %s271
      %p273 = scmp.eq.s32.totalorder %s79, 0
      %p274 = por %p272, %p273
      %s275 = ssub.s32 %s81, %s88
      %p276 = scmp.eq.s32.totalorder %s275, 0
      %s278 = sadd.s32 %s277, 1
      %s279 = scalar_select %p276, %s277, %s278
      %p282 = pneg %p276
      %p283 = scmp.eq.s32.totalorder %s73, 3
      %p284 = por %p282, %p283
      %p285 = scmp.ne.s32.totalorder %s277, %s280
      %p286 = scmp.eq.s32.totalorder %s73, 0
      %p287 = por %p285, %p286
      %p288 = scmp.ne.s32.totalorder %s277, %s280
      %p289 = scmp.eq.s32.totalorder %s78, 3
      %p290 = por %p288, %p289
      %p291 = scmp.ne.s32.totalorder %s280, %s281
      %p292 = scmp.eq.s32.totalorder %s78, 0
      %p293 = por %p291, %p292
      %p294 = scmp.ne.s32.totalorder %s280, %s281
      %p295 = scmp.eq.s32.totalorder %s79, 3
      %p296 = por %p294, %p295
      %p298 = scmp.ne.s32.totalorder %s281, %s297
      %p299 = scmp.eq.s32.totalorder %s79, 0
      %p300 = por %p298, %p299
      %s301 = ssub.s32 %s81, %s88
      %p302 = scmp.eq.s32.totalorder %s301, 0
      %s304 = sadd.s32 %s303, 1
      %s305 = scalar_select %p302, %s303, %s304
      %p308 = pneg %p302
      %p309 = scmp.eq.s32.totalorder %s73, 3
      %p310 = por %p308, %p309
      %p311 = scmp.ne.s32.totalorder %s303, %s306
      %p312 = scmp.eq.s32.totalorder %s73, 0
      %p313 = por %p311, %p312
      %p314 = scmp.ne.s32.totalorder %s303, %s306
      %p315 = scmp.eq.s32.totalorder %s78, 3
      %p316 = por %p314, %p315
      %p317 = scmp.ne.s32.totalorder %s306, %s307
      %p318 = scmp.eq.s32.totalorder %s78, 0
      %p319 = por %p317, %p318
      %p320 = scmp.ne.s32.totalorder %s306, %s307
      %p321 = scmp.eq.s32.totalorder %s79, 3
      %p322 = por %p320, %p321
      %p324 = scmp.ne.s32.totalorder %s307, %s323
      %p325 = scmp.eq.s32.totalorder %s79, 0
      %p326 = por %p324, %p325
      %s327 = ssub.s32 %s81, %s88
      %p328 = scmp.eq.s32.totalorder %s327, 0
      %s330 = sadd.s32 %s329, 1
      %s331 = scalar_select %p328, %s329, %s330
      %p334 = pneg %p328
      %p335 = scmp.eq.s32.totalorder %s73, 3
      %p336 = por %p334, %p335
      %p337 = scmp.ne.s32.totalorder %s329, %s332
      %p338 = scmp.eq.s32.totalorder %s73, 0
      %p339 = por %p337, %p338
      %p340 = scmp.ne.s32.totalorder %s329, %s332
      %p341 = scmp.eq.s32.totalorder %s78, 3
      %p342 = por %p340, %p341
      %p343 = scmp.ne.s32.totalorder %s332, %s333
      %p344 = scmp.eq.s32.totalorder %s78, 0
      %p345 = por %p343, %p344
      %p346 = scmp.ne.s32.totalorder %s332, %s333
      %p347 = scmp.eq.s32.totalorder %s79, 3
      %p348 = por %p346, %p347
      %p350 = scmp.ne.s32.totalorder %s333, %s349
      %p351 = scmp.eq.s32.totalorder %s79, 0
      %p352 = por %p350, %p351
      %s353 = ssub.s32 %s81, %s88
      %p354 = scmp.eq.s32.totalorder %s353, 0
      %s356 = sadd.s32 %s355, 1
      %s357 = scalar_select %p354, %s355, %s356
      %p360 = pneg %p354
      %p361 = scmp.eq.s32.totalorder %s73, 3
      %p362 = por %p360, %p361
      %p363 = scmp.ne.s32.totalorder %s355, %s358
      %p364 = scmp.eq.s32.totalorder %s73, 0
      %p365 = por %p363, %p364
      %p366 = scmp.ne.s32.totalorder %s355, %s358
      %p367 = scmp.eq.s32.totalorder %s78, 3
      %p368 = por %p366, %p367
      %p369 = scmp.ne.s32.totalorder %s358, %s359
      %p370 = scmp.eq.s32.totalorder %s78, 0
      %p371 = por %p369, %p370
      %p372 = scmp.ne.s32.totalorder %s358, %s359
      %p373 = scmp.eq.s32.totalorder %s79, 3
      %p374 = por %p372, %p373
      %p376 = scmp.ne.s32.totalorder %s359, %s375
      %p377 = scmp.eq.s32.totalorder %s79, 0
      %p378 = por %p376, %p377
      %s379 = ssub.s32 %s81, %s88
      %p380 = scmp.eq.s32.totalorder %s379, 0
      %s382 = sadd.s32 %s381, 1
      %s383 = scalar_select %p380, %s381, %s382
      %p386 = pneg %p380
      %p387 = scmp.eq.s32.totalorder %s73, 3
      %p388 = por %p386, %p387
      %p389 = scmp.ne.s32.totalorder %s381, %s384
      %p390 = scmp.eq.s32.totalorder %s73, 0
      %p391 = por %p389, %p390
      %p392 = scmp.ne.s32.totalorder %s381, %s384
      %p393 = scmp.eq.s32.totalorder %s78, 3
      %p394 = por %p392, %p393
      %p395 = scmp.ne.s32.totalorder %s384, %s385
      %p396 = scmp.eq.s32.totalorder %s78, 0
      %p397 = por %p395, %p396
      %p398 = scmp.ne.s32.totalorder %s384, %s385
      %p399 = scmp.eq.s32.totalorder %s79, 3
      %p400 = por %p398, %p399
      %p402 = scmp.ne.s32.totalorder %s385, %s401
      %p403 = scmp.eq.s32.totalorder %s79, 0
      %p404 = por %p402, %p403
      %s405 = ssub.s32 %s81, %s88
      %p406 = scmp.eq.s32.totalorder %s405, 0
      %s408 = sadd.s32 %s407, 1
      %s409 = scalar_select %p406, %s407, %s408
      %p412 = pneg %p406
      %p413 = scmp.eq.s32.totalorder %s73, 3
      %p414 = por %p412, %p413
      %p415 = scmp.ne.s32.totalorder %s407, %s410
      %p416 = scmp.eq.s32.totalorder %s73, 0
      %p417 = por %p415, %p416
      %p418 = scmp.ne.s32.totalorder %s407, %s410
      %p419 = scmp.eq.s32.totalorder %s78, 3
      %p420 = por %p418, %p419
      %p421 = scmp.ne.s32.totalorder %s410, %s411
      %p422 = scmp.eq.s32.totalorder %s78, 0
      %p423 = por %p421, %p422
      %p424 = scmp.ne.s32.totalorder %s410, %s411
      %p425 = scmp.eq.s32.totalorder %s79, 3
      %p426 = por %p424, %p425
      %p428 = scmp.ne.s32.totalorder %s411, %s427
      %p429 = scmp.eq.s32.totalorder %s79, 0
      %p430 = por %p428, %p429
      %s431 = ssub.s32 %s81, %s88
      %p432 = scmp.eq.s32.totalorder %s431, 0
      %s434 = sadd.s32 %s433, 1
      %s435 = scalar_select %p432, %s433, %s434
      %p438 = pneg %p432
      %p439 = scmp.eq.s32.totalorder %s73, 3
      %p440 = por %p438, %p439
      %p441 = scmp.ne.s32.totalorder %s433, %s436
      %p442 = scmp.eq.s32.totalorder %s73, 0
      %p443 = por %p441, %p442
      %p444 = scmp.ne.s32.totalorder %s433, %s436
      %p445 = scmp.eq.s32.totalorder %s78, 3
      %p446 = por %p444, %p445
      %p447 = scmp.ne.s32.totalorder %s436, %s437
      %p448 = scmp.eq.s32.totalorder %s78, 0
      %p449 = por %p447, %p448
      %p450 = scmp.ne.s32.totalorder %s436, %s437
      %p451 = scmp.eq.s32.totalorder %s79, 3
      %p452 = por %p450, %p451
      %p454 = scmp.ne.s32.totalorder %s437, %s453
      %p455 = scmp.eq.s32.totalorder %s79, 0
      %p456 = por %p454, %p455
      %s457 = ssub.s32 %s81, %s88
      %p458 = scmp.eq.s32.totalorder %s457, 0
      %s460 = sadd.s32 %s459, 1
      %s461 = scalar_select %p458, %s459, %s460
      %p464 = pneg %p458
      %p465 = scmp.eq.s32.totalorder %s73, 3
      %p466 = por %p464, %p465
      %p467 = scmp.ne.s32.totalorder %s459, %s462
      %p468 = scmp.eq.s32.totalorder %s73, 0
      %p469 = por %p467, %p468
      %p470 = scmp.ne.s32.totalorder %s459, %s462
      %p471 = scmp.eq.s32.totalorder %s78, 3
      %p472 = por %p470, %p471
      %p473 = scmp.ne.s32.totalorder %s462, %s463
      %p474 = scmp.eq.s32.totalorder %s78, 0
      %p475 = por %p473, %p474
      %p476 = scmp.ne.s32.totalorder %s462, %s463
      %p477 = scmp.eq.s32.totalorder %s79, 3
      %p478 = por %p476, %p477
      %p480 = scmp.ne.s32.totalorder %s463, %s479
      %p481 = scmp.eq.s32.totalorder %s79, 0
      %p482 = por %p480, %p481
      %s483 = ssub.s32 %s81, %s88
      %p484 = scmp.eq.s32.totalorder %s483, 0
      %s486 = sadd.s32 %s485, 1
      %s487 = scalar_select %p484, %s485, %s486
      %p490 = pneg %p484
      %p491 = scmp.eq.s32.totalorder %s73, 3
      %p492 = por %p490, %p491
      %p493 = scmp.ne.s32.totalorder %s485, %s488
      %p494 = scmp.eq.s32.totalorder %s73, 0
      %p495 = por %p493, %p494
      %p496 = scmp.ne.s32.totalorder %s485, %s488
      %p497 = scmp.eq.s32.totalorder %s78, 3
      %p498 = por %p496, %p497
      %p499 = scmp.ne.s32.totalorder %s488, %s489
      %p500 = scmp.eq.s32.totalorder %s78, 0
      %p501 = por %p499, %p500
      %p502 = scmp.ne.s32.totalorder %s488, %s489
      %p503 = scmp.eq.s32.totalorder %s79, 3
      %p504 = por %p502, %p503
      %p506 = scmp.ne.s32.totalorder %s489, %s505
      %p507 = scmp.eq.s32.totalorder %s79, 0
      %p508 = por %p506, %p507
      %s509 = ssub.s32 %s81, %s88
      %p510 = scmp.eq.s32.totalorder %s509, 0
      %s512 = sadd.s32 %s511, 1
      %s513 = scalar_select %p510, %s511, %s512
      %p516 = pneg %p510
      %p517 = scmp.eq.s32.totalorder %s73, 3
      %p518 = por %p516, %p517
      %p519 = scmp.ne.s32.totalorder %s511, %s514
      %p520 = scmp.eq.s32.totalorder %s73, 0
      %p521 = por %p519, %p520
      %p522 = scmp.ne.s32.totalorder %s511, %s514
      %p523 = scmp.eq.s32.totalorder %s78, 3
      %p524 = por %p522, %p523
      %p525 = scmp.ne.s32.totalorder %s514, %s515
      %p526 = scmp.eq.s32.totalorder %s78, 0
      %p527 = por %p525, %p526
      %p528 = scmp.ne.s32.totalorder %s514, %s515
      %p529 = scmp.eq.s32.totalorder %s79, 3
      %p530 = por %p528, %p529
      %p532 = scmp.ne.s32.totalorder %s515, %s531
      %p533 = scmp.eq.s32.totalorder %s79, 0
      %p534 = por %p532, %p533
      %s535 = ssub.s32 %s81, %s88
      %p536 = scmp.eq.s32.totalorder %s535, 0
      %s538 = sadd.s32 %s537, 1
      %s539 = scalar_select %p536, %s537, %s538
      %p542 = pneg %p536
      %p543 = scmp.eq.s32.totalorder %s73, 3
      %p544 = por %p542, %p543
      %p545 = scmp.ne.s32.totalorder %s537, %s540
      %p546 = scmp.eq.s32.totalorder %s73, 0
      %p547 = por %p545, %p546
      %p548 = scmp.ne.s32.totalorder %s537, %s540
      %p549 = scmp.eq.s32.totalorder %s78, 3
      %p550 = por %p548, %p549
      %p551 = scmp.ne.s32.totalorder %s540, %s541
      %p552 = scmp.eq.s32.totalorder %s78, 0
      %p553 = por %p551, %p552
      %p554 = scmp.ne.s32.totalorder %s540, %s541
      %p555 = scmp.eq.s32.totalorder %s79, 3
      %p556 = por %p554, %p555
      %p558 = scmp.ne.s32.totalorder %s541, %s557
      %p559 = scmp.eq.s32.totalorder %s79, 0
      %p560 = por %p558, %p559
      %s561 = ssub.s32 %s81, %s88
      %p562 = scmp.eq.s32.totalorder %s561, 0
      %s564 = sadd.s32 %s563, 1
      %s565 = scalar_select %p562, %s563, %s564
      %p568 = pneg %p562
      %p569 = scmp.eq.s32.totalorder %s73, 3
      %p570 = por %p568, %p569
      %p571 = scmp.ne.s32.totalorder %s563, %s566
      %p572 = scmp.eq.s32.totalorder %s73, 0
      %p573 = por %p571, %p572
      %p574 = scmp.ne.s32.totalorder %s563, %s566
      %p575 = scmp.eq.s32.totalorder %s78, 3
      %p576 = por %p574, %p575
      %p577 = scmp.ne.s32.totalorder %s566, %s567
      %p578 = scmp.eq.s32.totalorder %s78, 0
      %p579 = por %p577, %p578
      %p580 = scmp.ne.s32.totalorder %s566, %s567
      %p581 = scmp.eq.s32.totalorder %s79, 3
      %p582 = por %p580, %p581
      %p584 = scmp.ne.s32.totalorder %s567, %s583
      %p585 = scmp.eq.s32.totalorder %s79, 0
      %p586 = por %p584, %p585
      %s587 = ssub.s32 %s81, %s88
      %p588 = scmp.eq.s32.totalorder %s587, 0
      %s590 = sadd.s32 %s589, 1
      %s591 = scalar_select %p588, %s589, %s590
      %p594 = pneg %p588
      %p595 = scmp.eq.s32.totalorder %s73, 3
      %p596 = por %p594, %p595
      %p597 = scmp.ne.s32.totalorder %s589, %s592
      %p598 = scmp.eq.s32.totalorder %s73, 0
      %p599 = por %p597, %p598
      %p600 = scmp.ne.s32.totalorder %s589, %s592
      %p601 = scmp.eq.s32.totalorder %s78, 3
      %p602 = por %p600, %p601
      %p603 = scmp.ne.s32.totalorder %s592, %s593
      %p604 = scmp.eq.s32.totalorder %s78, 0
      %p605 = por %p603, %p604
      %p606 = scmp.ne.s32.totalorder %s592, %s593
      %p607 = scmp.eq.s32.totalorder %s79, 3
      %p608 = por %p606, %p607
      %p610 = scmp.ne.s32.totalorder %s593, %s609
      %p611 = scmp.eq.s32.totalorder %s79, 0
      %p612 = por %p610, %p611
      %s613 = ssub.s32 %s81, %s88
      %p614 = scmp.eq.s32.totalorder %s613, 0
      %s616 = sadd.s32 %s615, 1
      %s617 = scalar_select %p614, %s615, %s616
      %p620 = pneg %p614
      %p621 = scmp.eq.s32.totalorder %s73, 3
      %p622 = por %p620, %p621
      %p623 = scmp.ne.s32.totalorder %s615, %s618
      %p624 = scmp.eq.s32.totalorder %s73, 0
      %p625 = por %p623, %p624
      %p626 = scmp.ne.s32.totalorder %s615, %s618
      %p627 = scmp.eq.s32.totalorder %s78, 3
      %p628 = por %p626, %p627
      %p629 = scmp.ne.s32.totalorder %s618, %s619
      %p630 = scmp.eq.s32.totalorder %s78, 0
      %p631 = por %p629, %p630
      %p632 = scmp.ne.s32.totalorder %s618, %s619
      %p633 = scmp.eq.s32.totalorder %s79, 3
      %p634 = por %p632, %p633
      %p636 = scmp.ne.s32.totalorder %s619, %s635
      %p637 = scmp.eq.s32.totalorder %s79, 0
      %p638 = por %p636, %p637
      %s639 = ssub.s32 %s81, %s88
      %p640 = scmp.eq.s32.totalorder %s639, 0
      %s642 = sadd.s32 %s641, 1
      %s643 = scalar_select %p640, %s641, %s642
      %p646 = pneg %p640
      %p647 = scmp.eq.s32.totalorder %s73, 3
      %p648 = por %p646, %p647
      %p649 = scmp.ne.s32.totalorder %s641, %s644
      %p650 = scmp.eq.s32.totalorder %s73, 0
      %p651 = por %p649, %p650
      %p652 = scmp.ne.s32.totalorder %s641, %s644
      %p653 = scmp.eq.s32.totalorder %s78, 3
      %p654 = por %p652, %p653
      %p655 = scmp.ne.s32.totalorder %s644, %s645
      %p656 = scmp.eq.s32.totalorder %s78, 0
      %p657 = por %p655, %p656
      %p658 = scmp.ne.s32.totalorder %s644, %s645
      %p659 = scmp.eq.s32.totalorder %s79, 3
      %p660 = por %p658, %p659
      %p662 = scmp.ne.s32.totalorder %s645, %s661
      %p663 = scmp.eq.s32.totalorder %s79, 0
      %p664 = por %p662, %p663
      %s665 = ssub.s32 %s81, %s88
      %p666 = scmp.eq.s32.totalorder %s665, 0
      %s668 = sadd.s32 %s667, 1
      %s669 = scalar_select %p666, %s667, %s668
      %p672 = pneg %p666
      %p673 = scmp.eq.s32.totalorder %s73, 3
      %p674 = por %p672, %p673
      %p675 = scmp.ne.s32.totalorder %s667, %s670
      %p676 = scmp.eq.s32.totalorder %s73, 0
      %p677 = por %p675, %p676
      %p678 = scmp.ne.s32.totalorder %s667, %s670
      %p679 = scmp.eq.s32.totalorder %s78, 3
      %p680 = por %p678, %p679
      %p681 = scmp.ne.s32.totalorder %s670, %s671
      %p682 = scmp.eq.s32.totalorder %s78, 0
      %p683 = por %p681, %p682
      %p684 = scmp.ne.s32.totalorder %s670, %s671
      %p685 = scmp.eq.s32.totalorder %s79, 3
      %p686 = por %p684, %p685
      %p688 = scmp.ne.s32.totalorder %s671, %s687
      %p689 = scmp.eq.s32.totalorder %s79, 0
      %p690 = por %p688, %p689
      %s691 = ssub.s32 %s81, %s88
      %p692 = scmp.eq.s32.totalorder %s691, 0
      %s694 = sadd.s32 %s693, 1
      %s695 = scalar_select %p692, %s693, %s694
      %p698 = pneg %p692
      %p699 = scmp.eq.s32.totalorder %s73, 3
      %p700 = por %p698, %p699
      %p701 = scmp.ne.s32.totalorder %s693, %s696
      %p702 = scmp.eq.s32.totalorder %s73, 0
      %p703 = por %p701, %p702
      %p704 = scmp.ne.s32.totalorder %s693, %s696
      %p705 = scmp.eq.s32.totalorder %s78, 3
      %p706 = por %p704, %p705
      %p707 = scmp.ne.s32.totalorder %s696, %s697
      %p708 = scmp.eq.s32.totalorder %s78, 0
      %p709 = por %p707, %p708
      %p710 = scmp.ne.s32.totalorder %s696, %s697
      %p711 = scmp.eq.s32.totalorder %s79, 3
      %p712 = por %p710, %p711
      %p714 = scmp.ne.s32.totalorder %s697, %s713
      %p715 = scmp.eq.s32.totalorder %s79, 0
      %p716 = por %p714, %p715
      %s717 = ssub.s32 %s81, %s88
      %p718 = scmp.eq.s32.totalorder %s717, 0
      %s720 = sadd.s32 %s719, 1
      %s721 = scalar_select %p718, %s719, %s720
      %p724 = pneg %p718
      %p725 = scmp.eq.s32.totalorder %s73, 3
      %p726 = por %p724, %p725
      %p727 = scmp.ne.s32.totalorder %s719, %s722
      %p728 = scmp.eq.s32.totalorder %s73, 0
      %p729 = por %p727, %p728
      %p730 = scmp.ne.s32.totalorder %s719, %s722
      %p731 = scmp.eq.s32.totalorder %s78, 3
      %p732 = por %p730, %p731
      %p733 = scmp.ne.s32.totalorder %s722, %s723
      %p734 = scmp.eq.s32.totalorder %s78, 0
      %p735 = por %p733, %p734
      %p736 = scmp.ne.s32.totalorder %s722, %s723
      %p737 = scmp.eq.s32.totalorder %s79, 3
      %p738 = por %p736, %p737
      %p740 = scmp.ne.s32.totalorder %s723, %s739
      %p741 = scmp.eq.s32.totalorder %s79, 0
      %p742 = por %p740, %p741
      %s743 = ssub.s32 %s81, %s88
      %p744 = scmp.eq.s32.totalorder %s743, 0
      %s746 = sadd.s32 %s745, 1
      %s747 = scalar_select %p744, %s745, %s746
      %p750 = pneg %p744
      %p751 = scmp.eq.s32.totalorder %s73, 3
      %p752 = por %p750, %p751
      %p753 = scmp.ne.s32.totalorder %s745, %s748
      %p754 = scmp.eq.s32.totalorder %s73, 0
      %p755 = por %p753, %p754
      %p756 = scmp.ne.s32.totalorder %s745, %s748
      %p757 = scmp.eq.s32.totalorder %s78, 3
      %p758 = por %p756, %p757
      %p759 = scmp.ne.s32.totalorder %s748, %s749
      %p760 = scmp.eq.s32.totalorder %s78, 0
      %p761 = por %p759, %p760
      %p762 = scmp.ne.s32.totalorder %s748, %s749
      %p763 = scmp.eq.s32.totalorder %s79, 3
      %p764 = por %p762, %p763
      %p766 = scmp.ne.s32.totalorder %s749, %s765
      %p767 = scmp.eq.s32.totalorder %s79, 0
      %p768 = por %p766, %p767
      %s769 = ssub.s32 %s81, %s88
      %p770 = scmp.eq.s32.totalorder %s769, 0
      %s772 = sadd.s32 %s771, 1
      %s773 = scalar_select %p770, %s771, %s772
      %p776 = pneg %p770
      %p777 = scmp.eq.s32.totalorder %s73, 3
      %p778 = por %p776, %p777
      %p779 = scmp.ne.s32.totalorder %s771, %s774
      %p780 = scmp.eq.s32.totalorder %s73, 0
      %p781 = por %p779, %p780
      %p782 = scmp.ne.s32.totalorder %s771, %s774
      %p783 = scmp.eq.s32.totalorder %s78, 3
      %p784 = por %p782, %p783
      %p785 = scmp.ne.s32.totalorder %s774, %s775
      %p786 = scmp.eq.s32.totalorder %s78, 0
      %p787 = por %p785, %p786
      %p788 = scmp.ne.s32.totalorder %s774, %s775
      %p789 = scmp.eq.s32.totalorder %s79, 3
      %p790 = por %p788, %p789
      %p792 = scmp.ne.s32.totalorder %s775, %s791
      %p793 = scmp.eq.s32.totalorder %s79, 0
      %p794 = por %p792, %p793
      %s795 = ssub.s32 %s81, %s88
      %p796 = scmp.eq.s32.totalorder %s795, 0
      %s798 = sadd.s32 %s797, 1
      %s799 = scalar_select %p796, %s797, %s798
      %p802 = pneg %p796
      %p803 = scmp.eq.s32.totalorder %s73, 3
      %p804 = por %p802, %p803
      %p805 = scmp.ne.s32.totalorder %s797, %s800
      %p806 = scmp.eq.s32.totalorder %s73, 0
      %p807 = por %p805, %p806
      %p808 = scmp.ne.s32.totalorder %s797, %s800
      %p809 = scmp.eq.s32.totalorder %s78, 3
      %p810 = por %p808, %p809
      %p811 = scmp.ne.s32.totalorder %s800, %s801
      %p812 = scmp.eq.s32.totalorder %s78, 0
      %p813 = por %p811, %p812
      %p814 = scmp.ne.s32.totalorder %s800, %s801
      %p815 = scmp.eq.s32.totalorder %s79, 3
      %p816 = por %p814, %p815
      %p818 = scmp.ne.s32.totalorder %s801, %s817
      %p819 = scmp.eq.s32.totalorder %s79, 0
      %p820 = por %p818, %p819
      %s821 = ssub.s32 %s81, %s88
      %p822 = scmp.eq.s32.totalorder %s821, 0
      %s824 = sadd.s32 %s823, 1
      %s825 = scalar_select %p822, %s823, %s824
      %p828 = pneg %p822
      %p829 = scmp.eq.s32.totalorder %s73, 3
      %p830 = por %p828, %p829
      %p831 = scmp.ne.s32.totalorder %s823, %s826
      %p832 = scmp.eq.s32.totalorder %s73, 0
      %p833 = por %p831, %p832
      %p834 = scmp.ne.s32.totalorder %s823, %s826
      %p835 = scmp.eq.s32.totalorder %s78, 3
      %p836 = por %p834, %p835
      %p837 = scmp.ne.s32.totalorder %s826, %s827
      %p838 = scmp.eq.s32.totalorder %s78, 0
      %p839 = por %p837, %p838
      %p840 = scmp.ne.s32.totalorder %s826, %s827
      %p841 = scmp.eq.s32.totalorder %s79, 3
      %p842 = por %p840, %p841
      %p844 = scmp.ne.s32.totalorder %s827, %s843
      %p845 = scmp.eq.s32.totalorder %s79, 0
      %p846 = por %p844, %p845
      %s848 = sadd.s32 %s847, 1
      %p851 = scmp.eq.s32.totalorder %s73, 3
      %p852 = scmp.ne.s32.totalorder %s847, %s849
      %p853 = scmp.eq.s32.totalorder %s73, 0
      %p854 = por %p852, %p853
      %p855 = scmp.ne.s32.totalorder %s847, %s849
      %p856 = scmp.eq.s32.totalorder %s78, 3
      %p857 = por %p855, %p856
      %p858 = scmp.ne.s32.totalorder %s849, %s850
      %p859 = scmp.eq.s32.totalorder %s78, 0
      %p860 = por %p858, %p859
      %p861 = scmp.ne.s32.totalorder %s849, %s850
      %p862 = scmp.eq.s32.totalorder %s79, 3
      %p863 = por %p861, %p862
      %p865 = scmp.ne.s32.totalorder %s850, %s864
      %p866 = scmp.eq.s32.totalorder %s79, 0
      %p867 = por %p865, %p866
      %s869 = sadd.s32 %s868, 1
      %p872 = scmp.eq.s32.totalorder %s73, 3
      %p873 = scmp.ne.s32.totalorder %s868, %s870
      %p874 = scmp.eq.s32.totalorder %s73, 0
      %p875 = por %p873, %p874
      %p876 = scmp.ne.s32.totalorder %s868, %s870
      %p877 = scmp.eq.s32.totalorder %s78, 3
      %p878 = por %p876, %p877
      %p879 = scmp.ne.s32.totalorder %s870, %s871
      %p880 = scmp.eq.s32.totalorder %s78, 0
      %p881 = por %p879, %p880
      %p882 = scmp.ne.s32.totalorder %s870, %s871
      %p883 = scmp.eq.s32.totalorder %s79, 3
      %p884 = por %p882, %p883
      %p886 = scmp.ne.s32.totalorder %s871, %s885
      %p887 = scmp.eq.s32.totalorder %s79, 0
      %p888 = por %p886, %p887
      %s889 = ssub.s32 %s80, %s92
      %p890 = scmp.eq.s32.totalorder %s889, 0
      %s892 = sadd.s32 %s891, 1
      %s893 = scalar_select %p890, %s891, %s892
      %p896 = pneg %p890
      %p897 = scmp.eq.s32.totalorder %s73, 3
      %p898 = por %p896, %p897
      %p899 = scmp.ne.s32.totalorder %s891, %s894
      %p900 = scmp.eq.s32.totalorder %s73, 0
      %p901 = por %p899, %p900
      %p902 = scmp.ne.s32.totalorder %s891, %s894
      %p903 = scmp.eq.s32.totalorder %s78, 3
      %p904 = por %p902, %p903
      %p905 = scmp.ne.s32.totalorder %s894, %s895
      %p906 = scmp.eq.s32.totalorder %s78, 0
      %p907 = por %p905, %p906
      %p908 = scmp.ne.s32.totalorder %s894, %s895
      %p909 = scmp.eq.s32.totalorder %s79, 3
      %p910 = por %p908, %p909
      %p912 = scmp.ne.s32.totalorder %s895, %s911
      %p913 = scmp.eq.s32.totalorder %s79, 0
      %p914 = por %p912, %p913
      %p915 = scmp.le.s32.totalorder 1, %s73
      %p916 = scmp.lt.s32.totalorder %s73, 5
      %p917 = pnand %p915, %p916
      %p918 = pneg %p917
      // Predicated region
      $region9: #{fwd.3} parent=5 // pred_check
        _
      $region10: #{fwd.3} parent=5 // pred_check_branch
        %920 = sbr.rel (%p917) target = $region12
      $region11: #{fwd.3} parent=5 // pred_region
        %s921 = ssub.s32 %s73, 1
        // Predicated region
        $region13: #{fwd.3} parent=11 // pred_check
          %p922 = pneg %p860
        $region14: #{fwd.3} parent=11 // pred_check_branch
          %924 = sbr.rel (%p922) target = $region16
        $region15: #{fwd.3} parent=11 // pred_region
          _
        $region16: #{fwd.3} parent=11 // pred_fallthru
          _
        // Predicated region
        $region17: #{fwd.3} parent=11 // pred_check
          %p925 = pneg %p881
        $region18: #{fwd.3} parent=11 // pred_check_branch
          %927 = sbr.rel (%p925) target = $region20
        $region19: #{fwd.3} parent=11 // pred_region
          %s929 = ssub.s32 16, 16
          %930 = vsyncadd [#allocation4], %s929
          %s932 = sshll.u32 [#allocation3], 4
          %s933 = int_to_ptr.vmem [resolvable:$true] %s932
          %935 = dma.hbm_to_vmem [thread:$0]  %s61, 16, %s933, [#allocation4]
        $region20: #{fwd.3} parent=11 // pred_fallthru
          _
      $region12: #{fwd.3} parent=5 // pred_fallthru
        _
      %p936 = scmp.lt.s32.totalorder %s73, 4
      // Predicated region
      $region21: #{fwd.3} parent=5 // pred_check
        %p937 = pneg %p936
      $region22: #{fwd.3} parent=5 // pred_check_branch
        %939 = sbr.rel (%p937) target = $region24
      $region23: #{fwd.3} parent=5 // pred_region
        // Predicated region
        $region25: #{fwd.3} parent=23 // pred_check
          %p940 = pneg %p105
        $region26: #{fwd.3} parent=23 // pred_check_branch
          %942 = sbr.rel (%p940) target = $region28
        $region27: #{fwd.3} parent=23 // pred_region
          %p943 = scmp.lt.s32.totalorder %s80, 1
          %s944 = scalar_select %p943, %s80, 1
          %s945 = smul.addr %s944, 8
          %s946 = scalar_lea.vmem %s1, %s945
        $region28: #{fwd.3} parent=23 // pred_fallthru
          _
        // Predicated region
        $region29: #{fwd.3} parent=23 // pred_check
          %p947 = pneg %p131
        $region30: #{fwd.3} parent=23 // pred_check_branch
          %949 = sbr.rel (%p947) target = $region32
        $region31: #{fwd.3} parent=23 // pred_region
          %p950 = scmp.lt.s32.totalorder %s80, 1
          %s951 = scalar_select %p950, %s80, 1
          %s952 = smul.addr %s951, 2
          %s953 = smul.addr %s952, 8
          %s954 = scalar_lea.vmem %s3, %s953
        $region32: #{fwd.3} parent=23 // pred_fallthru
          _
        // Predicated region
        $region33: #{fwd.3} parent=23 // pred_check
          %p955 = pneg %p157
        $region34: #{fwd.3} parent=23 // pred_check_branch
          %957 = sbr.rel (%p955) target = $region36
        $region35: #{fwd.3} parent=23 // pred_region
          %p958 = scmp.lt.s32.totalorder %s80, 1
          %s959 = scalar_select %p958, %s80, 1
          %s960 = smul.addr %s959, 2
          %s961 = smul.addr %s960, 8
          %s962 = scalar_lea.vmem %s5, %s961
        $region36: #{fwd.3} parent=23 // pred_fallthru
          _
        // Predicated region
        $region37: #{fwd.3} parent=23 // pred_check
          %p963 = pneg %p183
        $region38: #{fwd.3} parent=23 // pred_check_branch
          %965 = sbr.rel (%p963) target = $region40
        $region39: #{fwd.3} parent=23 // pred_region
          %p966 = scmp.lt.s32.totalorder %s80, 1
          %s967 = scalar_select %p966, %s80, 1
          %s968 = smul.addr %s967, 2
          %s969 = smul.addr %s968, 8
          %s970 = scalar_lea.vmem %s7, %s969
        $region40: #{fwd.3} parent=23 // pred_fallthru
          _
        // Predicated region
        $region41: #{fwd.3} parent=23 // pred_check
          %p971 = pneg %p209
        $region42: #{fwd.3} parent=23 // pred_check_branch
          %973 = sbr.rel (%p971) target = $region44
        $region43: #{fwd.3} parent=23 // pred_region
          %p974 = scmp.lt.s32.totalorder %s80, 1
          %s975 = scalar_select %p974, %s80, 1
          %s976 = scalar_lea.vmem %s9, %s975
        $region44: #{fwd.3} parent=23 // pred_fallthru
          _
        // Predicated region
        $region45: #{fwd.3} parent=23 // pred_check
          %p977 = pneg %p235
        $region46: #{fwd.3} parent=23 // pred_check_branch
          %979 = sbr.rel (%p977) target = $region48
        $region47: #{fwd.3} parent=23 // pred_region
          %p980 = scmp.lt.s32.totalorder %s81, 1
          %s981 = scalar_select %p980, %s81, 1
          %s982 = smul.addr %s981, 4
          %s983 = smul.addr %s982, 4
          %s984 = scalar_lea.vmem %s11, %s983
        $region48: #{fwd.3} parent=23 // pred_fallthru
          _
        // Predicated region
        $region49: #{fwd.3} parent=23 // pred_check
          %p985 = pneg %p261
        $region50: #{fwd.3} parent=23 // pred_check_branch
          %987 = sbr.rel (%p985) target = $region52
        $region51: #{fwd.3} parent=23 // pred_region
          %p988 = scmp.lt.s32.totalorder %s81, 1
          %s989 = scalar_select %p988, %s81, 1
          %s990 = scalar_lea.vmem %s13, %s989
        $region52: #{fwd.3} parent=23 // pred_fallthru
          _
        // Predicated region
        $region53: #{fwd.3} parent=23 // pred_check
          %p991 = pneg %p287
        $region54: #{fwd.3} parent=23 // pred_check_branch
          %993 = sbr.rel (%p991) target = $region56
        $region55: #{fwd.3} parent=23 // pred_region
          %p994 = scmp.lt.s32.totalorder %s81, 1
          %s995 = scalar_select %p994, %s81, 1
          %s996 = smul.addr %s995, 4
          %s997 = smul.addr %s996, 4
          %s998 = scalar_lea.vmem %s15, %s997
        $region56: #{fwd.3} parent=23 // pred_fallthru
          _
        // Predicated region
        $region57: #{fwd.3} parent=23 // pred_check
          %p999 = pneg %p313
        $region58: #{fwd.3} parent=23 // pred_check_branch
          %1001 = sbr.rel (%p999) target = $region60
        $region59: #{fwd.3} parent=23 // pred_region
          %p1002 = scmp.lt.s32.totalorder %s81, 1
          %s1003 = scalar_select %p1002, %s81, 1
          %s1004 = scalar_lea.vmem %s17, %s1003
        $region60: #{fwd.3} parent=23 // pred_fallthru
          _
        // Predicated region
        $region61: #{fwd.3} parent=23 // pred_check
          %p1005 = pneg %p339
        $region62: #{fwd.3} parent=23 // pred_check_branch
          %1007 = sbr.rel (%p1005) target = $region64
        $region63: #{fwd.3} parent=23 // pred_region
          %p1008 = scmp.lt.s32.totalorder %s81, 1
          %s1009 = scalar_select %p1008, %s81, 1
          %s1010 = smul.addr %s1009, 4
          %s1011 = smul.addr %s1010, 4
          %s1012 = scalar_lea.vmem %s19, %s1011
        $region64: #{fwd.3} parent=23 // pred_fallthru
          _
        // Predicated region
        $region65: #{fwd.3} parent=23 // pred_check
          %p1013 = pneg %p365
        $region66: #{fwd.3} parent=23 // pred_check_branch
          %1015 = sbr.rel (%p1013) target = $region68
        $region67: #{fwd.3} parent=23 // pred_region
          %p1016 = scmp.lt.s32.totalorder %s81, 1
          %s1017 = scalar_select %p1016, %s81, 1
          %s1018 = scalar_lea.vmem %s21, %s1017
        $region68: #{fwd.3} parent=23 // pred_fallthru
          _
        // Predicated region
        $region69: #{fwd.3} parent=23 // pred_check
          %p1019 = pneg %p391
        $region70: #{fwd.3} parent=23 // pred_check_branch
          %1021 = sbr.rel (%p1019) target = $region72
        $region71: #{fwd.3} parent=23 // pred_region
          %p1022 = scmp.lt.s32.totalorder %s81, 1
          %s1023 = scalar_select %p1022, %s81, 1
          %s1024 = smul.addr %s1023, 4
          %s1025 = smul.addr %s1024, 4
          %s1026 = scalar_lea.vmem %s23, %s1025
        $region72: #{fwd.3} parent=23 // pred_fallthru
          _
        // Predicated region
        $region73: #{fwd.3} parent=23 // pred_check
          %p1027 = pneg %p417
        $region74: #{fwd.3} parent=23 // pred_check_branch
          %1029 = sbr.rel (%p1027) target = $region76
        $region75: #{fwd.3} parent=23 // pred_region
          %p1030 = scmp.lt.s32.totalorder %s81, 1
          %s1031 = scalar_select %p1030, %s81, 1
          %s1032 = scalar_lea.vmem %s25, %s1031
        $region76: #{fwd.3} parent=23 // pred_fallthru
          _
        // Predicated region
        $region77: #{fwd.3} parent=23 // pred_check
          %p1033 = pneg %p443
        $region78: #{fwd.3} parent=23 // pred_check_branch
          %1035 = sbr.rel (%p1033) target = $region80
        $region79: #{fwd.3} parent=23 // pred_region
          %p1036 = scmp.lt.s32.totalorder %s81, 1
          %s1037 = scalar_select %p1036, %s81, 1
          %s1038 = smul.addr %s1037, 4
          %s1039 = smul.addr %s1038, 4
          %s1040 = scalar_lea.vmem %s27, %s1039
        $region80: #{fwd.3} parent=23 // pred_fallthru
          _
        // Predicated region
        $region81: #{fwd.3} parent=23 // pred_check
          %p1041 = pneg %p469
        $region82: #{fwd.3} parent=23 // pred_check_branch
          %1043 = sbr.rel (%p1041) target = $region84
        $region83: #{fwd.3} parent=23 // pred_region
          %p1044 = scmp.lt.s32.totalorder %s81, 1
          %s1045 = scalar_select %p1044, %s81, 1
          %s1046 = scalar_lea.vmem %s29, %s1045
        $region84: #{fwd.3} parent=23 // pred_fallthru
          _
        // Predicated region
        $region85: #{fwd.3} parent=23 // pred_check
          %p1047 = pneg %p495
        $region86: #{fwd.3} parent=23 // pred_check_branch
          %1049 = sbr.rel (%p1047) target = $region88
        $region87: #{fwd.3} parent=23 // pred_region
          %p1050 = scmp.lt.s32.totalorder %s81, 1
          %s1051 = scalar_select %p1050, %s81, 1
          %s1052 = smul.addr %s1051, 4
          %s1053 = smul.addr %s1052, 4
          %s1054 = scalar_lea.vmem %s31, %s1053
        $region88: #{fwd.3} parent=23 // pred_fallthru
          _
        // Predicated region
        $region89: #{fwd.3} parent=23 // pred_check
          %p1055 = pneg %p521
        $region90: #{fwd.3} parent=23 // pred_check_branch
          %1057 = sbr.rel (%p1055) target = $region92
        $region91: #{fwd.3} parent=23 // pred_region
          %p1058 = scmp.lt.s32.totalorder %s81, 1
          %s1059 = scalar_select %p1058, %s81, 1
          %s1060 = scalar_lea.vmem %s33, %s1059
        $region92: #{fwd.3} parent=23 // pred_fallthru
          _
        // Predicated region
        $region93: #{fwd.3} parent=23 // pred_check
          %p1061 = pneg %p547
        $region94: #{fwd.3} parent=23 // pred_check_branch
          %1063 = sbr.rel (%p1061) target = $region96
        $region95: #{fwd.3} parent=23 // pred_region
          %p1064 = scmp.lt.s32.totalorder %s81, 1
          %s1065 = scalar_select %p1064, %s81, 1
          %s1066 = scalar_lea.vmem %s35, %s1065
        $region96: #{fwd.3} parent=23 // pred_fallthru
          _
        // Predicated region
        $region97: #{fwd.3} parent=23 // pred_check
          %p1067 = pneg %p573
        $region98: #{fwd.3} parent=23 // pred_check_branch
          %1069 = sbr.rel (%p1067) target = $region100
        $region99: #{fwd.3} parent=23 // pred_region
          %p1070 = scmp.lt.s32.totalorder %s81, 1
          %s1071 = scalar_select %p1070, %s81, 1
          %s1072 = scalar_lea.vmem %s37, %s1071
        $region100: #{fwd.3} parent=23 // pred_fallthru
          _
        // Predicated region
        $region101: #{fwd.3} parent=23 // pred_check
          %p1073 = pneg %p599
        $region102: #{fwd.3} parent=23 // pred_check_branch
          %1075 = sbr.rel (%p1073) target = $region104
        $region103: #{fwd.3} parent=23 // pred_region
          %p1076 = scmp.lt.s32.totalorder %s81, 1
          %s1077 = scalar_select %p1076, %s81, 1
          %s1078 = scalar_lea.vmem %s39, %s1077
        $region104: #{fwd.3} parent=23 // pred_fallthru
          _
        // Predicated region
        $region105: #{fwd.3} parent=23 // pred_check
          %p1079 = pneg %p625
        $region106: #{fwd.3} parent=23 // pred_check_branch
          %1081 = sbr.rel (%p1079) target = $region108
        $region107: #{fwd.3} parent=23 // pred_region
          %p1082 = scmp.lt.s32.totalorder %s81, 1
          %s1083 = scalar_select %p1082, %s81, 1
          %s1084 = scalar_lea.vmem %s41, %s1083
        $region108: #{fwd.3} parent=23 // pred_fallthru
          _
        // Predicated region
        $region109: #{fwd.3} parent=23 // pred_check
          %p1085 = pneg %p651
        $region110: #{fwd.3} parent=23 // pred_check_branch
          %1087 = sbr.rel (%p1085) target = $region112
        $region111: #{fwd.3} parent=23 // pred_region
          %p1088 = scmp.lt.s32.totalorder %s81, 1
          %s1089 = scalar_select %p1088, %s81, 1
          %s1090 = scalar_lea.vmem %s43, %s1089
        $region112: #{fwd.3} parent=23 // pred_fallthru
          _
        // Predicated region
        $region113: #{fwd.3} parent=23 // pred_check
          %p1091 = pneg %p677
        $region114: #{fwd.3} parent=23 // pred_check_branch
          %1093 = sbr.rel (%p1091) target = $region116
        $region115: #{fwd.3} parent=23 // pred_region
          %p1094 = scmp.lt.s32.totalorder %s81, 1
          %s1095 = scalar_select %p1094, %s81, 1
          %s1096 = scalar_lea.vmem %s45, %s1095
        $region116: #{fwd.3} parent=23 // pred_fallthru
          _
        // Predicated region
        $region117: #{fwd.3} parent=23 // pred_check
          %p1097 = pneg %p703
        $region118: #{fwd.3} parent=23 // pred_check_branch
          %1099 = sbr.rel (%p1097) target = $region120
        $region119: #{fwd.3} parent=23 // pred_region
          %p1100 = scmp.lt.s32.totalorder %s81, 1
          %s1101 = scalar_select %p1100, %s81, 1
          %s1102 = scalar_lea.vmem %s47, %s1101
        $region120: #{fwd.3} parent=23 // pred_fallthru
          _
        // Predicated region
        $region121: #{fwd.3} parent=23 // pred_check
          %p1103 = pneg %p729
        $region122: #{fwd.3} parent=23 // pred_check_branch
          %1105 = sbr.rel (%p1103) target = $region124
        $region123: #{fwd.3} parent=23 // pred_region
          %p1106 = scmp.lt.s32.totalorder %s81, 1
          %s1107 = scalar_select %p1106, %s81, 1
          %s1108 = scalar_lea.vmem %s49, %s1107
        $region124: #{fwd.3} parent=23 // pred_fallthru
          _
        // Predicated region
        $region125: #{fwd.3} parent=23 // pred_check
          %p1109 = pneg %p755
        $region126: #{fwd.3} parent=23 // pred_check_branch
          %1111 = sbr.rel (%p1109) target = $region128
        $region127: #{fwd.3} parent=23 // pred_region
          %p1112 = scmp.lt.s32.totalorder %s81, 1
          %s1113 = scalar_select %p1112, %s81, 1
          %s1114 = smul.addr %s1113, 4
          %s1115 = smul.addr %s1114, 4
          %s1116 = scalar_lea.vmem %s51, %s1115
        $region128: #{fwd.3} parent=23 // pred_fallthru
          _
        // Predicated region
        $region129: #{fwd.3} parent=23 // pred_check
          %p1117 = pneg %p781
        $region130: #{fwd.3} parent=23 // pred_check_branch
          %1119 = sbr.rel (%p1117) target = $region132
        $region131: #{fwd.3} parent=23 // pred_region
          %p1120 = scmp.lt.s32.totalorder %s81, 1
          %s1121 = scalar_select %p1120, %s81, 1
          %s1122 = scalar_lea.vmem %s53, %s1121
        $region132: #{fwd.3} parent=23 // pred_fallthru
          _
        // Predicated region
        $region133: #{fwd.3} parent=23 // pred_check
          %p1123 = pneg %p807
        $region134: #{fwd.3} parent=23 // pred_check_branch
          %1125 = sbr.rel (%p1123) target = $region136
        $region135: #{fwd.3} parent=23 // pred_region
          %p1126 = scmp.lt.s32.totalorder %s81, 1
          %s1127 = scalar_select %p1126, %s81, 1
          %s1128 = smul.addr %s1127, 8
          %s1129 = smul.addr %s1128, 4
          %s1130 = scalar_lea.vmem %s55, %s1129
        $region136: #{fwd.3} parent=23 // pred_fallthru
          _
        // Predicated region
        $region137: #{fwd.3} parent=23 // pred_check
          %p1131 = pneg %p833
        $region138: #{fwd.3} parent=23 // pred_check_branch
          %1133 = sbr.rel (%p1131) target = $region140
        $region139: #{fwd.3} parent=23 // pred_region
          %p1134 = scmp.lt.s32.totalorder %s81, 1
          %s1135 = scalar_select %p1134, %s81, 1
          %s1136 = scalar_lea.vmem %s57, %s1135
        $region140: #{fwd.3} parent=23 // pred_fallthru
          _
      $region24: #{fwd.3} parent=5 // pred_fallthru
        _
      %p1137 = scmp.le.s32.totalorder 1, %s73
      %p1138 = scmp.lt.s32.totalorder %s73, 5
      %p1139 = pnand %p1137, %p1138
      %p1140 = pneg %p1139
      // Predicated region
      $region141: #{fwd.3} parent=5 // pred_check
        _
      $region142: #{fwd.3} parent=5 // pred_check_branch
        %1142 = sbr.rel (%p1139) target = $region144
      $region143: #{fwd.3} parent=5 // pred_region
        %s1143 = ssub.s32 %s73, 1
        // Predicated region
        $region145: #{fwd.3} parent=143 // pred_check
          %p1144 = pneg %p881
        $region146: #{fwd.3} parent=143 // pred_check_branch
          %1146 = sbr.rel (%p1144) target = $region148
        $region147: #{fwd.3} parent=143 // pred_region
          %1147 = dma.done [#allocation4], 16
        $region148: #{fwd.3} parent=143 // pred_fallthru
          _
        %p1148 = scmp.lt.s32.totalorder %s82, 1
        %s1149 = scalar_select %p1148, %s82, 1
        %s1150 = smul.addr %s1149, 8
        %s1151 = scalar_lea.vmem %s1, %s1150
        %p1152 = pneg %p111
        %p1153 = pneg %p108
        %p1154 = scmp.lt.s32.totalorder %s82, 1
        %s1155 = scalar_select %p1154, %s82, 1
        %s1156 = smul.addr %s1155, 2
        %s1157 = smul.addr %s1156, 8
        %s1158 = scalar_lea.vmem %s3, %s1157
        %p1159 = pneg %p137
        %p1160 = pneg %p134
        %p1161 = scmp.lt.s32.totalorder %s82, 1
        %s1162 = scalar_select %p1161, %s82, 1
        %s1163 = smul.addr %s1162, 2
        %s1164 = smul.addr %s1163, 8
        %s1165 = scalar_lea.vmem %s5, %s1164
        %p1166 = pneg %p163
        %p1167 = pneg %p160
        %p1168 = scmp.lt.s32.totalorder %s82, 1
        %s1169 = scalar_select %p1168, %s82, 1
        %s1170 = smul.addr %s1169, 2
        %s1171 = smul.addr %s1170, 8
        %s1172 = scalar_lea.vmem %s7, %s1171
        %p1173 = pneg %p189
        %p1174 = pneg %p186
        %p1175 = scmp.lt.s32.totalorder %s82, 1
        %s1176 = scalar_select %p1175, %s82, 1
        %s1177 = scalar_lea.vmem %s9, %s1176
        %p1178 = pneg %p215
        %p1179 = pneg %p212
        %p1180 = scmp.lt.s32.totalorder %s83, 1
        %s1181 = scalar_select %p1180, %s83, 1
        %s1182 = smul.addr %s1181, 4
        %s1183 = smul.addr %s1182, 4
        %s1184 = scalar_lea.vmem %s11, %s1183
        %p1185 = pneg %p241
        %p1186 = pneg %p238
        %p1187 = scmp.lt.s32.totalorder %s83, 1
        %s1188 = scalar_select %p1187, %s83, 1
        %s1189 = scalar_lea.vmem %s13, %s1188
        %p1190 = pneg %p267
        %p1191 = pneg %p264
        %p1192 = scmp.lt.s32.totalorder %s83, 1
        %s1193 = scalar_select %p1192, %s83, 1
        %s1194 = smul.addr %s1193, 4
        %s1195 = smul.addr %s1194, 4
        %s1196 = scalar_lea.vmem %s15, %s1195
        %p1197 = pneg %p293
        %p1198 = pneg %p290
        %p1199 = scmp.lt.s32.totalorder %s83, 1
        %s1200 = scalar_select %p1199, %s83, 1
        %s1201 = scalar_lea.vmem %s17, %s1200
        %p1202 = pneg %p319
        %p1203 = pneg %p316
        %p1204 = scmp.lt.s32.totalorder %s83, 1
        %s1205 = scalar_select %p1204, %s83, 1
        %s1206 = smul.addr %s1205, 4
        %s1207 = smul.addr %s1206, 4
        %s1208 = scalar_lea.vmem %s19, %s1207
        %p1209 = pneg %p345
        %p1210 = pneg %p342
        %p1211 = scmp.lt.s32.totalorder %s83, 1
        %s1212 = scalar_select %p1211, %s83, 1
        %s1213 = scalar_lea.vmem %s21, %s1212
        %p1214 = pneg %p371
        %p1215 = pneg %p368
        %p1216 = scmp.lt.s32.totalorder %s83, 1
        %s1217 = scalar_select %p1216, %s83, 1
        %s1218 = smul.addr %s1217, 4
        %s1219 = smul.addr %s1218, 4
        %s1220 = scalar_lea.vmem %s23, %s1219
        %p1221 = pneg %p397
        %p1222 = pneg %p394
        %p1223 = scmp.lt.s32.totalorder %s83, 1
        %s1224 = scalar_select %p1223, %s83, 1
        %s1225 = scalar_lea.vmem %s25, %s1224
        %p1226 = pneg %p423
        %p1227 = pneg %p420
        %p1228 = scmp.lt.s32.totalorder %s83, 1
        %s1229 = scalar_select %p1228, %s83, 1
        %s1230 = smul.addr %s1229, 4
        %s1231 = smul.addr %s1230, 4
        %s1232 = scalar_lea.vmem %s27, %s1231
        %p1233 = pneg %p449
        %p1234 = pneg %p446
        %p1235 = scmp.lt.s32.totalorder %s83, 1
        %s1236 = scalar_select %p1235, %s83, 1
        %s1237 = scalar_lea.vmem %s29, %s1236
        %p1238 = pneg %p475
        %p1239 = pneg %p472
        %p1240 = scmp.lt.s32.totalorder %s83, 1
        %s1241 = scalar_select %p1240, %s83, 1
        %s1242 = smul.addr %s1241, 4
        %s1243 = smul.addr %s1242, 4
        %s1244 = scalar_lea.vmem %s31, %s1243
        %p1245 = pneg %p501
        %p1246 = pneg %p498
        %p1247 = scmp.lt.s32.totalorder %s83, 1
        %s1248 = scalar_select %p1247, %s83, 1
        %s1249 = scalar_lea.vmem %s33, %s1248
        %p1250 = pneg %p527
        %p1251 = pneg %p524
        %p1252 = scmp.lt.s32.totalorder %s83, 1
        %s1253 = scalar_select %p1252, %s83, 1
        %s1254 = scalar_lea.vmem %s35, %s1253
        %p1255 = pneg %p553
        %p1256 = pneg %p550
        %p1257 = scmp.lt.s32.totalorder %s83, 1
        %s1258 = scalar_select %p1257, %s83, 1
        %s1259 = scalar_lea.vmem %s37, %s1258
        %p1260 = pneg %p579
        %p1261 = pneg %p576
        %p1262 = scmp.lt.s32.totalorder %s83, 1
        %s1263 = scalar_select %p1262, %s83, 1
        %s1264 = scalar_lea.vmem %s39, %s1263
        %p1265 = pneg %p605
        %p1266 = pneg %p602
        %p1267 = scmp.lt.s32.totalorder %s83, 1
        %s1268 = scalar_select %p1267, %s83, 1
        %s1269 = scalar_lea.vmem %s41, %s1268
        %p1270 = pneg %p631
        %p1271 = pneg %p628
        %p1272 = scmp.lt.s32.totalorder %s83, 1
        %s1273 = scalar_select %p1272, %s83, 1
        %s1274 = scalar_lea.vmem %s43, %s1273
        %p1275 = pneg %p657
        %p1276 = pneg %p654
        %p1277 = scmp.lt.s32.totalorder %s83, 1
        %s1278 = scalar_select %p1277, %s83, 1
        %s1279 = scalar_lea.vmem %s45, %s1278
        %p1280 = pneg %p683
        %p1281 = pneg %p680
        %p1282 = scmp.lt.s32.totalorder %s83, 1
        %s1283 = scalar_select %p1282, %s83, 1
        %s1284 = scalar_lea.vmem %s47, %s1283
        %p1285 = pneg %p709
        %p1286 = pneg %p706
        %p1287 = scmp.lt.s32.totalorder %s83, 1
        %s1288 = scalar_select %p1287, %s83, 1
        %s1289 = scalar_lea.vmem %s49, %s1288
        %p1290 = pneg %p735
        %p1291 = pneg %p732
        %p1292 = scmp.lt.s32.totalorder %s83, 1
        %s1293 = scalar_select %p1292, %s83, 1
        %s1294 = smul.addr %s1293, 4
        %s1295 = smul.addr %s1294, 4
        %s1296 = scalar_lea.vmem %s51, %s1295
        %p1297 = pneg %p761
        %p1298 = pneg %p758
        %p1299 = scmp.lt.s32.totalorder %s83, 1
        %s1300 = scalar_select %p1299, %s83, 1
        %s1301 = scalar_lea.vmem %s53, %s1300
        %p1302 = pneg %p787
        %p1303 = pneg %p784
        %p1304 = scmp.lt.s32.totalorder %s83, 1
        %s1305 = scalar_select %p1304, %s83, 1
        %s1306 = smul.addr %s1305, 8
        %s1307 = smul.addr %s1306, 4
        %s1308 = scalar_lea.vmem %s55, %s1307
        %p1309 = pneg %p813
        %p1310 = pneg %p810
        %p1311 = scmp.lt.s32.totalorder %s83, 1
        %s1312 = scalar_select %p1311, %s83, 1
        %s1313 = scalar_lea.vmem %s57, %s1312
        %p1314 = pneg %p839
        %p1315 = pneg %p836
        %p1316 = pneg %p860
        %p1317 = pneg %p857
        %p1318 = pneg %p881
        %p1319 = pneg %p878
        %p1320 = pneg %p907
        %p1321 = pneg %p904
        %s1322 = sand.u32 %s894, 1
        %s1323 = scalar_lea.sflag [#allocation5], %s1322
        %s1324 = sand.u32 %s894, 1
        %s1325 = smul.addr %s1324, 8
        %s1326 = scalar_lea.vmem [#allocation6], %s1325
        %p1327 = scmp.lt.s32.totalorder %s82, 1
        %s1328 = scalar_select %p1327, %s82, 1
        %s1329 = smul.addr %s1328, 8
        %s1330 = scalar_lea.vmem %s1, %s1329
        %p1331 = scmp.lt.s32.totalorder %s82, 1
        %s1332 = scalar_select %p1331, %s82, 1
        %s1333 = smul.addr %s1332, 2
        %s1334 = smul.addr %s1333, 8
        %s1335 = scalar_lea.vmem %s3, %s1334
        %p1336 = scmp.lt.s32.totalorder %s82, 1
        %s1337 = scalar_select %p1336, %s82, 1
        %s1338 = smul.addr %s1337, 2
        %s1339 = smul.addr %s1338, 8
        %s1340 = scalar_lea.vmem %s5, %s1339
        %p1341 = scmp.lt.s32.totalorder %s82, 1
        %s1342 = scalar_select %p1341, %s82, 1
        %s1343 = smul.addr %s1342, 2
        %s1344 = smul.addr %s1343, 8
        %s1345 = scalar_lea.vmem %s7, %s1344
        %p1346 = scmp.lt.s32.totalorder %s82, 1
        %s1347 = scalar_select %p1346, %s82, 1
        %s1348 = scalar_lea.vmem %s9, %s1347
        %p1349 = scmp.lt.s32.totalorder %s83, 1
        %s1350 = scalar_select %p1349, %s83, 1
        %s1351 = smul.addr %s1350, 4
        %s1352 = smul.addr %s1351, 4
        %s1353 = scalar_lea.vmem %s11, %s1352
        %p1354 = scmp.lt.s32.totalorder %s83, 1
        %s1355 = scalar_select %p1354, %s83, 1
        %s1356 = scalar_lea.vmem %s13, %s1355
        %p1357 = scmp.lt.s32.totalorder %s83, 1
        %s1358 = scalar_select %p1357, %s83, 1
        %s1359 = smul.addr %s1358, 4
        %s1360 = smul.addr %s1359, 4
        %s1361 = scalar_lea.vmem %s15, %s1360
        %p1362 = scmp.lt.s32.totalorder %s83, 1
        %s1363 = scalar_select %p1362, %s83, 1
        %s1364 = scalar_lea.vmem %s17, %s1363
        %p1365 = scmp.lt.s32.totalorder %s83, 1
        %s1366 = scalar_select %p1365, %s83, 1
        %s1367 = smul.addr %s1366, 4
        %s1368 = smul.addr %s1367, 4
        %s1369 = scalar_lea.vmem %s19, %s1368
        %p1370 = scmp.lt.s32.totalorder %s83, 1
        %s1371 = scalar_select %p1370, %s83, 1
        %s1372 = scalar_lea.vmem %s21, %s1371
        %p1373 = scmp.lt.s32.totalorder %s83, 1
        %s1374 = scalar_select %p1373, %s83, 1
        %s1375 = smul.addr %s1374, 4
        %s1376 = smul.addr %s1375, 4
        %s1377 = scalar_lea.vmem %s23, %s1376
        %p1378 = scmp.lt.s32.totalorder %s83, 1
        %s1379 = scalar_select %p1378, %s83, 1
        %s1380 = scalar_lea.vmem %s25, %s1379
        %p1381 = scmp.lt.s32.totalorder %s83, 1
        %s1382 = scalar_select %p1381, %s83, 1
        %s1383 = smul.addr %s1382, 4
        %s1384 = smul.addr %s1383, 4
        %s1385 = scalar_lea.vmem %s27, %s1384
        %p1386 = scmp.lt.s32.totalorder %s83, 1
        %s1387 = scalar_select %p1386, %s83, 1
        %s1388 = scalar_lea.vmem %s29, %s1387
        %p1389 = scmp.lt.s32.totalorder %s83, 1
        %s1390 = scalar_select %p1389, %s83, 1
        %s1391 = smul.addr %s1390, 4
        %s1392 = smul.addr %s1391, 4
        %s1393 = scalar_lea.vmem %s31, %s1392
        %p1394 = scmp.lt.s32.totalorder %s83, 1
        %s1395 = scalar_select %p1394, %s83, 1
        %s1396 = scalar_lea.vmem %s33, %s1395
        %p1397 = scmp.lt.s32.totalorder %s83, 1
        %s1398 = scalar_select %p1397, %s83, 1
        %s1399 = scalar_lea.vmem %s35, %s1398
        %p1400 = scmp.lt.s32.totalorder %s83, 1
        %s1401 = scalar_select %p1400, %s83, 1
        %s1402 = scalar_lea.vmem %s37, %s1401
        %p1403 = scmp.lt.s32.totalorder %s83, 1
        %s1404 = scalar_select %p1403, %s83, 1
        %s1405 = scalar_lea.vmem %s39, %s1404
        %p1406 = scmp.lt.s32.totalorder %s83, 1
        %s1407 = scalar_select %p1406, %s83, 1
        %s1408 = scalar_lea.vmem %s41, %s1407
        %p1409 = scmp.lt.s32.totalorder %s83, 1
        %s1410 = scalar_select %p1409, %s83, 1
        %s1411 = scalar_lea.vmem %s43, %s1410
        %p1412 = scmp.lt.s32.totalorder %s83, 1
        %s1413 = scalar_select %p1412, %s83, 1
        %s1414 = scalar_lea.vmem %s45, %s1413
        %p1415 = scmp.lt.s32.totalorder %s83, 1
        %s1416 = scalar_select %p1415, %s83, 1
        %s1417 = scalar_lea.vmem %s47, %s1416
        %p1418 = scmp.lt.s32.totalorder %s83, 1
        %s1419 = scalar_select %p1418, %s83, 1
        %s1420 = scalar_lea.vmem %s49, %s1419
        %p1421 = scmp.lt.s32.totalorder %s83, 1
        %s1422 = scalar_select %p1421, %s83, 1
        %s1423 = smul.addr %s1422, 4
        %s1424 = smul.addr %s1423, 4
        %s1425 = scalar_lea.vmem %s51, %s1424
        %p1426 = scmp.lt.s32.totalorder %s83, 1
        %s1427 = scalar_select %p1426, %s83, 1
        %s1428 = scalar_lea.vmem %s53, %s1427
        %p1429 = scmp.lt.s32.totalorder %s83, 1
        %s1430 = scalar_select %p1429, %s83, 1
        %s1431 = smul.addr %s1430, 8
        %s1432 = smul.addr %s1431, 4
        %s1433 = scalar_lea.vmem %s55, %s1432
        %p1434 = scmp.lt.s32.totalorder %s83, 1
        %s1435 = scalar_select %p1434, %s83, 1
        %s1436 = scalar_lea.vmem %s57, %s1435
        %p1438 = scmp.eq.s32.totalorder %s83, 0
        // Predicated region
        $region149: #{fwd.3} parent=143 // pred_check
          %p1439 = pneg %p1438
        $region150: #{fwd.3} parent=143 // pred_check_branch
          %1441 = sbr.rel (%p1439) target = $region152
        $region151: #{fwd.3} parent=143 // pred_region
          %vm1442 = vcmask 261120
          %1443 = vst.msk [vmem:[%s1326] sm:$0xff] %vm1442, 0.0
        $region152: #{fwd.3} parent=143 // pred_fallthru
          _
        %v1444 = vld [vmem:[%s1326] sm:$0xff]
        %v1445 = vld [vmem:[%s1330] sm:$0xff]
        %v1446 = vld [vmem:[%s1335] sm:$0xff]
        %v1447 = vld [vmem:[%s1335 + $0x8] sm:$0xff]
        %v1448 = vld [vmem:[%s1340] sm:$0xff]
        %v1449 = vld [vmem:[%s1340 + $0x8] sm:$0xff]
        %v1450 = vld [vmem:[%s1345] sm:$0xff]
        %v1451 = vld [vmem:[%s1345 + $0x8] sm:$0xff]
        %v1452 = vld [vmem:[%s1348] sm:$0x1]
        %v1453 = vadd.f32 %v1444, %v1445
        %v1454 = vld [vmem:[%s1353] sm:$0xf]
        %v1455 = vld [vmem:[%s1353 + $0x4] sm:$0xf]
        %v1456 = vld [vmem:[%s1353 + $0x8] sm:$0xf]
        %v1457 = vld [vmem:[%s1353 + $0xc] sm:$0xf]
        %v1458 = vld [vmem:[%s1356] sm:$0x1]
        %v1459 = vld [vmem:[%s1361] sm:$0xf]
        %v1460 = vld [vmem:[%s1361 + $0x4] sm:$0xf]
        %v1461 = vld [vmem:[%s1361 + $0x8] sm:$0xf]
        %v1462 = vld [vmem:[%s1361 + $0xc] sm:$0xf]
        %v1463 = vld [vmem:[%s1364] sm:$0x1]
        %v1464 = vpack.c.bf16 %v1453, %v1453
        %v1466 = vlaneseq
        %v1467 = vshrl.u32 %v1466, 7
        %v1468 = vsub.s32 0, %v1467
        %v1469 = vrot.slane %v1458, %v1468
        %v1475 = vunpack.c.l.b16 %v1454
        %v1476 = vunpack.c.l.b16 %v1455
        %v1477 = vunpack.c.l.b16 %v1456
        %v1478 = vunpack.c.l.b16 %v1457
        %v1479 = vpack.c.b16 %v1476, %v1475
        %v1480 = vpack.c.b16 %v1478, %v1477
        %vm1483 = vcmask 261120
        %v1485 = vsel %vm1483, %v1464, 0
        %1487 = vmatprep.subr.bf16.mxu0 0
        %1488 = vmatpush1.bf16.msra.mxu0 %v1479
        %1489 = vmatprep.subr.bf16.mxu0 0
        %1490 = vmatpush1.bf16.msra.mxu0 %v1480
        %1491 = vmatprep.subr.bf16.mxu0 0
        %1492 = vmatpush1.bf16.msra.mxu0 0
        %1493 = vmatprep.subr.bf16.mxu0 0
        %1494 = vmatpush1.bf16.msra.mxu0 0
        %1495 = vmatprep.subr.bf16.mxu0 0
        %1496 = vmatpush1.bf16.msra.mxu0 0
        %1497 = vmatprep.subr.bf16.mxu0 0
        %1498 = vmatpush1.bf16.msra.mxu0 0
        %1499 = vmatprep.subr.bf16.mxu0 0
        %1500 = vmatpush1.bf16.msra.mxu0 0
        %1501 = vmatprep.subr.bf16.mxu0 0
        %1502 = vmatpush1.bf16.msra.mxu0 0
        %1503 = vmatprep.subr.bf16.mxu0 0
        %1504 = vmatpush1.bf16.msra.mxu0 0
        %1505 = vmatprep.subr.bf16.mxu0 0
        %1506 = vmatpush1.bf16.msra.mxu0 0
        %1507 = vmatprep.subr.bf16.mxu0 0
        %1508 = vmatpush1.bf16.msra.mxu0 0
        %1509 = vmatprep.subr.bf16.mxu0 0
        %1510 = vmatpush1.bf16.msra.mxu0 0
        %1511 = vmatprep.subr.bf16.mxu0 0
        %1512 = vmatpush1.bf16.msra.mxu0 0
        %1513 = vmatprep.subr.bf16.mxu0 0
        %1514 = vmatpush1.bf16.msra.mxu0 0
        %1515 = vmatprep.subr.bf16.mxu0 0
        %1516 = vmatpush1.bf16.msra.mxu0 0
        %1517 = vmatprep.subr.bf16.mxu0 0
        %1518 = vmatpush1.bf16.msra.mxu0 0
        %1519 = vmatprep.mubr.bf16.mxu0 0
        %1520 = vmatmul.mubr.bf16.gmra.mrb[0].mxu0 %v1485
        %v1521 = vpop.f32.mrb[0].mxu0
        %v1522 = vadd.f32 %v1469, %v1521
        %v1523 = vpop.f32.mrb[0].mxu0
        %v1524 = vpop.f32.mrb[0].mxu0
        %v1525 = vpop.f32.mrb[0].mxu0
        %1526 = vdwg.mxu0
        %v1527 = vpack.c.bf16 %v1444, %v1444
        %1528 = vrot.lane.b32.xlu0 %v1479, 64
        %v1529 = vpop.permute.xlu0 %1528
        %1530 = vrot.lane.b32.xlu0 %v1480, 64
        %v1531 = vpop.permute.xlu0 %1530
        %1534 = vrot.lane.b32.xlu0 %v1469, 64
        %v1535 = vpop.permute.xlu0 %1534
        %v1538 = vsel %vm1483, %v1527, 0
        %1540 = vmatprep.subr.bf16.mxu0 0
        %1541 = vmatpush1.bf16.msra.mxu0 %v1529
        %1542 = vmatprep.subr.bf16.mxu0 0
        %1543 = vmatpush1.bf16.msra.mxu0 %v1531
        %1544 = vmatprep.subr.bf16.mxu0 0
        %1545 = vmatpush1.bf16.msra.mxu0 0
        %1546 = vmatprep.subr.bf16.mxu0 0
        %1547 = vmatpush1.bf16.msra.mxu0 0
        %1548 = vmatprep.subr.bf16.mxu0 0
        %1549 = vmatpush1.bf16.msra.mxu0 0
        %1550 = vmatprep.subr.bf16.mxu0 0
        %1551 = vmatpush1.bf16.msra.mxu0 0
        %1552 = vmatprep.subr.bf16.mxu0 0
        %1553 = vmatpush1.bf16.msra.mxu0 0
        %1554 = vmatprep.subr.bf16.mxu0 0
        %1555 = vmatpush1.bf16.msra.mxu0 0
        %1556 = vmatprep.subr.bf16.mxu0 0
        %1557 = vmatpush1.bf16.msra.mxu0 0
        %1558 = vmatprep.subr.bf16.mxu0 0
        %1559 = vmatpush1.bf16.msra.mxu0 0
        %1560 = vmatprep.subr.bf16.mxu0 0
        %1561 = vmatpush1.bf16.msra.mxu0 0
        %1562 = vmatprep.subr.bf16.mxu0 0
        %1563 = vmatpush1.bf16.msra.mxu0 0
        %1564 = vmatprep.subr.bf16.mxu0 0
        %1565 = vmatpush1.bf16.msra.mxu0 0
        %1566 = vmatprep.subr.bf16.mxu0 0
        %1567 = vmatpush1.bf16.msra.mxu0 0
        %1568 = vmatprep.subr.bf16.mxu0 0
        %1569 = vmatpush1.bf16.msra.mxu0 0
        %1570 = vmatprep.subr.bf16.mxu0 0
        %1571 = vmatpush1.bf16.msra.mxu0 0
        %1572 = vmatprep.mubr.bf16.mxu0 0
        %1573 = vmatmul.mubr.bf16.gmra.mrb[0].mxu0 %v1538
        %v1574 = vpop.f32.mrb[0].mxu0
        %v1575 = vadd.f32 %v1535, %v1574
        %v1576 = vpop.f32.mrb[0].mxu0
        %v1577 = vpop.f32.mrb[0].mxu0
        %v1578 = vpop.f32.mrb[0].mxu0
        %1579 = vdwg.mxu0
        %v1580 = vpack.c.bf16 %v1522, %v1522
        %v1581 = vpack.c.bf16 %v1575, %v1575
        %1583 = vrot.lane.b32.xlu0 %v1580, 96
        %v1584 = vpop.permute.xlu0 %1583
        %vm1585 = vcmask 64512
        %v1587 = vsel %vm1585, %v1580, 0
        %v1590 = vsel %vm1585, %v1584, 0
        %1592 = vmatprep.subr.bf16.mxu0 0
        %1593 = vmatpush1.bf16.xpose.msra.mxu0 %v1590
        %1594 = vmatprep.subr.bf16.mxu0 0
        %1595 = vmatpush1.bf16.xpose.msra.mxu0 0
        %1596 = vmatprep.subr.bf16.mxu0 0
        %1597 = vmatpush1.bf16.xpose.msra.mxu0 0
        %1598 = vmatprep.subr.bf16.mxu0 0
        %1599 = vmatpush1.bf16.xpose.msra.mxu0 0
        %1600 = vmatprep.subr.bf16.mxu0 0
        %1601 = vmatpush1.bf16.xpose.msra.mxu0 0
        %1602 = vmatprep.subr.bf16.mxu0 0
        %1603 = vmatpush1.bf16.xpose.msra.mxu0 0
        %1604 = vmatprep.subr.bf16.mxu0 0
        %1605 = vmatpush1.bf16.xpose.msra.mxu0 0
        %1606 = vmatprep.subr.bf16.mxu0 0
        %1607 = vmatpush1.bf16.xpose.msra.mxu0 0
        %1608 = vmatprep.subr.bf16.mxu0 0
        %1609 = vmatpush1.bf16.xpose.msra.mxu0 0
        %1610 = vmatprep.subr.bf16.mxu0 0
        %1611 = vmatpush1.bf16.xpose.msra.mxu0 0
        %1612 = vmatprep.subr.bf16.mxu0 0
        %1613 = vmatpush1.bf16.xpose.msra.mxu0 0
        %1614 = vmatprep.subr.bf16.mxu0 0
        %1615 = vmatpush1.bf16.xpose.msra.mxu0 0
        %1616 = vmatprep.subr.bf16.mxu0 0
        %1617 = vmatpush1.bf16.xpose.msra.mxu0 0
        %1618 = vmatprep.subr.bf16.mxu0 0
        %1619 = vmatpush1.bf16.xpose.msra.mxu0 0
        %1620 = vmatprep.subr.bf16.mxu0 0
        %1621 = vmatpush1.bf16.xpose.msra.mxu0 0
        %1622 = vmatprep.subr.bf16.mxu0 0
        %1623 = vmatpush1.bf16.xpose.msra.mxu0 0
        %1624 = vmatprep.mubr.bf16.mxu0 0
        %1625 = vmatmul.mubr.bf16.gmra.mrb[0].mxu0 %v1587
        %v1626 = vpop.f32.mrb[0].mxu0
        %v1627 = vadd.f32 0.0, %v1626
        %v1628 = vpop.f32.mrb[0].mxu0
        %v1629 = vpop.f32.mrb[0].mxu0
        %v1630 = vpop.f32.mrb[0].mxu0
        %1631 = vdwg.mxu0
        %v1632 = vsel %vm1585, %v1627, -inf
        %1633 = vmax.xlane.f32.xlu0 %v1632
        %v1634 = vpop.xlane.xlu0 %1633
        %v1635 = vsub.f32 %v1627, %v1634
        %v1636 = vmul.f32 %v1635, 1.442695
        %v1637 = vpow.pop %v1636
        %v1638 = vsel %vm1585, %v1637, 0.0
        %1639 = vadd.xlane.f32.xlu0 %v1638
        %v1640 = vpop.xlane.xlu0 %1639
        %v1641 = vrcp.pop %v1640
        %v1642 = vmul.f32 %v1637, %v1641
        %v1643 = vpack.c.bf16 %v1642, %v1642
        %v1645 = vsel %vm1585, %v1643, 0
        %vm1647 = vcmask 1043456
        %v1649 = vsel %vm1647, %v1581, 0
        %1651 = vmatprep.subr.bf16.mxu0 0
        %1652 = vmatpush1.bf16.msra.mxu0 %v1649
        %1653 = vmatprep.subr.bf16.mxu0 0
        %1654 = vmatpush1.bf16.msra.mxu0 0
        %1655 = vmatprep.subr.bf16.mxu0 0
        %1656 = vmatpush1.bf16.msra.mxu0 0
        %1657 = vmatprep.subr.bf16.mxu0 0
        %1658 = vmatpush1.bf16.msra.mxu0 0
        %1659 = vmatprep.subr.bf16.mxu0 0
        %1660 = vmatpush1.bf16.msra.mxu0 0
        %1661 = vmatprep.subr.bf16.mxu0 0
        %1662 = vmatpush1.bf16.msra.mxu0 0
        %1663 = vmatprep.subr.bf16.mxu0 0
        %1664 = vmatpush1.bf16.msra.mxu0 0
        %1665 = vmatprep.subr.bf16.mxu0 0
        %1666 = vmatpush1.bf16.msra.mxu0 0
        %1667 = vmatprep.subr.bf16.mxu0 0
        %1668 = vmatpush1.bf16.msra.mxu0 0
        %1669 = vmatprep.subr.bf16.mxu0 0
        %1670 = vmatpush1.bf16.msra.mxu0 0
        %1671 = vmatprep.subr.bf16.mxu0 0
        %1672 = vmatpush1.bf16.msra.mxu0 0
        %1673 = vmatprep.subr.bf16.mxu0 0
        %1674 = vmatpush1.bf16.msra.mxu0 0
        %1675 = vmatprep.subr.bf16.mxu0 0
        %1676 = vmatpush1.bf16.msra.mxu0 0
        %1677 = vmatprep.subr.bf16.mxu0 0
        %1678 = vmatpush1.bf16.msra.mxu0 0
        %1679 = vmatprep.subr.bf16.mxu0 0
        %1680 = vmatpush1.bf16.msra.mxu0 0
        %1681 = vmatprep.subr.bf16.mxu0 0
        %1682 = vmatpush1.bf16.msra.mxu0 0
        %1683 = vmatprep.mubr.bf16.mxu0 0
        %1684 = vmatmul.mubr.bf16.gmra.mrb[0].mxu0 %v1645
        %v1685 = vpop.f32.mrb[0].mxu0
        %v1686 = vadd.f32 0.0, %v1685
        %v1687 = vpop.f32.mrb[0].mxu0
        %v1688 = vpop.f32.mrb[0].mxu0
        %v1689 = vpop.f32.mrb[0].mxu0
        %1690 = vdwg.mxu0
        %1691 = vst.msk [vmem:[#allocation2] sm:$0xff] %vm1585, %v1686
        %1692 = vrot.lane.b32.xlu0 %v1580, 120
        %v1693 = vpop.permute.xlu0 %1692
        %1694 = vrot.lane.b32.xlu0 %v1580, 88
        %v1695 = vpop.permute.xlu0 %1694
        %v1697 = vsel %vm1585, %v1693, 0
        %v1700 = vsel %vm1585, %v1695, 0
        %1702 = vmatprep.subr.bf16.mxu0 0
        %1703 = vmatpush1.bf16.xpose.msra.mxu0 %v1700
        %1704 = vmatprep.subr.bf16.mxu0 0
        %1705 = vmatpush1.bf16.xpose.msra.mxu0 0
        %1706 = vmatprep.subr.bf16.mxu0 0
        %1707 = vmatpush1.bf16.xpose.msra.mxu0 0
        %1708 = vmatprep.subr.bf16.mxu0 0
        %1709 = vmatpush1.bf16.xpose.msra.mxu0 0
        %1710 = vmatprep.subr.bf16.mxu0 0
        %1711 = vmatpush1.bf16.xpose.msra.mxu0 0
        %1712 = vmatprep.subr.bf16.mxu0 0
        %1713 = vmatpush1.bf16.xpose.msra.mxu0 0
        %1714 = vmatprep.subr.bf16.mxu0 0
        %1715 = vmatpush1.bf16.xpose.msra.mxu0 0
        %1716 = vmatprep.subr.bf16.mxu0 0
        %1717 = vmatpush1.bf16.xpose.msra.mxu0 0
        %1718 = vmatprep.subr.bf16.mxu0 0
        %1719 = vmatpush1.bf16.xpose.msra.mxu0 0
        %1720 = vmatprep.subr.bf16.mxu0 0
        %1721 = vmatpush1.bf16.xpose.msra.mxu0 0
        %1722 = vmatprep.subr.bf16.mxu0 0
        %1723 = vmatpush1.bf16.xpose.msra.mxu0 0
        %1724 = vmatprep.subr.bf16.mxu0 0
        %1725 = vmatpush1.bf16.xpose.msra.mxu0 0
        %1726 = vmatprep.subr.bf16.mxu0 0
        %1727 = vmatpush1.bf16.xpose.msra.mxu0 0
        %1728 = vmatprep.subr.bf16.mxu0 0
        %1729 = vmatpush1.bf16.xpose.msra.mxu0 0
        %1730 = vmatprep.subr.bf16.mxu0 0
        %1731 = vmatpush1.bf16.xpose.msra.mxu0 0
        %1732 = vmatprep.subr.bf16.mxu0 0
        %1733 = vmatpush1.bf16.xpose.msra.mxu0 0
        %1734 = vmatprep.mubr.bf16.mxu0 0
        %1735 = vmatmul.mubr.bf16.gmra.mrb[0].mxu0 %v1697
        %v1736 = vpop.f32.mrb[0].mxu0
        %v1737 = vadd.f32 0.0, %v1736
        %v1738 = vpop.f32.mrb[0].mxu0
        %v1739 = vpop.f32.mrb[0].mxu0
        %v1740 = vpop.f32.mrb[0].mxu0
        %1741 = vdwg.mxu0
        %v1742 = vsel %vm1585, %v1737, -inf
        %1743 = vmax.xlane.f32.xlu0 %v1742
        %v1744 = vpop.xlane.xlu0 %1743
        %v1745 = vsub.f32 %v1737, %v1744
        %v1746 = vmul.f32 %v1745, 1.442695
        %v1747 = vpow.pop %v1746
        %v1748 = vsel %vm1585, %v1747, 0.0
        %1749 = vadd.xlane.f32.xlu0 %v1748
        %v1750 = vpop.xlane.xlu0 %1749
        %v1751 = vrcp.pop %v1750
        %v1752 = vmul.f32 %v1747, %v1751
        %v1753 = vpack.c.bf16 %v1752, %v1752
        %1755 = vrot.lane.b32.xlu0 %v1581, 120
        %v1756 = vpop.permute.xlu0 %1755
        %v1758 = vsel %vm1585, %v1753, 0
        %v1761 = vsel %vm1647, %v1756, 0
        %1763 = vmatprep.subr.bf16.mxu0 0
        %1764 = vmatpush1.bf16.msra.mxu0 %v1761
        %1765 = vmatprep.subr.bf16.mxu0 0
        %1766 = vmatpush1.bf16.msra.mxu0 0
        %1767 = vmatprep.subr.bf16.mxu0 0
        %1768 = vmatpush1.bf16.msra.mxu0 0
        %1769 = vmatprep.subr.bf16.mxu0 0
        %1770 = vmatpush1.bf16.msra.mxu0 0
        %1771 = vmatprep.subr.bf16.mxu0 0
        %1772 = vmatpush1.bf16.msra.mxu0 0
        %1773 = vmatprep.subr.bf16.mxu0 0
        %1774 = vmatpush1.bf16.msra.mxu0 0
        %1775 = vmatprep.subr.bf16.mxu0 0
        %1776 = vmatpush1.bf16.msra.mxu0 0
        %1777 = vmatprep.subr.bf16.mxu0 0
        %1778 = vmatpush1.bf16.msra.mxu0 0
        %1779 = vmatprep.subr.bf16.mxu0 0
        %1780 = vmatpush1.bf16.msra.mxu0 0
        %1781 = vmatprep.subr.bf16.mxu0 0
        %1782 = vmatpush1.bf16.msra.mxu0 0
        %1783 = vmatprep.subr.bf16.mxu0 0
        %1784 = vmatpush1.bf16.msra.mxu0 0
        %1785 = vmatprep.subr.bf16.mxu0 0
        %1786 = vmatpush1.bf16.msra.mxu0 0
        %1787 = vmatprep.subr.bf16.mxu0 0
        %1788 = vmatpush1.bf16.msra.mxu0 0
        %1789 = vmatprep.subr.bf16.mxu0 0
        %1790 = vmatpush1.bf16.msra.mxu0 0
        %1791 = vmatprep.subr.bf16.mxu0 0
        %1792 = vmatpush1.bf16.msra.mxu0 0
        %1793 = vmatprep.subr.bf16.mxu0 0
        %1794 = vmatpush1.bf16.msra.mxu0 0
        %1795 = vmatprep.mubr.bf16.mxu0 0
        %1796 = vmatmul.mubr.bf16.gmra.mrb[0].mxu0 %v1758
        %v1797 = vpop.f32.mrb[0].mxu0
        %v1798 = vadd.f32 0.0, %v1797
        %v1799 = vpop.f32.mrb[0].mxu0
        %v1800 = vpop.f32.mrb[0].mxu0
        %v1801 = vpop.f32.mrb[0].mxu0
        %1802 = vdwg.mxu0
        %1804 = vrot.lane.b32.xlu0 %v1798, 8
        %v1805 = vpop.permute.xlu0 %1804
        %vm1807 = vcmask 130112
        %1808 = vst.msk [vmem:[#allocation2] sm:$0xff] %vm1807, %v1805
        %1809 = vrot.lane.b32.xlu0 %v1580, 112
        %v1810 = vpop.permute.xlu0 %1809
        %1811 = vrot.lane.b32.xlu0 %v1580, 80
        %v1812 = vpop.permute.xlu0 %1811
        %v1814 = vsel %vm1585, %v1810, 0
        %v1817 = vsel %vm1585, %v1812, 0
        %1819 = vmatprep.subr.bf16.mxu0 0
        %1820 = vmatpush1.bf16.xpose.msra.mxu0 %v1817
        %1821 = vmatprep.subr.bf16.mxu0 0
        %1822 = vmatpush1.bf16.xpose.msra.mxu0 0
        %1823 = vmatprep.subr.bf16.mxu0 0
        %1824 = vmatpush1.bf16.xpose.msra.mxu0 0
        %1825 = vmatprep.subr.bf16.mxu0 0
        %1826 = vmatpush1.bf16.xpose.msra.mxu0 0
        %1827 = vmatprep.subr.bf16.mxu0 0
        %1828 = vmatpush1.bf16.xpose.msra.mxu0 0
        %1829 = vmatprep.subr.bf16.mxu0 0
        %1830 = vmatpush1.bf16.xpose.msra.mxu0 0
        %1831 = vmatprep.subr.bf16.mxu0 0
        %1832 = vmatpush1.bf16.xpose.msra.mxu0 0
        %1833 = vmatprep.subr.bf16.mxu0 0
        %1834 = vmatpush1.bf16.xpose.msra.mxu0 0
        %1835 = vmatprep.subr.bf16.mxu0 0
        %1836 = vmatpush1.bf16.xpose.msra.mxu0 0
        %1837 = vmatprep.subr.bf16.mxu0 0
        %1838 = vmatpush1.bf16.xpose.msra.mxu0 0
        %1839 = vmatprep.subr.bf16.mxu0 0
        %1840 = vmatpush1.bf16.xpose.msra.mxu0 0
        %1841 = vmatprep.subr.bf16.mxu0 0
        %1842 = vmatpush1.bf16.xpose.msra.mxu0 0
        %1843 = vmatprep.subr.bf16.mxu0 0
        %1844 = vmatpush1.bf16.xpose.msra.mxu0 0
        %1845 = vmatprep.subr.bf16.mxu0 0
        %1846 = vmatpush1.bf16.xpose.msra.mxu0 0
        %1847 = vmatprep.subr.bf16.mxu0 0
        %1848 = vmatpush1.bf16.xpose.msra.mxu0 0
        %1849 = vmatprep.subr.bf16.mxu0 0
        %1850 = vmatpush1.bf16.xpose.msra.mxu0 0
        %1851 = vmatprep.mubr.bf16.mxu0 0
        %1852 = vmatmul.mubr.bf16.gmra.mrb[0].mxu0 %v1814
        %v1853 = vpop.f32.mrb[0].mxu0
        %v1854 = vadd.f32 0.0, %v1853
        %v1855 = vpop.f32.mrb[0].mxu0
        %v1856 = vpop.f32.mrb[0].mxu0
        %v1857 = vpop.f32.mrb[0].mxu0
        %1858 = vdwg.mxu0
        %v1859 = vsel %vm1585, %v1854, -inf
        %1860 = vmax.xlane.f32.xlu0 %v1859
        %v1861 = vpop.xlane.xlu0 %1860
        %v1862 = vsub.f32 %v1854, %v1861
        %v1863 = vmul.f32 %v1862, 1.442695
        %v1864 = vpow.pop %v1863
        %v1865 = vsel %vm1585, %v1864, 0.0
        %1866 = vadd.xlane.f32.xlu0 %v1865
        %v1867 = vpop.xlane.xlu0 %1866
        %v1868 = vrcp.pop %v1867
        %v1869 = vmul.f32 %v1864, %v1868
        %v1870 = vpack.c.bf16 %v1869, %v1869
        %1871 = vrot.lane.b32.xlu0 %v1581, 112
        %v1872 = vpop.permute.xlu0 %1871
        %v1874 = vsel %vm1585, %v1870, 0
        %v1877 = vsel %vm1647, %v1872, 0
        %1879 = vmatprep.subr.bf16.mxu0 0
        %1880 = vmatpush1.bf16.msra.mxu0 %v1877
        %1881 = vmatprep.subr.bf16.mxu0 0
        %1882 = vmatpush1.bf16.msra.mxu0 0
        %1883 = vmatprep.subr.bf16.mxu0 0
        %1884 = vmatpush1.bf16.msra.mxu0 0
        %1885 = vmatprep.subr.bf16.mxu0 0
        %1886 = vmatpush1.bf16.msra.mxu0 0
        %1887 = vmatprep.subr.bf16.mxu0 0
        %1888 = vmatpush1.bf16.msra.mxu0 0
        %1889 = vmatprep.subr.bf16.mxu0 0
        %1890 = vmatpush1.bf16.msra.mxu0 0
        %1891 = vmatprep.subr.bf16.mxu0 0
        %1892 = vmatpush1.bf16.msra.mxu0 0
        %1893 = vmatprep.subr.bf16.mxu0 0
        %1894 = vmatpush1.bf16.msra.mxu0 0
        %1895 = vmatprep.subr.bf16.mxu0 0
        %1896 = vmatpush1.bf16.msra.mxu0 0
        %1897 = vmatprep.subr.bf16.mxu0 0
        %1898 = vmatpush1.bf16.msra.mxu0 0
        %1899 = vmatprep.subr.bf16.mxu0 0
        %1900 = vmatpush1.bf16.msra.mxu0 0
        %1901 = vmatprep.subr.bf16.mxu0 0
        %1902 = vmatpush1.bf16.msra.mxu0 0
        %1903 = vmatprep.subr.bf16.mxu0 0
        %1904 = vmatpush1.bf16.msra.mxu0 0
        %1905 = vmatprep.subr.bf16.mxu0 0
        %1906 = vmatpush1.bf16.msra.mxu0 0
        %1907 = vmatprep.subr.bf16.mxu0 0
        %1908 = vmatpush1.bf16.msra.mxu0 0
        %1909 = vmatprep.subr.bf16.mxu0 0
        %1910 = vmatpush1.bf16.msra.mxu0 0
        %1911 = vmatprep.mubr.bf16.mxu0 0
        %1912 = vmatmul.mubr.bf16.gmra.mrb[0].mxu0 %v1874
        %v1913 = vpop.f32.mrb[0].mxu0
        %v1914 = vadd.f32 0.0, %v1913
        %v1915 = vpop.f32.mrb[0].mxu0
        %v1916 = vpop.f32.mrb[0].mxu0
        %v1917 = vpop.f32.mrb[0].mxu0
        %1918 = vdwg.mxu0
        %1920 = vrot.lane.b32.xlu0 %v1914, 16
        %v1921 = vpop.permute.xlu0 %1920
        %vm1923 = vcmask 195712
        %1924 = vst.msk [vmem:[#allocation2] sm:$0xff] %vm1923, %v1921
        %1925 = vrot.lane.b32.xlu0 %v1580, 104
        %v1926 = vpop.permute.xlu0 %1925
        %1927 = vrot.lane.b32.xlu0 %v1580, 72
        %v1928 = vpop.permute.xlu0 %1927
        %v1930 = vsel %vm1585, %v1926, 0
        %v1933 = vsel %vm1585, %v1928, 0
        %1935 = vmatprep.subr.bf16.mxu0 0
        %1936 = vmatpush1.bf16.xpose.msra.mxu0 %v1933
        %1937 = vmatprep.subr.bf16.mxu0 0
        %1938 = vmatpush1.bf16.xpose.msra.mxu0 0
        %1939 = vmatprep.subr.bf16.mxu0 0
        %1940 = vmatpush1.bf16.xpose.msra.mxu0 0
        %1941 = vmatprep.subr.bf16.mxu0 0
        %1942 = vmatpush1.bf16.xpose.msra.mxu0 0
        %1943 = vmatprep.subr.bf16.mxu0 0
        %1944 = vmatpush1.bf16.xpose.msra.mxu0 0
        %1945 = vmatprep.subr.bf16.mxu0 0
        %1946 = vmatpush1.bf16.xpose.msra.mxu0 0
        %1947 = vmatprep.subr.bf16.mxu0 0
        %1948 = vmatpush1.bf16.xpose.msra.mxu0 0
        %1949 = vmatprep.subr.bf16.mxu0 0
        %1950 = vmatpush1.bf16.xpose.msra.mxu0 0
        %1951 = vmatprep.subr.bf16.mxu0 0
        %1952 = vmatpush1.bf16.xpose.msra.mxu0 0
        %1953 = vmatprep.subr.bf16.mxu0 0
        %1954 = vmatpush1.bf16.xpose.msra.mxu0 0
        %1955 = vmatprep.subr.bf16.mxu0 0
        %1956 = vmatpush1.bf16.xpose.msra.mxu0 0
        %1957 = vmatprep.subr.bf16.mxu0 0
        %1958 = vmatpush1.bf16.xpose.msra.mxu0 0
        %1959 = vmatprep.subr.bf16.mxu0 0
        %1960 = vmatpush1.bf16.xpose.msra.mxu0 0
        %1961 = vmatprep.subr.bf16.mxu0 0
        %1962 = vmatpush1.bf16.xpose.msra.mxu0 0
        %1963 = vmatprep.subr.bf16.mxu0 0
        %1964 = vmatpush1.bf16.xpose.msra.mxu0 0
        %1965 = vmatprep.subr.bf16.mxu0 0
        %1966 = vmatpush1.bf16.xpose.msra.mxu0 0
        %1967 = vmatprep.mubr.bf16.mxu0 0
        %1968 = vmatmul.mubr.bf16.gmra.mrb[0].mxu0 %v1930
        %v1969 = vpop.f32.mrb[0].mxu0
        %v1970 = vadd.f32 0.0, %v1969
        %v1971 = vpop.f32.mrb[0].mxu0
        %v1972 = vpop.f32.mrb[0].mxu0
        %v1973 = vpop.f32.mrb[0].mxu0
        %1974 = vdwg.mxu0
        %v1975 = vsel %vm1585, %v1970, -inf
        %1976 = vmax.xlane.f32.xlu0 %v1975
        %v1977 = vpop.xlane.xlu0 %1976
        %v1978 = vsub.f32 %v1970, %v1977
        %v1979 = vmul.f32 %v1978, 1.442695
        %v1980 = vpow.pop %v1979
        %v1981 = vsel %vm1585, %v1980, 0.0
        %1982 = vadd.xlane.f32.xlu0 %v1981
        %v1983 = vpop.xlane.xlu0 %1982
        %v1984 = vrcp.pop %v1983
        %v1985 = vmul.f32 %v1980, %v1984
        %v1986 = vpack.c.bf16 %v1985, %v1985
        %1987 = vrot.lane.b32.xlu0 %v1581, 104
        %v1988 = vpop.permute.xlu0 %1987
        %v1990 = vsel %vm1585, %v1986, 0
        %v1993 = vsel %vm1647, %v1988, 0
        %1995 = vmatprep.subr.bf16.mxu0 0
        %1996 = vmatpush1.bf16.msra.mxu0 %v1993
        %1997 = vmatprep.subr.bf16.mxu0 0
        %1998 = vmatpush1.bf16.msra.mxu0 0
        %1999 = vmatprep.subr.bf16.mxu0 0
        %2000 = vmatpush1.bf16.msra.mxu0 0
        %2001 = vmatprep.subr.bf16.mxu0 0
        %2002 = vmatpush1.bf16.msra.mxu0 0
        %2003 = vmatprep.subr.bf16.mxu0 0
        %2004 = vmatpush1.bf16.msra.mxu0 0
        %2005 = vmatprep.subr.bf16.mxu0 0
        %2006 = vmatpush1.bf16.msra.mxu0 0
        %2007 = vmatprep.subr.bf16.mxu0 0
        %2008 = vmatpush1.bf16.msra.mxu0 0
        %2009 = vmatprep.subr.bf16.mxu0 0
        %2010 = vmatpush1.bf16.msra.mxu0 0
        %2011 = vmatprep.subr.bf16.mxu0 0
        %2012 = vmatpush1.bf16.msra.mxu0 0
        %2013 = vmatprep.subr.bf16.mxu0 0
        %2014 = vmatpush1.bf16.msra.mxu0 0
        %2015 = vmatprep.subr.bf16.mxu0 0
        %2016 = vmatpush1.bf16.msra.mxu0 0
        %2017 = vmatprep.subr.bf16.mxu0 0
        %2018 = vmatpush1.bf16.msra.mxu0 0
        %2019 = vmatprep.subr.bf16.mxu0 0
        %2020 = vmatpush1.bf16.msra.mxu0 0
        %2021 = vmatprep.subr.bf16.mxu0 0
        %2022 = vmatpush1.bf16.msra.mxu0 0
        %2023 = vmatprep.subr.bf16.mxu0 0
        %2024 = vmatpush1.bf16.msra.mxu0 0
        %2025 = vmatprep.subr.bf16.mxu0 0
        %2026 = vmatpush1.bf16.msra.mxu0 0
        %2027 = vmatprep.mubr.bf16.mxu0 0
        %2028 = vmatmul.mubr.bf16.gmra.mrb[0].mxu0 %v1990
        %v2029 = vpop.f32.mrb[0].mxu0
        %v2030 = vadd.f32 0.0, %v2029
        %v2031 = vpop.f32.mrb[0].mxu0
        %v2032 = vpop.f32.mrb[0].mxu0
        %v2033 = vpop.f32.mrb[0].mxu0
        %2034 = vdwg.mxu0
        %2036 = vrot.lane.b32.xlu0 %v2030, 24
        %v2037 = vpop.permute.xlu0 %2036
        %vm2039 = vcmask 261312
        %2040 = vst.msk [vmem:[#allocation2] sm:$0xff] %vm2039, %v2037
        %v2041 = vld [vmem:[#allocation2] sm:$0xff]
        %v2042 = vpack.c.bf16 %v2041, %v2041
        %v2044 = vlaneseq
        %v2045 = vshrl.u32 %v2044, 7
        %v2046 = vsub.s32 0, %v2045
        %v2047 = vrot.slane %v1463, %v2046
        %v2053 = vunpack.c.l.b16 %v1459
        %v2054 = vunpack.c.l.b16 %v1460
        %v2055 = vunpack.c.l.b16 %v1461
        %v2056 = vunpack.c.l.b16 %v1462
        %v2057 = vpack.c.b16 %v2054, %v2053
        %v2058 = vpack.c.b16 %v2056, %v2055
        %v2062 = vsel %vm1483, %v2042, 0
        %2064 = vmatprep.subr.bf16.mxu0 0
        %2065 = vmatpush1.bf16.msra.mxu0 %v2057
        %2066 = vmatprep.subr.bf16.mxu0 0
        %2067 = vmatpush1.bf16.msra.mxu0 %v2058
        %2068 = vmatprep.subr.bf16.mxu0 0
        %2069 = vmatpush1.bf16.msra.mxu0 0
        %2070 = vmatprep.subr.bf16.mxu0 0
        %2071 = vmatpush1.bf16.msra.mxu0 0
        %2072 = vmatprep.subr.bf16.mxu0 0
        %2073 = vmatpush1.bf16.msra.mxu0 0
        %2074 = vmatprep.subr.bf16.mxu0 0
        %2075 = vmatpush1.bf16.msra.mxu0 0
        %2076 = vmatprep.subr.bf16.mxu0 0
        %2077 = vmatpush1.bf16.msra.mxu0 0
        %2078 = vmatprep.subr.bf16.mxu0 0
        %2079 = vmatpush1.bf16.msra.mxu0 0
        %2080 = vmatprep.subr.bf16.mxu0 0
        %2081 = vmatpush1.bf16.msra.mxu0 0
        %2082 = vmatprep.subr.bf16.mxu0 0
        %2083 = vmatpush1.bf16.msra.mxu0 0
        %2084 = vmatprep.subr.bf16.mxu0 0
        %2085 = vmatpush1.bf16.msra.mxu0 0
        %2086 = vmatprep.subr.bf16.mxu0 0
        %2087 = vmatpush1.bf16.msra.mxu0 0
        %2088 = vmatprep.subr.bf16.mxu0 0
        %2089 = vmatpush1.bf16.msra.mxu0 0
        %2090 = vmatprep.subr.bf16.mxu0 0
        %2091 = vmatpush1.bf16.msra.mxu0 0
        %2092 = vmatprep.subr.bf16.mxu0 0
        %2093 = vmatpush1.bf16.msra.mxu0 0
        %2094 = vmatprep.subr.bf16.mxu0 0
        %2095 = vmatpush1.bf16.msra.mxu0 0
        %2096 = vmatprep.mubr.bf16.mxu0 0
        %2097 = vmatmul.mubr.bf16.gmra.mrb[0].mxu0 %v2062
        %v2098 = vpop.f32.mrb[0].mxu0
        %v2099 = vadd.f32 %v2047, %v2098
        %v2100 = vpop.f32.mrb[0].mxu0
        %v2101 = vpop.f32.mrb[0].mxu0
        %v2102 = vpop.f32.mrb[0].mxu0
        %2103 = vdwg.mxu0
        %v2104 = vadd.f32 %v1444, %v2099
        %v2105 = vld [vmem:[%s1399] sm:$0x1]
        %v2106 = vld [vmem:[%s1402] sm:$0x1]
        %v2107 = vsel %vm1483, %v2104, 0.0
        %2108 = vadd.xlane.f32.xlu0 %v2107
        %v2109 = vpop.xlane.xlu0 %2108
        %v2110 = vrcp.pop 32.0
        %v2111 = vmul.f32 %v2109, %v2110
        %v2112 = vsub.f32 %v2104, %v2111
        %v2113 = vmul.f32 %v2112, %v2112
        %v2114 = vsel %vm1483, %v2113, 0.0
        %2115 = vadd.xlane.f32.xlu0 %v2114
        %v2116 = vpop.xlane.xlu0 %2115
        %v2117 = vmul.f32 %v2116, %v2110
        %v2118 = vadd.f32 %v2117, 1e-05
        %v2119 = vrsqrt.pop %v2118
        %v2120 = vmul.f32 %v2112, %v2119
        %v2122 = vlaneseq
        %v2123 = vshrl.u32 %v2122, 7
        %v2124 = vsub.s32 0, %v2123
        %v2125 = vrot.slane %v2105, %v2124
        %v2127 = vmul.f32 %v2120, %v2125
        %v2129 = vlaneseq
        %v2130 = vshrl.u32 %v2129, 7
        %v2131 = vsub.s32 0, %v2130
        %v2132 = vrot.slane %v2106, %v2131
        %v2134 = vadd.f32 %v2127, %v2132
        %v2135 = vadd.f32 %v2134, %v1445
        %v2136 = vld [vmem:[%s1369] sm:$0xf]
        %v2137 = vld [vmem:[%s1369 + $0x4] sm:$0xf]
        %v2138 = vld [vmem:[%s1369 + $0x8] sm:$0xf]
        %v2139 = vld [vmem:[%s1369 + $0xc] sm:$0xf]
        %v2140 = vld [vmem:[%s1372] sm:$0x1]
        %v2141 = vld [vmem:[%s1377] sm:$0xf]
        %v2142 = vld [vmem:[%s1377 + $0x4] sm:$0xf]
        %v2143 = vld [vmem:[%s1377 + $0x8] sm:$0xf]
        %v2144 = vld [vmem:[%s1377 + $0xc] sm:$0xf]
        %v2145 = vld [vmem:[%s1380] sm:$0x1]
        %v2146 = vpack.c.bf16 %v2135, %v2135
        %v2148 = vlaneseq
        %v2149 = vshrl.u32 %v2148, 7
        %v2150 = vsub.s32 0, %v2149
        %v2151 = vrot.slane %v2140, %v2150
        %v2157 = vunpack.c.l.b16 %v2136
        %v2158 = vunpack.c.l.b16 %v2137
        %v2159 = vunpack.c.l.b16 %v2138
        %v2160 = vunpack.c.l.b16 %v2139
        %v2161 = vpack.c.b16 %v2158, %v2157
        %v2162 = vpack.c.b16 %v2160, %v2159
        %v2166 = vsel %vm1483, %v2146, 0
        %2168 = vmatprep.subr.bf16.mxu0 0
        %2169 = vmatpush1.bf16.msra.mxu0 %v2161
        %2170 = vmatprep.subr.bf16.mxu0 0
        %2171 = vmatpush1.bf16.msra.mxu0 %v2162
        %2172 = vmatprep.subr.bf16.mxu0 0
        %2173 = vmatpush1.bf16.msra.mxu0 0
        %2174 = vmatprep.subr.bf16.mxu0 0
        %2175 = vmatpush1.bf16.msra.mxu0 0
        %2176 = vmatprep.subr.bf16.mxu0 0
        %2177 = vmatpush1.bf16.msra.mxu0 0
        %2178 = vmatprep.subr.bf16.mxu0 0
        %2179 = vmatpush1.bf16.msra.mxu0 0
        %2180 = vmatprep.subr.bf16.mxu0 0
        %2181 = vmatpush1.bf16.msra.mxu0 0
        %2182 = vmatprep.subr.bf16.mxu0 0
        %2183 = vmatpush1.bf16.msra.mxu0 0
        %2184 = vmatprep.subr.bf16.mxu0 0
        %2185 = vmatpush1.bf16.msra.mxu0 0
        %2186 = vmatprep.subr.bf16.mxu0 0
        %2187 = vmatpush1.bf16.msra.mxu0 0
        %2188 = vmatprep.subr.bf16.mxu0 0
        %2189 = vmatpush1.bf16.msra.mxu0 0
        %2190 = vmatprep.subr.bf16.mxu0 0
        %2191 = vmatpush1.bf16.msra.mxu0 0
        %2192 = vmatprep.subr.bf16.mxu0 0
        %2193 = vmatpush1.bf16.msra.mxu0 0
        %2194 = vmatprep.subr.bf16.mxu0 0
        %2195 = vmatpush1.bf16.msra.mxu0 0
        %2196 = vmatprep.subr.bf16.mxu0 0
        %2197 = vmatpush1.bf16.msra.mxu0 0
        %2198 = vmatprep.subr.bf16.mxu0 0
        %2199 = vmatpush1.bf16.msra.mxu0 0
        %2200 = vmatprep.mubr.bf16.mxu0 0
        %2201 = vmatmul.mubr.bf16.gmra.mrb[0].mxu0 %v2166
        %v2202 = vpop.f32.mrb[0].mxu0
        %v2203 = vadd.f32 %v2151, %v2202
        %v2204 = vpop.f32.mrb[0].mxu0
        %v2205 = vpop.f32.mrb[0].mxu0
        %v2206 = vpop.f32.mrb[0].mxu0
        %2207 = vdwg.mxu0
        %v2208 = vpack.c.bf16 %v1447, %v1446
        %2209 = vrot.lane.b32.xlu0 %v2161, 96
        %v2210 = vpop.permute.xlu0 %2209
        %2211 = vrot.lane.b32.xlu0 %v2162, 96
        %v2212 = vpop.permute.xlu0 %2211
        %2215 = vrot.lane.b32.xlu0 %v2151, 96
        %v2216 = vpop.permute.xlu0 %2215
        %v2219 = vsel %vm1483, %v2208, 0
        %2221 = vmatprep.subr.bf16.mxu0 0
        %2222 = vmatpush1.bf16.msra.mxu0 %v2210
        %2223 = vmatprep.subr.bf16.mxu0 0
        %2224 = vmatpush1.bf16.msra.mxu0 %v2212
        %2225 = vmatprep.subr.bf16.mxu0 0
        %2226 = vmatpush1.bf16.msra.mxu0 0
        %2227 = vmatprep.subr.bf16.mxu0 0
        %2228 = vmatpush1.bf16.msra.mxu0 0
        %2229 = vmatprep.subr.bf16.mxu0 0
        %2230 = vmatpush1.bf16.msra.mxu0 0
        %2231 = vmatprep.subr.bf16.mxu0 0
        %2232 = vmatpush1.bf16.msra.mxu0 0
        %2233 = vmatprep.subr.bf16.mxu0 0
        %2234 = vmatpush1.bf16.msra.mxu0 0
        %2235 = vmatprep.subr.bf16.mxu0 0
        %2236 = vmatpush1.bf16.msra.mxu0 0
        %2237 = vmatprep.subr.bf16.mxu0 0
        %2238 = vmatpush1.bf16.msra.mxu0 0
        %2239 = vmatprep.subr.bf16.mxu0 0
        %2240 = vmatpush1.bf16.msra.mxu0 0
        %2241 = vmatprep.subr.bf16.mxu0 0
        %2242 = vmatpush1.bf16.msra.mxu0 0
        %2243 = vmatprep.subr.bf16.mxu0 0
        %2244 = vmatpush1.bf16.msra.mxu0 0
        %2245 = vmatprep.subr.bf16.mxu0 0
        %2246 = vmatpush1.bf16.msra.mxu0 0
        %2247 = vmatprep.subr.bf16.mxu0 0
        %2248 = vmatpush1.bf16.msra.mxu0 0
        %2249 = vmatprep.subr.bf16.mxu0 0
        %2250 = vmatpush1.bf16.msra.mxu0 0
        %2251 = vmatprep.subr.bf16.mxu0 0
        %2252 = vmatpush1.bf16.msra.mxu0 0
        %2253 = vmatprep.mubr.bf16.mxu0 0
        %2254 = vmatmul.mubr.bf16.gmra.mrb[0].mxu0 %v2219
        %v2255 = vpop.f32.mrb[0].mxu0
        %v2256 = vadd.f32 %v2216, %v2255
        %v2257 = vpop.f32.mrb[0].mxu0
        %v2258 = vpop.f32.mrb[0].mxu0
        %v2259 = vadd.f32 %v2216, %v2258
        %v2260 = vpop.f32.mrb[0].mxu0
        %2261 = vdwg.mxu0
        %v2263 = vlaneseq
        %v2264 = vshrl.u32 %v2263, 7
        %v2265 = vsub.s32 0, %v2264
        %v2266 = vrot.slane %v1452, %v2265
        %v2268 = vpack.c.bf16 %v2203, %v2203
        %v2269 = vpack.c.bf16 %v2259, %v2256
        %v2271 = vsel %vm1585, %v2268, 0
        %v2274 = vsel %vm1585, %v2269, 0
        %2276 = vmatprep.subr.bf16.mxu0 0
        %2277 = vmatpush1.bf16.xpose.msra.mxu0 %v2274
        %2278 = vmatprep.subr.bf16.mxu0 0
        %2279 = vmatpush1.bf16.xpose.msra.mxu0 0
        %2280 = vmatprep.subr.bf16.mxu0 0
        %2281 = vmatpush1.bf16.xpose.msra.mxu0 0
        %2282 = vmatprep.subr.bf16.mxu0 0
        %2283 = vmatpush1.bf16.xpose.msra.mxu0 0
        %2284 = vmatprep.subr.bf16.mxu0 0
        %2285 = vmatpush1.bf16.xpose.msra.mxu0 0
        %2286 = vmatprep.subr.bf16.mxu0 0
        %2287 = vmatpush1.bf16.xpose.msra.mxu0 0
        %2288 = vmatprep.subr.bf16.mxu0 0
        %2289 = vmatpush1.bf16.xpose.msra.mxu0 0
        %2290 = vmatprep.subr.bf16.mxu0 0
        %2291 = vmatpush1.bf16.xpose.msra.mxu0 0
        %2292 = vmatprep.subr.bf16.mxu0 0
        %2293 = vmatpush1.bf16.xpose.msra.mxu0 0
        %2294 = vmatprep.subr.bf16.mxu0 0
        %2295 = vmatpush1.bf16.xpose.msra.mxu0 0
        %2296 = vmatprep.subr.bf16.mxu0 0
        %2297 = vmatpush1.bf16.xpose.msra.mxu0 0
        %2298 = vmatprep.subr.bf16.mxu0 0
        %2299 = vmatpush1.bf16.xpose.msra.mxu0 0
        %2300 = vmatprep.subr.bf16.mxu0 0
        %2301 = vmatpush1.bf16.xpose.msra.mxu0 0
        %2302 = vmatprep.subr.bf16.mxu0 0
        %2303 = vmatpush1.bf16.xpose.msra.mxu0 0
        %2304 = vmatprep.subr.bf16.mxu0 0
        %2305 = vmatpush1.bf16.xpose.msra.mxu0 0
        %2306 = vmatprep.subr.bf16.mxu0 0
        %2307 = vmatpush1.bf16.xpose.msra.mxu0 0
        %2308 = vmatprep.mubr.bf16.mxu0 0
        %2309 = vmatmul.mubr.bf16.gmra.mrb[0].mxu0 %v2271
        %v2310 = vpop.f32.mrb[0].mxu0
        %v2311 = vadd.f32 %v2266, %v2310
        %v2312 = vpop.f32.mrb[0].mxu0
        %v2313 = vpop.f32.mrb[0].mxu0
        %v2314 = vpop.f32.mrb[0].mxu0
        %2315 = vdwg.mxu0
        %vm2316 = vcmask 130048
        %v2317 = vsel %vm2316, %v2311, -inf
        %2318 = vmax.xlane.f32.xlu0 %v2317
        %v2319 = vpop.xlane.xlu0 %2318
        %v2320 = vsub.f32 %v2311, %v2319
        %v2321 = vmul.f32 %v2320, 1.442695
        %v2322 = vpow.pop %v2321
        %v2323 = vsel %vm2316, %v2322, 0.0
        %2324 = vadd.xlane.f32.xlu0 %v2323
        %v2325 = vpop.xlane.xlu0 %2324
        %v2326 = vrcp.pop %v2325
        %v2327 = vmul.f32 %v2322, %v2326
        %v2328 = vpack.c.bf16 %v2327, %v2327
        %2330 = vrot.lane.b32.xlu0 %v2269, 96
        %v2331 = vpop.permute.xlu0 %2330
        %v2334 = vsel %vm2316, %v2328, 0
        %2336 = vmatprep.subr.bf16.mxu0 0
        %2337 = vmatpush1.bf16.msra.mxu0 %v2331
        %2338 = vmatprep.subr.bf16.mxu0 0
        %2339 = vmatpush1.bf16.msra.mxu0 0
        %2340 = vmatprep.subr.bf16.mxu0 0
        %2341 = vmatpush1.bf16.msra.mxu0 0
        %2342 = vmatprep.subr.bf16.mxu0 0
        %2343 = vmatpush1.bf16.msra.mxu0 0
        %2344 = vmatprep.subr.bf16.mxu0 0
        %2345 = vmatpush1.bf16.msra.mxu0 0
        %2346 = vmatprep.subr.bf16.mxu0 0
        %2347 = vmatpush1.bf16.msra.mxu0 0
        %2348 = vmatprep.subr.bf16.mxu0 0
        %2349 = vmatpush1.bf16.msra.mxu0 0
        %2350 = vmatprep.subr.bf16.mxu0 0
        %2351 = vmatpush1.bf16.msra.mxu0 0
        %2352 = vmatprep.subr.bf16.mxu0 0
        %2353 = vmatpush1.bf16.msra.mxu0 0
        %2354 = vmatprep.subr.bf16.mxu0 0
        %2355 = vmatpush1.bf16.msra.mxu0 0
        %2356 = vmatprep.subr.bf16.mxu0 0
        %2357 = vmatpush1.bf16.msra.mxu0 0
        %2358 = vmatprep.subr.bf16.mxu0 0
        %2359 = vmatpush1.bf16.msra.mxu0 0
        %2360 = vmatprep.subr.bf16.mxu0 0
        %2361 = vmatpush1.bf16.msra.mxu0 0
        %2362 = vmatprep.subr.bf16.mxu0 0
        %2363 = vmatpush1.bf16.msra.mxu0 0
        %2364 = vmatprep.subr.bf16.mxu0 0
        %2365 = vmatpush1.bf16.msra.mxu0 0
        %2366 = vmatprep.subr.bf16.mxu0 0
        %2367 = vmatpush1.bf16.msra.mxu0 0
        %2368 = vmatprep.mubr.bf16.mxu0 0
        %2369 = vmatmul.mubr.bf16.gmra.mrb[0].mxu0 %v2334
        %v2370 = vpop.f32.mrb[0].mxu0
        %v2371 = vadd.f32 0.0, %v2370
        %v2372 = vpop.f32.mrb[0].mxu0
        %v2373 = vpop.f32.mrb[0].mxu0
        %v2374 = vpop.f32.mrb[0].mxu0
        %2375 = vdwg.mxu0
        %2376 = vst.msk [vmem:[#allocation2] sm:$0xff] %vm1585, %v2371
        %2378 = vrot.lane.b32.xlu0 %v2268, 120
        %v2379 = vpop.permute.xlu0 %2378
        %2380 = vrot.lane.b32.xlu0 %v2269, 120
        %v2381 = vpop.permute.xlu0 %2380
        %v2383 = vsel %vm1585, %v2379, 0
        %v2386 = vsel %vm1585, %v2381, 0
        %2388 = vmatprep.subr.bf16.mxu0 0
        %2389 = vmatpush1.bf16.xpose.msra.mxu0 %v2386
        %2390 = vmatprep.subr.bf16.mxu0 0
        %2391 = vmatpush1.bf16.xpose.msra.mxu0 0
        %2392 = vmatprep.subr.bf16.mxu0 0
        %2393 = vmatpush1.bf16.xpose.msra.mxu0 0
        %2394 = vmatprep.subr.bf16.mxu0 0
        %2395 = vmatpush1.bf16.xpose.msra.mxu0 0
        %2396 = vmatprep.subr.bf16.mxu0 0
        %2397 = vmatpush1.bf16.xpose.msra.mxu0 0
        %2398 = vmatprep.subr.bf16.mxu0 0
        %2399 = vmatpush1.bf16.xpose.msra.mxu0 0
        %2400 = vmatprep.subr.bf16.mxu0 0
        %2401 = vmatpush1.bf16.xpose.msra.mxu0 0
        %2402 = vmatprep.subr.bf16.mxu0 0
        %2403 = vmatpush1.bf16.xpose.msra.mxu0 0
        %2404 = vmatprep.subr.bf16.mxu0 0
        %2405 = vmatpush1.bf16.xpose.msra.mxu0 0
        %2406 = vmatprep.subr.bf16.mxu0 0
        %2407 = vmatpush1.bf16.xpose.msra.mxu0 0
        %2408 = vmatprep.subr.bf16.mxu0 0
        %2409 = vmatpush1.bf16.xpose.msra.mxu0 0
        %2410 = vmatprep.subr.bf16.mxu0 0
        %2411 = vmatpush1.bf16.xpose.msra.mxu0 0
        %2412 = vmatprep.subr.bf16.mxu0 0
        %2413 = vmatpush1.bf16.xpose.msra.mxu0 0
        %2414 = vmatprep.subr.bf16.mxu0 0
        %2415 = vmatpush1.bf16.xpose.msra.mxu0 0
        %2416 = vmatprep.subr.bf16.mxu0 0
        %2417 = vmatpush1.bf16.xpose.msra.mxu0 0
        %2418 = vmatprep.subr.bf16.mxu0 0
        %2419 = vmatpush1.bf16.xpose.msra.mxu0 0
        %2420 = vmatprep.mubr.bf16.mxu0 0
        %2421 = vmatmul.mubr.bf16.gmra.mrb[0].mxu0 %v2383
        %v2422 = vpop.f32.mrb[0].mxu0
        %v2423 = vadd.f32 %v2266, %v2422
        %v2424 = vpop.f32.mrb[0].mxu0
        %v2425 = vpop.f32.mrb[0].mxu0
        %v2426 = vpop.f32.mrb[0].mxu0
        %2427 = vdwg.mxu0
        %v2428 = vsel %vm2316, %v2423, -inf
        %2429 = vmax.xlane.f32.xlu0 %v2428
        %v2430 = vpop.xlane.xlu0 %2429
        %v2431 = vsub.f32 %v2423, %v2430
        %v2432 = vmul.f32 %v2431, 1.442695
        %v2433 = vpow.pop %v2432
        %v2434 = vsel %vm2316, %v2433, 0.0
        %2435 = vadd.xlane.f32.xlu0 %v2434
        %v2436 = vpop.xlane.xlu0 %2435
        %v2437 = vrcp.pop %v2436
        %v2438 = vmul.f32 %v2433, %v2437
        %v2439 = vpack.c.bf16 %v2438, %v2438
        %2440 = vrot.lane.b32.xlu0 %v2269, 88
        %v2441 = vpop.permute.xlu0 %2440
        %v2444 = vsel %vm2316, %v2439, 0
        %2446 = vmatprep.subr.bf16.mxu0 0
        %2447 = vmatpush1.bf16.msra.mxu0 %v2441
        %2448 = vmatprep.subr.bf16.mxu0 0
        %2449 = vmatpush1.bf16.msra.mxu0 0
        %2450 = vmatprep.subr.bf16.mxu0 0
        %2451 = vmatpush1.bf16.msra.mxu0 0
        %2452 = vmatprep.subr.bf16.mxu0 0
        %2453 = vmatpush1.bf16.msra.mxu0 0
        %2454 = vmatprep.subr.bf16.mxu0 0
        %2455 = vmatpush1.bf16.msra.mxu0 0
        %2456 = vmatprep.subr.bf16.mxu0 0
        %2457 = vmatpush1.bf16.msra.mxu0 0
        %2458 = vmatprep.subr.bf16.mxu0 0
        %2459 = vmatpush1.bf16.msra.mxu0 0
        %2460 = vmatprep.subr.bf16.mxu0 0
        %2461 = vmatpush1.bf16.msra.mxu0 0
        %2462 = vmatprep.subr.bf16.mxu0 0
        %2463 = vmatpush1.bf16.msra.mxu0 0
        %2464 = vmatprep.subr.bf16.mxu0 0
        %2465 = vmatpush1.bf16.msra.mxu0 0
        %2466 = vmatprep.subr.bf16.mxu0 0
        %2467 = vmatpush1.bf16.msra.mxu0 0
        %2468 = vmatprep.subr.bf16.mxu0 0
        %2469 = vmatpush1.bf16.msra.mxu0 0
        %2470 = vmatprep.subr.bf16.mxu0 0
        %2471 = vmatpush1.bf16.msra.mxu0 0
        %2472 = vmatprep.subr.bf16.mxu0 0
        %2473 = vmatpush1.bf16.msra.mxu0 0
        %2474 = vmatprep.subr.bf16.mxu0 0
        %2475 = vmatpush1.bf16.msra.mxu0 0
        %2476 = vmatprep.subr.bf16.mxu0 0
        %2477 = vmatpush1.bf16.msra.mxu0 0
        %2478 = vmatprep.mubr.bf16.mxu0 0
        %2479 = vmatmul.mubr.bf16.gmra.mrb[0].mxu0 %v2444
        %v2480 = vpop.f32.mrb[0].mxu0
        %v2481 = vadd.f32 0.0, %v2480
        %v2482 = vpop.f32.mrb[0].mxu0
        %v2483 = vpop.f32.mrb[0].mxu0
        %v2484 = vpop.f32.mrb[0].mxu0
        %2485 = vdwg.mxu0
        %2487 = vrot.lane.b32.xlu0 %v2481, 8
        %v2488 = vpop.permute.xlu0 %2487
        %2490 = vst.msk [vmem:[#allocation2] sm:$0xff] %vm1807, %v2488
        %2491 = vrot.lane.b32.xlu0 %v2268, 112
        %v2492 = vpop.permute.xlu0 %2491
        %2493 = vrot.lane.b32.xlu0 %v2269, 112
        %v2494 = vpop.permute.xlu0 %2493
        %v2496 = vsel %vm1585, %v2492, 0
        %v2499 = vsel %vm1585, %v2494, 0
        %2501 = vmatprep.subr.bf16.mxu0 0
        %2502 = vmatpush1.bf16.xpose.msra.mxu0 %v2499
        %2503 = vmatprep.subr.bf16.mxu0 0
        %2504 = vmatpush1.bf16.xpose.msra.mxu0 0
        %2505 = vmatprep.subr.bf16.mxu0 0
        %2506 = vmatpush1.bf16.xpose.msra.mxu0 0
        %2507 = vmatprep.subr.bf16.mxu0 0
        %2508 = vmatpush1.bf16.xpose.msra.mxu0 0
        %2509 = vmatprep.subr.bf16.mxu0 0
        %2510 = vmatpush1.bf16.xpose.msra.mxu0 0
        %2511 = vmatprep.subr.bf16.mxu0 0
        %2512 = vmatpush1.bf16.xpose.msra.mxu0 0
        %2513 = vmatprep.subr.bf16.mxu0 0
        %2514 = vmatpush1.bf16.xpose.msra.mxu0 0
        %2515 = vmatprep.subr.bf16.mxu0 0
        %2516 = vmatpush1.bf16.xpose.msra.mxu0 0
        %2517 = vmatprep.subr.bf16.mxu0 0
        %2518 = vmatpush1.bf16.xpose.msra.mxu0 0
        %2519 = vmatprep.subr.bf16.mxu0 0
        %2520 = vmatpush1.bf16.xpose.msra.mxu0 0
        %2521 = vmatprep.subr.bf16.mxu0 0
        %2522 = vmatpush1.bf16.xpose.msra.mxu0 0
        %2523 = vmatprep.subr.bf16.mxu0 0
        %2524 = vmatpush1.bf16.xpose.msra.mxu0 0
        %2525 = vmatprep.subr.bf16.mxu0 0
        %2526 = vmatpush1.bf16.xpose.msra.mxu0 0
        %2527 = vmatprep.subr.bf16.mxu0 0
        %2528 = vmatpush1.bf16.xpose.msra.mxu0 0
        %2529 = vmatprep.subr.bf16.mxu0 0
        %2530 = vmatpush1.bf16.xpose.msra.mxu0 0
        %2531 = vmatprep.subr.bf16.mxu0 0
        %2532 = vmatpush1.bf16.xpose.msra.mxu0 0
        %2533 = vmatprep.mubr.bf16.mxu0 0
        %2534 = vmatmul.mubr.bf16.gmra.mrb[0].mxu0 %v2496
        %v2535 = vpop.f32.mrb[0].mxu0
        %v2536 = vadd.f32 %v2266, %v2535
        %v2537 = vpop.f32.mrb[0].mxu0
        %v2538 = vpop.f32.mrb[0].mxu0
        %v2539 = vpop.f32.mrb[0].mxu0
        %2540 = vdwg.mxu0
        %v2541 = vsel %vm2316, %v2536, -inf
        %2542 = vmax.xlane.f32.xlu0 %v2541
        %v2543 = vpop.xlane.xlu0 %2542
        %v2544 = vsub.f32 %v2536, %v2543
        %v2545 = vmul.f32 %v2544, 1.442695
        %v2546 = vpow.pop %v2545
        %v2547 = vsel %vm2316, %v2546, 0.0
        %2548 = vadd.xlane.f32.xlu0 %v2547
        %v2549 = vpop.xlane.xlu0 %2548
        %v2550 = vrcp.pop %v2549
        %v2551 = vmul.f32 %v2546, %v2550
        %v2552 = vpack.c.bf16 %v2551, %v2551
        %2553 = vrot.lane.b32.xlu0 %v2269, 80
        %v2554 = vpop.permute.xlu0 %2553
        %v2557 = vsel %vm2316, %v2552, 0
        %2559 = vmatprep.subr.bf16.mxu0 0
        %2560 = vmatpush1.bf16.msra.mxu0 %v2554
        %2561 = vmatprep.subr.bf16.mxu0 0
        %2562 = vmatpush1.bf16.msra.mxu0 0
        %2563 = vmatprep.subr.bf16.mxu0 0
        %2564 = vmatpush1.bf16.msra.mxu0 0
        %2565 = vmatprep.subr.bf16.mxu0 0
        %2566 = vmatpush1.bf16.msra.mxu0 0
        %2567 = vmatprep.subr.bf16.mxu0 0
        %2568 = vmatpush1.bf16.msra.mxu0 0
        %2569 = vmatprep.subr.bf16.mxu0 0
        %2570 = vmatpush1.bf16.msra.mxu0 0
        %2571 = vmatprep.subr.bf16.mxu0 0
        %2572 = vmatpush1.bf16.msra.mxu0 0
        %2573 = vmatprep.subr.bf16.mxu0 0
        %2574 = vmatpush1.bf16.msra.mxu0 0
        %2575 = vmatprep.subr.bf16.mxu0 0
        %2576 = vmatpush1.bf16.msra.mxu0 0
        %2577 = vmatprep.subr.bf16.mxu0 0
        %2578 = vmatpush1.bf16.msra.mxu0 0
        %2579 = vmatprep.subr.bf16.mxu0 0
        %2580 = vmatpush1.bf16.msra.mxu0 0
        %2581 = vmatprep.subr.bf16.mxu0 0
        %2582 = vmatpush1.bf16.msra.mxu0 0
        %2583 = vmatprep.subr.bf16.mxu0 0
        %2584 = vmatpush1.bf16.msra.mxu0 0
        %2585 = vmatprep.subr.bf16.mxu0 0
        %2586 = vmatpush1.bf16.msra.mxu0 0
        %2587 = vmatprep.subr.bf16.mxu0 0
        %2588 = vmatpush1.bf16.msra.mxu0 0
        %2589 = vmatprep.subr.bf16.mxu0 0
        %2590 = vmatpush1.bf16.msra.mxu0 0
        %2591 = vmatprep.mubr.bf16.mxu0 0
        %2592 = vmatmul.mubr.bf16.gmra.mrb[0].mxu0 %v2557
        %v2593 = vpop.f32.mrb[0].mxu0
        %v2594 = vadd.f32 0.0, %v2593
        %v2595 = vpop.f32.mrb[0].mxu0
        %v2596 = vpop.f32.mrb[0].mxu0
        %v2597 = vpop.f32.mrb[0].mxu0
        %2598 = vdwg.mxu0
        %2600 = vrot.lane.b32.xlu0 %v2594, 16
        %v2601 = vpop.permute.xlu0 %2600
        %2603 = vst.msk [vmem:[#allocation2] sm:$0xff] %vm1923, %v2601
        %2604 = vrot.lane.b32.xlu0 %v2268, 104
        %v2605 = vpop.permute.xlu0 %2604
        %2606 = vrot.lane.b32.xlu0 %v2269, 104
        %v2607 = vpop.permute.xlu0 %2606
        %v2609 = vsel %vm1585, %v2605, 0
        %v2612 = vsel %vm1585, %v2607, 0
        %2614 = vmatprep.subr.bf16.mxu0 0
        %2615 = vmatpush1.bf16.xpose.msra.mxu0 %v2612
        %2616 = vmatprep.subr.bf16.mxu0 0
        %2617 = vmatpush1.bf16.xpose.msra.mxu0 0
        %2618 = vmatprep.subr.bf16.mxu0 0
        %2619 = vmatpush1.bf16.xpose.msra.mxu0 0
        %2620 = vmatprep.subr.bf16.mxu0 0
        %2621 = vmatpush1.bf16.xpose.msra.mxu0 0
        %2622 = vmatprep.subr.bf16.mxu0 0
        %2623 = vmatpush1.bf16.xpose.msra.mxu0 0
        %2624 = vmatprep.subr.bf16.mxu0 0
        %2625 = vmatpush1.bf16.xpose.msra.mxu0 0
        %2626 = vmatprep.subr.bf16.mxu0 0
        %2627 = vmatpush1.bf16.xpose.msra.mxu0 0
        %2628 = vmatprep.subr.bf16.mxu0 0
        %2629 = vmatpush1.bf16.xpose.msra.mxu0 0
        %2630 = vmatprep.subr.bf16.mxu0 0
        %2631 = vmatpush1.bf16.xpose.msra.mxu0 0
        %2632 = vmatprep.subr.bf16.mxu0 0
        %2633 = vmatpush1.bf16.xpose.msra.mxu0 0
        %2634 = vmatprep.subr.bf16.mxu0 0
        %2635 = vmatpush1.bf16.xpose.msra.mxu0 0
        %2636 = vmatprep.subr.bf16.mxu0 0
        %2637 = vmatpush1.bf16.xpose.msra.mxu0 0
        %2638 = vmatprep.subr.bf16.mxu0 0
        %2639 = vmatpush1.bf16.xpose.msra.mxu0 0
        %2640 = vmatprep.subr.bf16.mxu0 0
        %2641 = vmatpush1.bf16.xpose.msra.mxu0 0
        %2642 = vmatprep.subr.bf16.mxu0 0
        %2643 = vmatpush1.bf16.xpose.msra.mxu0 0
        %2644 = vmatprep.subr.bf16.mxu0 0
        %2645 = vmatpush1.bf16.xpose.msra.mxu0 0
        %2646 = vmatprep.mubr.bf16.mxu0 0
        %2647 = vmatmul.mubr.bf16.gmra.mrb[0].mxu0 %v2609
        %v2648 = vpop.f32.mrb[0].mxu0
        %v2649 = vadd.f32 %v2266, %v2648
        %v2650 = vpop.f32.mrb[0].mxu0
        %v2651 = vpop.f32.mrb[0].mxu0
        %v2652 = vpop.f32.mrb[0].mxu0
        %2653 = vdwg.mxu0
        %v2654 = vsel %vm2316, %v2649, -inf
        %2655 = vmax.xlane.f32.xlu0 %v2654
        %v2656 = vpop.xlane.xlu0 %2655
        %v2657 = vsub.f32 %v2649, %v2656
        %v2658 = vmul.f32 %v2657, 1.442695
        %v2659 = vpow.pop %v2658
        %v2660 = vsel %vm2316, %v2659, 0.0
        %2661 = vadd.xlane.f32.xlu0 %v2660
        %v2662 = vpop.xlane.xlu0 %2661
        %v2663 = vrcp.pop %v2662
        %v2664 = vmul.f32 %v2659, %v2663
        %v2665 = vpack.c.bf16 %v2664, %v2664
        %2666 = vrot.lane.b32.xlu0 %v2269, 72
        %v2667 = vpop.permute.xlu0 %2666
        %v2670 = vsel %vm2316, %v2665, 0
        %2672 = vmatprep.subr.bf16.mxu0 0
        %2673 = vmatpush1.bf16.msra.mxu0 %v2667
        %2674 = vmatprep.subr.bf16.mxu0 0
        %2675 = vmatpush1.bf16.msra.mxu0 0
        %2676 = vmatprep.subr.bf16.mxu0 0
        %2677 = vmatpush1.bf16.msra.mxu0 0
        %2678 = vmatprep.subr.bf16.mxu0 0
        %2679 = vmatpush1.bf16.msra.mxu0 0
        %2680 = vmatprep.subr.bf16.mxu0 0
        %2681 = vmatpush1.bf16.msra.mxu0 0
        %2682 = vmatprep.subr.bf16.mxu0 0
        %2683 = vmatpush1.bf16.msra.mxu0 0
        %2684 = vmatprep.subr.bf16.mxu0 0
        %2685 = vmatpush1.bf16.msra.mxu0 0
        %2686 = vmatprep.subr.bf16.mxu0 0
        %2687 = vmatpush1.bf16.msra.mxu0 0
        %2688 = vmatprep.subr.bf16.mxu0 0
        %2689 = vmatpush1.bf16.msra.mxu0 0
        %2690 = vmatprep.subr.bf16.mxu0 0
        %2691 = vmatpush1.bf16.msra.mxu0 0
        %2692 = vmatprep.subr.bf16.mxu0 0
        %2693 = vmatpush1.bf16.msra.mxu0 0
        %2694 = vmatprep.subr.bf16.mxu0 0
        %2695 = vmatpush1.bf16.msra.mxu0 0
        %2696 = vmatprep.subr.bf16.mxu0 0
        %2697 = vmatpush1.bf16.msra.mxu0 0
        %2698 = vmatprep.subr.bf16.mxu0 0
        %2699 = vmatpush1.bf16.msra.mxu0 0
        %2700 = vmatprep.subr.bf16.mxu0 0
        %2701 = vmatpush1.bf16.msra.mxu0 0
        %2702 = vmatprep.subr.bf16.mxu0 0
        %2703 = vmatpush1.bf16.msra.mxu0 0
        %2704 = vmatprep.mubr.bf16.mxu0 0
        %2705 = vmatmul.mubr.bf16.gmra.mrb[0].mxu0 %v2670
        %v2706 = vpop.f32.mrb[0].mxu0
        %v2707 = vadd.f32 0.0, %v2706
        %v2708 = vpop.f32.mrb[0].mxu0
        %v2709 = vpop.f32.mrb[0].mxu0
        %v2710 = vpop.f32.mrb[0].mxu0
        %2711 = vdwg.mxu0
        %2713 = vrot.lane.b32.xlu0 %v2707, 24
        %v2714 = vpop.permute.xlu0 %2713
        %2716 = vst.msk [vmem:[#allocation2] sm:$0xff] %vm2039, %v2714
        %v2717 = vld [vmem:[#allocation2] sm:$0xff]
        %v2718 = vpack.c.bf16 %v2717, %v2717
        %v2720 = vlaneseq
        %v2721 = vshrl.u32 %v2720, 7
        %v2722 = vsub.s32 0, %v2721
        %v2723 = vrot.slane %v2145, %v2722
        %v2729 = vunpack.c.l.b16 %v2141
        %v2730 = vunpack.c.l.b16 %v2142
        %v2731 = vunpack.c.l.b16 %v2143
        %v2732 = vunpack.c.l.b16 %v2144
        %v2733 = vpack.c.b16 %v2730, %v2729
        %v2734 = vpack.c.b16 %v2732, %v2731
        %v2738 = vsel %vm1483, %v2718, 0
        %2740 = vmatprep.subr.bf16.mxu0 0
        %2741 = vmatpush1.bf16.msra.mxu0 %v2733
        %2742 = vmatprep.subr.bf16.mxu0 0
        %2743 = vmatpush1.bf16.msra.mxu0 %v2734
        %2744 = vmatprep.subr.bf16.mxu0 0
        %2745 = vmatpush1.bf16.msra.mxu0 0
        %2746 = vmatprep.subr.bf16.mxu0 0
        %2747 = vmatpush1.bf16.msra.mxu0 0
        %2748 = vmatprep.subr.bf16.mxu0 0
        %2749 = vmatpush1.bf16.msra.mxu0 0
        %2750 = vmatprep.subr.bf16.mxu0 0
        %2751 = vmatpush1.bf16.msra.mxu0 0
        %2752 = vmatprep.subr.bf16.mxu0 0
        %2753 = vmatpush1.bf16.msra.mxu0 0
        %2754 = vmatprep.subr.bf16.mxu0 0
        %2755 = vmatpush1.bf16.msra.mxu0 0
        %2756 = vmatprep.subr.bf16.mxu0 0
        %2757 = vmatpush1.bf16.msra.mxu0 0
        %2758 = vmatprep.subr.bf16.mxu0 0
        %2759 = vmatpush1.bf16.msra.mxu0 0
        %2760 = vmatprep.subr.bf16.mxu0 0
        %2761 = vmatpush1.bf16.msra.mxu0 0
        %2762 = vmatprep.subr.bf16.mxu0 0
        %2763 = vmatpush1.bf16.msra.mxu0 0
        %2764 = vmatprep.subr.bf16.mxu0 0
        %2765 = vmatpush1.bf16.msra.mxu0 0
        %2766 = vmatprep.subr.bf16.mxu0 0
        %2767 = vmatpush1.bf16.msra.mxu0 0
        %2768 = vmatprep.subr.bf16.mxu0 0
        %2769 = vmatpush1.bf16.msra.mxu0 0
        %2770 = vmatprep.subr.bf16.mxu0 0
        %2771 = vmatpush1.bf16.msra.mxu0 0
        %2772 = vmatprep.mubr.bf16.mxu0 0
        %2773 = vmatmul.mubr.bf16.gmra.mrb[0].mxu0 %v2738
        %v2774 = vpop.f32.mrb[0].mxu0
        %v2775 = vadd.f32 %v2723, %v2774
        %v2776 = vpop.f32.mrb[0].mxu0
        %v2777 = vpop.f32.mrb[0].mxu0
        %v2778 = vpop.f32.mrb[0].mxu0
        %2779 = vdwg.mxu0
        %v2780 = vadd.f32 %v2134, %v2775
        %v2781 = vld [vmem:[%s1405] sm:$0x1]
        %v2782 = vld [vmem:[%s1408] sm:$0x1]
        %v2783 = vsel %vm1483, %v2780, 0.0
        %2784 = vadd.xlane.f32.xlu0 %v2783
        %v2785 = vpop.xlane.xlu0 %2784
        %v2786 = vmul.f32 %v2785, %v2110
        %v2787 = vsub.f32 %v2780, %v2786
        %v2788 = vmul.f32 %v2787, %v2787
        %v2789 = vsel %vm1483, %v2788, 0.0
        %2790 = vadd.xlane.f32.xlu0 %v2789
        %v2791 = vpop.xlane.xlu0 %2790
        %v2792 = vmul.f32 %v2791, %v2110
        %v2793 = vadd.f32 %v2792, 1e-05
        %v2794 = vrsqrt.pop %v2793
        %v2795 = vmul.f32 %v2787, %v2794
        %v2797 = vlaneseq
        %v2798 = vshrl.u32 %v2797, 7
        %v2799 = vsub.s32 0, %v2798
        %v2800 = vrot.slane %v2781, %v2799
        %v2802 = vmul.f32 %v2795, %v2800
        %v2804 = vlaneseq
        %v2805 = vshrl.u32 %v2804, 7
        %v2806 = vsub.s32 0, %v2805
        %v2807 = vrot.slane %v2782, %v2806
        %v2809 = vadd.f32 %v2802, %v2807
        %v2810 = vadd.f32 %v2809, %v1445
        %v2811 = vld [vmem:[%s1385] sm:$0xf]
        %v2812 = vld [vmem:[%s1385 + $0x4] sm:$0xf]
        %v2813 = vld [vmem:[%s1385 + $0x8] sm:$0xf]
        %v2814 = vld [vmem:[%s1385 + $0xc] sm:$0xf]
        %v2815 = vld [vmem:[%s1388] sm:$0x1]
        %v2816 = vld [vmem:[%s1393] sm:$0xf]
        %v2817 = vld [vmem:[%s1393 + $0x4] sm:$0xf]
        %v2818 = vld [vmem:[%s1393 + $0x8] sm:$0xf]
        %v2819 = vld [vmem:[%s1393 + $0xc] sm:$0xf]
        %v2820 = vld [vmem:[%s1396] sm:$0x1]
        %v2821 = vpack.c.bf16 %v2810, %v2810
        %v2823 = vlaneseq
        %v2824 = vshrl.u32 %v2823, 7
        %v2825 = vsub.s32 0, %v2824
        %v2826 = vrot.slane %v2815, %v2825
        %v2832 = vunpack.c.l.b16 %v2811
        %v2833 = vunpack.c.l.b16 %v2812
        %v2834 = vunpack.c.l.b16 %v2813
        %v2835 = vunpack.c.l.b16 %v2814
        %v2836 = vpack.c.b16 %v2833, %v2832
        %v2837 = vpack.c.b16 %v2835, %v2834
        %v2841 = vsel %vm1483, %v2821, 0
        %2843 = vmatprep.subr.bf16.mxu0 0
        %2844 = vmatpush1.bf16.msra.mxu0 %v2836
        %2845 = vmatprep.subr.bf16.mxu0 0
        %2846 = vmatpush1.bf16.msra.mxu0 %v2837
        %2847 = vmatprep.subr.bf16.mxu0 0
        %2848 = vmatpush1.bf16.msra.mxu0 0
        %2849 = vmatprep.subr.bf16.mxu0 0
        %2850 = vmatpush1.bf16.msra.mxu0 0
        %2851 = vmatprep.subr.bf16.mxu0 0
        %2852 = vmatpush1.bf16.msra.mxu0 0
        %2853 = vmatprep.subr.bf16.mxu0 0
        %2854 = vmatpush1.bf16.msra.mxu0 0
        %2855 = vmatprep.subr.bf16.mxu0 0
        %2856 = vmatpush1.bf16.msra.mxu0 0
        %2857 = vmatprep.subr.bf16.mxu0 0
        %2858 = vmatpush1.bf16.msra.mxu0 0
        %2859 = vmatprep.subr.bf16.mxu0 0
        %2860 = vmatpush1.bf16.msra.mxu0 0
        %2861 = vmatprep.subr.bf16.mxu0 0
        %2862 = vmatpush1.bf16.msra.mxu0 0
        %2863 = vmatprep.subr.bf16.mxu0 0
        %2864 = vmatpush1.bf16.msra.mxu0 0
        %2865 = vmatprep.subr.bf16.mxu0 0
        %2866 = vmatpush1.bf16.msra.mxu0 0
        %2867 = vmatprep.subr.bf16.mxu0 0
        %2868 = vmatpush1.bf16.msra.mxu0 0
        %2869 = vmatprep.subr.bf16.mxu0 0
        %2870 = vmatpush1.bf16.msra.mxu0 0
        %2871 = vmatprep.subr.bf16.mxu0 0
        %2872 = vmatpush1.bf16.msra.mxu0 0
        %2873 = vmatprep.subr.bf16.mxu0 0
        %2874 = vmatpush1.bf16.msra.mxu0 0
        %2875 = vmatprep.mubr.bf16.mxu0 0
        %2876 = vmatmul.mubr.bf16.gmra.mrb[0].mxu0 %v2841
        %v2877 = vpop.f32.mrb[0].mxu0
        %v2878 = vadd.f32 %v2826, %v2877
        %v2879 = vpop.f32.mrb[0].mxu0
        %v2880 = vpop.f32.mrb[0].mxu0
        %v2881 = vpop.f32.mrb[0].mxu0
        %2882 = vdwg.mxu0
        %v2883 = vpack.c.bf16 %v1451, %v1450
        %2884 = vrot.lane.b32.xlu0 %v2836, 96
        %v2885 = vpop.permute.xlu0 %2884
        %2886 = vrot.lane.b32.xlu0 %v2837, 96
        %v2887 = vpop.permute.xlu0 %2886
        %2890 = vrot.lane.b32.xlu0 %v2826, 96
        %v2891 = vpop.permute.xlu0 %2890
        %v2894 = vsel %vm1483, %v2883, 0
        %2896 = vmatprep.subr.bf16.mxu0 0
        %2897 = vmatpush1.bf16.msra.mxu0 %v2885
        %2898 = vmatprep.subr.bf16.mxu0 0
        %2899 = vmatpush1.bf16.msra.mxu0 %v2887
        %2900 = vmatprep.subr.bf16.mxu0 0
        %2901 = vmatpush1.bf16.msra.mxu0 0
        %2902 = vmatprep.subr.bf16.mxu0 0
        %2903 = vmatpush1.bf16.msra.mxu0 0
        %2904 = vmatprep.subr.bf16.mxu0 0
        %2905 = vmatpush1.bf16.msra.mxu0 0
        %2906 = vmatprep.subr.bf16.mxu0 0
        %2907 = vmatpush1.bf16.msra.mxu0 0
        %2908 = vmatprep.subr.bf16.mxu0 0
        %2909 = vmatpush1.bf16.msra.mxu0 0
        %2910 = vmatprep.subr.bf16.mxu0 0
        %2911 = vmatpush1.bf16.msra.mxu0 0
        %2912 = vmatprep.subr.bf16.mxu0 0
        %2913 = vmatpush1.bf16.msra.mxu0 0
        %2914 = vmatprep.subr.bf16.mxu0 0
        %2915 = vmatpush1.bf16.msra.mxu0 0
        %2916 = vmatprep.subr.bf16.mxu0 0
        %2917 = vmatpush1.bf16.msra.mxu0 0
        %2918 = vmatprep.subr.bf16.mxu0 0
        %2919 = vmatpush1.bf16.msra.mxu0 0
        %2920 = vmatprep.subr.bf16.mxu0 0
        %2921 = vmatpush1.bf16.msra.mxu0 0
        %2922 = vmatprep.subr.bf16.mxu0 0
        %2923 = vmatpush1.bf16.msra.mxu0 0
        %2924 = vmatprep.subr.bf16.mxu0 0
        %2925 = vmatpush1.bf16.msra.mxu0 0
        %2926 = vmatprep.subr.bf16.mxu0 0
        %2927 = vmatpush1.bf16.msra.mxu0 0
        %2928 = vmatprep.mubr.bf16.mxu0 0
        %2929 = vmatmul.mubr.bf16.gmra.mrb[0].mxu0 %v2894
        %v2930 = vpop.f32.mrb[0].mxu0
        %v2931 = vadd.f32 %v2891, %v2930
        %v2932 = vpop.f32.mrb[0].mxu0
        %v2933 = vpop.f32.mrb[0].mxu0
        %v2934 = vadd.f32 %v2891, %v2933
        %v2935 = vpop.f32.mrb[0].mxu0
        %2936 = vdwg.mxu0
        %v2937 = vpack.c.bf16 %v1449, %v1448
        %2938 = vrot.lane.b32.xlu0 %v2836, 64
        %v2939 = vpop.permute.xlu0 %2938
        %2940 = vrot.lane.b32.xlu0 %v2837, 64
        %v2941 = vpop.permute.xlu0 %2940
        %2944 = vrot.lane.b32.xlu0 %v2826, 64
        %v2945 = vpop.permute.xlu0 %2944
        %v2948 = vsel %vm1483, %v2937, 0
        %2950 = vmatprep.subr.bf16.mxu0 0
        %2951 = vmatpush1.bf16.msra.mxu0 %v2939
        %2952 = vmatprep.subr.bf16.mxu0 0
        %2953 = vmatpush1.bf16.msra.mxu0 %v2941
        %2954 = vmatprep.subr.bf16.mxu0 0
        %2955 = vmatpush1.bf16.msra.mxu0 0
        %2956 = vmatprep.subr.bf16.mxu0 0
        %2957 = vmatpush1.bf16.msra.mxu0 0
        %2958 = vmatprep.subr.bf16.mxu0 0
        %2959 = vmatpush1.bf16.msra.mxu0 0
        %2960 = vmatprep.subr.bf16.mxu0 0
        %2961 = vmatpush1.bf16.msra.mxu0 0
        %2962 = vmatprep.subr.bf16.mxu0 0
        %2963 = vmatpush1.bf16.msra.mxu0 0
        %2964 = vmatprep.subr.bf16.mxu0 0
        %2965 = vmatpush1.bf16.msra.mxu0 0
        %2966 = vmatprep.subr.bf16.mxu0 0
        %2967 = vmatpush1.bf16.msra.mxu0 0
        %2968 = vmatprep.subr.bf16.mxu0 0
        %2969 = vmatpush1.bf16.msra.mxu0 0
        %2970 = vmatprep.subr.bf16.mxu0 0
        %2971 = vmatpush1.bf16.msra.mxu0 0
        %2972 = vmatprep.subr.bf16.mxu0 0
        %2973 = vmatpush1.bf16.msra.mxu0 0
        %2974 = vmatprep.subr.bf16.mxu0 0
        %2975 = vmatpush1.bf16.msra.mxu0 0
        %2976 = vmatprep.subr.bf16.mxu0 0
        %2977 = vmatpush1.bf16.msra.mxu0 0
        %2978 = vmatprep.subr.bf16.mxu0 0
        %2979 = vmatpush1.bf16.msra.mxu0 0
        %2980 = vmatprep.subr.bf16.mxu0 0
        %2981 = vmatpush1.bf16.msra.mxu0 0
        %2982 = vmatprep.mubr.bf16.mxu0 0
        %2983 = vmatmul.mubr.bf16.gmra.mrb[0].mxu0 %v2948
        %v2984 = vpop.f32.mrb[0].mxu0
        %v2985 = vadd.f32 %v2945, %v2984
        %v2986 = vpop.f32.mrb[0].mxu0
        %v2987 = vpop.f32.mrb[0].mxu0
        %v2988 = vadd.f32 %v2945, %v2987
        %v2989 = vpop.f32.mrb[0].mxu0
        %2990 = vdwg.mxu0
        %v2991 = vpack.c.bf16 %v2878, %v2878
        %v2992 = vpack.c.bf16 %v2934, %v2931
        %v2993 = vpack.c.bf16 %v2988, %v2985
        %v2995 = vsel %vm1585, %v2991, 0
        %v2998 = vsel %vm1585, %v2992, 0
        %3000 = vmatprep.subr.bf16.mxu0 0
        %3001 = vmatpush1.bf16.xpose.msra.mxu0 %v2998
        %3002 = vmatprep.subr.bf16.mxu0 0
        %3003 = vmatpush1.bf16.xpose.msra.mxu0 0
        %3004 = vmatprep.subr.bf16.mxu0 0
        %3005 = vmatpush1.bf16.xpose.msra.mxu0 0
        %3006 = vmatprep.subr.bf16.mxu0 0
        %3007 = vmatpush1.bf16.xpose.msra.mxu0 0
        %3008 = vmatprep.subr.bf16.mxu0 0
        %3009 = vmatpush1.bf16.xpose.msra.mxu0 0
        %3010 = vmatprep.subr.bf16.mxu0 0
        %3011 = vmatpush1.bf16.xpose.msra.mxu0 0
        %3012 = vmatprep.subr.bf16.mxu0 0
        %3013 = vmatpush1.bf16.xpose.msra.mxu0 0
        %3014 = vmatprep.subr.bf16.mxu0 0
        %3015 = vmatpush1.bf16.xpose.msra.mxu0 0
        %3016 = vmatprep.subr.bf16.mxu0 0
        %3017 = vmatpush1.bf16.xpose.msra.mxu0 0
        %3018 = vmatprep.subr.bf16.mxu0 0
        %3019 = vmatpush1.bf16.xpose.msra.mxu0 0
        %3020 = vmatprep.subr.bf16.mxu0 0
        %3021 = vmatpush1.bf16.xpose.msra.mxu0 0
        %3022 = vmatprep.subr.bf16.mxu0 0
        %3023 = vmatpush1.bf16.xpose.msra.mxu0 0
        %3024 = vmatprep.subr.bf16.mxu0 0
        %3025 = vmatpush1.bf16.xpose.msra.mxu0 0
        %3026 = vmatprep.subr.bf16.mxu0 0
        %3027 = vmatpush1.bf16.xpose.msra.mxu0 0
        %3028 = vmatprep.subr.bf16.mxu0 0
        %3029 = vmatpush1.bf16.xpose.msra.mxu0 0
        %3030 = vmatprep.subr.bf16.mxu0 0
        %3031 = vmatpush1.bf16.xpose.msra.mxu0 0
        %3032 = vmatprep.mubr.bf16.mxu0 0
        %3033 = vmatmul.mubr.bf16.gmra.mrb[0].mxu0 %v2995
        %v3034 = vpop.f32.mrb[0].mxu0
        %v3035 = vadd.f32 %v2266, %v3034
        %v3036 = vpop.f32.mrb[0].mxu0
        %v3037 = vpop.f32.mrb[0].mxu0
        %v3038 = vpop.f32.mrb[0].mxu0
        %3039 = vdwg.mxu0
        %v3040 = vsel %vm2316, %v3035, -inf
        %3041 = vmax.xlane.f32.xlu0 %v3040
        %v3042 = vpop.xlane.xlu0 %3041
        %v3043 = vsub.f32 %v3035, %v3042
        %v3044 = vmul.f32 %v3043, 1.442695
        %v3045 = vpow.pop %v3044
        %v3046 = vsel %vm2316, %v3045, 0.0
        %3047 = vadd.xlane.f32.xlu0 %v3046
        %v3048 = vpop.xlane.xlu0 %3047
        %v3049 = vrcp.pop %v3048
        %v3050 = vmul.f32 %v3045, %v3049
        %v3051 = vpack.c.bf16 %v3050, %v3050
        %v3053 = vsel %vm2316, %v3051, 0
        %3055 = vmatprep.subr.bf16.mxu0 0
        %3056 = vmatpush1.bf16.msra.mxu0 %v2993
        %3057 = vmatprep.subr.bf16.mxu0 0
        %3058 = vmatpush1.bf16.msra.mxu0 0
        %3059 = vmatprep.subr.bf16.mxu0 0
        %3060 = vmatpush1.bf16.msra.mxu0 0
        %3061 = vmatprep.subr.bf16.mxu0 0
        %3062 = vmatpush1.bf16.msra.mxu0 0
        %3063 = vmatprep.subr.bf16.mxu0 0
        %3064 = vmatpush1.bf16.msra.mxu0 0
        %3065 = vmatprep.subr.bf16.mxu0 0
        %3066 = vmatpush1.bf16.msra.mxu0 0
        %3067 = vmatprep.subr.bf16.mxu0 0
        %3068 = vmatpush1.bf16.msra.mxu0 0
        %3069 = vmatprep.subr.bf16.mxu0 0
        %3070 = vmatpush1.bf16.msra.mxu0 0
        %3071 = vmatprep.subr.bf16.mxu0 0
        %3072 = vmatpush1.bf16.msra.mxu0 0
        %3073 = vmatprep.subr.bf16.mxu0 0
        %3074 = vmatpush1.bf16.msra.mxu0 0
        %3075 = vmatprep.subr.bf16.mxu0 0
        %3076 = vmatpush1.bf16.msra.mxu0 0
        %3077 = vmatprep.subr.bf16.mxu0 0
        %3078 = vmatpush1.bf16.msra.mxu0 0
        %3079 = vmatprep.subr.bf16.mxu0 0
        %3080 = vmatpush1.bf16.msra.mxu0 0
        %3081 = vmatprep.subr.bf16.mxu0 0
        %3082 = vmatpush1.bf16.msra.mxu0 0
        %3083 = vmatprep.subr.bf16.mxu0 0
        %3084 = vmatpush1.bf16.msra.mxu0 0
        %3085 = vmatprep.subr.bf16.mxu0 0
        %3086 = vmatpush1.bf16.msra.mxu0 0
        %3087 = vmatprep.mubr.bf16.mxu0 0
        %3088 = vmatmul.mubr.bf16.gmra.mrb[0].mxu0 %v3053
        %v3089 = vpop.f32.mrb[0].mxu0
        %v3090 = vadd.f32 0.0, %v3089
        %v3091 = vpop.f32.mrb[0].mxu0
        %v3092 = vpop.f32.mrb[0].mxu0
        %v3093 = vpop.f32.mrb[0].mxu0
        %3094 = vdwg.mxu0
        %3095 = vst.msk [vmem:[#allocation2] sm:$0xff] %vm1585, %v3090
        %3097 = vrot.lane.b32.xlu0 %v2991, 120
        %v3098 = vpop.permute.xlu0 %3097
        %3100 = vrot.lane.b32.xlu0 %v2992, 120
        %v3101 = vpop.permute.xlu0 %3100
        %v3103 = vsel %vm1585, %v3098, 0
        %v3106 = vsel %vm1585, %v3101, 0
        %3108 = vmatprep.subr.bf16.mxu0 0
        %3109 = vmatpush1.bf16.xpose.msra.mxu0 %v3106
        %3110 = vmatprep.subr.bf16.mxu0 0
        %3111 = vmatpush1.bf16.xpose.msra.mxu0 0
        %3112 = vmatprep.subr.bf16.mxu0 0
        %3113 = vmatpush1.bf16.xpose.msra.mxu0 0
        %3114 = vmatprep.subr.bf16.mxu0 0
        %3115 = vmatpush1.bf16.xpose.msra.mxu0 0
        %3116 = vmatprep.subr.bf16.mxu0 0
        %3117 = vmatpush1.bf16.xpose.msra.mxu0 0
        %3118 = vmatprep.subr.bf16.mxu0 0
        %3119 = vmatpush1.bf16.xpose.msra.mxu0 0
        %3120 = vmatprep.subr.bf16.mxu0 0
        %3121 = vmatpush1.bf16.xpose.msra.mxu0 0
        %3122 = vmatprep.subr.bf16.mxu0 0
        %3123 = vmatpush1.bf16.xpose.msra.mxu0 0
        %3124 = vmatprep.subr.bf16.mxu0 0
        %3125 = vmatpush1.bf16.xpose.msra.mxu0 0
        %3126 = vmatprep.subr.bf16.mxu0 0
        %3127 = vmatpush1.bf16.xpose.msra.mxu0 0
        %3128 = vmatprep.subr.bf16.mxu0 0
        %3129 = vmatpush1.bf16.xpose.msra.mxu0 0
        %3130 = vmatprep.subr.bf16.mxu0 0
        %3131 = vmatpush1.bf16.xpose.msra.mxu0 0
        %3132 = vmatprep.subr.bf16.mxu0 0
        %3133 = vmatpush1.bf16.xpose.msra.mxu0 0
        %3134 = vmatprep.subr.bf16.mxu0 0
        %3135 = vmatpush1.bf16.xpose.msra.mxu0 0
        %3136 = vmatprep.subr.bf16.mxu0 0
        %3137 = vmatpush1.bf16.xpose.msra.mxu0 0
        %3138 = vmatprep.subr.bf16.mxu0 0
        %3139 = vmatpush1.bf16.xpose.msra.mxu0 0
        %3140 = vmatprep.mubr.bf16.mxu0 0
        %3141 = vmatmul.mubr.bf16.gmra.mrb[0].mxu0 %v3103
        %v3142 = vpop.f32.mrb[0].mxu0
        %v3143 = vadd.f32 %v2266, %v3142
        %v3144 = vpop.f32.mrb[0].mxu0
        %v3145 = vpop.f32.mrb[0].mxu0
        %v3146 = vpop.f32.mrb[0].mxu0
        %3147 = vdwg.mxu0
        %v3148 = vsel %vm2316, %v3143, -inf
        %3149 = vmax.xlane.f32.xlu0 %v3148
        %v3150 = vpop.xlane.xlu0 %3149
        %v3151 = vsub.f32 %v3143, %v3150
        %v3152 = vmul.f32 %v3151, 1.442695
        %v3153 = vpow.pop %v3152
        %v3154 = vsel %vm2316, %v3153, 0.0
        %3155 = vadd.xlane.f32.xlu0 %v3154
        %v3156 = vpop.xlane.xlu0 %3155
        %v3157 = vrcp.pop %v3156
        %v3158 = vmul.f32 %v3153, %v3157
        %v3159 = vpack.c.bf16 %v3158, %v3158
        %3161 = vrot.lane.b32.xlu0 %v2993, 120
        %v3162 = vpop.permute.xlu0 %3161
        %v3165 = vsel %vm2316, %v3159, 0
        %3167 = vmatprep.subr.bf16.mxu0 0
        %3168 = vmatpush1.bf16.msra.mxu0 %v3162
        %3169 = vmatprep.subr.bf16.mxu0 0
        %3170 = vmatpush1.bf16.msra.mxu0 0
        %3171 = vmatprep.subr.bf16.mxu0 0
        %3172 = vmatpush1.bf16.msra.mxu0 0
        %3173 = vmatprep.subr.bf16.mxu0 0
        %3174 = vmatpush1.bf16.msra.mxu0 0
        %3175 = vmatprep.subr.bf16.mxu0 0
        %3176 = vmatpush1.bf16.msra.mxu0 0
        %3177 = vmatprep.subr.bf16.mxu0 0
        %3178 = vmatpush1.bf16.msra.mxu0 0
        %3179 = vmatprep.subr.bf16.mxu0 0
        %3180 = vmatpush1.bf16.msra.mxu0 0
        %3181 = vmatprep.subr.bf16.mxu0 0
        %3182 = vmatpush1.bf16.msra.mxu0 0
        %3183 = vmatprep.subr.bf16.mxu0 0
        %3184 = vmatpush1.bf16.msra.mxu0 0
        %3185 = vmatprep.subr.bf16.mxu0 0
        %3186 = vmatpush1.bf16.msra.mxu0 0
        %3187 = vmatprep.subr.bf16.mxu0 0
        %3188 = vmatpush1.bf16.msra.mxu0 0
        %3189 = vmatprep.subr.bf16.mxu0 0
        %3190 = vmatpush1.bf16.msra.mxu0 0
        %3191 = vmatprep.subr.bf16.mxu0 0
        %3192 = vmatpush1.bf16.msra.mxu0 0
        %3193 = vmatprep.subr.bf16.mxu0 0
        %3194 = vmatpush1.bf16.msra.mxu0 0
        %3195 = vmatprep.subr.bf16.mxu0 0
        %3196 = vmatpush1.bf16.msra.mxu0 0
        %3197 = vmatprep.subr.bf16.mxu0 0
        %3198 = vmatpush1.bf16.msra.mxu0 0
        %3199 = vmatprep.mubr.bf16.mxu0 0
        %3200 = vmatmul.mubr.bf16.gmra.mrb[0].mxu0 %v3165
        %v3201 = vpop.f32.mrb[0].mxu0
        %v3202 = vadd.f32 0.0, %v3201
        %v3203 = vpop.f32.mrb[0].mxu0
        %v3204 = vpop.f32.mrb[0].mxu0
        %v3205 = vpop.f32.mrb[0].mxu0
        %3206 = vdwg.mxu0
        %3208 = vrot.lane.b32.xlu0 %v3202, 8
        %v3209 = vpop.permute.xlu0 %3208
        %3211 = vst.msk [vmem:[#allocation2] sm:$0xff] %vm1807, %v3209
        %3212 = vrot.lane.b32.xlu0 %v2991, 112
        %v3213 = vpop.permute.xlu0 %3212
        %3214 = vrot.lane.b32.xlu0 %v2992, 112
        %v3215 = vpop.permute.xlu0 %3214
        %v3217 = vsel %vm1585, %v3213, 0
        %v3220 = vsel %vm1585, %v3215, 0
        %3222 = vmatprep.subr.bf16.mxu0 0
        %3223 = vmatpush1.bf16.xpose.msra.mxu0 %v3220
        %3224 = vmatprep.subr.bf16.mxu0 0
        %3225 = vmatpush1.bf16.xpose.msra.mxu0 0
        %3226 = vmatprep.subr.bf16.mxu0 0
        %3227 = vmatpush1.bf16.xpose.msra.mxu0 0
        %3228 = vmatprep.subr.bf16.mxu0 0
        %3229 = vmatpush1.bf16.xpose.msra.mxu0 0
        %3230 = vmatprep.subr.bf16.mxu0 0
        %3231 = vmatpush1.bf16.xpose.msra.mxu0 0
        %3232 = vmatprep.subr.bf16.mxu0 0
        %3233 = vmatpush1.bf16.xpose.msra.mxu0 0
        %3234 = vmatprep.subr.bf16.mxu0 0
        %3235 = vmatpush1.bf16.xpose.msra.mxu0 0
        %3236 = vmatprep.subr.bf16.mxu0 0
        %3237 = vmatpush1.bf16.xpose.msra.mxu0 0
        %3238 = vmatprep.subr.bf16.mxu0 0
        %3239 = vmatpush1.bf16.xpose.msra.mxu0 0
        %3240 = vmatprep.subr.bf16.mxu0 0
        %3241 = vmatpush1.bf16.xpose.msra.mxu0 0
        %3242 = vmatprep.subr.bf16.mxu0 0
        %3243 = vmatpush1.bf16.xpose.msra.mxu0 0
        %3244 = vmatprep.subr.bf16.mxu0 0
        %3245 = vmatpush1.bf16.xpose.msra.mxu0 0
        %3246 = vmatprep.subr.bf16.mxu0 0
        %3247 = vmatpush1.bf16.xpose.msra.mxu0 0
        %3248 = vmatprep.subr.bf16.mxu0 0
        %3249 = vmatpush1.bf16.xpose.msra.mxu0 0
        %3250 = vmatprep.subr.bf16.mxu0 0
        %3251 = vmatpush1.bf16.xpose.msra.mxu0 0
        %3252 = vmatprep.subr.bf16.mxu0 0
        %3253 = vmatpush1.bf16.xpose.msra.mxu0 0
        %3254 = vmatprep.mubr.bf16.mxu0 0
        %3255 = vmatmul.mubr.bf16.gmra.mrb[0].mxu0 %v3217
        %v3256 = vpop.f32.mrb[0].mxu0
        %v3257 = vadd.f32 %v2266, %v3256
        %v3258 = vpop.f32.mrb[0].mxu0
        %v3259 = vpop.f32.mrb[0].mxu0
        %v3260 = vpop.f32.mrb[0].mxu0
        %3261 = vdwg.mxu0
        %v3262 = vsel %vm2316, %v3257, -inf
        %3263 = vmax.xlane.f32.xlu0 %v3262
        %v3264 = vpop.xlane.xlu0 %3263
        %v3265 = vsub.f32 %v3257, %v3264
        %v3266 = vmul.f32 %v3265, 1.442695
        %v3267 = vpow.pop %v3266
        %v3268 = vsel %vm2316, %v3267, 0.0
        %3269 = vadd.xlane.f32.xlu0 %v3268
        %v3270 = vpop.xlane.xlu0 %3269
        %v3271 = vrcp.pop %v3270
        %v3272 = vmul.f32 %v3267, %v3271
        %v3273 = vpack.c.bf16 %v3272, %v3272
        %3274 = vrot.lane.b32.xlu0 %v2993, 112
        %v3275 = vpop.permute.xlu0 %3274
        %v3278 = vsel %vm2316, %v3273, 0
        %3280 = vmatprep.subr.bf16.mxu0 0
        %3281 = vmatpush1.bf16.msra.mxu0 %v3275
        %3282 = vmatprep.subr.bf16.mxu0 0
        %3283 = vmatpush1.bf16.msra.mxu0 0
        %3284 = vmatprep.subr.bf16.mxu0 0
        %3285 = vmatpush1.bf16.msra.mxu0 0
        %3286 = vmatprep.subr.bf16.mxu0 0
        %3287 = vmatpush1.bf16.msra.mxu0 0
        %3288 = vmatprep.subr.bf16.mxu0 0
        %3289 = vmatpush1.bf16.msra.mxu0 0
        %3290 = vmatprep.subr.bf16.mxu0 0
        %3291 = vmatpush1.bf16.msra.mxu0 0
        %3292 = vmatprep.subr.bf16.mxu0 0
        %3293 = vmatpush1.bf16.msra.mxu0 0
        %3294 = vmatprep.subr.bf16.mxu0 0
        %3295 = vmatpush1.bf16.msra.mxu0 0
        %3296 = vmatprep.subr.bf16.mxu0 0
        %3297 = vmatpush1.bf16.msra.mxu0 0
        %3298 = vmatprep.subr.bf16.mxu0 0
        %3299 = vmatpush1.bf16.msra.mxu0 0
        %3300 = vmatprep.subr.bf16.mxu0 0
        %3301 = vmatpush1.bf16.msra.mxu0 0
        %3302 = vmatprep.subr.bf16.mxu0 0
        %3303 = vmatpush1.bf16.msra.mxu0 0
        %3304 = vmatprep.subr.bf16.mxu0 0
        %3305 = vmatpush1.bf16.msra.mxu0 0
        %3306 = vmatprep.subr.bf16.mxu0 0
        %3307 = vmatpush1.bf16.msra.mxu0 0
        %3308 = vmatprep.subr.bf16.mxu0 0
        %3309 = vmatpush1.bf16.msra.mxu0 0
        %3310 = vmatprep.subr.bf16.mxu0 0
        %3311 = vmatpush1.bf16.msra.mxu0 0
        %3312 = vmatprep.mubr.bf16.mxu0 0
        %3313 = vmatmul.mubr.bf16.gmra.mrb[0].mxu0 %v3278
        %v3314 = vpop.f32.mrb[0].mxu0
        %v3315 = vadd.f32 0.0, %v3314
        %v3316 = vpop.f32.mrb[0].mxu0
        %v3317 = vpop.f32.mrb[0].mxu0
        %v3318 = vpop.f32.mrb[0].mxu0
        %3319 = vdwg.mxu0
        %3321 = vrot.lane.b32.xlu0 %v3315, 16
        %v3322 = vpop.permute.xlu0 %3321
        %3324 = vst.msk [vmem:[#allocation2] sm:$0xff] %vm1923, %v3322
        %3325 = vrot.lane.b32.xlu0 %v2991, 104
        %v3326 = vpop.permute.xlu0 %3325
        %3327 = vrot.lane.b32.xlu0 %v2992, 104
        %v3328 = vpop.permute.xlu0 %3327
        %v3330 = vsel %vm1585, %v3326, 0
        %v3333 = vsel %vm1585, %v3328, 0
        %3335 = vmatprep.subr.bf16.mxu0 0
        %3336 = vmatpush1.bf16.xpose.msra.mxu0 %v3333
        %3337 = vmatprep.subr.bf16.mxu0 0
        %3338 = vmatpush1.bf16.xpose.msra.mxu0 0
        %3339 = vmatprep.subr.bf16.mxu0 0
        %3340 = vmatpush1.bf16.xpose.msra.mxu0 0
        %3341 = vmatprep.subr.bf16.mxu0 0
        %3342 = vmatpush1.bf16.xpose.msra.mxu0 0
        %3343 = vmatprep.subr.bf16.mxu0 0
        %3344 = vmatpush1.bf16.xpose.msra.mxu0 0
        %3345 = vmatprep.subr.bf16.mxu0 0
        %3346 = vmatpush1.bf16.xpose.msra.mxu0 0
        %3347 = vmatprep.subr.bf16.mxu0 0
        %3348 = vmatpush1.bf16.xpose.msra.mxu0 0
        %3349 = vmatprep.subr.bf16.mxu0 0
        %3350 = vmatpush1.bf16.xpose.msra.mxu0 0
        %3351 = vmatprep.subr.bf16.mxu0 0
        %3352 = vmatpush1.bf16.xpose.msra.mxu0 0
        %3353 = vmatprep.subr.bf16.mxu0 0
        %3354 = vmatpush1.bf16.xpose.msra.mxu0 0
        %3355 = vmatprep.subr.bf16.mxu0 0
        %3356 = vmatpush1.bf16.xpose.msra.mxu0 0
        %3357 = vmatprep.subr.bf16.mxu0 0
        %3358 = vmatpush1.bf16.xpose.msra.mxu0 0
        %3359 = vmatprep.subr.bf16.mxu0 0
        %3360 = vmatpush1.bf16.xpose.msra.mxu0 0
        %3361 = vmatprep.subr.bf16.mxu0 0
        %3362 = vmatpush1.bf16.xpose.msra.mxu0 0
        %3363 = vmatprep.subr.bf16.mxu0 0
        %3364 = vmatpush1.bf16.xpose.msra.mxu0 0
        %3365 = vmatprep.subr.bf16.mxu0 0
        %3366 = vmatpush1.bf16.xpose.msra.mxu0 0
        %3367 = vmatprep.mubr.bf16.mxu0 0
        %3368 = vmatmul.mubr.bf16.gmra.mrb[0].mxu0 %v3330
        %v3369 = vpop.f32.mrb[0].mxu0
        %v3370 = vadd.f32 %v2266, %v3369
        %v3371 = vpop.f32.mrb[0].mxu0
        %v3372 = vpop.f32.mrb[0].mxu0
        %v3373 = vpop.f32.mrb[0].mxu0
        %3374 = vdwg.mxu0
        %v3375 = vsel %vm2316, %v3370, -inf
        %3376 = vmax.xlane.f32.xlu0 %v3375
        %v3377 = vpop.xlane.xlu0 %3376
        %v3378 = vsub.f32 %v3370, %v3377
        %v3379 = vmul.f32 %v3378, 1.442695
        %v3380 = vpow.pop %v3379
        %v3381 = vsel %vm2316, %v3380, 0.0
        %3382 = vadd.xlane.f32.xlu0 %v3381
        %v3383 = vpop.xlane.xlu0 %3382
        %v3384 = vrcp.pop %v3383
        %v3385 = vmul.f32 %v3380, %v3384
        %v3386 = vpack.c.bf16 %v3385, %v3385
        %3387 = vrot.lane.b32.xlu0 %v2993, 104
        %v3388 = vpop.permute.xlu0 %3387
        %v3391 = vsel %vm2316, %v3386, 0
        %3393 = vmatprep.subr.bf16.mxu0 0
        %3394 = vmatpush1.bf16.msra.mxu0 %v3388
        %3395 = vmatprep.subr.bf16.mxu0 0
        %3396 = vmatpush1.bf16.msra.mxu0 0
        %3397 = vmatprep.subr.bf16.mxu0 0
        %3398 = vmatpush1.bf16.msra.mxu0 0
        %3399 = vmatprep.subr.bf16.mxu0 0
        %3400 = vmatpush1.bf16.msra.mxu0 0
        %3401 = vmatprep.subr.bf16.mxu0 0
        %3402 = vmatpush1.bf16.msra.mxu0 0
        %3403 = vmatprep.subr.bf16.mxu0 0
        %3404 = vmatpush1.bf16.msra.mxu0 0
        %3405 = vmatprep.subr.bf16.mxu0 0
        %3406 = vmatpush1.bf16.msra.mxu0 0
        %3407 = vmatprep.subr.bf16.mxu0 0
        %3408 = vmatpush1.bf16.msra.mxu0 0
        %3409 = vmatprep.subr.bf16.mxu0 0
        %3410 = vmatpush1.bf16.msra.mxu0 0
        %3411 = vmatprep.subr.bf16.mxu0 0
        %3412 = vmatpush1.bf16.msra.mxu0 0
        %3413 = vmatprep.subr.bf16.mxu0 0
        %3414 = vmatpush1.bf16.msra.mxu0 0
        %3415 = vmatprep.subr.bf16.mxu0 0
        %3416 = vmatpush1.bf16.msra.mxu0 0
        %3417 = vmatprep.subr.bf16.mxu0 0
        %3418 = vmatpush1.bf16.msra.mxu0 0
        %3419 = vmatprep.subr.bf16.mxu0 0
        %3420 = vmatpush1.bf16.msra.mxu0 0
        %3421 = vmatprep.subr.bf16.mxu0 0
        %3422 = vmatpush1.bf16.msra.mxu0 0
        %3423 = vmatprep.subr.bf16.mxu0 0
        %3424 = vmatpush1.bf16.msra.mxu0 0
        %3425 = vmatprep.mubr.bf16.mxu0 0
        %3426 = vmatmul.mubr.bf16.gmra.mrb[0].mxu0 %v3391
        %v3427 = vpop.f32.mrb[0].mxu0
        %v3428 = vadd.f32 0.0, %v3427
        %v3429 = vpop.f32.mrb[0].mxu0
        %v3430 = vpop.f32.mrb[0].mxu0
        %v3431 = vpop.f32.mrb[0].mxu0
        %3432 = vdwg.mxu0
        %3434 = vrot.lane.b32.xlu0 %v3428, 24
        %v3435 = vpop.permute.xlu0 %3434
        %3437 = vst.msk [vmem:[#allocation2] sm:$0xff] %vm2039, %v3435
        %v3438 = vld [vmem:[#allocation2] sm:$0xff]
        %v3439 = vpack.c.bf16 %v3438, %v3438
        %v3441 = vlaneseq
        %v3442 = vshrl.u32 %v3441, 7
        %v3443 = vsub.s32 0, %v3442
        %v3444 = vrot.slane %v2820, %v3443
        %v3450 = vunpack.c.l.b16 %v2816
        %v3451 = vunpack.c.l.b16 %v2817
        %v3452 = vunpack.c.l.b16 %v2818
        %v3453 = vunpack.c.l.b16 %v2819
        %v3454 = vpack.c.b16 %v3451, %v3450
        %v3455 = vpack.c.b16 %v3453, %v3452
        %v3459 = vsel %vm1483, %v3439, 0
        %3461 = vmatprep.subr.bf16.mxu0 0
        %3462 = vmatpush1.bf16.msra.mxu0 %v3454
        %3463 = vmatprep.subr.bf16.mxu0 0
        %3464 = vmatpush1.bf16.msra.mxu0 %v3455
        %3465 = vmatprep.subr.bf16.mxu0 0
        %3466 = vmatpush1.bf16.msra.mxu0 0
        %3467 = vmatprep.subr.bf16.mxu0 0
        %3468 = vmatpush1.bf16.msra.mxu0 0
        %3469 = vmatprep.subr.bf16.mxu0 0
        %3470 = vmatpush1.bf16.msra.mxu0 0
        %3471 = vmatprep.subr.bf16.mxu0 0
        %3472 = vmatpush1.bf16.msra.mxu0 0
        %3473 = vmatprep.subr.bf16.mxu0 0
        %3474 = vmatpush1.bf16.msra.mxu0 0
        %3475 = vmatprep.subr.bf16.mxu0 0
        %3476 = vmatpush1.bf16.msra.mxu0 0
        %3477 = vmatprep.subr.bf16.mxu0 0
        %3478 = vmatpush1.bf16.msra.mxu0 0
        %3479 = vmatprep.subr.bf16.mxu0 0
        %3480 = vmatpush1.bf16.msra.mxu0 0
        %3481 = vmatprep.subr.bf16.mxu0 0
        %3482 = vmatpush1.bf16.msra.mxu0 0
        %3483 = vmatprep.subr.bf16.mxu0 0
        %3484 = vmatpush1.bf16.msra.mxu0 0
        %3485 = vmatprep.subr.bf16.mxu0 0
        %3486 = vmatpush1.bf16.msra.mxu0 0
        %3487 = vmatprep.subr.bf16.mxu0 0
        %3488 = vmatpush1.bf16.msra.mxu0 0
        %3489 = vmatprep.subr.bf16.mxu0 0
        %3490 = vmatpush1.bf16.msra.mxu0 0
        %3491 = vmatprep.subr.bf16.mxu0 0
        %3492 = vmatpush1.bf16.msra.mxu0 0
        %3493 = vmatprep.mubr.bf16.mxu0 0
        %3494 = vmatmul.mubr.bf16.gmra.mrb[0].mxu0 %v3459
        %v3495 = vpop.f32.mrb[0].mxu0
        %v3496 = vadd.f32 %v3444, %v3495
        %v3497 = vpop.f32.mrb[0].mxu0
        %v3498 = vpop.f32.mrb[0].mxu0
        %v3499 = vpop.f32.mrb[0].mxu0
        %3500 = vdwg.mxu0
        %v3501 = vadd.f32 %v2809, %v3496
        %v3502 = vld [vmem:[%s1411] sm:$0x1]
        %v3503 = vld [vmem:[%s1414] sm:$0x1]
        %v3504 = vsel %vm1483, %v3501, 0.0
        %3505 = vadd.xlane.f32.xlu0 %v3504
        %v3506 = vpop.xlane.xlu0 %3505
        %v3507 = vmul.f32 %v3506, %v2110
        %v3508 = vsub.f32 %v3501, %v3507
        %v3509 = vmul.f32 %v3508, %v3508
        %v3510 = vsel %vm1483, %v3509, 0.0
        %3511 = vadd.xlane.f32.xlu0 %v3510
        %v3512 = vpop.xlane.xlu0 %3511
        %v3513 = vmul.f32 %v3512, %v2110
        %v3514 = vadd.f32 %v3513, 1e-05
        %v3515 = vrsqrt.pop %v3514
        %v3516 = vmul.f32 %v3508, %v3515
        %v3518 = vlaneseq
        %v3519 = vshrl.u32 %v3518, 7
        %v3520 = vsub.s32 0, %v3519
        %v3521 = vrot.slane %v3502, %v3520
        %v3523 = vmul.f32 %v3516, %v3521
        %v3525 = vlaneseq
        %v3526 = vshrl.u32 %v3525, 7
        %v3527 = vsub.s32 0, %v3526
        %v3528 = vrot.slane %v3503, %v3527
        %v3530 = vadd.f32 %v3523, %v3528
        %v3531 = vld [vmem:[%s1425] sm:$0xf]
        %v3532 = vld [vmem:[%s1425 + $0x4] sm:$0xf]
        %v3533 = vld [vmem:[%s1425 + $0x8] sm:$0xf]
        %v3534 = vld [vmem:[%s1425 + $0xc] sm:$0xf]
        %v3535 = vld [vmem:[%s1428] sm:$0x1]
        %v3536 = vld [vmem:[%s1433] sm:$0xf]
        %v3537 = vld [vmem:[%s1433 + $0x4] sm:$0xf]
        %v3538 = vld [vmem:[%s1433 + $0x8] sm:$0xf]
        %v3539 = vld [vmem:[%s1433 + $0xc] sm:$0xf]
        %v3540 = vld [vmem:[%s1433 + $0x10] sm:$0xf]
        %v3541 = vld [vmem:[%s1433 + $0x14] sm:$0xf]
        %v3542 = vld [vmem:[%s1433 + $0x18] sm:$0xf]
        %v3543 = vld [vmem:[%s1433 + $0x1c] sm:$0xf]
        %v3544 = vld [vmem:[%s1436] sm:$0x1]
        %v3545 = vpack.c.bf16 %v3530, %v3530
        %v3547 = vlaneseq
        %v3548 = vshrl.u32 %v3547, 7
        %v3549 = vsub.s32 0, %v3548
        %v3550 = vrot.slane %v3535, %v3549
        %v3556 = vunpack.c.l.b16 %v3531
        %v3557 = vunpack.c.l.b16 %v3532
        %v3558 = vunpack.c.l.b16 %v3533
        %v3559 = vunpack.c.l.b16 %v3534
        %v3560 = vpack.c.b16 %v3557, %v3556
        %v3561 = vpack.c.b16 %v3559, %v3558
        %v3565 = vsel %vm1483, %v3545, 0
        %3567 = vmatprep.subr.bf16.mxu0 0
        %3568 = vmatpush1.bf16.msra.mxu0 %v3560
        %3569 = vmatprep.subr.bf16.mxu0 0
        %3570 = vmatpush1.bf16.msra.mxu0 %v3561
        %3571 = vmatprep.subr.bf16.mxu0 0
        %3572 = vmatpush1.bf16.msra.mxu0 0
        %3573 = vmatprep.subr.bf16.mxu0 0
        %3574 = vmatpush1.bf16.msra.mxu0 0
        %3575 = vmatprep.subr.bf16.mxu0 0
        %3576 = vmatpush1.bf16.msra.mxu0 0
        %3577 = vmatprep.subr.bf16.mxu0 0
        %3578 = vmatpush1.bf16.msra.mxu0 0
        %3579 = vmatprep.subr.bf16.mxu0 0
        %3580 = vmatpush1.bf16.msra.mxu0 0
        %3581 = vmatprep.subr.bf16.mxu0 0
        %3582 = vmatpush1.bf16.msra.mxu0 0
        %3583 = vmatprep.subr.bf16.mxu0 0
        %3584 = vmatpush1.bf16.msra.mxu0 0
        %3585 = vmatprep.subr.bf16.mxu0 0
        %3586 = vmatpush1.bf16.msra.mxu0 0
        %3587 = vmatprep.subr.bf16.mxu0 0
        %3588 = vmatpush1.bf16.msra.mxu0 0
        %3589 = vmatprep.subr.bf16.mxu0 0
        %3590 = vmatpush1.bf16.msra.mxu0 0
        %3591 = vmatprep.subr.bf16.mxu0 0
        %3592 = vmatpush1.bf16.msra.mxu0 0
        %3593 = vmatprep.subr.bf16.mxu0 0
        %3594 = vmatpush1.bf16.msra.mxu0 0
        %3595 = vmatprep.subr.bf16.mxu0 0
        %3596 = vmatpush1.bf16.msra.mxu0 0
        %3597 = vmatprep.subr.bf16.mxu0 0
        %3598 = vmatpush1.bf16.msra.mxu0 0
        %3599 = vmatprep.mubr.bf16.mxu0 0
        %3600 = vmatmul.mubr.bf16.gmra.mrb[0].mxu0 %v3565
        %v3601 = vpop.f32.mrb[0].mxu0
        %v3602 = vadd.f32 %v3550, %v3601
        %v3603 = vpop.f32.mrb[0].mxu0
        %v3604 = vpop.f32.mrb[0].mxu0
        %v3605 = vpop.f32.mrb[0].mxu0
        %3606 = vdwg.mxu0
        %vm3607 = vcmp.ge.f32.partialorder %v3602, 0.0
        %v3608 = vmul.f32 %v3602, 0.01
        %v3609 = vsel %vm3607, %v3602, %v3608
        %v3610 = vpack.c.bf16 %v3609, %v3609
        %v3612 = vlaneseq
        %v3613 = vshrl.u32 %v3612, 7
        %v3614 = vsub.s32 0, %v3613
        %v3615 = vrot.slane %v3544, %v3614
        %v3625 = vunpack.c.l.b16 %v3536
        %v3626 = vunpack.c.l.b16 %v3537
        %v3627 = vunpack.c.l.b16 %v3538
        %v3628 = vunpack.c.l.b16 %v3539
        %v3629 = vunpack.c.l.b16 %v3540
        %v3630 = vunpack.c.l.b16 %v3541
        %v3631 = vunpack.c.l.b16 %v3542
        %v3632 = vunpack.c.l.b16 %v3543
        %v3633 = vpack.c.b16 %v3626, %v3625
        %v3634 = vpack.c.b16 %v3628, %v3627
        %v3635 = vpack.c.b16 %v3630, %v3629
        %v3636 = vpack.c.b16 %v3632, %v3631
        %vm3641 = vcmask 523264
        %v3643 = vsel %vm3641, %v3610, 0
        %3645 = vmatprep.subr.bf16.mxu0 0
        %3646 = vmatpush1.bf16.msra.mxu0 %v3633
        %3647 = vmatprep.subr.bf16.mxu0 0
        %3648 = vmatpush1.bf16.msra.mxu0 %v3634
        %3649 = vmatprep.subr.bf16.mxu0 0
        %3650 = vmatpush1.bf16.msra.mxu0 %v3635
        %3651 = vmatprep.subr.bf16.mxu0 0
        %3652 = vmatpush1.bf16.msra.mxu0 %v3636
        %3653 = vmatprep.subr.bf16.mxu0 0
        %3654 = vmatpush1.bf16.msra.mxu0 0
        %3655 = vmatprep.subr.bf16.mxu0 0
        %3656 = vmatpush1.bf16.msra.mxu0 0
        %3657 = vmatprep.subr.bf16.mxu0 0
        %3658 = vmatpush1.bf16.msra.mxu0 0
        %3659 = vmatprep.subr.bf16.mxu0 0
        %3660 = vmatpush1.bf16.msra.mxu0 0
        %3661 = vmatprep.subr.bf16.mxu0 0
        %3662 = vmatpush1.bf16.msra.mxu0 0
        %3663 = vmatprep.subr.bf16.mxu0 0
        %3664 = vmatpush1.bf16.msra.mxu0 0
        %3665 = vmatprep.subr.bf16.mxu0 0
        %3666 = vmatpush1.bf16.msra.mxu0 0
        %3667 = vmatprep.subr.bf16.mxu0 0
        %3668 = vmatpush1.bf16.msra.mxu0 0
        %3669 = vmatprep.subr.bf16.mxu0 0
        %3670 = vmatpush1.bf16.msra.mxu0 0
        %3671 = vmatprep.subr.bf16.mxu0 0
        %3672 = vmatpush1.bf16.msra.mxu0 0
        %3673 = vmatprep.subr.bf16.mxu0 0
        %3674 = vmatpush1.bf16.msra.mxu0 0
        %3675 = vmatprep.subr.bf16.mxu0 0
        %3676 = vmatpush1.bf16.msra.mxu0 0
        %3677 = vmatprep.mubr.bf16.mxu0 0
        %3678 = vmatmul.mubr.bf16.gmra.mrb[0].mxu0 %v3643
        %v3679 = vpop.f32.mrb[0].mxu0
        %v3680 = vadd.f32 %v3615, %v3679
        %v3681 = vpop.f32.mrb[0].mxu0
        %v3682 = vpop.f32.mrb[0].mxu0
        %v3683 = vpop.f32.mrb[0].mxu0
        %3684 = vdwg.mxu0
        %v3685 = vadd.f32 %v3530, %v3680
        %v3686 = vld [vmem:[%s1417] sm:$0x1]
        %v3687 = vld [vmem:[%s1420] sm:$0x1]
        %v3688 = vsel %vm1483, %v3685, 0.0
        %3689 = vadd.xlane.f32.xlu0 %v3688
        %v3690 = vpop.xlane.xlu0 %3689
        %v3691 = vmul.f32 %v3690, %v2110
        %v3692 = vsub.f32 %v3685, %v3691
        %v3693 = vmul.f32 %v3692, %v3692
        %v3694 = vsel %vm1483, %v3693, 0.0
        %3695 = vadd.xlane.f32.xlu0 %v3694
        %v3696 = vpop.xlane.xlu0 %3695
        %v3697 = vmul.f32 %v3696, %v2110
        %v3698 = vadd.f32 %v3697, 1e-05
        %v3699 = vrsqrt.pop %v3698
        %v3700 = vmul.f32 %v3692, %v3699
        %v3702 = vlaneseq
        %v3703 = vshrl.u32 %v3702, 7
        %v3704 = vsub.s32 0, %v3703
        %v3705 = vrot.slane %v3686, %v3704
        %v3707 = vmul.f32 %v3700, %v3705
        %v3709 = vlaneseq
        %v3710 = vshrl.u32 %v3709, 7
        %v3711 = vsub.s32 0, %v3710
        %v3712 = vrot.slane %v3687, %v3711
        %v3714 = vadd.f32 %v3707, %v3712
        %3715 = vst.msk [vmem:[%s1326] sm:$0xff] %vm1483, %v3714
        %p3716 = scmp.eq.s32.totalorder %s83, 1
        // Predicated region
        $region153: #{fwd.3} parent=143 // pred_check
          %p3717 = pneg %p3716
        $region154: #{fwd.3} parent=143 // pred_check_branch
          %3719 = sbr.rel (%p3717) target = $region156
        $region155: #{fwd.3} parent=143 // pred_region
          %v3720 = vld [vmem:[%s59] sm:$0x1]
          %v3721 = vld [vmem:[#allocation3] sm:$0x1]
          %v3722 = vsel %vm1483, %v3714, 0.0
          %3723 = vadd.xlane.f32.xlu0 %v3722
          %v3724 = vpop.xlane.xlu0 %3723
          %v3725 = vmul.f32 %v3724, %v2110
          %v3726 = vsub.f32 %v3714, %v3725
          %v3727 = vmul.f32 %v3726, %v3726
          %v3728 = vsel %vm1483, %v3727, 0.0
          %3729 = vadd.xlane.f32.xlu0 %v3728
          %v3730 = vpop.xlane.xlu0 %3729
          %v3731 = vmul.f32 %v3730, %v2110
          %v3732 = vadd.f32 %v3731, 1e-05
          %v3733 = vrsqrt.pop %v3732
          %v3734 = vmul.f32 %v3726, %v3733
          %v3736 = vlaneseq
          %v3737 = vshrl.u32 %v3736, 7
          %v3738 = vsub.s32 0, %v3737
          %v3739 = vrot.slane %v3720, %v3738
          %v3741 = vmul.f32 %v3734, %v3739
          %v3743 = vlaneseq
          %v3744 = vshrl.u32 %v3743, 7
          %v3745 = vsub.s32 0, %v3744
          %v3746 = vrot.slane %v3721, %v3745
          %v3748 = vadd.f32 %v3741, %v3746
          %3749 = vst.msk [vmem:[%s1326] sm:$0xff] %vm1483, %v3748
        $region156: #{fwd.3} parent=143 // pred_fallthru
          _
        %s3750 = sand.u32 %s894, 1
        %s3751 = scalar_lea.sflag [#allocation5], %s3750
        %s3752 = sand.u32 %s894, 1
        %s3753 = smul.addr %s3752, 8
        %s3754 = scalar_lea.vmem [#allocation6], %s3753
        // Predicated region
        $region157: #{fwd.3} parent=143 // pred_check
          %p3755 = pneg %p904
        $region158: #{fwd.3} parent=143 // pred_check_branch
          %3757 = sbr.rel (%p3755) target = $region160
        $region159: #{fwd.3} parent=143 // pred_region
          %s3759 = ssub.s32 128, 128
          %3760 = vsyncadd %s3751, %s3759
          %s3761 = smul.addr %s82, 128
          %s3762 = scalar_lea.hbm %s63, %s3761
          %s3764 = sshll.u32 %s3754, 4
          %s3765 = int_to_ptr.vmem [resolvable:$true] %s3764
          %3767 = dma.vmem_to_hbm [thread:$0]  %s3765, 128, %s3762, %s3751
        $region160: #{fwd.3} parent=143 // pred_fallthru
          _
      $region144: #{fwd.3} parent=5 // pred_fallthru
        _
      %p3768 = scmp.le.s32.totalorder 2, %s73
      // Predicated region
      $region161: #{fwd.3} parent=5 // pred_check
        %p3769 = pneg %p3768
      $region162: #{fwd.3} parent=5 // pred_check_branch
        %3771 = sbr.rel (%p3769) target = $region164
      $region163: #{fwd.3} parent=5 // pred_region
        %s3772 = ssub.s32 %s73, 2
        // Predicated region
        $region165: #{fwd.3} parent=163 // pred_check
          %p3773 = pneg %p910
        $region166: #{fwd.3} parent=163 // pred_check_branch
          %3775 = sbr.rel (%p3773) target = $region168
        $region167: #{fwd.3} parent=163 // pred_region
          %s3776 = sand.u32 %s895, 1
          %s3777 = scalar_lea.sflag [#allocation5], %s3776
          %s3778 = sand.u32 %s895, 1
          %s3779 = smul.addr %s3778, 8
          %s3780 = scalar_lea.vmem [#allocation6], %s3779
          %3781 = dma.done %s3777, 128
        $region168: #{fwd.3} parent=163 // pred_fallthru
          _
      $region164: #{fwd.3} parent=5 // pred_fallthru
        _
    $region6: #{fwd.3} parent=1 // loop_footer
      %s77 = sadd.s32 1, %s73
    $region7: #{fwd.3} parent=1 // loop_footer_branch
      %72 = sbr.rel target = $region3
    $region8: #{fwd.3} parent=1 // loop_exit
      _
    %3782 = vsyncpa [#allocation4], 1
    %s3783 = scalar_lea.sflag [#allocation4], 1
    %3784 = vsyncpa %s3783, 1
    %3785 = vsyncpa [#allocation5], 1
    %s3786 = scalar_lea.sflag [#allocation5], 1
    %3787 = vsyncpa %s3786, 1

</llo_original>
